<compile_context>
chip_gen: v7x
topology: tpu7x:2x2x1
jax: 0.10.0
libtpu: 0.0.40
codegen_flags: <defaults>
</compile_context>

<pallas_src>
import functools

import jax
import jax.numpy as jnp
from jax import lax
from jax.experimental import pallas as pl
from jax.experimental.pallas import tpu as pltpu

# Problem sizes (match the PyTorch module defaults).
T = 16          # sequence length
C_IN = 16       # EMG input channels
C_MID1 = 64
C_MID2 = 128
C_OUT = 20      # pose outputs
KSZ = 5
PAD = KSZ // 2  # 2


def _round_up(n, m):
    return (n + m - 1) // m * m


# ----------------------------------------------------------------------------
# Kernel: three bf16 matmuls with f32 accumulation / elementwise math.
# ----------------------------------------------------------------------------
def emg_pose_kernel(x_ref, w1_ref, b1_ref, w2_ref, b2_ref, wfc_ref, bfc_ref,
                    out_ref):
    # x_ref: (BB, T*C_IN) f32; w*_ref bf16; b*_ref f32.
    xb = x_ref[...].astype(jnp.bfloat16)

    # Conv1d(16->64, k=5, pad=2) + ReLU  (folded Toeplitz matmul)
    h1 = jnp.dot(xb, w1_ref[...], preferred_element_type=jnp.float32)
    h1 = jnp.maximum(h1 + b1_ref[...], 0.0)            # (BB, T*C_MID1) f32

    # Conv1d(64->128, k=5, pad=2) + ReLU
    h2 = jnp.dot(h1.astype(jnp.bfloat16), w2_ref[...],
                 preferred_element_type=jnp.float32)
    h2 = jnp.maximum(h2 + b2_ref[...], 0.0)             # (BB, T*C_MID2) f32

    # AdaptiveAvgPool1d(1) + Linear(128->20), folded into one matmul.
    out = jnp.dot(h2.astype(jnp.bfloat16), wfc_ref[...],
                  preferred_element_type=jnp.float32)
    out_ref[...] = out + bfc_ref[...]                   # (BB, C_OUT) f32


# ----------------------------------------------------------------------------
# Wrapper.
# ----------------------------------------------------------------------------
@functools.partial(jax.jit, static_argnames=("block_b",))
def emg_to_pose(x, folded_params, block_b=256):
    """x: (B, T, C_IN) f32 -> (B, C_OUT) f32."""
    w1, b1, w2, b2, wfc, bfc = folded_params
    B = x.shape[0]
    x2 = x.reshape(B, T * C_IN)          # contiguous reshape: no data movement

    BB = min(block_b, _round_up(B, 8))   # batch tile per grid step
    B_pad = _round_up(B, BB)
    if B_pad != B:
        x2 = jnp.pad(x2, ((0, B_pad - B), (0, 0)))

    out = pl.pallas_call(
        emg_pose_kernel,
        out_shape=jax.ShapeDtypeStruct((B_pad, C_OUT), jnp.float32),
        grid=(B_pad // BB,),
        in_specs=[
            pl.BlockSpec((BB, T * C_IN), lambda b: (b, 0)),
            pl.BlockSpec((T * C_IN, T * C_MID1), lambda b: (0, 0)),
            pl.BlockSpec((1, T * C_MID1), lambda b: (0, 0)),
            pl.BlockSpec((T * C_MID1, T * C_MID2), lambda b: (0, 0)),
            pl.BlockSpec((1, T * C_MID2), lambda b: (0, 0)),
            pl.BlockSpec((T * C_MID2, C_OUT), lambda b: (0, 0)),
            pl.BlockSpec((1, C_OUT), lambda b: (0, 0)),
        ],
        out_specs=pl.BlockSpec((BB, C_OUT), lambda b: (b, 0)),
        compiler_params=pltpu.CompilerParams(
            dimension_semantics=("parallel",),
            vmem_limit_bytes=32 * 1024 * 1024),
    )(x2, w1, b1, w2, b2, wfc, bfc)
    return out[:B]


# ----------------------------------------------------------------------------
# Parameter handling.
#   Natural layout (matches PyTorch, used by the reference):
#     w1: (KSZ, C_IN, C_MID1)   with w1[k, i, o] == torch_w1[o, i, k]
#     w2: (KSZ, C_MID1, C_MID2)
#     wfc: (C_MID2, C_OUT), biases (1, C).
#   Folded layout (used by the kernel): block-banded Toeplitz matrices.
# ----------------------------------------------------------------------------
def _conv_toeplitz(w):
    """(KSZ, C_in, C_out) tap weights -> (T*C_in, T*C_out) banded matrix.

    big[t*C_in + i, t2*C_out + o] = w[t - t2 + PAD, i, o] when the tap exists,
    else 0 — i.e. exactly PyTorch's zero-padded stride-1 Conv1d.
    """
    K, ci, co = w.shape
    t = jnp.arange(T)[:, None]        # input time index
    t2 = jnp.arange(T)[None, :]       # output time index
    k = t - t2 + PAD                  # which tap connects t -> t2
    valid = (k >= 0) & (k < K)
    big = w[jnp.clip(k, 0, K - 1)]                       # (T, T, ci, co)
    big = jnp.where(valid[:, :, None, None], big, 0.0)
    big = jnp.transpose(big, (0, 2, 1, 3))               # (T, ci, T, co)
    return big.reshape(T * ci, T * co)


def fold_params(params):
    """One-time weight preprocessing for the kernel (bf16 matmul operands)."""
    w1, b1, w2, b2, wfc, bfc = params
    w1_big = _conv_toeplitz(w1).astype(jnp.bfloat16)          # (256, 1024)
    w2_big = _conv_toeplitz(w2).astype(jnp.bfloat16)          # (1024, 2048)
    b1_big = jnp.tile(b1, (1, T))                             # (1, 1024) f32
    b2_big = jnp.tile(b2, (1, T))                             # (1, 2048) f32
    wfc_big = jnp.tile(wfc / T, (T, 1)).astype(jnp.bfloat16)  # (2048, 20)
    return (w1_big, b1_big, w2_big, b2_big, wfc_big, bfc)


def init_params(key):
    ks = jax.random.split(key, 6)
    w1 = jax.random.normal(ks[0], (KSZ, C_IN, C_MID1), jnp.float32) * 0.10
    b1 = jax.random.normal(ks[1], (1, C_MID1), jnp.float32) * 0.10
    w2 = jax.random.normal(ks[2], (KSZ, C_MID1, C_MID2), jnp.float32) * 0.05
    b2 = jax.random.normal(ks[3], (1, C_MID2), jnp.float32) * 0.05
    wfc = jax.random.normal(ks[4], (C_MID2, C_OUT), jnp.float32) * 0.05
    bfc = jax.random.normal(ks[5], (1, C_OUT), jnp.float32) * 0.05
    return (w1, b1, w2, b2, wfc, bfc)


def reference(x, params):
    """Pure-JAX f32 reference mirroring the PyTorch forward (NCW conv)."""
    w1, b1, w2, b2, wfc, bfc = params
    w1_t = jnp.transpose(w1, (2, 1, 0))   # (O, I, K) torch layout
    w2_t = jnp.transpose(w2, (2, 1, 0))
    xt = jnp.transpose(x, (0, 2, 1))      # (B, C_in, T)
    h = lax.conv_general_dilated(xt, w1_t, window_strides=(1,),
                                 padding=[(PAD, PAD)],
                                 dimension_numbers=('NCH', 'OIH', 'NCH'))
    h = jax.nn.relu(h + b1[0][None, :, None])
    h = lax.conv_general_dilated(h, w2_t, window_strides=(1,),
                                 padding=[(PAD, PAD)],
                                 dimension_numbers=('NCH', 'OIH', 'NCH'))
    h = jax.nn.relu(h + b2[0][None, :, None])
    pooled = jnp.mean(h, axis=2)          # (B, 128)
    return pooled @ wfc + bfc


if __name__ == "__main__":
    B = 2
    key = jax.random.PRNGKey(0)
    kx, kp = jax.random.split(key)
    x = jax.random.normal(kx, (B, T, C_IN), jnp.float32)
    params = init_params(kp)
    folded = fold_params(params)

    out = jax.block_until_ready(emg_to_pose(x, folded))
    ref = jax.block_until_ready(reference(x, params))

    assert out.shape == (B, C_OUT), out.shape
    max_err = float(jnp.max(jnp.abs(out - ref)))
    # bf16 matmul operands (f32 accumulation) -> relaxed tolerance vs f32 ref.
    assert jnp.allclose(out, ref, rtol=2e-2, atol=2e-2), f"max err {max_err}"

    print("KERNEL_OK")
</pallas_src>

<mosaic_0001>
module attributes {stable_mosaic.version = 11 : i64} {
  func.func @emg_pose_kernel(%arg0: i32, %arg1: memref<8x256xf32, #tpu.memory_space<vmem>>, %arg2: memref<256x1024xbf16, #tpu.memory_space<vmem>>, %arg3: memref<1x1024xf32, #tpu.memory_space<vmem>>, %arg4: memref<1024x2048xbf16, #tpu.memory_space<vmem>>, %arg5: memref<1x2048xf32, #tpu.memory_space<vmem>>, %arg6: memref<2048x20xbf16, #tpu.memory_space<vmem>>, %arg7: memref<1x20xf32, #tpu.memory_space<vmem>>, %arg8: memref<8x20xf32, #tpu.memory_space<vmem>>) attributes {dimension_semantics = [#tpu.dimension_semantics<parallel>], iteration_bounds = array<i64: 1>, scalar_prefetch = 0 : i64, scratch_operands = 0 : i64, tpu.core_type = #tpu.core_type<tc>, window_params = [{transform_indices = @transform_0, window_bounds = array<i64: 8, 256>}, {pipeline_mode = #tpu.pipeline_mode<synchronous>, transform_indices = @transform_1, window_bounds = array<i64: 256, 1024>}, {pipeline_mode = #tpu.pipeline_mode<synchronous>, transform_indices = @transform_2, window_bounds = array<i64: 1, 1024>}, {pipeline_mode = #tpu.pipeline_mode<synchronous>, transform_indices = @transform_3, window_bounds = array<i64: 1024, 2048>}, {pipeline_mode = #tpu.pipeline_mode<synchronous>, transform_indices = @transform_4, window_bounds = array<i64: 1, 2048>}, {pipeline_mode = #tpu.pipeline_mode<synchronous>, transform_indices = @transform_5, window_bounds = array<i64: 2048, 20>}, {pipeline_mode = #tpu.pipeline_mode<synchronous>, transform_indices = @transform_6, window_bounds = array<i64: 1, 20>}, {transform_indices = @transform_7, window_bounds = array<i64: 8, 20>}]} {
    %c0 = arith.constant 0 : index
    %c0_0 = arith.constant 0 : index
    %0 = vector.load %arg1[%c0, %c0_0] : memref<8x256xf32, #tpu.memory_space<vmem>>, vector<8x256xf32>
    %1 = arith.truncf %0 : vector<8x256xf32> to vector<8x256xbf16>
    %c0_1 = arith.constant 0 : index
    %c0_2 = arith.constant 0 : index
    %2 = vector.load %arg2[%c0_1, %c0_2] : memref<256x1024xbf16, #tpu.memory_space<vmem>>, vector<256x1024xbf16>
    %cst = arith.constant dense<0.000000e+00> : vector<8x1024xf32>
    %3 = tpu.matmul %1, %2, %cst {dimension_numbers = #tpu.dot_dimension_numbers<[1], [0], [0], [1], [0, 0, 1, 1], [], []>} : vector<8x256xbf16>, vector<256x1024xbf16>, vector<8x1024xf32> -> vector<8x1024xf32>
    %c0_3 = arith.constant 0 : index
    %c0_4 = arith.constant 0 : index
    %4 = vector.load %arg3[%c0_3, %c0_4] : memref<1x1024xf32, #tpu.memory_space<vmem>>, vector<1x1024xf32>
    %5 = vector.broadcast %4 : vector<1x1024xf32> to vector<8x1024xf32>
    %6 = arith.addf %3, %5 : vector<8x1024xf32>
    %cst_5 = arith.constant 0.000000e+00 : f32
    %7 = vector.broadcast %cst_5 : f32 to vector<8x1024xf32>
    %8 = arith.maximumf %6, %7 : vector<8x1024xf32>
    %9 = arith.truncf %8 : vector<8x1024xf32> to vector<8x1024xbf16>
    %c0_6 = arith.constant 0 : index
    %c0_7 = arith.constant 0 : index
    %10 = vector.load %arg4[%c0_6, %c0_7] : memref<1024x2048xbf16, #tpu.memory_space<vmem>>, vector<1024x2048xbf16>
    %cst_8 = arith.constant dense<0.000000e+00> : vector<8x2048xf32>
    %11 = tpu.matmul %9, %10, %cst_8 {dimension_numbers = #tpu.dot_dimension_numbers<[1], [0], [0], [1], [0, 0, 1, 1], [], []>} : vector<8x1024xbf16>, vector<1024x2048xbf16>, vector<8x2048xf32> -> vector<8x2048xf32>
    %c0_9 = arith.constant 0 : index
    %c0_10 = arith.constant 0 : index
    %12 = vector.load %arg5[%c0_9, %c0_10] : memref<1x2048xf32, #tpu.memory_space<vmem>>, vector<1x2048xf32>
    %13 = vector.broadcast %12 : vector<1x2048xf32> to vector<8x2048xf32>
    %14 = arith.addf %11, %13 : vector<8x2048xf32>
    %cst_11 = arith.constant 0.000000e+00 : f32
    %15 = vector.broadcast %cst_11 : f32 to vector<8x2048xf32>
    %16 = arith.maximumf %14, %15 : vector<8x2048xf32>
    %17 = arith.truncf %16 : vector<8x2048xf32> to vector<8x2048xbf16>
    %c0_12 = arith.constant 0 : index
    %c0_13 = arith.constant 0 : index
    %18 = vector.load %arg6[%c0_12, %c0_13] : memref<2048x20xbf16, #tpu.memory_space<vmem>>, vector<2048x20xbf16>
    %cst_14 = arith.constant dense<0.000000e+00> : vector<8x20xf32>
    %19 = tpu.matmul %17, %18, %cst_14 {dimension_numbers = #tpu.dot_dimension_numbers<[1], [0], [0], [1], [0, 0, 1, 1], [], []>} : vector<8x2048xbf16>, vector<2048x20xbf16>, vector<8x20xf32> -> vector<8x20xf32>
    %c0_15 = arith.constant 0 : index
    %c0_16 = arith.constant 0 : index
    %20 = vector.load %arg7[%c0_15, %c0_16] : memref<1x20xf32, #tpu.memory_space<vmem>>, vector<1x20xf32>
    %21 = vector.broadcast %20 : vector<1x20xf32> to vector<8x20xf32>
    %22 = arith.addf %19, %21 : vector<8x20xf32>
    %c0_17 = arith.constant 0 : index
    %c0_18 = arith.constant 0 : index
    %23 = vector.load %arg8[%c0_17, %c0_18] : memref<8x20xf32, #tpu.memory_space<vmem>>, vector<8x20xf32>
    tpu.vector_store %arg8[%c0_17, %c0_18], %22 {strides = array<i32>} : memref<8x20xf32, #tpu.memory_space<vmem>>, vector<8x20xf32>,
    return
  }
  func.func @transform_0(%arg0: i32) -> (i32, i32) {
    %c0_i32 = arith.constant 0 : i32
    %c0_i32_0 = arith.constant 0 : i32
    return %arg0, %c0_i32 : i32, i32
  }
  func.func @transform_1(%arg0: i32) -> (i32, i32) {
    %c0_i32 = arith.constant 0 : i32
    %c0_i32_0 = arith.constant 0 : i32
    %c0_i32_1 = arith.constant 0 : i32
    return %c0_i32, %c0_i32_0 : i32, i32
  }
  func.func @transform_2(%arg0: i32) -> (i32, i32) {
    %c0_i32 = arith.constant 0 : i32
    %c0_i32_0 = arith.constant 0 : i32
    %c0_i32_1 = arith.constant 0 : i32
    return %c0_i32, %c0_i32_0 : i32, i32
  }
  func.func @transform_3(%arg0: i32) -> (i32, i32) {
    %c0_i32 = arith.constant 0 : i32
    %c0_i32_0 = arith.constant 0 : i32
    %c0_i32_1 = arith.constant 0 : i32
    return %c0_i32, %c0_i32_0 : i32, i32
  }
  func.func @transform_4(%arg0: i32) -> (i32, i32) {
    %c0_i32 = arith.constant 0 : i32
    %c0_i32_0 = arith.constant 0 : i32
    %c0_i32_1 = arith.constant 0 : i32
    return %c0_i32, %c0_i32_0 : i32, i32
  }
  func.func @transform_5(%arg0: i32) -> (i32, i32) {
    %c0_i32 = arith.constant 0 : i32
    %c0_i32_0 = arith.constant 0 : i32
    %c0_i32_1 = arith.constant 0 : i32
    return %c0_i32, %c0_i32_0 : i32, i32
  }
  func.func @transform_6(%arg0: i32) -> (i32, i32) {
    %c0_i32 = arith.constant 0 : i32
    %c0_i32_0 = arith.constant 0 : i32
    %c0_i32_1 = arith.constant 0 : i32
    return %c0_i32, %c0_i32_0 : i32, i32
  }
  func.func @transform_7(%arg0: i32) -> (i32, i32) {
    %c0_i32 = arith.constant 0 : i32
    %c0_i32_0 = arith.constant 0 : i32
    return %arg0, %c0_i32 : i32, i32
  }
}

</mosaic_0001>

<llo_original>
// kernel: emg_to_pose.1
$region0: #{emg_to_pose.1}
  #allocation0 [shape = 'u32[]', space=smem, size = 0x4, offset = 0x4, fixed_abs, tag = 'smem constant byte address 0x4 - core index']
  #allocation1 [shape = 'u32[144,128]{1,0:T(1,128)}', space=vmem, size = 0x12000, scoped, tag = 'internal scratch']
  %s0 = inlined_call_operand.vmem [shape: f32[8,256], index: 0, kind: input, shape index: {}]
  %s1 = inlined_call_operand.hbm [shape: bf16[256,1024], index: 1, kind: input, shape index: {}]
  %s2 = inlined_call_operand.hbm [shape: f32[1,1024], index: 2, kind: input, shape index: {}]
  %s3 = inlined_call_operand.hbm [shape: bf16[1024,2048], index: 3, kind: input, shape index: {}]
  %s4 = inlined_call_operand.hbm [shape: f32[1,2048], index: 4, kind: input, shape index: {}]
  %s5 = inlined_call_operand.vmem [shape: bf16[2048,20], index: 5, kind: input, shape index: {}]
  %s6 = inlined_call_operand.hbm [shape: f32[1,20], index: 6, kind: input, shape index: {}]
  %s7 = inlined_call_operand.vmem [shape: f32[8,20], index: 7, kind: output, shape index: {}]
  %s8 = sld [smem:[#allocation0]]
  $region58: #{emg_to_pose.1} parent=0
    _
  %s10 = ssub.s32 1, %s8
  %s11 = scalar_select 0, %s10, %s8
  $region1: #{emg_to_pose.1} parent=0
    #allocation2 [shape = 'u8[524288]{0}', space=vmem, size = 0x80000, scoped, tag = 'input window, operand 1, single buffered']
    #allocation3 [shape = 's32[1]{0}', space=sflag, size = 0x4, scoped, tag = 'scoped memory for emg_to_pose.1']
    #allocation4 [shape = 'u8[4096]{0}', space=vmem, size = 0x1000, scoped, tag = 'input window, operand 2, single buffered']
    #allocation5 [shape = 's32[1]{0}', space=sflag, size = 0x4, scoped, tag = 'scoped memory for emg_to_pose.1']
    #allocation6 [shape = 'u8[4194304]{0}', space=vmem, size = 0x400000, scoped, tag = 'input window, operand 3, single buffered']
    #allocation7 [shape = 'u8[8192]{0}', space=vmem, size = 0x2000, scoped, tag = 'input window, operand 4, single buffered']
    #allocation8 [shape = 's32[1]{0}', space=sflag, size = 0x4, scoped, tag = 'scoped memory for emg_to_pose.1']
    #allocation9 [shape = 'u8[512]{0}', space=vmem, size = 0x400, scoped, tag = 'input window, operand 6, single buffered']
    %12 = vsyncpa [#allocation3], 0
    %13 = vsyncpa [#allocation5], 0
    %14 = vsyncpa [#allocation8], 0
    // Predicated region
    $region2: #{emg_to_pose.1} parent=1 // pred_check
      _
    $region3: #{emg_to_pose.1} parent=1 // pred_check_branch
      %16 = sbr.rel (0) target = $region5
    $region4: #{emg_to_pose.1} parent=1 // pred_region
      _
    $region5: #{emg_to_pose.1} parent=1 // pred_fallthru
      _
    // Predicated region
    $region6: #{emg_to_pose.1} parent=1 // pred_check
      _
    $region7: #{emg_to_pose.1} parent=1 // pred_check_branch
      %18 = sbr.rel (0) target = $region9
    $region8: #{emg_to_pose.1} parent=1 // pred_region
      %s20 = ssub.s32 16384, 16384
      %21 = vsyncadd [#allocation3], %s20
      %s22 = sshll.u32 [#allocation2], 4
      %s23 = int_to_ptr.vmem [resolvable:$true] %s22
      %28 = dma.hbm_to_vmem [thread:$0]  %s1, 16384, %s23, [#allocation3], 512, 512, 32
    $region9: #{emg_to_pose.1} parent=1 // pred_fallthru
      _
    // Predicated region
    $region10: #{emg_to_pose.1} parent=1 // pred_check
      _
    $region11: #{emg_to_pose.1} parent=1 // pred_check_branch
      %30 = sbr.rel (0) target = $region13
    $region12: #{emg_to_pose.1} parent=1 // pred_region
      %s32 = ssub.s32 128, 128
      %33 = vsyncadd [#allocation5], %s32
      %s35 = sshll.u32 [#allocation4], 4
      %s36 = int_to_ptr.vmem [resolvable:$true] %s35
      %38 = dma.hbm_to_vmem [thread:$0]  %s2, 128, %s36, [#allocation5]
    $region13: #{emg_to_pose.1} parent=1 // pred_fallthru
      _
    // Predicated region
    $region14: #{emg_to_pose.1} parent=1 // pred_check
      _
    $region15: #{emg_to_pose.1} parent=1 // pred_check_branch
      %40 = sbr.rel (0) target = $region17
    $region16: #{emg_to_pose.1} parent=1 // pred_region
      %s42 = ssub.s32 131072, 131072
      %43 = vsyncadd [#allocation5], %s42
      %s44 = sshll.u32 [#allocation6], 4
      %s45 = int_to_ptr.vmem [resolvable:$true] %s44
      %50 = dma.hbm_to_vmem [thread:$0]  %s3, 131072, %s45, [#allocation5], 1024, 1024, 64
    $region17: #{emg_to_pose.1} parent=1 // pred_fallthru
      _
    // Predicated region
    $region18: #{emg_to_pose.1} parent=1 // pred_check
      _
    $region19: #{emg_to_pose.1} parent=1 // pred_check_branch
      %52 = sbr.rel (0) target = $region21
    $region20: #{emg_to_pose.1} parent=1 // pred_region
      %s54 = ssub.s32 256, 256
      %55 = vsyncadd [#allocation8], %s54
      %s57 = sshll.u32 [#allocation7], 4
      %s58 = int_to_ptr.vmem [resolvable:$true] %s57
      %60 = dma.hbm_to_vmem [thread:$0]  %s4, 256, %s58, [#allocation8]
    $region21: #{emg_to_pose.1} parent=1 // pred_fallthru
      _
    // Predicated region
    $region22: #{emg_to_pose.1} parent=1 // pred_check
      _
    $region23: #{emg_to_pose.1} parent=1 // pred_check_branch
      %62 = sbr.rel (0) target = $region25
    $region24: #{emg_to_pose.1} parent=1 // pred_region
      _
    $region25: #{emg_to_pose.1} parent=1 // pred_fallthru
      _
    // Predicated region
    $region26: #{emg_to_pose.1} parent=1 // pred_check
      _
    $region27: #{emg_to_pose.1} parent=1 // pred_check_branch
      %64 = sbr.rel (0) target = $region29
    $region28: #{emg_to_pose.1} parent=1 // pred_region
      %s66 = ssub.s32 16, 16
      %67 = vsyncadd [#allocation8], %s66
      %s69 = sshll.u32 [#allocation9], 4
      %s70 = int_to_ptr.vmem [resolvable:$true] %s69
      %72 = dma.hbm_to_vmem [thread:$0]  %s6, 16, %s70, [#allocation8]
    $region29: #{emg_to_pose.1} parent=1 // pred_fallthru
      _
    // Predicated region
    $region30: #{emg_to_pose.1} parent=1 // pred_check
      _
    $region31: #{emg_to_pose.1} parent=1 // pred_check_branch
      %74 = sbr.rel (0) target = $region33
    $region32: #{emg_to_pose.1} parent=1 // pred_region
      %75 = dma.done [#allocation3], 16384
    $region33: #{emg_to_pose.1} parent=1 // pred_fallthru
      _
    // Predicated region
    $region34: #{emg_to_pose.1} parent=1 // pred_check
      _
    $region35: #{emg_to_pose.1} parent=1 // pred_check_branch
      %77 = sbr.rel (0) target = $region37
    $region36: #{emg_to_pose.1} parent=1 // pred_region
      %78 = dma.done [#allocation5], 128
    $region37: #{emg_to_pose.1} parent=1 // pred_fallthru
      _
    // Predicated region
    $region38: #{emg_to_pose.1} parent=1 // pred_check
      _
    $region39: #{emg_to_pose.1} parent=1 // pred_check_branch
      %80 = sbr.rel (0) target = $region41
    $region40: #{emg_to_pose.1} parent=1 // pred_region
      %81 = dma.done [#allocation5], 131072
    $region41: #{emg_to_pose.1} parent=1 // pred_fallthru
      _
    // Predicated region
    $region42: #{emg_to_pose.1} parent=1 // pred_check
      _
    $region43: #{emg_to_pose.1} parent=1 // pred_check_branch
      %83 = sbr.rel (0) target = $region45
    $region44: #{emg_to_pose.1} parent=1 // pred_region
      %84 = dma.done [#allocation8], 256
    $region45: #{emg_to_pose.1} parent=1 // pred_fallthru
      _
    // Predicated region
    $region46: #{emg_to_pose.1} parent=1 // pred_check
      _
    $region47: #{emg_to_pose.1} parent=1 // pred_check_branch
      %86 = sbr.rel (0) target = $region49
    $region48: #{emg_to_pose.1} parent=1 // pred_region
      %87 = dma.done [#allocation8], 16
    $region49: #{emg_to_pose.1} parent=1 // pred_fallthru
      _
    %v89 = vld [vmem:[%s0] sm:$0xff]
    %v90 = vld [vmem:[%s0 + $0x8] sm:$0xff]
    %v91 = vpack.c.bf16 %v89, %v89
    %v92 = vpack.c.bf16 %v90, %v90
    %v93 = vld [vmem:[#allocation2] sm:$0xff]
    %v94 = vld [vmem:[#allocation2 + $0x8] sm:$0xff]
    %v95 = vld [vmem:[#allocation2 + $0x10] sm:$0xff]
    %v96 = vld [vmem:[#allocation2 + $0x18] sm:$0xff]
    %v97 = vld [vmem:[#allocation2 + $0x20] sm:$0xff]
    %v98 = vld [vmem:[#allocation2 + $0x28] sm:$0xff]
    %v99 = vld [vmem:[#allocation2 + $0x30] sm:$0xff]
    %v100 = vld [vmem:[#allocation2 + $0x38] sm:$0xff]
    %v101 = vld [vmem:[#allocation2 + $0x40] sm:$0xff]
    %v102 = vld [vmem:[#allocation2 + $0x48] sm:$0xff]
    %v103 = vld [vmem:[#allocation2 + $0x50] sm:$0xff]
    %v104 = vld [vmem:[#allocation2 + $0x58] sm:$0xff]
    %v105 = vld [vmem:[#allocation2 + $0x60] sm:$0xff]
    %v106 = vld [vmem:[#allocation2 + $0x68] sm:$0xff]
    %v107 = vld [vmem:[#allocation2 + $0x70] sm:$0xff]
    %v108 = vld [vmem:[#allocation2 + $0x78] sm:$0xff]
    %v109 = vld [vmem:[#allocation2 + $0x80] sm:$0xff]
    %v110 = vld [vmem:[#allocation2 + $0x88] sm:$0xff]
    %v111 = vld [vmem:[#allocation2 + $0x90] sm:$0xff]
    %v112 = vld [vmem:[#allocation2 + $0x98] sm:$0xff]
    %v113 = vld [vmem:[#allocation2 + $0xa0] sm:$0xff]
    %v114 = vld [vmem:[#allocation2 + $0xa8] sm:$0xff]
    %v115 = vld [vmem:[#allocation2 + $0xb0] sm:$0xff]
    %v116 = vld [vmem:[#allocation2 + $0xb8] sm:$0xff]
    %v117 = vld [vmem:[#allocation2 + $0xc0] sm:$0xff]
    %v118 = vld [vmem:[#allocation2 + $0xc8] sm:$0xff]
    %v119 = vld [vmem:[#allocation2 + $0xd0] sm:$0xff]
    %v120 = vld [vmem:[#allocation2 + $0xd8] sm:$0xff]
    %v121 = vld [vmem:[#allocation2 + $0xe0] sm:$0xff]
    %v122 = vld [vmem:[#allocation2 + $0xe8] sm:$0xff]
    %v123 = vld [vmem:[#allocation2 + $0xf0] sm:$0xff]
    %v124 = vld [vmem:[#allocation2 + $0xf8] sm:$0xff]
    %v125 = vld [vmem:[#allocation2 + $0x100] sm:$0xff]
    %v126 = vld [vmem:[#allocation2 + $0x108] sm:$0xff]
    %v127 = vld [vmem:[#allocation2 + $0x110] sm:$0xff]
    %v128 = vld [vmem:[#allocation2 + $0x118] sm:$0xff]
    %v129 = vld [vmem:[#allocation2 + $0x120] sm:$0xff]
    %v130 = vld [vmem:[#allocation2 + $0x128] sm:$0xff]
    %v131 = vld [vmem:[#allocation2 + $0x130] sm:$0xff]
    %v132 = vld [vmem:[#allocation2 + $0x138] sm:$0xff]
    %v133 = vld [vmem:[#allocation2 + $0x140] sm:$0xff]
    %v134 = vld [vmem:[#allocation2 + $0x148] sm:$0xff]
    %v135 = vld [vmem:[#allocation2 + $0x150] sm:$0xff]
    %v136 = vld [vmem:[#allocation2 + $0x158] sm:$0xff]
    %v137 = vld [vmem:[#allocation2 + $0x160] sm:$0xff]
    %v138 = vld [vmem:[#allocation2 + $0x168] sm:$0xff]
    %v139 = vld [vmem:[#allocation2 + $0x170] sm:$0xff]
    %v140 = vld [vmem:[#allocation2 + $0x178] sm:$0xff]
    %v141 = vld [vmem:[#allocation2 + $0x180] sm:$0xff]
    %v142 = vld [vmem:[#allocation2 + $0x188] sm:$0xff]
    %v143 = vld [vmem:[#allocation2 + $0x190] sm:$0xff]
    %v144 = vld [vmem:[#allocation2 + $0x198] sm:$0xff]
    %v145 = vld [vmem:[#allocation2 + $0x1a0] sm:$0xff]
    %v146 = vld [vmem:[#allocation2 + $0x1a8] sm:$0xff]
    %v147 = vld [vmem:[#allocation2 + $0x1b0] sm:$0xff]
    %v148 = vld [vmem:[#allocation2 + $0x1b8] sm:$0xff]
    %v149 = vld [vmem:[#allocation2 + $0x1c0] sm:$0xff]
    %v150 = vld [vmem:[#allocation2 + $0x1c8] sm:$0xff]
    %v151 = vld [vmem:[#allocation2 + $0x1d0] sm:$0xff]
    %v152 = vld [vmem:[#allocation2 + $0x1d8] sm:$0xff]
    %v153 = vld [vmem:[#allocation2 + $0x1e0] sm:$0xff]
    %v154 = vld [vmem:[#allocation2 + $0x1e8] sm:$0xff]
    %v155 = vld [vmem:[#allocation2 + $0x1f0] sm:$0xff]
    %v156 = vld [vmem:[#allocation2 + $0x1f8] sm:$0xff]
    %v157 = vld [vmem:[#allocation2 + $0x200] sm:$0xff]
    %v158 = vld [vmem:[#allocation2 + $0x208] sm:$0xff]
    %v159 = vld [vmem:[#allocation2 + $0x210] sm:$0xff]
    %v160 = vld [vmem:[#allocation2 + $0x218] sm:$0xff]
    %v161 = vld [vmem:[#allocation2 + $0x220] sm:$0xff]
    %v162 = vld [vmem:[#allocation2 + $0x228] sm:$0xff]
    %v163 = vld [vmem:[#allocation2 + $0x230] sm:$0xff]
    %v164 = vld [vmem:[#allocation2 + $0x238] sm:$0xff]
    %v165 = vld [vmem:[#allocation2 + $0x240] sm:$0xff]
    %v166 = vld [vmem:[#allocation2 + $0x248] sm:$0xff]
    %v167 = vld [vmem:[#allocation2 + $0x250] sm:$0xff]
    %v168 = vld [vmem:[#allocation2 + $0x258] sm:$0xff]
    %v169 = vld [vmem:[#allocation2 + $0x260] sm:$0xff]
    %v170 = vld [vmem:[#allocation2 + $0x268] sm:$0xff]
    %v171 = vld [vmem:[#allocation2 + $0x270] sm:$0xff]
    %v172 = vld [vmem:[#allocation2 + $0x278] sm:$0xff]
    %v173 = vld [vmem:[#allocation2 + $0x280] sm:$0xff]
    %v174 = vld [vmem:[#allocation2 + $0x288] sm:$0xff]
    %v175 = vld [vmem:[#allocation2 + $0x290] sm:$0xff]
    %v176 = vld [vmem:[#allocation2 + $0x298] sm:$0xff]
    %v177 = vld [vmem:[#allocation2 + $0x2a0] sm:$0xff]
    %v178 = vld [vmem:[#allocation2 + $0x2a8] sm:$0xff]
    %v179 = vld [vmem:[#allocation2 + $0x2b0] sm:$0xff]
    %v180 = vld [vmem:[#allocation2 + $0x2b8] sm:$0xff]
    %v181 = vld [vmem:[#allocation2 + $0x2c0] sm:$0xff]
    %v182 = vld [vmem:[#allocation2 + $0x2c8] sm:$0xff]
    %v183 = vld [vmem:[#allocation2 + $0x2d0] sm:$0xff]
    %v184 = vld [vmem:[#allocation2 + $0x2d8] sm:$0xff]
    %v185 = vld [vmem:[#allocation2 + $0x2e0] sm:$0xff]
    %v186 = vld [vmem:[#allocation2 + $0x2e8] sm:$0xff]
    %v187 = vld [vmem:[#allocation2 + $0x2f0] sm:$0xff]
    %v188 = vld [vmem:[#allocation2 + $0x2f8] sm:$0xff]
    %v189 = vld [vmem:[#allocation2 + $0x300] sm:$0xff]
    %v190 = vld [vmem:[#allocation2 + $0x308] sm:$0xff]
    %v191 = vld [vmem:[#allocation2 + $0x310] sm:$0xff]
    %v192 = vld [vmem:[#allocation2 + $0x318] sm:$0xff]
    %v193 = vld [vmem:[#allocation2 + $0x320] sm:$0xff]
    %v194 = vld [vmem:[#allocation2 + $0x328] sm:$0xff]
    %v195 = vld [vmem:[#allocation2 + $0x330] sm:$0xff]
    %v196 = vld [vmem:[#allocation2 + $0x338] sm:$0xff]
    %v197 = vld [vmem:[#allocation2 + $0x340] sm:$0xff]
    %v198 = vld [vmem:[#allocation2 + $0x348] sm:$0xff]
    %v199 = vld [vmem:[#allocation2 + $0x350] sm:$0xff]
    %v200 = vld [vmem:[#allocation2 + $0x358] sm:$0xff]
    %v201 = vld [vmem:[#allocation2 + $0x360] sm:$0xff]
    %v202 = vld [vmem:[#allocation2 + $0x368] sm:$0xff]
    %v203 = vld [vmem:[#allocation2 + $0x370] sm:$0xff]
    %v204 = vld [vmem:[#allocation2 + $0x378] sm:$0xff]
    %v205 = vld [vmem:[#allocation2 + $0x380] sm:$0xff]
    %v206 = vld [vmem:[#allocation2 + $0x388] sm:$0xff]
    %v207 = vld [vmem:[#allocation2 + $0x390] sm:$0xff]
    %v208 = vld [vmem:[#allocation2 + $0x398] sm:$0xff]
    %v209 = vld [vmem:[#allocation2 + $0x3a0] sm:$0xff]
    %v210 = vld [vmem:[#allocation2 + $0x3a8] sm:$0xff]
    %v211 = vld [vmem:[#allocation2 + $0x3b0] sm:$0xff]
    %v212 = vld [vmem:[#allocation2 + $0x3b8] sm:$0xff]
    %v213 = vld [vmem:[#allocation2 + $0x3c0] sm:$0xff]
    %v214 = vld [vmem:[#allocation2 + $0x3c8] sm:$0xff]
    %v215 = vld [vmem:[#allocation2 + $0x3d0] sm:$0xff]
    %v216 = vld [vmem:[#allocation2 + $0x3d8] sm:$0xff]
    %v217 = vld [vmem:[#allocation2 + $0x3e0] sm:$0xff]
    %v218 = vld [vmem:[#allocation2 + $0x3e8] sm:$0xff]
    %v219 = vld [vmem:[#allocation2 + $0x3f0] sm:$0xff]
    %v220 = vld [vmem:[#allocation2 + $0x3f8] sm:$0xff]
    %v221 = vld [vmem:[#allocation4] sm:$0xff]
    %v223 = vlaneseq
    %v224 = vshrl.u32 %v223, 7
    %v225 = vsub.s32 0, %v224
    %v226 = vrot.slane %v221, %v225
    %v227 = vlaneseq
    %v228 = vshrl.u32 %v227, 7
    %v229 = vsub.s32 1, %v228
    %v230 = vrot.slane %v221, %v229
    %v231 = vlaneseq
    %v232 = vshrl.u32 %v231, 7
    %v233 = vsub.s32 2, %v232
    %v234 = vrot.slane %v221, %v233
    %v235 = vlaneseq
    %v236 = vshrl.u32 %v235, 7
    %v237 = vsub.s32 3, %v236
    %v238 = vrot.slane %v221, %v237
    %v239 = vlaneseq
    %v240 = vshrl.u32 %v239, 7
    %v241 = vsub.s32 4, %v240
    %v242 = vrot.slane %v221, %v241
    %v243 = vlaneseq
    %v244 = vshrl.u32 %v243, 7
    %v245 = vsub.s32 5, %v244
    %v246 = vrot.slane %v221, %v245
    %v247 = vlaneseq
    %v248 = vshrl.u32 %v247, 7
    %v249 = vsub.s32 6, %v248
    %v250 = vrot.slane %v221, %v249
    %v251 = vlaneseq
    %v252 = vshrl.u32 %v251, 7
    %v253 = vsub.s32 7, %v252
    %v254 = vrot.slane %v221, %v253
    %v391 = vunpack.c.l.b16 %v93
    %v392 = vunpack.c.h.b16 %v93
    %v393 = vunpack.c.l.b16 %v94
    %v394 = vunpack.c.h.b16 %v94
    %v395 = vunpack.c.l.b16 %v95
    %v396 = vunpack.c.h.b16 %v95
    %v397 = vunpack.c.l.b16 %v96
    %v398 = vunpack.c.h.b16 %v96
    %v399 = vunpack.c.l.b16 %v97
    %v400 = vunpack.c.h.b16 %v97
    %v401 = vunpack.c.l.b16 %v98
    %v402 = vunpack.c.h.b16 %v98
    %v403 = vunpack.c.l.b16 %v99
    %v404 = vunpack.c.h.b16 %v99
    %v405 = vunpack.c.l.b16 %v100
    %v406 = vunpack.c.h.b16 %v100
    %v407 = vunpack.c.l.b16 %v101
    %v408 = vunpack.c.h.b16 %v101
    %v409 = vunpack.c.l.b16 %v102
    %v410 = vunpack.c.h.b16 %v102
    %v411 = vunpack.c.l.b16 %v103
    %v412 = vunpack.c.h.b16 %v103
    %v413 = vunpack.c.l.b16 %v104
    %v414 = vunpack.c.h.b16 %v104
    %v415 = vunpack.c.l.b16 %v105
    %v416 = vunpack.c.h.b16 %v105
    %v417 = vunpack.c.l.b16 %v106
    %v418 = vunpack.c.h.b16 %v106
    %v419 = vunpack.c.l.b16 %v107
    %v420 = vunpack.c.h.b16 %v107
    %v421 = vunpack.c.l.b16 %v108
    %v422 = vunpack.c.h.b16 %v108
    %v423 = vunpack.c.l.b16 %v109
    %v424 = vunpack.c.h.b16 %v109
    %v425 = vunpack.c.l.b16 %v110
    %v426 = vunpack.c.h.b16 %v110
    %v427 = vunpack.c.l.b16 %v111
    %v428 = vunpack.c.h.b16 %v111
    %v429 = vunpack.c.l.b16 %v112
    %v430 = vunpack.c.h.b16 %v112
    %v431 = vunpack.c.l.b16 %v113
    %v432 = vunpack.c.h.b16 %v113
    %v433 = vunpack.c.l.b16 %v114
    %v434 = vunpack.c.h.b16 %v114
    %v435 = vunpack.c.l.b16 %v115
    %v436 = vunpack.c.h.b16 %v115
    %v437 = vunpack.c.l.b16 %v116
    %v438 = vunpack.c.h.b16 %v116
    %v439 = vunpack.c.l.b16 %v117
    %v440 = vunpack.c.h.b16 %v117
    %v441 = vunpack.c.l.b16 %v118
    %v442 = vunpack.c.h.b16 %v118
    %v443 = vunpack.c.l.b16 %v119
    %v444 = vunpack.c.h.b16 %v119
    %v445 = vunpack.c.l.b16 %v120
    %v446 = vunpack.c.h.b16 %v120
    %v447 = vunpack.c.l.b16 %v121
    %v448 = vunpack.c.h.b16 %v121
    %v449 = vunpack.c.l.b16 %v122
    %v450 = vunpack.c.h.b16 %v122
    %v451 = vunpack.c.l.b16 %v123
    %v452 = vunpack.c.h.b16 %v123
    %v453 = vunpack.c.l.b16 %v124
    %v454 = vunpack.c.h.b16 %v124
    %v455 = vunpack.c.l.b16 %v125
    %v456 = vunpack.c.h.b16 %v125
    %v457 = vunpack.c.l.b16 %v126
    %v458 = vunpack.c.h.b16 %v126
    %v459 = vunpack.c.l.b16 %v127
    %v460 = vunpack.c.h.b16 %v127
    %v461 = vunpack.c.l.b16 %v128
    %v462 = vunpack.c.h.b16 %v128
    %v463 = vunpack.c.l.b16 %v129
    %v464 = vunpack.c.h.b16 %v129
    %v465 = vunpack.c.l.b16 %v130
    %v466 = vunpack.c.h.b16 %v130
    %v467 = vunpack.c.l.b16 %v131
    %v468 = vunpack.c.h.b16 %v131
    %v469 = vunpack.c.l.b16 %v132
    %v470 = vunpack.c.h.b16 %v132
    %v471 = vunpack.c.l.b16 %v133
    %v472 = vunpack.c.h.b16 %v133
    %v473 = vunpack.c.l.b16 %v134
    %v474 = vunpack.c.h.b16 %v134
    %v475 = vunpack.c.l.b16 %v135
    %v476 = vunpack.c.h.b16 %v135
    %v477 = vunpack.c.l.b16 %v136
    %v478 = vunpack.c.h.b16 %v136
    %v479 = vunpack.c.l.b16 %v137
    %v480 = vunpack.c.h.b16 %v137
    %v481 = vunpack.c.l.b16 %v138
    %v482 = vunpack.c.h.b16 %v138
    %v483 = vunpack.c.l.b16 %v139
    %v484 = vunpack.c.h.b16 %v139
    %v485 = vunpack.c.l.b16 %v140
    %v486 = vunpack.c.h.b16 %v140
    %v487 = vunpack.c.l.b16 %v141
    %v488 = vunpack.c.h.b16 %v141
    %v489 = vunpack.c.l.b16 %v142
    %v490 = vunpack.c.h.b16 %v142
    %v491 = vunpack.c.l.b16 %v143
    %v492 = vunpack.c.h.b16 %v143
    %v493 = vunpack.c.l.b16 %v144
    %v494 = vunpack.c.h.b16 %v144
    %v495 = vunpack.c.l.b16 %v145
    %v496 = vunpack.c.h.b16 %v145
    %v497 = vunpack.c.l.b16 %v146
    %v498 = vunpack.c.h.b16 %v146
    %v499 = vunpack.c.l.b16 %v147
    %v500 = vunpack.c.h.b16 %v147
    %v501 = vunpack.c.l.b16 %v148
    %v502 = vunpack.c.h.b16 %v148
    %v503 = vunpack.c.l.b16 %v149
    %v504 = vunpack.c.h.b16 %v149
    %v505 = vunpack.c.l.b16 %v150
    %v506 = vunpack.c.h.b16 %v150
    %v507 = vunpack.c.l.b16 %v151
    %v508 = vunpack.c.h.b16 %v151
    %v509 = vunpack.c.l.b16 %v152
    %v510 = vunpack.c.h.b16 %v152
    %v511 = vunpack.c.l.b16 %v153
    %v512 = vunpack.c.h.b16 %v153
    %v513 = vunpack.c.l.b16 %v154
    %v514 = vunpack.c.h.b16 %v154
    %v515 = vunpack.c.l.b16 %v155
    %v516 = vunpack.c.h.b16 %v155
    %v517 = vunpack.c.l.b16 %v156
    %v518 = vunpack.c.h.b16 %v156
    %v519 = vunpack.c.l.b16 %v157
    %v520 = vunpack.c.h.b16 %v157
    %v521 = vunpack.c.l.b16 %v158
    %v522 = vunpack.c.h.b16 %v158
    %v523 = vunpack.c.l.b16 %v159
    %v524 = vunpack.c.h.b16 %v159
    %v525 = vunpack.c.l.b16 %v160
    %v526 = vunpack.c.h.b16 %v160
    %v527 = vunpack.c.l.b16 %v161
    %v528 = vunpack.c.h.b16 %v161
    %v529 = vunpack.c.l.b16 %v162
    %v530 = vunpack.c.h.b16 %v162
    %v531 = vunpack.c.l.b16 %v163
    %v532 = vunpack.c.h.b16 %v163
    %v533 = vunpack.c.l.b16 %v164
    %v534 = vunpack.c.h.b16 %v164
    %v535 = vunpack.c.l.b16 %v165
    %v536 = vunpack.c.h.b16 %v165
    %v537 = vunpack.c.l.b16 %v166
    %v538 = vunpack.c.h.b16 %v166
    %v539 = vunpack.c.l.b16 %v167
    %v540 = vunpack.c.h.b16 %v167
    %v541 = vunpack.c.l.b16 %v168
    %v542 = vunpack.c.h.b16 %v168
    %v543 = vunpack.c.l.b16 %v169
    %v544 = vunpack.c.h.b16 %v169
    %v545 = vunpack.c.l.b16 %v170
    %v546 = vunpack.c.h.b16 %v170
    %v547 = vunpack.c.l.b16 %v171
    %v548 = vunpack.c.h.b16 %v171
    %v549 = vunpack.c.l.b16 %v172
    %v550 = vunpack.c.h.b16 %v172
    %v551 = vunpack.c.l.b16 %v173
    %v552 = vunpack.c.h.b16 %v173
    %v553 = vunpack.c.l.b16 %v174
    %v554 = vunpack.c.h.b16 %v174
    %v555 = vunpack.c.l.b16 %v175
    %v556 = vunpack.c.h.b16 %v175
    %v557 = vunpack.c.l.b16 %v176
    %v558 = vunpack.c.h.b16 %v176
    %v559 = vunpack.c.l.b16 %v177
    %v560 = vunpack.c.h.b16 %v177
    %v561 = vunpack.c.l.b16 %v178
    %v562 = vunpack.c.h.b16 %v178
    %v563 = vunpack.c.l.b16 %v179
    %v564 = vunpack.c.h.b16 %v179
    %v565 = vunpack.c.l.b16 %v180
    %v566 = vunpack.c.h.b16 %v180
    %v567 = vunpack.c.l.b16 %v181
    %v568 = vunpack.c.h.b16 %v181
    %v569 = vunpack.c.l.b16 %v182
    %v570 = vunpack.c.h.b16 %v182
    %v571 = vunpack.c.l.b16 %v183
    %v572 = vunpack.c.h.b16 %v183
    %v573 = vunpack.c.l.b16 %v184
    %v574 = vunpack.c.h.b16 %v184
    %v575 = vunpack.c.l.b16 %v185
    %v576 = vunpack.c.h.b16 %v185
    %v577 = vunpack.c.l.b16 %v186
    %v578 = vunpack.c.h.b16 %v186
    %v579 = vunpack.c.l.b16 %v187
    %v580 = vunpack.c.h.b16 %v187
    %v581 = vunpack.c.l.b16 %v188
    %v582 = vunpack.c.h.b16 %v188
    %v583 = vunpack.c.l.b16 %v189
    %v584 = vunpack.c.h.b16 %v189
    %v585 = vunpack.c.l.b16 %v190
    %v586 = vunpack.c.h.b16 %v190
    %v587 = vunpack.c.l.b16 %v191
    %v588 = vunpack.c.h.b16 %v191
    %v589 = vunpack.c.l.b16 %v192
    %v590 = vunpack.c.h.b16 %v192
    %v591 = vunpack.c.l.b16 %v193
    %v592 = vunpack.c.h.b16 %v193
    %v593 = vunpack.c.l.b16 %v194
    %v594 = vunpack.c.h.b16 %v194
    %v595 = vunpack.c.l.b16 %v195
    %v596 = vunpack.c.h.b16 %v195
    %v597 = vunpack.c.l.b16 %v196
    %v598 = vunpack.c.h.b16 %v196
    %v599 = vunpack.c.l.b16 %v197
    %v600 = vunpack.c.h.b16 %v197
    %v601 = vunpack.c.l.b16 %v198
    %v602 = vunpack.c.h.b16 %v198
    %v603 = vunpack.c.l.b16 %v199
    %v604 = vunpack.c.h.b16 %v199
    %v605 = vunpack.c.l.b16 %v200
    %v606 = vunpack.c.h.b16 %v200
    %v607 = vunpack.c.l.b16 %v201
    %v608 = vunpack.c.h.b16 %v201
    %v609 = vunpack.c.l.b16 %v202
    %v610 = vunpack.c.h.b16 %v202
    %v611 = vunpack.c.l.b16 %v203
    %v612 = vunpack.c.h.b16 %v203
    %v613 = vunpack.c.l.b16 %v204
    %v614 = vunpack.c.h.b16 %v204
    %v615 = vunpack.c.l.b16 %v205
    %v616 = vunpack.c.h.b16 %v205
    %v617 = vunpack.c.l.b16 %v206
    %v618 = vunpack.c.h.b16 %v206
    %v619 = vunpack.c.l.b16 %v207
    %v620 = vunpack.c.h.b16 %v207
    %v621 = vunpack.c.l.b16 %v208
    %v622 = vunpack.c.h.b16 %v208
    %v623 = vunpack.c.l.b16 %v209
    %v624 = vunpack.c.h.b16 %v209
    %v625 = vunpack.c.l.b16 %v210
    %v626 = vunpack.c.h.b16 %v210
    %v627 = vunpack.c.l.b16 %v211
    %v628 = vunpack.c.h.b16 %v211
    %v629 = vunpack.c.l.b16 %v212
    %v630 = vunpack.c.h.b16 %v212
    %v631 = vunpack.c.l.b16 %v213
    %v632 = vunpack.c.h.b16 %v213
    %v633 = vunpack.c.l.b16 %v214
    %v634 = vunpack.c.h.b16 %v214
    %v635 = vunpack.c.l.b16 %v215
    %v636 = vunpack.c.h.b16 %v215
    %v637 = vunpack.c.l.b16 %v216
    %v638 = vunpack.c.h.b16 %v216
    %v639 = vunpack.c.l.b16 %v217
    %v640 = vunpack.c.h.b16 %v217
    %v641 = vunpack.c.l.b16 %v218
    %v642 = vunpack.c.h.b16 %v218
    %v643 = vunpack.c.l.b16 %v219
    %v644 = vunpack.c.h.b16 %v219
    %v645 = vunpack.c.l.b16 %v220
    %v646 = vunpack.c.h.b16 %v220
    %v647 = vpack.c.b16 %v399, %v391
    %v648 = vpack.c.b16 %v400, %v392
    %v649 = vpack.c.b16 %v401, %v393
    %v650 = vpack.c.b16 %v402, %v394
    %v651 = vpack.c.b16 %v403, %v395
    %v652 = vpack.c.b16 %v404, %v396
    %v653 = vpack.c.b16 %v405, %v397
    %v654 = vpack.c.b16 %v406, %v398
    %v655 = vpack.c.b16 %v415, %v407
    %v656 = vpack.c.b16 %v416, %v408
    %v657 = vpack.c.b16 %v417, %v409
    %v658 = vpack.c.b16 %v418, %v410
    %v659 = vpack.c.b16 %v419, %v411
    %v660 = vpack.c.b16 %v420, %v412
    %v661 = vpack.c.b16 %v421, %v413
    %v662 = vpack.c.b16 %v422, %v414
    %v663 = vpack.c.b16 %v431, %v423
    %v664 = vpack.c.b16 %v432, %v424
    %v665 = vpack.c.b16 %v433, %v425
    %v666 = vpack.c.b16 %v434, %v426
    %v667 = vpack.c.b16 %v435, %v427
    %v668 = vpack.c.b16 %v436, %v428
    %v669 = vpack.c.b16 %v437, %v429
    %v670 = vpack.c.b16 %v438, %v430
    %v671 = vpack.c.b16 %v447, %v439
    %v672 = vpack.c.b16 %v448, %v440
    %v673 = vpack.c.b16 %v449, %v441
    %v674 = vpack.c.b16 %v450, %v442
    %v675 = vpack.c.b16 %v451, %v443
    %v676 = vpack.c.b16 %v452, %v444
    %v677 = vpack.c.b16 %v453, %v445
    %v678 = vpack.c.b16 %v454, %v446
    %v679 = vpack.c.b16 %v463, %v455
    %v680 = vpack.c.b16 %v464, %v456
    %v681 = vpack.c.b16 %v465, %v457
    %v682 = vpack.c.b16 %v466, %v458
    %v683 = vpack.c.b16 %v467, %v459
    %v684 = vpack.c.b16 %v468, %v460
    %v685 = vpack.c.b16 %v469, %v461
    %v686 = vpack.c.b16 %v470, %v462
    %v687 = vpack.c.b16 %v479, %v471
    %v688 = vpack.c.b16 %v480, %v472
    %v689 = vpack.c.b16 %v481, %v473
    %v690 = vpack.c.b16 %v482, %v474
    %v691 = vpack.c.b16 %v483, %v475
    %v692 = vpack.c.b16 %v484, %v476
    %v693 = vpack.c.b16 %v485, %v477
    %v694 = vpack.c.b16 %v486, %v478
    %v695 = vpack.c.b16 %v495, %v487
    %v696 = vpack.c.b16 %v496, %v488
    %v697 = vpack.c.b16 %v497, %v489
    %v698 = vpack.c.b16 %v498, %v490
    %v699 = vpack.c.b16 %v499, %v491
    %v700 = vpack.c.b16 %v500, %v492
    %v701 = vpack.c.b16 %v501, %v493
    %v702 = vpack.c.b16 %v502, %v494
    %v703 = vpack.c.b16 %v511, %v503
    %v704 = vpack.c.b16 %v512, %v504
    %v705 = vpack.c.b16 %v513, %v505
    %v706 = vpack.c.b16 %v514, %v506
    %v707 = vpack.c.b16 %v515, %v507
    %v708 = vpack.c.b16 %v516, %v508
    %v709 = vpack.c.b16 %v517, %v509
    %v710 = vpack.c.b16 %v518, %v510
    %v711 = vpack.c.b16 %v527, %v519
    %v712 = vpack.c.b16 %v528, %v520
    %v713 = vpack.c.b16 %v529, %v521
    %v714 = vpack.c.b16 %v530, %v522
    %v715 = vpack.c.b16 %v531, %v523
    %v716 = vpack.c.b16 %v532, %v524
    %v717 = vpack.c.b16 %v533, %v525
    %v718 = vpack.c.b16 %v534, %v526
    %v719 = vpack.c.b16 %v543, %v535
    %v720 = vpack.c.b16 %v544, %v536
    %v721 = vpack.c.b16 %v545, %v537
    %v722 = vpack.c.b16 %v546, %v538
    %v723 = vpack.c.b16 %v547, %v539
    %v724 = vpack.c.b16 %v548, %v540
    %v725 = vpack.c.b16 %v549, %v541
    %v726 = vpack.c.b16 %v550, %v542
    %v727 = vpack.c.b16 %v559, %v551
    %v728 = vpack.c.b16 %v560, %v552
    %v729 = vpack.c.b16 %v561, %v553
    %v730 = vpack.c.b16 %v562, %v554
    %v731 = vpack.c.b16 %v563, %v555
    %v732 = vpack.c.b16 %v564, %v556
    %v733 = vpack.c.b16 %v565, %v557
    %v734 = vpack.c.b16 %v566, %v558
    %v735 = vpack.c.b16 %v575, %v567
    %v736 = vpack.c.b16 %v576, %v568
    %v737 = vpack.c.b16 %v577, %v569
    %v738 = vpack.c.b16 %v578, %v570
    %v739 = vpack.c.b16 %v579, %v571
    %v740 = vpack.c.b16 %v580, %v572
    %v741 = vpack.c.b16 %v581, %v573
    %v742 = vpack.c.b16 %v582, %v574
    %v743 = vpack.c.b16 %v591, %v583
    %v744 = vpack.c.b16 %v592, %v584
    %v745 = vpack.c.b16 %v593, %v585
    %v746 = vpack.c.b16 %v594, %v586
    %v747 = vpack.c.b16 %v595, %v587
    %v748 = vpack.c.b16 %v596, %v588
    %v749 = vpack.c.b16 %v597, %v589
    %v750 = vpack.c.b16 %v598, %v590
    %v751 = vpack.c.b16 %v607, %v599
    %v752 = vpack.c.b16 %v608, %v600
    %v753 = vpack.c.b16 %v609, %v601
    %v754 = vpack.c.b16 %v610, %v602
    %v755 = vpack.c.b16 %v611, %v603
    %v756 = vpack.c.b16 %v612, %v604
    %v757 = vpack.c.b16 %v613, %v605
    %v758 = vpack.c.b16 %v614, %v606
    %v759 = vpack.c.b16 %v623, %v615
    %v760 = vpack.c.b16 %v624, %v616
    %v761 = vpack.c.b16 %v625, %v617
    %v762 = vpack.c.b16 %v626, %v618
    %v763 = vpack.c.b16 %v627, %v619
    %v764 = vpack.c.b16 %v628, %v620
    %v765 = vpack.c.b16 %v629, %v621
    %v766 = vpack.c.b16 %v630, %v622
    %v767 = vpack.c.b16 %v639, %v631
    %v768 = vpack.c.b16 %v640, %v632
    %v769 = vpack.c.b16 %v641, %v633
    %v770 = vpack.c.b16 %v642, %v634
    %v771 = vpack.c.b16 %v643, %v635
    %v772 = vpack.c.b16 %v644, %v636
    %v773 = vpack.c.b16 %v645, %v637
    %v774 = vpack.c.b16 %v646, %v638
    %903 = vmatprep.subr.bf16.mxu0 %v648
    %904 = vmatpush1.bf16.msra.mxu0 %v647
    %905 = vmatprep.subr.bf16.mxu0 %v656
    %906 = vmatpush1.bf16.msra.mxu0 %v655
    %907 = vmatprep.subr.bf16.mxu0 %v664
    %908 = vmatpush1.bf16.msra.mxu0 %v663
    %909 = vmatprep.subr.bf16.mxu0 %v672
    %910 = vmatpush1.bf16.msra.mxu0 %v671
    %911 = vmatprep.subr.bf16.mxu0 %v680
    %912 = vmatpush1.bf16.msra.mxu0 %v679
    %913 = vmatprep.subr.bf16.mxu0 %v688
    %914 = vmatpush1.bf16.msra.mxu0 %v687
    %915 = vmatprep.subr.bf16.mxu0 %v696
    %916 = vmatpush1.bf16.msra.mxu0 %v695
    %917 = vmatprep.subr.bf16.mxu0 %v704
    %918 = vmatpush1.bf16.msra.mxu0 %v703
    %919 = vmatprep.subr.bf16.mxu0 %v712
    %920 = vmatpush1.bf16.msra.mxu0 %v711
    %921 = vmatprep.subr.bf16.mxu0 %v720
    %922 = vmatpush1.bf16.msra.mxu0 %v719
    %923 = vmatprep.subr.bf16.mxu0 %v728
    %924 = vmatpush1.bf16.msra.mxu0 %v727
    %925 = vmatprep.subr.bf16.mxu0 %v736
    %926 = vmatpush1.bf16.msra.mxu0 %v735
    %927 = vmatprep.subr.bf16.mxu0 %v744
    %928 = vmatpush1.bf16.msra.mxu0 %v743
    %929 = vmatprep.subr.bf16.mxu0 %v752
    %930 = vmatpush1.bf16.msra.mxu0 %v751
    %931 = vmatprep.subr.bf16.mxu0 %v760
    %932 = vmatpush1.bf16.msra.mxu0 %v759
    %933 = vmatprep.subr.bf16.mxu0 %v768
    %934 = vmatpush1.bf16.msra.mxu0 %v767
    %935 = vmatprep.mubr.bf16.mxu0 %v92
    %936 = vmatmul.mubr.bf16.gmra.mrb[0].mxu0 %v91
    %v937 = vpop.f32.mrb[0].mxu0
    %v938 = vadd.f32 %v226, %v937
    %v939 = vpop.f32.mrb[0].mxu0
    %v940 = vadd.f32 %v230, %v939
    %v941 = vpop.f32.mrb[0].mxu0
    %v942 = vpop.f32.mrb[0].mxu0
    %943 = vdwg.mxu0
    %944 = vmatprep.subr.bf16.mxu0 %v650
    %945 = vmatpush1.bf16.msra.mxu0 %v649
    %946 = vmatprep.subr.bf16.mxu0 %v658
    %947 = vmatpush1.bf16.msra.mxu0 %v657
    %948 = vmatprep.subr.bf16.mxu0 %v666
    %949 = vmatpush1.bf16.msra.mxu0 %v665
    %950 = vmatprep.subr.bf16.mxu0 %v674
    %951 = vmatpush1.bf16.msra.mxu0 %v673
    %952 = vmatprep.subr.bf16.mxu0 %v682
    %953 = vmatpush1.bf16.msra.mxu0 %v681
    %954 = vmatprep.subr.bf16.mxu0 %v690
    %955 = vmatpush1.bf16.msra.mxu0 %v689
    %956 = vmatprep.subr.bf16.mxu0 %v698
    %957 = vmatpush1.bf16.msra.mxu0 %v697
    %958 = vmatprep.subr.bf16.mxu0 %v706
    %959 = vmatpush1.bf16.msra.mxu0 %v705
    %960 = vmatprep.subr.bf16.mxu0 %v714
    %961 = vmatpush1.bf16.msra.mxu0 %v713
    %962 = vmatprep.subr.bf16.mxu0 %v722
    %963 = vmatpush1.bf16.msra.mxu0 %v721
    %964 = vmatprep.subr.bf16.mxu0 %v730
    %965 = vmatpush1.bf16.msra.mxu0 %v729
    %966 = vmatprep.subr.bf16.mxu0 %v738
    %967 = vmatpush1.bf16.msra.mxu0 %v737
    %968 = vmatprep.subr.bf16.mxu0 %v746
    %969 = vmatpush1.bf16.msra.mxu0 %v745
    %970 = vmatprep.subr.bf16.mxu0 %v754
    %971 = vmatpush1.bf16.msra.mxu0 %v753
    %972 = vmatprep.subr.bf16.mxu0 %v762
    %973 = vmatpush1.bf16.msra.mxu0 %v761
    %974 = vmatprep.subr.bf16.mxu0 %v770
    %975 = vmatpush1.bf16.msra.mxu0 %v769
    %976 = vmatprep.mubr.bf16.mxu0 %v92
    %977 = vmatmul.mubr.bf16.gmra.mrb[0].mxu0 %v91
    %v978 = vpop.f32.mrb[0].mxu0
    %v979 = vadd.f32 %v234, %v978
    %v980 = vpop.f32.mrb[0].mxu0
    %v981 = vadd.f32 %v238, %v980
    %v982 = vpop.f32.mrb[0].mxu0
    %v983 = vpop.f32.mrb[0].mxu0
    %984 = vdwg.mxu0
    %985 = vmatprep.subr.bf16.mxu0 %v652
    %986 = vmatpush1.bf16.msra.mxu0 %v651
    %987 = vmatprep.subr.bf16.mxu0 %v660
    %988 = vmatpush1.bf16.msra.mxu0 %v659
    %989 = vmatprep.subr.bf16.mxu0 %v668
    %990 = vmatpush1.bf16.msra.mxu0 %v667
    %991 = vmatprep.subr.bf16.mxu0 %v676
    %992 = vmatpush1.bf16.msra.mxu0 %v675
    %993 = vmatprep.subr.bf16.mxu0 %v684
    %994 = vmatpush1.bf16.msra.mxu0 %v683
    %995 = vmatprep.subr.bf16.mxu0 %v692
    %996 = vmatpush1.bf16.msra.mxu0 %v691
    %997 = vmatprep.subr.bf16.mxu0 %v700
    %998 = vmatpush1.bf16.msra.mxu0 %v699
    %999 = vmatprep.subr.bf16.mxu0 %v708
    %1000 = vmatpush1.bf16.msra.mxu0 %v707
    %1001 = vmatprep.subr.bf16.mxu0 %v716
    %1002 = vmatpush1.bf16.msra.mxu0 %v715
    %1003 = vmatprep.subr.bf16.mxu0 %v724
    %1004 = vmatpush1.bf16.msra.mxu0 %v723
    %1005 = vmatprep.subr.bf16.mxu0 %v732
    %1006 = vmatpush1.bf16.msra.mxu0 %v731
    %1007 = vmatprep.subr.bf16.mxu0 %v740
    %1008 = vmatpush1.bf16.msra.mxu0 %v739
    %1009 = vmatprep.subr.bf16.mxu0 %v748
    %1010 = vmatpush1.bf16.msra.mxu0 %v747
    %1011 = vmatprep.subr.bf16.mxu0 %v756
    %1012 = vmatpush1.bf16.msra.mxu0 %v755
    %1013 = vmatprep.subr.bf16.mxu0 %v764
    %1014 = vmatpush1.bf16.msra.mxu0 %v763
    %1015 = vmatprep.subr.bf16.mxu0 %v772
    %1016 = vmatpush1.bf16.msra.mxu0 %v771
    %1017 = vmatprep.mubr.bf16.mxu0 %v92
    %1018 = vmatmul.mubr.bf16.gmra.mrb[0].mxu0 %v91
    %v1019 = vpop.f32.mrb[0].mxu0
    %v1020 = vadd.f32 %v242, %v1019
    %v1021 = vpop.f32.mrb[0].mxu0
    %v1022 = vadd.f32 %v246, %v1021
    %v1023 = vpop.f32.mrb[0].mxu0
    %v1024 = vpop.f32.mrb[0].mxu0
    %1025 = vdwg.mxu0
    %1026 = vmatprep.subr.bf16.mxu0 %v654
    %1027 = vmatpush1.bf16.msra.mxu0 %v653
    %1028 = vmatprep.subr.bf16.mxu0 %v662
    %1029 = vmatpush1.bf16.msra.mxu0 %v661
    %1030 = vmatprep.subr.bf16.mxu0 %v670
    %1031 = vmatpush1.bf16.msra.mxu0 %v669
    %1032 = vmatprep.subr.bf16.mxu0 %v678
    %1033 = vmatpush1.bf16.msra.mxu0 %v677
    %1034 = vmatprep.subr.bf16.mxu0 %v686
    %1035 = vmatpush1.bf16.msra.mxu0 %v685
    %1036 = vmatprep.subr.bf16.mxu0 %v694
    %1037 = vmatpush1.bf16.msra.mxu0 %v693
    %1038 = vmatprep.subr.bf16.mxu0 %v702
    %1039 = vmatpush1.bf16.msra.mxu0 %v701
    %1040 = vmatprep.subr.bf16.mxu0 %v710
    %1041 = vmatpush1.bf16.msra.mxu0 %v709
    %1042 = vmatprep.subr.bf16.mxu0 %v718
    %1043 = vmatpush1.bf16.msra.mxu0 %v717
    %1044 = vmatprep.subr.bf16.mxu0 %v726
    %1045 = vmatpush1.bf16.msra.mxu0 %v725
    %1046 = vmatprep.subr.bf16.mxu0 %v734
    %1047 = vmatpush1.bf16.msra.mxu0 %v733
    %1048 = vmatprep.subr.bf16.mxu0 %v742
    %1049 = vmatpush1.bf16.msra.mxu0 %v741
    %1050 = vmatprep.subr.bf16.mxu0 %v750
    %1051 = vmatpush1.bf16.msra.mxu0 %v749
    %1052 = vmatprep.subr.bf16.mxu0 %v758
    %1053 = vmatpush1.bf16.msra.mxu0 %v757
    %1054 = vmatprep.subr.bf16.mxu0 %v766
    %1055 = vmatpush1.bf16.msra.mxu0 %v765
    %1056 = vmatprep.subr.bf16.mxu0 %v774
    %1057 = vmatpush1.bf16.msra.mxu0 %v773
    %1058 = vmatprep.mubr.bf16.mxu0 %v92
    %1059 = vmatmul.mubr.bf16.gmra.mrb[0].mxu0 %v91
    %v1060 = vpop.f32.mrb[0].mxu0
    %v1061 = vadd.f32 %v250, %v1060
    %v1062 = vpop.f32.mrb[0].mxu0
    %v1063 = vadd.f32 %v254, %v1062
    %v1064 = vpop.f32.mrb[0].mxu0
    %v1065 = vpop.f32.mrb[0].mxu0
    %1066 = vdwg.mxu0
    %v1067 = vmax.f32 %v938, 0.0
    %v1068 = vmax.f32 %v940, 0.0
    %v1069 = vmax.f32 %v979, 0.0
    %v1070 = vmax.f32 %v981, 0.0
    %v1071 = vmax.f32 %v1020, 0.0
    %v1072 = vmax.f32 %v1022, 0.0
    %v1073 = vmax.f32 %v1061, 0.0
    %v1074 = vmax.f32 %v1063, 0.0
    %v1075 = vpack.c.bf16 %v1067, %v1067
    %v1076 = vpack.c.bf16 %v1068, %v1068
    %v1077 = vpack.c.bf16 %v1069, %v1069
    %v1078 = vpack.c.bf16 %v1070, %v1070
    %v1079 = vpack.c.bf16 %v1071, %v1071
    %v1080 = vpack.c.bf16 %v1072, %v1072
    %v1081 = vpack.c.bf16 %v1073, %v1073
    %v1082 = vpack.c.bf16 %v1074, %v1074
    %v1083 = vld [vmem:[#allocation6] sm:$0xff]
    %v1084 = vld [vmem:[#allocation6 + $0x8] sm:$0xff]
    %v1085 = vld [vmem:[#allocation6 + $0x10] sm:$0xff]
    %v1086 = vld [vmem:[#allocation6 + $0x18] sm:$0xff]
    %v1087 = vld [vmem:[#allocation6 + $0x20] sm:$0xff]
    %v1088 = vld [vmem:[#allocation6 + $0x28] sm:$0xff]
    %v1089 = vld [vmem:[#allocation6 + $0x30] sm:$0xff]
    %v1090 = vld [vmem:[#allocation6 + $0x38] sm:$0xff]
    %v1091 = vld [vmem:[#allocation6 + $0x40] sm:$0xff]
    %v1092 = vld [vmem:[#allocation6 + $0x48] sm:$0xff]
    %v1093 = vld [vmem:[#allocation6 + $0x50] sm:$0xff]
    %v1094 = vld [vmem:[#allocation6 + $0x58] sm:$0xff]
    %v1095 = vld [vmem:[#allocation6 + $0x60] sm:$0xff]
    %v1096 = vld [vmem:[#allocation6 + $0x68] sm:$0xff]
    %v1097 = vld [vmem:[#allocation6 + $0x70] sm:$0xff]
    %v1098 = vld [vmem:[#allocation6 + $0x78] sm:$0xff]
    %v1099 = vld [vmem:[#allocation6 + $0x80] sm:$0xff]
    %v1100 = vld [vmem:[#allocation6 + $0x88] sm:$0xff]
    %v1101 = vld [vmem:[#allocation6 + $0x90] sm:$0xff]
    %v1102 = vld [vmem:[#allocation6 + $0x98] sm:$0xff]
    %v1103 = vld [vmem:[#allocation6 + $0xa0] sm:$0xff]
    %v1104 = vld [vmem:[#allocation6 + $0xa8] sm:$0xff]
    %v1105 = vld [vmem:[#allocation6 + $0xb0] sm:$0xff]
    %v1106 = vld [vmem:[#allocation6 + $0xb8] sm:$0xff]
    %v1107 = vld [vmem:[#allocation6 + $0xc0] sm:$0xff]
    %v1108 = vld [vmem:[#allocation6 + $0xc8] sm:$0xff]
    %v1109 = vld [vmem:[#allocation6 + $0xd0] sm:$0xff]
    %v1110 = vld [vmem:[#allocation6 + $0xd8] sm:$0xff]
    %v1111 = vld [vmem:[#allocation6 + $0xe0] sm:$0xff]
    %v1112 = vld [vmem:[#allocation6 + $0xe8] sm:$0xff]
    %v1113 = vld [vmem:[#allocation6 + $0xf0] sm:$0xff]
    %v1114 = vld [vmem:[#allocation6 + $0xf8] sm:$0xff]
    %v1115 = vld [vmem:[#allocation6 + $0x100] sm:$0xff]
    %v1116 = vld [vmem:[#allocation6 + $0x108] sm:$0xff]
    %v1117 = vld [vmem:[#allocation6 + $0x110] sm:$0xff]
    %v1118 = vld [vmem:[#allocation6 + $0x118] sm:$0xff]
    %v1119 = vld [vmem:[#allocation6 + $0x120] sm:$0xff]
    %v1120 = vld [vmem:[#allocation6 + $0x128] sm:$0xff]
    %v1121 = vld [vmem:[#allocation6 + $0x130] sm:$0xff]
    %v1122 = vld [vmem:[#allocation6 + $0x138] sm:$0xff]
    %v1123 = vld [vmem:[#allocation6 + $0x140] sm:$0xff]
    %v1124 = vld [vmem:[#allocation6 + $0x148] sm:$0xff]
    %v1125 = vld [vmem:[#allocation6 + $0x150] sm:$0xff]
    %v1126 = vld [vmem:[#allocation6 + $0x158] sm:$0xff]
    %v1127 = vld [vmem:[#allocation6 + $0x160] sm:$0xff]
    %v1128 = vld [vmem:[#allocation6 + $0x168] sm:$0xff]
    %v1129 = vld [vmem:[#allocation6 + $0x170] sm:$0xff]
    %v1130 = vld [vmem:[#allocation6 + $0x178] sm:$0xff]
    %v1131 = vld [vmem:[#allocation6 + $0x180] sm:$0xff]
    %v1132 = vld [vmem:[#allocation6 + $0x188] sm:$0xff]
    %v1133 = vld [vmem:[#allocation6 + $0x190] sm:$0xff]
    %v1134 = vld [vmem:[#allocation6 + $0x198] sm:$0xff]
    %v1135 = vld [vmem:[#allocation6 + $0x1a0] sm:$0xff]
    %v1136 = vld [vmem:[#allocation6 + $0x1a8] sm:$0xff]
    %v1137 = vld [vmem:[#allocation6 + $0x1b0] sm:$0xff]
    %v1138 = vld [vmem:[#allocation6 + $0x1b8] sm:$0xff]
    %v1139 = vld [vmem:[#allocation6 + $0x1c0] sm:$0xff]
    %v1140 = vld [vmem:[#allocation6 + $0x1c8] sm:$0xff]
    %v1141 = vld [vmem:[#allocation6 + $0x1d0] sm:$0xff]
    %v1142 = vld [vmem:[#allocation6 + $0x1d8] sm:$0xff]
    %v1143 = vld [vmem:[#allocation6 + $0x1e0] sm:$0xff]
    %v1144 = vld [vmem:[#allocation6 + $0x1e8] sm:$0xff]
    %v1145 = vld [vmem:[#allocation6 + $0x1f0] sm:$0xff]
    %v1146 = vld [vmem:[#allocation6 + $0x1f8] sm:$0xff]
    %v1147 = vld [vmem:[#allocation6 + $0x200] sm:$0xff]
    %v1148 = vld [vmem:[#allocation6 + $0x208] sm:$0xff]
    %v1149 = vld [vmem:[#allocation6 + $0x210] sm:$0xff]
    %v1150 = vld [vmem:[#allocation6 + $0x218] sm:$0xff]
    %v1151 = vld [vmem:[#allocation6 + $0x220] sm:$0xff]
    %v1152 = vld [vmem:[#allocation6 + $0x228] sm:$0xff]
    %v1153 = vld [vmem:[#allocation6 + $0x230] sm:$0xff]
    %v1154 = vld [vmem:[#allocation6 + $0x238] sm:$0xff]
    %v1155 = vld [vmem:[#allocation6 + $0x240] sm:$0xff]
    %v1156 = vld [vmem:[#allocation6 + $0x248] sm:$0xff]
    %v1157 = vld [vmem:[#allocation6 + $0x250] sm:$0xff]
    %v1158 = vld [vmem:[#allocation6 + $0x258] sm:$0xff]
    %v1159 = vld [vmem:[#allocation6 + $0x260] sm:$0xff]
    %v1160 = vld [vmem:[#allocation6 + $0x268] sm:$0xff]
    %v1161 = vld [vmem:[#allocation6 + $0x270] sm:$0xff]
    %v1162 = vld [vmem:[#allocation6 + $0x278] sm:$0xff]
    %v1163 = vld [vmem:[#allocation6 + $0x280] sm:$0xff]
    %v1164 = vld [vmem:[#allocation6 + $0x288] sm:$0xff]
    %v1165 = vld [vmem:[#allocation6 + $0x290] sm:$0xff]
    %v1166 = vld [vmem:[#allocation6 + $0x298] sm:$0xff]
    %v1167 = vld [vmem:[#allocation6 + $0x2a0] sm:$0xff]
    %v1168 = vld [vmem:[#allocation6 + $0x2a8] sm:$0xff]
    %v1169 = vld [vmem:[#allocation6 + $0x2b0] sm:$0xff]
    %v1170 = vld [vmem:[#allocation6 + $0x2b8] sm:$0xff]
    %v1171 = vld [vmem:[#allocation6 + $0x2c0] sm:$0xff]
    %v1172 = vld [vmem:[#allocation6 + $0x2c8] sm:$0xff]
    %v1173 = vld [vmem:[#allocation6 + $0x2d0] sm:$0xff]
    %v1174 = vld [vmem:[#allocation6 + $0x2d8] sm:$0xff]
    %v1175 = vld [vmem:[#allocation6 + $0x2e0] sm:$0xff]
    %v1176 = vld [vmem:[#allocation6 + $0x2e8] sm:$0xff]
    %v1177 = vld [vmem:[#allocation6 + $0x2f0] sm:$0xff]
    %v1178 = vld [vmem:[#allocation6 + $0x2f8] sm:$0xff]
    %v1179 = vld [vmem:[#allocation6 + $0x300] sm:$0xff]
    %v1180 = vld [vmem:[#allocation6 + $0x308] sm:$0xff]
    %v1181 = vld [vmem:[#allocation6 + $0x310] sm:$0xff]
    %v1182 = vld [vmem:[#allocation6 + $0x318] sm:$0xff]
    %v1183 = vld [vmem:[#allocation6 + $0x320] sm:$0xff]
    %v1184 = vld [vmem:[#allocation6 + $0x328] sm:$0xff]
    %v1185 = vld [vmem:[#allocation6 + $0x330] sm:$0xff]
    %v1186 = vld [vmem:[#allocation6 + $0x338] sm:$0xff]
    %v1187 = vld [vmem:[#allocation6 + $0x340] sm:$0xff]
    %v1188 = vld [vmem:[#allocation6 + $0x348] sm:$0xff]
    %v1189 = vld [vmem:[#allocation6 + $0x350] sm:$0xff]
    %v1190 = vld [vmem:[#allocation6 + $0x358] sm:$0xff]
    %v1191 = vld [vmem:[#allocation6 + $0x360] sm:$0xff]
    %v1192 = vld [vmem:[#allocation6 + $0x368] sm:$0xff]
    %v1193 = vld [vmem:[#allocation6 + $0x370] sm:$0xff]
    %v1194 = vld [vmem:[#allocation6 + $0x378] sm:$0xff]
    %v1195 = vld [vmem:[#allocation6 + $0x380] sm:$0xff]
    %v1196 = vld [vmem:[#allocation6 + $0x388] sm:$0xff]
    %v1197 = vld [vmem:[#allocation6 + $0x390] sm:$0xff]
    %v1198 = vld [vmem:[#allocation6 + $0x398] sm:$0xff]
    %v1199 = vld [vmem:[#allocation6 + $0x3a0] sm:$0xff]
    %v1200 = vld [vmem:[#allocation6 + $0x3a8] sm:$0xff]
    %v1201 = vld [vmem:[#allocation6 + $0x3b0] sm:$0xff]
    %v1202 = vld [vmem:[#allocation6 + $0x3b8] sm:$0xff]
    %v1203 = vld [vmem:[#allocation6 + $0x3c0] sm:$0xff]
    %v1204 = vld [vmem:[#allocation6 + $0x3c8] sm:$0xff]
    %v1205 = vld [vmem:[#allocation6 + $0x3d0] sm:$0xff]
    %v1206 = vld [vmem:[#allocation6 + $0x3d8] sm:$0xff]
    %v1207 = vld [vmem:[#allocation6 + $0x3e0] sm:$0xff]
    %v1208 = vld [vmem:[#allocation6 + $0x3e8] sm:$0xff]
    %v1209 = vld [vmem:[#allocation6 + $0x3f0] sm:$0xff]
    %v1210 = vld [vmem:[#allocation6 + $0x3f8] sm:$0xff]
    %v1211 = vld [vmem:[#allocation6 + $0x400] sm:$0xff]
    %v1212 = vld [vmem:[#allocation6 + $0x408] sm:$0xff]
    %v1213 = vld [vmem:[#allocation6 + $0x410] sm:$0xff]
    %v1214 = vld [vmem:[#allocation6 + $0x418] sm:$0xff]
    %v1215 = vld [vmem:[#allocation6 + $0x420] sm:$0xff]
    %v1216 = vld [vmem:[#allocation6 + $0x428] sm:$0xff]
    %v1217 = vld [vmem:[#allocation6 + $0x430] sm:$0xff]
    %v1218 = vld [vmem:[#allocation6 + $0x438] sm:$0xff]
    %v1219 = vld [vmem:[#allocation6 + $0x440] sm:$0xff]
    %v1220 = vld [vmem:[#allocation6 + $0x448] sm:$0xff]
    %v1221 = vld [vmem:[#allocation6 + $0x450] sm:$0xff]
    %v1222 = vld [vmem:[#allocation6 + $0x458] sm:$0xff]
    %v1223 = vld [vmem:[#allocation6 + $0x460] sm:$0xff]
    %v1224 = vld [vmem:[#allocation6 + $0x468] sm:$0xff]
    %v1225 = vld [vmem:[#allocation6 + $0x470] sm:$0xff]
    %v1226 = vld [vmem:[#allocation6 + $0x478] sm:$0xff]
    %v1227 = vld [vmem:[#allocation6 + $0x480] sm:$0xff]
    %v1228 = vld [vmem:[#allocation6 + $0x488] sm:$0xff]
    %v1229 = vld [vmem:[#allocation6 + $0x490] sm:$0xff]
    %v1230 = vld [vmem:[#allocation6 + $0x498] sm:$0xff]
    %v1231 = vld [vmem:[#allocation6 + $0x4a0] sm:$0xff]
    %v1232 = vld [vmem:[#allocation6 + $0x4a8] sm:$0xff]
    %v1233 = vld [vmem:[#allocation6 + $0x4b0] sm:$0xff]
    %v1234 = vld [vmem:[#allocation6 + $0x4b8] sm:$0xff]
    %v1235 = vld [vmem:[#allocation6 + $0x4c0] sm:$0xff]
    %v1236 = vld [vmem:[#allocation6 + $0x4c8] sm:$0xff]
    %v1237 = vld [vmem:[#allocation6 + $0x4d0] sm:$0xff]
    %v1238 = vld [vmem:[#allocation6 + $0x4d8] sm:$0xff]
    %v1239 = vld [vmem:[#allocation6 + $0x4e0] sm:$0xff]
    %v1240 = vld [vmem:[#allocation6 + $0x4e8] sm:$0xff]
    %v1241 = vld [vmem:[#allocation6 + $0x4f0] sm:$0xff]
    %v1242 = vld [vmem:[#allocation6 + $0x4f8] sm:$0xff]
    %v1243 = vld [vmem:[#allocation6 + $0x500] sm:$0xff]
    %v1244 = vld [vmem:[#allocation6 + $0x508] sm:$0xff]
    %v1245 = vld [vmem:[#allocation6 + $0x510] sm:$0xff]
    %v1246 = vld [vmem:[#allocation6 + $0x518] sm:$0xff]
    %v1247 = vld [vmem:[#allocation6 + $0x520] sm:$0xff]
    %v1248 = vld [vmem:[#allocation6 + $0x528] sm:$0xff]
    %v1249 = vld [vmem:[#allocation6 + $0x530] sm:$0xff]
    %v1250 = vld [vmem:[#allocation6 + $0x538] sm:$0xff]
    %v1251 = vld [vmem:[#allocation6 + $0x540] sm:$0xff]
    %v1252 = vld [vmem:[#allocation6 + $0x548] sm:$0xff]
    %v1253 = vld [vmem:[#allocation6 + $0x550] sm:$0xff]
    %v1254 = vld [vmem:[#allocation6 + $0x558] sm:$0xff]
    %v1255 = vld [vmem:[#allocation6 + $0x560] sm:$0xff]
    %v1256 = vld [vmem:[#allocation6 + $0x568] sm:$0xff]
    %v1257 = vld [vmem:[#allocation6 + $0x570] sm:$0xff]
    %v1258 = vld [vmem:[#allocation6 + $0x578] sm:$0xff]
    %v1259 = vld [vmem:[#allocation6 + $0x580] sm:$0xff]
    %v1260 = vld [vmem:[#allocation6 + $0x588] sm:$0xff]
    %v1261 = vld [vmem:[#allocation6 + $0x590] sm:$0xff]
    %v1262 = vld [vmem:[#allocation6 + $0x598] sm:$0xff]
    %v1263 = vld [vmem:[#allocation6 + $0x5a0] sm:$0xff]
    %v1264 = vld [vmem:[#allocation6 + $0x5a8] sm:$0xff]
    %v1265 = vld [vmem:[#allocation6 + $0x5b0] sm:$0xff]
    %v1266 = vld [vmem:[#allocation6 + $0x5b8] sm:$0xff]
    %v1267 = vld [vmem:[#allocation6 + $0x5c0] sm:$0xff]
    %v1268 = vld [vmem:[#allocation6 + $0x5c8] sm:$0xff]
    %v1269 = vld [vmem:[#allocation6 + $0x5d0] sm:$0xff]
    %v1270 = vld [vmem:[#allocation6 + $0x5d8] sm:$0xff]
    %v1271 = vld [vmem:[#allocation6 + $0x5e0] sm:$0xff]
    %v1272 = vld [vmem:[#allocation6 + $0x5e8] sm:$0xff]
    %v1273 = vld [vmem:[#allocation6 + $0x5f0] sm:$0xff]
    %v1274 = vld [vmem:[#allocation6 + $0x5f8] sm:$0xff]
    %v1275 = vld [vmem:[#allocation6 + $0x600] sm:$0xff]
    %v1276 = vld [vmem:[#allocation6 + $0x608] sm:$0xff]
    %v1277 = vld [vmem:[#allocation6 + $0x610] sm:$0xff]
    %v1278 = vld [vmem:[#allocation6 + $0x618] sm:$0xff]
    %v1279 = vld [vmem:[#allocation6 + $0x620] sm:$0xff]
    %v1280 = vld [vmem:[#allocation6 + $0x628] sm:$0xff]
    %v1281 = vld [vmem:[#allocation6 + $0x630] sm:$0xff]
    %v1282 = vld [vmem:[#allocation6 + $0x638] sm:$0xff]
    %v1283 = vld [vmem:[#allocation6 + $0x640] sm:$0xff]
    %v1284 = vld [vmem:[#allocation6 + $0x648] sm:$0xff]
    %v1285 = vld [vmem:[#allocation6 + $0x650] sm:$0xff]
    %v1286 = vld [vmem:[#allocation6 + $0x658] sm:$0xff]
    %v1287 = vld [vmem:[#allocation6 + $0x660] sm:$0xff]
    %v1288 = vld [vmem:[#allocation6 + $0x668] sm:$0xff]
    %v1289 = vld [vmem:[#allocation6 + $0x670] sm:$0xff]
    %v1290 = vld [vmem:[#allocation6 + $0x678] sm:$0xff]
    %v1291 = vld [vmem:[#allocation6 + $0x680] sm:$0xff]
    %v1292 = vld [vmem:[#allocation6 + $0x688] sm:$0xff]
    %v1293 = vld [vmem:[#allocation6 + $0x690] sm:$0xff]
    %v1294 = vld [vmem:[#allocation6 + $0x698] sm:$0xff]
    %v1295 = vld [vmem:[#allocation6 + $0x6a0] sm:$0xff]
    %v1296 = vld [vmem:[#allocation6 + $0x6a8] sm:$0xff]
    %v1297 = vld [vmem:[#allocation6 + $0x6b0] sm:$0xff]
    %v1298 = vld [vmem:[#allocation6 + $0x6b8] sm:$0xff]
    %v1299 = vld [vmem:[#allocation6 + $0x6c0] sm:$0xff]
    %v1300 = vld [vmem:[#allocation6 + $0x6c8] sm:$0xff]
    %v1301 = vld [vmem:[#allocation6 + $0x6d0] sm:$0xff]
    %v1302 = vld [vmem:[#allocation6 + $0x6d8] sm:$0xff]
    %v1303 = vld [vmem:[#allocation6 + $0x6e0] sm:$0xff]
    %v1304 = vld [vmem:[#allocation6 + $0x6e8] sm:$0xff]
    %v1305 = vld [vmem:[#allocation6 + $0x6f0] sm:$0xff]
    %v1306 = vld [vmem:[#allocation6 + $0x6f8] sm:$0xff]
    %v1307 = vld [vmem:[#allocation6 + $0x700] sm:$0xff]
    %v1308 = vld [vmem:[#allocation6 + $0x708] sm:$0xff]
    %v1309 = vld [vmem:[#allocation6 + $0x710] sm:$0xff]
    %v1310 = vld [vmem:[#allocation6 + $0x718] sm:$0xff]
    %v1311 = vld [vmem:[#allocation6 + $0x720] sm:$0xff]
    %v1312 = vld [vmem:[#allocation6 + $0x728] sm:$0xff]
    %v1313 = vld [vmem:[#allocation6 + $0x730] sm:$0xff]
    %v1314 = vld [vmem:[#allocation6 + $0x738] sm:$0xff]
    %v1315 = vld [vmem:[#allocation6 + $0x740] sm:$0xff]
    %v1316 = vld [vmem:[#allocation6 + $0x748] sm:$0xff]
    %v1317 = vld [vmem:[#allocation6 + $0x750] sm:$0xff]
    %v1318 = vld [vmem:[#allocation6 + $0x758] sm:$0xff]
    %v1319 = vld [vmem:[#allocation6 + $0x760] sm:$0xff]
    %v1320 = vld [vmem:[#allocation6 + $0x768] sm:$0xff]
    %v1321 = vld [vmem:[#allocation6 + $0x770] sm:$0xff]
    %v1322 = vld [vmem:[#allocation6 + $0x778] sm:$0xff]
    %v1323 = vld [vmem:[#allocation6 + $0x780] sm:$0xff]
    %v1324 = vld [vmem:[#allocation6 + $0x788] sm:$0xff]
    %v1325 = vld [vmem:[#allocation6 + $0x790] sm:$0xff]
    %v1326 = vld [vmem:[#allocation6 + $0x798] sm:$0xff]
    %v1327 = vld [vmem:[#allocation6 + $0x7a0] sm:$0xff]
    %v1328 = vld [vmem:[#allocation6 + $0x7a8] sm:$0xff]
    %v1329 = vld [vmem:[#allocation6 + $0x7b0] sm:$0xff]
    %v1330 = vld [vmem:[#allocation6 + $0x7b8] sm:$0xff]
    %v1331 = vld [vmem:[#allocation6 + $0x7c0] sm:$0xff]
    %v1332 = vld [vmem:[#allocation6 + $0x7c8] sm:$0xff]
    %v1333 = vld [vmem:[#allocation6 + $0x7d0] sm:$0xff]
    %v1334 = vld [vmem:[#allocation6 + $0x7d8] sm:$0xff]
    %v1335 = vld [vmem:[#allocation6 + $0x7e0] sm:$0xff]
    %v1336 = vld [vmem:[#allocation6 + $0x7e8] sm:$0xff]
    %v1337 = vld [vmem:[#allocation6 + $0x7f0] sm:$0xff]
    %v1338 = vld [vmem:[#allocation6 + $0x7f8] sm:$0xff]
    %v1339 = vld [vmem:[#allocation6 + $0x800] sm:$0xff]
    %v1340 = vld [vmem:[#allocation6 + $0x808] sm:$0xff]
    %v1341 = vld [vmem:[#allocation6 + $0x810] sm:$0xff]
    %v1342 = vld [vmem:[#allocation6 + $0x818] sm:$0xff]
    %v1343 = vld [vmem:[#allocation6 + $0x820] sm:$0xff]
    %v1344 = vld [vmem:[#allocation6 + $0x828] sm:$0xff]
    %v1345 = vld [vmem:[#allocation6 + $0x830] sm:$0xff]
    %v1346 = vld [vmem:[#allocation6 + $0x838] sm:$0xff]
    %v1347 = vld [vmem:[#allocation6 + $0x840] sm:$0xff]
    %v1348 = vld [vmem:[#allocation6 + $0x848] sm:$0xff]
    %v1349 = vld [vmem:[#allocation6 + $0x850] sm:$0xff]
    %v1350 = vld [vmem:[#allocation6 + $0x858] sm:$0xff]
    %v1351 = vld [vmem:[#allocation6 + $0x860] sm:$0xff]
    %v1352 = vld [vmem:[#allocation6 + $0x868] sm:$0xff]
    %v1353 = vld [vmem:[#allocation6 + $0x870] sm:$0xff]
    %v1354 = vld [vmem:[#allocation6 + $0x878] sm:$0xff]
    %v1355 = vld [vmem:[#allocation6 + $0x880] sm:$0xff]
    %v1356 = vld [vmem:[#allocation6 + $0x888] sm:$0xff]
    %v1357 = vld [vmem:[#allocation6 + $0x890] sm:$0xff]
    %v1358 = vld [vmem:[#allocation6 + $0x898] sm:$0xff]
    %v1359 = vld [vmem:[#allocation6 + $0x8a0] sm:$0xff]
    %v1360 = vld [vmem:[#allocation6 + $0x8a8] sm:$0xff]
    %v1361 = vld [vmem:[#allocation6 + $0x8b0] sm:$0xff]
    %v1362 = vld [vmem:[#allocation6 + $0x8b8] sm:$0xff]
    %v1363 = vld [vmem:[#allocation6 + $0x8c0] sm:$0xff]
    %v1364 = vld [vmem:[#allocation6 + $0x8c8] sm:$0xff]
    %v1365 = vld [vmem:[#allocation6 + $0x8d0] sm:$0xff]
    %v1366 = vld [vmem:[#allocation6 + $0x8d8] sm:$0xff]
    %v1367 = vld [vmem:[#allocation6 + $0x8e0] sm:$0xff]
    %v1368 = vld [vmem:[#allocation6 + $0x8e8] sm:$0xff]
    %v1369 = vld [vmem:[#allocation6 + $0x8f0] sm:$0xff]
    %v1370 = vld [vmem:[#allocation6 + $0x8f8] sm:$0xff]
    %v1371 = vld [vmem:[#allocation6 + $0x900] sm:$0xff]
    %v1372 = vld [vmem:[#allocation6 + $0x908] sm:$0xff]
    %v1373 = vld [vmem:[#allocation6 + $0x910] sm:$0xff]
    %v1374 = vld [vmem:[#allocation6 + $0x918] sm:$0xff]
    %v1375 = vld [vmem:[#allocation6 + $0x920] sm:$0xff]
    %v1376 = vld [vmem:[#allocation6 + $0x928] sm:$0xff]
    %v1377 = vld [vmem:[#allocation6 + $0x930] sm:$0xff]
    %v1378 = vld [vmem:[#allocation6 + $0x938] sm:$0xff]
    %v1379 = vld [vmem:[#allocation6 + $0x940] sm:$0xff]
    %v1380 = vld [vmem:[#allocation6 + $0x948] sm:$0xff]
    %v1381 = vld [vmem:[#allocation6 + $0x950] sm:$0xff]
    %v1382 = vld [vmem:[#allocation6 + $0x958] sm:$0xff]
    %v1383 = vld [vmem:[#allocation6 + $0x960] sm:$0xff]
    %v1384 = vld [vmem:[#allocation6 + $0x968] sm:$0xff]
    %v1385 = vld [vmem:[#allocation6 + $0x970] sm:$0xff]
    %v1386 = vld [vmem:[#allocation6 + $0x978] sm:$0xff]
    %v1387 = vld [vmem:[#allocation6 + $0x980] sm:$0xff]
    %v1388 = vld [vmem:[#allocation6 + $0x988] sm:$0xff]
    %v1389 = vld [vmem:[#allocation6 + $0x990] sm:$0xff]
    %v1390 = vld [vmem:[#allocation6 + $0x998] sm:$0xff]
    %v1391 = vld [vmem:[#allocation6 + $0x9a0] sm:$0xff]
    %v1392 = vld [vmem:[#allocation6 + $0x9a8] sm:$0xff]
    %v1393 = vld [vmem:[#allocation6 + $0x9b0] sm:$0xff]
    %v1394 = vld [vmem:[#allocation6 + $0x9b8] sm:$0xff]
    %v1395 = vld [vmem:[#allocation6 + $0x9c0] sm:$0xff]
    %v1396 = vld [vmem:[#allocation6 + $0x9c8] sm:$0xff]
    %v1397 = vld [vmem:[#allocation6 + $0x9d0] sm:$0xff]
    %v1398 = vld [vmem:[#allocation6 + $0x9d8] sm:$0xff]
    %v1399 = vld [vmem:[#allocation6 + $0x9e0] sm:$0xff]
    %v1400 = vld [vmem:[#allocation6 + $0x9e8] sm:$0xff]
    %v1401 = vld [vmem:[#allocation6 + $0x9f0] sm:$0xff]
    %v1402 = vld [vmem:[#allocation6 + $0x9f8] sm:$0xff]
    %v1403 = vld [vmem:[#allocation6 + $0xa00] sm:$0xff]
    %v1404 = vld [vmem:[#allocation6 + $0xa08] sm:$0xff]
    %v1405 = vld [vmem:[#allocation6 + $0xa10] sm:$0xff]
    %v1406 = vld [vmem:[#allocation6 + $0xa18] sm:$0xff]
    %v1407 = vld [vmem:[#allocation6 + $0xa20] sm:$0xff]
    %v1408 = vld [vmem:[#allocation6 + $0xa28] sm:$0xff]
    %v1409 = vld [vmem:[#allocation6 + $0xa30] sm:$0xff]
    %v1410 = vld [vmem:[#allocation6 + $0xa38] sm:$0xff]
    %v1411 = vld [vmem:[#allocation6 + $0xa40] sm:$0xff]
    %v1412 = vld [vmem:[#allocation6 + $0xa48] sm:$0xff]
    %v1413 = vld [vmem:[#allocation6 + $0xa50] sm:$0xff]
    %v1414 = vld [vmem:[#allocation6 + $0xa58] sm:$0xff]
    %v1415 = vld [vmem:[#allocation6 + $0xa60] sm:$0xff]
    %v1416 = vld [vmem:[#allocation6 + $0xa68] sm:$0xff]
    %v1417 = vld [vmem:[#allocation6 + $0xa70] sm:$0xff]
    %v1418 = vld [vmem:[#allocation6 + $0xa78] sm:$0xff]
    %v1419 = vld [vmem:[#allocation6 + $0xa80] sm:$0xff]
    %v1420 = vld [vmem:[#allocation6 + $0xa88] sm:$0xff]
    %v1421 = vld [vmem:[#allocation6 + $0xa90] sm:$0xff]
    %v1422 = vld [vmem:[#allocation6 + $0xa98] sm:$0xff]
    %v1423 = vld [vmem:[#allocation6 + $0xaa0] sm:$0xff]
    %v1424 = vld [vmem:[#allocation6 + $0xaa8] sm:$0xff]
    %v1425 = vld [vmem:[#allocation6 + $0xab0] sm:$0xff]
    %v1426 = vld [vmem:[#allocation6 + $0xab8] sm:$0xff]
    %v1427 = vld [vmem:[#allocation6 + $0xac0] sm:$0xff]
    %v1428 = vld [vmem:[#allocation6 + $0xac8] sm:$0xff]
    %v1429 = vld [vmem:[#allocation6 + $0xad0] sm:$0xff]
    %v1430 = vld [vmem:[#allocation6 + $0xad8] sm:$0xff]
    %v1431 = vld [vmem:[#allocation6 + $0xae0] sm:$0xff]
    %v1432 = vld [vmem:[#allocation6 + $0xae8] sm:$0xff]
    %v1433 = vld [vmem:[#allocation6 + $0xaf0] sm:$0xff]
    %v1434 = vld [vmem:[#allocation6 + $0xaf8] sm:$0xff]
    %v1435 = vld [vmem:[#allocation6 + $0xb00] sm:$0xff]
    %v1436 = vld [vmem:[#allocation6 + $0xb08] sm:$0xff]
    %v1437 = vld [vmem:[#allocation6 + $0xb10] sm:$0xff]
    %v1438 = vld [vmem:[#allocation6 + $0xb18] sm:$0xff]
    %v1439 = vld [vmem:[#allocation6 + $0xb20] sm:$0xff]
    %v1440 = vld [vmem:[#allocation6 + $0xb28] sm:$0xff]
    %v1441 = vld [vmem:[#allocation6 + $0xb30] sm:$0xff]
    %v1442 = vld [vmem:[#allocation6 + $0xb38] sm:$0xff]
    %v1443 = vld [vmem:[#allocation6 + $0xb40] sm:$0xff]
    %v1444 = vld [vmem:[#allocation6 + $0xb48] sm:$0xff]
    %v1445 = vld [vmem:[#allocation6 + $0xb50] sm:$0xff]
    %v1446 = vld [vmem:[#allocation6 + $0xb58] sm:$0xff]
    %v1447 = vld [vmem:[#allocation6 + $0xb60] sm:$0xff]
    %v1448 = vld [vmem:[#allocation6 + $0xb68] sm:$0xff]
    %v1449 = vld [vmem:[#allocation6 + $0xb70] sm:$0xff]
    %v1450 = vld [vmem:[#allocation6 + $0xb78] sm:$0xff]
    %v1451 = vld [vmem:[#allocation6 + $0xb80] sm:$0xff]
    %v1452 = vld [vmem:[#allocation6 + $0xb88] sm:$0xff]
    %v1453 = vld [vmem:[#allocation6 + $0xb90] sm:$0xff]
    %v1454 = vld [vmem:[#allocation6 + $0xb98] sm:$0xff]
    %v1455 = vld [vmem:[#allocation6 + $0xba0] sm:$0xff]
    %v1456 = vld [vmem:[#allocation6 + $0xba8] sm:$0xff]
    %v1457 = vld [vmem:[#allocation6 + $0xbb0] sm:$0xff]
    %v1458 = vld [vmem:[#allocation6 + $0xbb8] sm:$0xff]
    %v1459 = vld [vmem:[#allocation6 + $0xbc0] sm:$0xff]
    %v1460 = vld [vmem:[#allocation6 + $0xbc8] sm:$0xff]
    %v1461 = vld [vmem:[#allocation6 + $0xbd0] sm:$0xff]
    %v1462 = vld [vmem:[#allocation6 + $0xbd8] sm:$0xff]
    %v1463 = vld [vmem:[#allocation6 + $0xbe0] sm:$0xff]
    %v1464 = vld [vmem:[#allocation6 + $0xbe8] sm:$0xff]
    %v1465 = vld [vmem:[#allocation6 + $0xbf0] sm:$0xff]
    %v1466 = vld [vmem:[#allocation6 + $0xbf8] sm:$0xff]
    %v1467 = vld [vmem:[#allocation6 + $0xc00] sm:$0xff]
    %v1468 = vld [vmem:[#allocation6 + $0xc08] sm:$0xff]
    %v1469 = vld [vmem:[#allocation6 + $0xc10] sm:$0xff]
    %v1470 = vld [vmem:[#allocation6 + $0xc18] sm:$0xff]
    %v1471 = vld [vmem:[#allocation6 + $0xc20] sm:$0xff]
    %v1472 = vld [vmem:[#allocation6 + $0xc28] sm:$0xff]
    %v1473 = vld [vmem:[#allocation6 + $0xc30] sm:$0xff]
    %v1474 = vld [vmem:[#allocation6 + $0xc38] sm:$0xff]
    %v1475 = vld [vmem:[#allocation6 + $0xc40] sm:$0xff]
    %v1476 = vld [vmem:[#allocation6 + $0xc48] sm:$0xff]
    %v1477 = vld [vmem:[#allocation6 + $0xc50] sm:$0xff]
    %v1478 = vld [vmem:[#allocation6 + $0xc58] sm:$0xff]
    %v1479 = vld [vmem:[#allocation6 + $0xc60] sm:$0xff]
    %v1480 = vld [vmem:[#allocation6 + $0xc68] sm:$0xff]
    %v1481 = vld [vmem:[#allocation6 + $0xc70] sm:$0xff]
    %v1482 = vld [vmem:[#allocation6 + $0xc78] sm:$0xff]
    %v1483 = vld [vmem:[#allocation6 + $0xc80] sm:$0xff]
    %v1484 = vld [vmem:[#allocation6 + $0xc88] sm:$0xff]
    %v1485 = vld [vmem:[#allocation6 + $0xc90] sm:$0xff]
    %v1486 = vld [vmem:[#allocation6 + $0xc98] sm:$0xff]
    %v1487 = vld [vmem:[#allocation6 + $0xca0] sm:$0xff]
    %v1488 = vld [vmem:[#allocation6 + $0xca8] sm:$0xff]
    %v1489 = vld [vmem:[#allocation6 + $0xcb0] sm:$0xff]
    %v1490 = vld [vmem:[#allocation6 + $0xcb8] sm:$0xff]
    %v1491 = vld [vmem:[#allocation6 + $0xcc0] sm:$0xff]
    %v1492 = vld [vmem:[#allocation6 + $0xcc8] sm:$0xff]
    %v1493 = vld [vmem:[#allocation6 + $0xcd0] sm:$0xff]
    %v1494 = vld [vmem:[#allocation6 + $0xcd8] sm:$0xff]
    %v1495 = vld [vmem:[#allocation6 + $0xce0] sm:$0xff]
    %v1496 = vld [vmem:[#allocation6 + $0xce8] sm:$0xff]
    %v1497 = vld [vmem:[#allocation6 + $0xcf0] sm:$0xff]
    %v1498 = vld [vmem:[#allocation6 + $0xcf8] sm:$0xff]
    %v1499 = vld [vmem:[#allocation6 + $0xd00] sm:$0xff]
    %v1500 = vld [vmem:[#allocation6 + $0xd08] sm:$0xff]
    %v1501 = vld [vmem:[#allocation6 + $0xd10] sm:$0xff]
    %v1502 = vld [vmem:[#allocation6 + $0xd18] sm:$0xff]
    %v1503 = vld [vmem:[#allocation6 + $0xd20] sm:$0xff]
    %v1504 = vld [vmem:[#allocation6 + $0xd28] sm:$0xff]
    %v1505 = vld [vmem:[#allocation6 + $0xd30] sm:$0xff]
    %v1506 = vld [vmem:[#allocation6 + $0xd38] sm:$0xff]
    %v1507 = vld [vmem:[#allocation6 + $0xd40] sm:$0xff]
    %v1508 = vld [vmem:[#allocation6 + $0xd48] sm:$0xff]
    %v1509 = vld [vmem:[#allocation6 + $0xd50] sm:$0xff]
    %v1510 = vld [vmem:[#allocation6 + $0xd58] sm:$0xff]
    %v1511 = vld [vmem:[#allocation6 + $0xd60] sm:$0xff]
    %v1512 = vld [vmem:[#allocation6 + $0xd68] sm:$0xff]
    %v1513 = vld [vmem:[#allocation6 + $0xd70] sm:$0xff]
    %v1514 = vld [vmem:[#allocation6 + $0xd78] sm:$0xff]
    %v1515 = vld [vmem:[#allocation6 + $0xd80] sm:$0xff]
    %v1516 = vld [vmem:[#allocation6 + $0xd88] sm:$0xff]
    %v1517 = vld [vmem:[#allocation6 + $0xd90] sm:$0xff]
    %v1518 = vld [vmem:[#allocation6 + $0xd98] sm:$0xff]
    %v1519 = vld [vmem:[#allocation6 + $0xda0] sm:$0xff]
    %v1520 = vld [vmem:[#allocation6 + $0xda8] sm:$0xff]
    %v1521 = vld [vmem:[#allocation6 + $0xdb0] sm:$0xff]
    %v1522 = vld [vmem:[#allocation6 + $0xdb8] sm:$0xff]
    %v1523 = vld [vmem:[#allocation6 + $0xdc0] sm:$0xff]
    %v1524 = vld [vmem:[#allocation6 + $0xdc8] sm:$0xff]
    %v1525 = vld [vmem:[#allocation6 + $0xdd0] sm:$0xff]
    %v1526 = vld [vmem:[#allocation6 + $0xdd8] sm:$0xff]
    %v1527 = vld [vmem:[#allocation6 + $0xde0] sm:$0xff]
    %v1528 = vld [vmem:[#allocation6 + $0xde8] sm:$0xff]
    %v1529 = vld [vmem:[#allocation6 + $0xdf0] sm:$0xff]
    %v1530 = vld [vmem:[#allocation6 + $0xdf8] sm:$0xff]
    %v1531 = vld [vmem:[#allocation6 + $0xe00] sm:$0xff]
    %v1532 = vld [vmem:[#allocation6 + $0xe08] sm:$0xff]
    %v1533 = vld [vmem:[#allocation6 + $0xe10] sm:$0xff]
    %v1534 = vld [vmem:[#allocation6 + $0xe18] sm:$0xff]
    %v1535 = vld [vmem:[#allocation6 + $0xe20] sm:$0xff]
    %v1536 = vld [vmem:[#allocation6 + $0xe28] sm:$0xff]
    %v1537 = vld [vmem:[#allocation6 + $0xe30] sm:$0xff]
    %v1538 = vld [vmem:[#allocation6 + $0xe38] sm:$0xff]
    %v1539 = vld [vmem:[#allocation6 + $0xe40] sm:$0xff]
    %v1540 = vld [vmem:[#allocation6 + $0xe48] sm:$0xff]
    %v1541 = vld [vmem:[#allocation6 + $0xe50] sm:$0xff]
    %v1542 = vld [vmem:[#allocation6 + $0xe58] sm:$0xff]
    %v1543 = vld [vmem:[#allocation6 + $0xe60] sm:$0xff]
    %v1544 = vld [vmem:[#allocation6 + $0xe68] sm:$0xff]
    %v1545 = vld [vmem:[#allocation6 + $0xe70] sm:$0xff]
    %v1546 = vld [vmem:[#allocation6 + $0xe78] sm:$0xff]
    %v1547 = vld [vmem:[#allocation6 + $0xe80] sm:$0xff]
    %v1548 = vld [vmem:[#allocation6 + $0xe88] sm:$0xff]
    %v1549 = vld [vmem:[#allocation6 + $0xe90] sm:$0xff]
    %v1550 = vld [vmem:[#allocation6 + $0xe98] sm:$0xff]
    %v1551 = vld [vmem:[#allocation6 + $0xea0] sm:$0xff]
    %v1552 = vld [vmem:[#allocation6 + $0xea8] sm:$0xff]
    %v1553 = vld [vmem:[#allocation6 + $0xeb0] sm:$0xff]
    %v1554 = vld [vmem:[#allocation6 + $0xeb8] sm:$0xff]
    %v1555 = vld [vmem:[#allocation6 + $0xec0] sm:$0xff]
    %v1556 = vld [vmem:[#allocation6 + $0xec8] sm:$0xff]
    %v1557 = vld [vmem:[#allocation6 + $0xed0] sm:$0xff]
    %v1558 = vld [vmem:[#allocation6 + $0xed8] sm:$0xff]
    %v1559 = vld [vmem:[#allocation6 + $0xee0] sm:$0xff]
    %v1560 = vld [vmem:[#allocation6 + $0xee8] sm:$0xff]
    %v1561 = vld [vmem:[#allocation6 + $0xef0] sm:$0xff]
    %v1562 = vld [vmem:[#allocation6 + $0xef8] sm:$0xff]
    %v1563 = vld [vmem:[#allocation6 + $0xf00] sm:$0xff]
    %v1564 = vld [vmem:[#allocation6 + $0xf08] sm:$0xff]
    %v1565 = vld [vmem:[#allocation6 + $0xf10] sm:$0xff]
    %v1566 = vld [vmem:[#allocation6 + $0xf18] sm:$0xff]
    %v1567 = vld [vmem:[#allocation6 + $0xf20] sm:$0xff]
    %v1568 = vld [vmem:[#allocation6 + $0xf28] sm:$0xff]
    %v1569 = vld [vmem:[#allocation6 + $0xf30] sm:$0xff]
    %v1570 = vld [vmem:[#allocation6 + $0xf38] sm:$0xff]
    %v1571 = vld [vmem:[#allocation6 + $0xf40] sm:$0xff]
    %v1572 = vld [vmem:[#allocation6 + $0xf48] sm:$0xff]
    %v1573 = vld [vmem:[#allocation6 + $0xf50] sm:$0xff]
    %v1574 = vld [vmem:[#allocation6 + $0xf58] sm:$0xff]
    %v1575 = vld [vmem:[#allocation6 + $0xf60] sm:$0xff]
    %v1576 = vld [vmem:[#allocation6 + $0xf68] sm:$0xff]
    %v1577 = vld [vmem:[#allocation6 + $0xf70] sm:$0xff]
    %v1578 = vld [vmem:[#allocation6 + $0xf78] sm:$0xff]
    %v1579 = vld [vmem:[#allocation6 + $0xf80] sm:$0xff]
    %v1580 = vld [vmem:[#allocation6 + $0xf88] sm:$0xff]
    %v1581 = vld [vmem:[#allocation6 + $0xf90] sm:$0xff]
    %v1582 = vld [vmem:[#allocation6 + $0xf98] sm:$0xff]
    %v1583 = vld [vmem:[#allocation6 + $0xfa0] sm:$0xff]
    %v1584 = vld [vmem:[#allocation6 + $0xfa8] sm:$0xff]
    %v1585 = vld [vmem:[#allocation6 + $0xfb0] sm:$0xff]
    %v1586 = vld [vmem:[#allocation6 + $0xfb8] sm:$0xff]
    %v1587 = vld [vmem:[#allocation6 + $0xfc0] sm:$0xff]
    %v1588 = vld [vmem:[#allocation6 + $0xfc8] sm:$0xff]
    %v1589 = vld [vmem:[#allocation6 + $0xfd0] sm:$0xff]
    %v1590 = vld [vmem:[#allocation6 + $0xfd8] sm:$0xff]
    %v1591 = vld [vmem:[#allocation6 + $0xfe0] sm:$0xff]
    %v1592 = vld [vmem:[#allocation6 + $0xfe8] sm:$0xff]
    %v1593 = vld [vmem:[#allocation6 + $0xff0] sm:$0xff]
    %v1594 = vld [vmem:[#allocation6 + $0xff8] sm:$0xff]
    %v1595 = vld [vmem:[#allocation6 + $0x1000] sm:$0xff]
    %v1596 = vld [vmem:[#allocation6 + $0x1008] sm:$0xff]
    %v1597 = vld [vmem:[#allocation6 + $0x1010] sm:$0xff]
    %v1598 = vld [vmem:[#allocation6 + $0x1018] sm:$0xff]
    %v1599 = vld [vmem:[#allocation6 + $0x1020] sm:$0xff]
    %v1600 = vld [vmem:[#allocation6 + $0x1028] sm:$0xff]
    %v1601 = vld [vmem:[#allocation6 + $0x1030] sm:$0xff]
    %v1602 = vld [vmem:[#allocation6 + $0x1038] sm:$0xff]
    %v1603 = vld [vmem:[#allocation6 + $0x1040] sm:$0xff]
    %v1604 = vld [vmem:[#allocation6 + $0x1048] sm:$0xff]
    %v1605 = vld [vmem:[#allocation6 + $0x1050] sm:$0xff]
    %v1606 = vld [vmem:[#allocation6 + $0x1058] sm:$0xff]
    %v1607 = vld [vmem:[#allocation6 + $0x1060] sm:$0xff]
    %v1608 = vld [vmem:[#allocation6 + $0x1068] sm:$0xff]
    %v1609 = vld [vmem:[#allocation6 + $0x1070] sm:$0xff]
    %v1610 = vld [vmem:[#allocation6 + $0x1078] sm:$0xff]
    %v1611 = vld [vmem:[#allocation6 + $0x1080] sm:$0xff]
    %v1612 = vld [vmem:[#allocation6 + $0x1088] sm:$0xff]
    %v1613 = vld [vmem:[#allocation6 + $0x1090] sm:$0xff]
    %v1614 = vld [vmem:[#allocation6 + $0x1098] sm:$0xff]
    %v1615 = vld [vmem:[#allocation6 + $0x10a0] sm:$0xff]
    %v1616 = vld [vmem:[#allocation6 + $0x10a8] sm:$0xff]
    %v1617 = vld [vmem:[#allocation6 + $0x10b0] sm:$0xff]
    %v1618 = vld [vmem:[#allocation6 + $0x10b8] sm:$0xff]
    %v1619 = vld [vmem:[#allocation6 + $0x10c0] sm:$0xff]
    %v1620 = vld [vmem:[#allocation6 + $0x10c8] sm:$0xff]
    %v1621 = vld [vmem:[#allocation6 + $0x10d0] sm:$0xff]
    %v1622 = vld [vmem:[#allocation6 + $0x10d8] sm:$0xff]
    %v1623 = vld [vmem:[#allocation6 + $0x10e0] sm:$0xff]
    %v1624 = vld [vmem:[#allocation6 + $0x10e8] sm:$0xff]
    %v1625 = vld [vmem:[#allocation6 + $0x10f0] sm:$0xff]
    %v1626 = vld [vmem:[#allocation6 + $0x10f8] sm:$0xff]
    %v1627 = vld [vmem:[#allocation6 + $0x1100] sm:$0xff]
    %v1628 = vld [vmem:[#allocation6 + $0x1108] sm:$0xff]
    %v1629 = vld [vmem:[#allocation6 + $0x1110] sm:$0xff]
    %v1630 = vld [vmem:[#allocation6 + $0x1118] sm:$0xff]
    %v1631 = vld [vmem:[#allocation6 + $0x1120] sm:$0xff]
    %v1632 = vld [vmem:[#allocation6 + $0x1128] sm:$0xff]
    %v1633 = vld [vmem:[#allocation6 + $0x1130] sm:$0xff]
    %v1634 = vld [vmem:[#allocation6 + $0x1138] sm:$0xff]
    %v1635 = vld [vmem:[#allocation6 + $0x1140] sm:$0xff]
    %v1636 = vld [vmem:[#allocation6 + $0x1148] sm:$0xff]
    %v1637 = vld [vmem:[#allocation6 + $0x1150] sm:$0xff]
    %v1638 = vld [vmem:[#allocation6 + $0x1158] sm:$0xff]
    %v1639 = vld [vmem:[#allocation6 + $0x1160] sm:$0xff]
    %v1640 = vld [vmem:[#allocation6 + $0x1168] sm:$0xff]
    %v1641 = vld [vmem:[#allocation6 + $0x1170] sm:$0xff]
    %v1642 = vld [vmem:[#allocation6 + $0x1178] sm:$0xff]
    %v1643 = vld [vmem:[#allocation6 + $0x1180] sm:$0xff]
    %v1644 = vld [vmem:[#allocation6 + $0x1188] sm:$0xff]
    %v1645 = vld [vmem:[#allocation6 + $0x1190] sm:$0xff]
    %v1646 = vld [vmem:[#allocation6 + $0x1198] sm:$0xff]
    %v1647 = vld [vmem:[#allocation6 + $0x11a0] sm:$0xff]
    %v1648 = vld [vmem:[#allocation6 + $0x11a8] sm:$0xff]
    %v1649 = vld [vmem:[#allocation6 + $0x11b0] sm:$0xff]
    %v1650 = vld [vmem:[#allocation6 + $0x11b8] sm:$0xff]
    %v1651 = vld [vmem:[#allocation6 + $0x11c0] sm:$0xff]
    %v1652 = vld [vmem:[#allocation6 + $0x11c8] sm:$0xff]
    %v1653 = vld [vmem:[#allocation6 + $0x11d0] sm:$0xff]
    %v1654 = vld [vmem:[#allocation6 + $0x11d8] sm:$0xff]
    %v1655 = vld [vmem:[#allocation6 + $0x11e0] sm:$0xff]
    %v1656 = vld [vmem:[#allocation6 + $0x11e8] sm:$0xff]
    %v1657 = vld [vmem:[#allocation6 + $0x11f0] sm:$0xff]
    %v1658 = vld [vmem:[#allocation6 + $0x11f8] sm:$0xff]
    %v1659 = vld [vmem:[#allocation6 + $0x1200] sm:$0xff]
    %v1660 = vld [vmem:[#allocation6 + $0x1208] sm:$0xff]
    %v1661 = vld [vmem:[#allocation6 + $0x1210] sm:$0xff]
    %v1662 = vld [vmem:[#allocation6 + $0x1218] sm:$0xff]
    %v1663 = vld [vmem:[#allocation6 + $0x1220] sm:$0xff]
    %v1664 = vld [vmem:[#allocation6 + $0x1228] sm:$0xff]
    %v1665 = vld [vmem:[#allocation6 + $0x1230] sm:$0xff]
    %v1666 = vld [vmem:[#allocation6 + $0x1238] sm:$0xff]
    %v1667 = vld [vmem:[#allocation6 + $0x1240] sm:$0xff]
    %v1668 = vld [vmem:[#allocation6 + $0x1248] sm:$0xff]
    %v1669 = vld [vmem:[#allocation6 + $0x1250] sm:$0xff]
    %v1670 = vld [vmem:[#allocation6 + $0x1258] sm:$0xff]
    %v1671 = vld [vmem:[#allocation6 + $0x1260] sm:$0xff]
    %v1672 = vld [vmem:[#allocation6 + $0x1268] sm:$0xff]
    %v1673 = vld [vmem:[#allocation6 + $0x1270] sm:$0xff]
    %v1674 = vld [vmem:[#allocation6 + $0x1278] sm:$0xff]
    %v1675 = vld [vmem:[#allocation6 + $0x1280] sm:$0xff]
    %v1676 = vld [vmem:[#allocation6 + $0x1288] sm:$0xff]
    %v1677 = vld [vmem:[#allocation6 + $0x1290] sm:$0xff]
    %v1678 = vld [vmem:[#allocation6 + $0x1298] sm:$0xff]
    %v1679 = vld [vmem:[#allocation6 + $0x12a0] sm:$0xff]
    %v1680 = vld [vmem:[#allocation6 + $0x12a8] sm:$0xff]
    %v1681 = vld [vmem:[#allocation6 + $0x12b0] sm:$0xff]
    %v1682 = vld [vmem:[#allocation6 + $0x12b8] sm:$0xff]
    %v1683 = vld [vmem:[#allocation6 + $0x12c0] sm:$0xff]
    %v1684 = vld [vmem:[#allocation6 + $0x12c8] sm:$0xff]
    %v1685 = vld [vmem:[#allocation6 + $0x12d0] sm:$0xff]
    %v1686 = vld [vmem:[#allocation6 + $0x12d8] sm:$0xff]
    %v1687 = vld [vmem:[#allocation6 + $0x12e0] sm:$0xff]
    %v1688 = vld [vmem:[#allocation6 + $0x12e8] sm:$0xff]
    %v1689 = vld [vmem:[#allocation6 + $0x12f0] sm:$0xff]
    %v1690 = vld [vmem:[#allocation6 + $0x12f8] sm:$0xff]
    %v1691 = vld [vmem:[#allocation6 + $0x1300] sm:$0xff]
    %v1692 = vld [vmem:[#allocation6 + $0x1308] sm:$0xff]
    %v1693 = vld [vmem:[#allocation6 + $0x1310] sm:$0xff]
    %v1694 = vld [vmem:[#allocation6 + $0x1318] sm:$0xff]
    %v1695 = vld [vmem:[#allocation6 + $0x1320] sm:$0xff]
    %v1696 = vld [vmem:[#allocation6 + $0x1328] sm:$0xff]
    %v1697 = vld [vmem:[#allocation6 + $0x1330] sm:$0xff]
    %v1698 = vld [vmem:[#allocation6 + $0x1338] sm:$0xff]
    %v1699 = vld [vmem:[#allocation6 + $0x1340] sm:$0xff]
    %v1700 = vld [vmem:[#allocation6 + $0x1348] sm:$0xff]
    %v1701 = vld [vmem:[#allocation6 + $0x1350] sm:$0xff]
    %v1702 = vld [vmem:[#allocation6 + $0x1358] sm:$0xff]
    %v1703 = vld [vmem:[#allocation6 + $0x1360] sm:$0xff]
    %v1704 = vld [vmem:[#allocation6 + $0x1368] sm:$0xff]
    %v1705 = vld [vmem:[#allocation6 + $0x1370] sm:$0xff]
    %v1706 = vld [vmem:[#allocation6 + $0x1378] sm:$0xff]
    %v1707 = vld [vmem:[#allocation6 + $0x1380] sm:$0xff]
    %v1708 = vld [vmem:[#allocation6 + $0x1388] sm:$0xff]
    %v1709 = vld [vmem:[#allocation6 + $0x1390] sm:$0xff]
    %v1710 = vld [vmem:[#allocation6 + $0x1398] sm:$0xff]
    %v1711 = vld [vmem:[#allocation6 + $0x13a0] sm:$0xff]
    %v1712 = vld [vmem:[#allocation6 + $0x13a8] sm:$0xff]
    %v1713 = vld [vmem:[#allocation6 + $0x13b0] sm:$0xff]
    %v1714 = vld [vmem:[#allocation6 + $0x13b8] sm:$0xff]
    %v1715 = vld [vmem:[#allocation6 + $0x13c0] sm:$0xff]
    %v1716 = vld [vmem:[#allocation6 + $0x13c8] sm:$0xff]
    %v1717 = vld [vmem:[#allocation6 + $0x13d0] sm:$0xff]
    %v1718 = vld [vmem:[#allocation6 + $0x13d8] sm:$0xff]
    %v1719 = vld [vmem:[#allocation6 + $0x13e0] sm:$0xff]
    %v1720 = vld [vmem:[#allocation6 + $0x13e8] sm:$0xff]
    %v1721 = vld [vmem:[#allocation6 + $0x13f0] sm:$0xff]
    %v1722 = vld [vmem:[#allocation6 + $0x13f8] sm:$0xff]
    %v1723 = vld [vmem:[#allocation6 + $0x1400] sm:$0xff]
    %v1724 = vld [vmem:[#allocation6 + $0x1408] sm:$0xff]
    %v1725 = vld [vmem:[#allocation6 + $0x1410] sm:$0xff]
    %v1726 = vld [vmem:[#allocation6 + $0x1418] sm:$0xff]
    %v1727 = vld [vmem:[#allocation6 + $0x1420] sm:$0xff]
    %v1728 = vld [vmem:[#allocation6 + $0x1428] sm:$0xff]
    %v1729 = vld [vmem:[#allocation6 + $0x1430] sm:$0xff]
    %v1730 = vld [vmem:[#allocation6 + $0x1438] sm:$0xff]
    %v1731 = vld [vmem:[#allocation6 + $0x1440] sm:$0xff]
    %v1732 = vld [vmem:[#allocation6 + $0x1448] sm:$0xff]
    %v1733 = vld [vmem:[#allocation6 + $0x1450] sm:$0xff]
    %v1734 = vld [vmem:[#allocation6 + $0x1458] sm:$0xff]
    %v1735 = vld [vmem:[#allocation6 + $0x1460] sm:$0xff]
    %v1736 = vld [vmem:[#allocation6 + $0x1468] sm:$0xff]
    %v1737 = vld [vmem:[#allocation6 + $0x1470] sm:$0xff]
    %v1738 = vld [vmem:[#allocation6 + $0x1478] sm:$0xff]
    %v1739 = vld [vmem:[#allocation6 + $0x1480] sm:$0xff]
    %v1740 = vld [vmem:[#allocation6 + $0x1488] sm:$0xff]
    %v1741 = vld [vmem:[#allocation6 + $0x1490] sm:$0xff]
    %v1742 = vld [vmem:[#allocation6 + $0x1498] sm:$0xff]
    %v1743 = vld [vmem:[#allocation6 + $0x14a0] sm:$0xff]
    %v1744 = vld [vmem:[#allocation6 + $0x14a8] sm:$0xff]
    %v1745 = vld [vmem:[#allocation6 + $0x14b0] sm:$0xff]
    %v1746 = vld [vmem:[#allocation6 + $0x14b8] sm:$0xff]
    %v1747 = vld [vmem:[#allocation6 + $0x14c0] sm:$0xff]
    %v1748 = vld [vmem:[#allocation6 + $0x14c8] sm:$0xff]
    %v1749 = vld [vmem:[#allocation6 + $0x14d0] sm:$0xff]
    %v1750 = vld [vmem:[#allocation6 + $0x14d8] sm:$0xff]
    %v1751 = vld [vmem:[#allocation6 + $0x14e0] sm:$0xff]
    %v1752 = vld [vmem:[#allocation6 + $0x14e8] sm:$0xff]
    %v1753 = vld [vmem:[#allocation6 + $0x14f0] sm:$0xff]
    %v1754 = vld [vmem:[#allocation6 + $0x14f8] sm:$0xff]
    %v1755 = vld [vmem:[#allocation6 + $0x1500] sm:$0xff]
    %v1756 = vld [vmem:[#allocation6 + $0x1508] sm:$0xff]
    %v1757 = vld [vmem:[#allocation6 + $0x1510] sm:$0xff]
    %v1758 = vld [vmem:[#allocation6 + $0x1518] sm:$0xff]
    %v1759 = vld [vmem:[#allocation6 + $0x1520] sm:$0xff]
    %v1760 = vld [vmem:[#allocation6 + $0x1528] sm:$0xff]
    %v1761 = vld [vmem:[#allocation6 + $0x1530] sm:$0xff]
    %v1762 = vld [vmem:[#allocation6 + $0x1538] sm:$0xff]
    %v1763 = vld [vmem:[#allocation6 + $0x1540] sm:$0xff]
    %v1764 = vld [vmem:[#allocation6 + $0x1548] sm:$0xff]
    %v1765 = vld [vmem:[#allocation6 + $0x1550] sm:$0xff]
    %v1766 = vld [vmem:[#allocation6 + $0x1558] sm:$0xff]
    %v1767 = vld [vmem:[#allocation6 + $0x1560] sm:$0xff]
    %v1768 = vld [vmem:[#allocation6 + $0x1568] sm:$0xff]
    %v1769 = vld [vmem:[#allocation6 + $0x1570] sm:$0xff]
    %v1770 = vld [vmem:[#allocation6 + $0x1578] sm:$0xff]
    %v1771 = vld [vmem:[#allocation6 + $0x1580] sm:$0xff]
    %v1772 = vld [vmem:[#allocation6 + $0x1588] sm:$0xff]
    %v1773 = vld [vmem:[#allocation6 + $0x1590] sm:$0xff]
    %v1774 = vld [vmem:[#allocation6 + $0x1598] sm:$0xff]
    %v1775 = vld [vmem:[#allocation6 + $0x15a0] sm:$0xff]
    %v1776 = vld [vmem:[#allocation6 + $0x15a8] sm:$0xff]
    %v1777 = vld [vmem:[#allocation6 + $0x15b0] sm:$0xff]
    %v1778 = vld [vmem:[#allocation6 + $0x15b8] sm:$0xff]
    %v1779 = vld [vmem:[#allocation6 + $0x15c0] sm:$0xff]
    %v1780 = vld [vmem:[#allocation6 + $0x15c8] sm:$0xff]
    %v1781 = vld [vmem:[#allocation6 + $0x15d0] sm:$0xff]
    %v1782 = vld [vmem:[#allocation6 + $0x15d8] sm:$0xff]
    %v1783 = vld [vmem:[#allocation6 + $0x15e0] sm:$0xff]
    %v1784 = vld [vmem:[#allocation6 + $0x15e8] sm:$0xff]
    %v1785 = vld [vmem:[#allocation6 + $0x15f0] sm:$0xff]
    %v1786 = vld [vmem:[#allocation6 + $0x15f8] sm:$0xff]
    %v1787 = vld [vmem:[#allocation6 + $0x1600] sm:$0xff]
    %v1788 = vld [vmem:[#allocation6 + $0x1608] sm:$0xff]
    %v1789 = vld [vmem:[#allocation6 + $0x1610] sm:$0xff]
    %v1790 = vld [vmem:[#allocation6 + $0x1618] sm:$0xff]
    %v1791 = vld [vmem:[#allocation6 + $0x1620] sm:$0xff]
    %v1792 = vld [vmem:[#allocation6 + $0x1628] sm:$0xff]
    %v1793 = vld [vmem:[#allocation6 + $0x1630] sm:$0xff]
    %v1794 = vld [vmem:[#allocation6 + $0x1638] sm:$0xff]
    %v1795 = vld [vmem:[#allocation6 + $0x1640] sm:$0xff]
    %v1796 = vld [vmem:[#allocation6 + $0x1648] sm:$0xff]
    %v1797 = vld [vmem:[#allocation6 + $0x1650] sm:$0xff]
    %v1798 = vld [vmem:[#allocation6 + $0x1658] sm:$0xff]
    %v1799 = vld [vmem:[#allocation6 + $0x1660] sm:$0xff]
    %v1800 = vld [vmem:[#allocation6 + $0x1668] sm:$0xff]
    %v1801 = vld [vmem:[#allocation6 + $0x1670] sm:$0xff]
    %v1802 = vld [vmem:[#allocation6 + $0x1678] sm:$0xff]
    %v1803 = vld [vmem:[#allocation6 + $0x1680] sm:$0xff]
    %v1804 = vld [vmem:[#allocation6 + $0x1688] sm:$0xff]
    %v1805 = vld [vmem:[#allocation6 + $0x1690] sm:$0xff]
    %v1806 = vld [vmem:[#allocation6 + $0x1698] sm:$0xff]
    %v1807 = vld [vmem:[#allocation6 + $0x16a0] sm:$0xff]
    %v1808 = vld [vmem:[#allocation6 + $0x16a8] sm:$0xff]
    %v1809 = vld [vmem:[#allocation6 + $0x16b0] sm:$0xff]
    %v1810 = vld [vmem:[#allocation6 + $0x16b8] sm:$0xff]
    %v1811 = vld [vmem:[#allocation6 + $0x16c0] sm:$0xff]
    %v1812 = vld [vmem:[#allocation6 + $0x16c8] sm:$0xff]
    %v1813 = vld [vmem:[#allocation6 + $0x16d0] sm:$0xff]
    %v1814 = vld [vmem:[#allocation6 + $0x16d8] sm:$0xff]
    %v1815 = vld [vmem:[#allocation6 + $0x16e0] sm:$0xff]
    %v1816 = vld [vmem:[#allocation6 + $0x16e8] sm:$0xff]
    %v1817 = vld [vmem:[#allocation6 + $0x16f0] sm:$0xff]
    %v1818 = vld [vmem:[#allocation6 + $0x16f8] sm:$0xff]
    %v1819 = vld [vmem:[#allocation6 + $0x1700] sm:$0xff]
    %v1820 = vld [vmem:[#allocation6 + $0x1708] sm:$0xff]
    %v1821 = vld [vmem:[#allocation6 + $0x1710] sm:$0xff]
    %v1822 = vld [vmem:[#allocation6 + $0x1718] sm:$0xff]
    %v1823 = vld [vmem:[#allocation6 + $0x1720] sm:$0xff]
    %v1824 = vld [vmem:[#allocation6 + $0x1728] sm:$0xff]
    %v1825 = vld [vmem:[#allocation6 + $0x1730] sm:$0xff]
    %v1826 = vld [vmem:[#allocation6 + $0x1738] sm:$0xff]
    %v1827 = vld [vmem:[#allocation6 + $0x1740] sm:$0xff]
    %v1828 = vld [vmem:[#allocation6 + $0x1748] sm:$0xff]
    %v1829 = vld [vmem:[#allocation6 + $0x1750] sm:$0xff]
    %v1830 = vld [vmem:[#allocation6 + $0x1758] sm:$0xff]
    %v1831 = vld [vmem:[#allocation6 + $0x1760] sm:$0xff]
    %v1832 = vld [vmem:[#allocation6 + $0x1768] sm:$0xff]
    %v1833 = vld [vmem:[#allocation6 + $0x1770] sm:$0xff]
    %v1834 = vld [vmem:[#allocation6 + $0x1778] sm:$0xff]
    %v1835 = vld [vmem:[#allocation6 + $0x1780] sm:$0xff]
    %v1836 = vld [vmem:[#allocation6 + $0x1788] sm:$0xff]
    %v1837 = vld [vmem:[#allocation6 + $0x1790] sm:$0xff]
    %v1838 = vld [vmem:[#allocation6 + $0x1798] sm:$0xff]
    %v1839 = vld [vmem:[#allocation6 + $0x17a0] sm:$0xff]
    %v1840 = vld [vmem:[#allocation6 + $0x17a8] sm:$0xff]
    %v1841 = vld [vmem:[#allocation6 + $0x17b0] sm:$0xff]
    %v1842 = vld [vmem:[#allocation6 + $0x17b8] sm:$0xff]
    %v1843 = vld [vmem:[#allocation6 + $0x17c0] sm:$0xff]
    %v1844 = vld [vmem:[#allocation6 + $0x17c8] sm:$0xff]
    %v1845 = vld [vmem:[#allocation6 + $0x17d0] sm:$0xff]
    %v1846 = vld [vmem:[#allocation6 + $0x17d8] sm:$0xff]
    %v1847 = vld [vmem:[#allocation6 + $0x17e0] sm:$0xff]
    %v1848 = vld [vmem:[#allocation6 + $0x17e8] sm:$0xff]
    %v1849 = vld [vmem:[#allocation6 + $0x17f0] sm:$0xff]
    %v1850 = vld [vmem:[#allocation6 + $0x17f8] sm:$0xff]
    %v1851 = vld [vmem:[#allocation6 + $0x1800] sm:$0xff]
    %v1852 = vld [vmem:[#allocation6 + $0x1808] sm:$0xff]
    %v1853 = vld [vmem:[#allocation6 + $0x1810] sm:$0xff]
    %v1854 = vld [vmem:[#allocation6 + $0x1818] sm:$0xff]
    %v1855 = vld [vmem:[#allocation6 + $0x1820] sm:$0xff]
    %v1856 = vld [vmem:[#allocation6 + $0x1828] sm:$0xff]
    %v1857 = vld [vmem:[#allocation6 + $0x1830] sm:$0xff]
    %v1858 = vld [vmem:[#allocation6 + $0x1838] sm:$0xff]
    %v1859 = vld [vmem:[#allocation6 + $0x1840] sm:$0xff]
    %v1860 = vld [vmem:[#allocation6 + $0x1848] sm:$0xff]
    %v1861 = vld [vmem:[#allocation6 + $0x1850] sm:$0xff]
    %v1862 = vld [vmem:[#allocation6 + $0x1858] sm:$0xff]
    %v1863 = vld [vmem:[#allocation6 + $0x1860] sm:$0xff]
    %v1864 = vld [vmem:[#allocation6 + $0x1868] sm:$0xff]
    %v1865 = vld [vmem:[#allocation6 + $0x1870] sm:$0xff]
    %v1866 = vld [vmem:[#allocation6 + $0x1878] sm:$0xff]
    %v1867 = vld [vmem:[#allocation6 + $0x1880] sm:$0xff]
    %v1868 = vld [vmem:[#allocation6 + $0x1888] sm:$0xff]
    %v1869 = vld [vmem:[#allocation6 + $0x1890] sm:$0xff]
    %v1870 = vld [vmem:[#allocation6 + $0x1898] sm:$0xff]
    %v1871 = vld [vmem:[#allocation6 + $0x18a0] sm:$0xff]
    %v1872 = vld [vmem:[#allocation6 + $0x18a8] sm:$0xff]
    %v1873 = vld [vmem:[#allocation6 + $0x18b0] sm:$0xff]
    %v1874 = vld [vmem:[#allocation6 + $0x18b8] sm:$0xff]
    %v1875 = vld [vmem:[#allocation6 + $0x18c0] sm:$0xff]
    %v1876 = vld [vmem:[#allocation6 + $0x18c8] sm:$0xff]
    %v1877 = vld [vmem:[#allocation6 + $0x18d0] sm:$0xff]
    %v1878 = vld [vmem:[#allocation6 + $0x18d8] sm:$0xff]
    %v1879 = vld [vmem:[#allocation6 + $0x18e0] sm:$0xff]
    %v1880 = vld [vmem:[#allocation6 + $0x18e8] sm:$0xff]
    %v1881 = vld [vmem:[#allocation6 + $0x18f0] sm:$0xff]
    %v1882 = vld [vmem:[#allocation6 + $0x18f8] sm:$0xff]
    %v1883 = vld [vmem:[#allocation6 + $0x1900] sm:$0xff]
    %v1884 = vld [vmem:[#allocation6 + $0x1908] sm:$0xff]
    %v1885 = vld [vmem:[#allocation6 + $0x1910] sm:$0xff]
    %v1886 = vld [vmem:[#allocation6 + $0x1918] sm:$0xff]
    %v1887 = vld [vmem:[#allocation6 + $0x1920] sm:$0xff]
    %v1888 = vld [vmem:[#allocation6 + $0x1928] sm:$0xff]
    %v1889 = vld [vmem:[#allocation6 + $0x1930] sm:$0xff]
    %v1890 = vld [vmem:[#allocation6 + $0x1938] sm:$0xff]
    %v1891 = vld [vmem:[#allocation6 + $0x1940] sm:$0xff]
    %v1892 = vld [vmem:[#allocation6 + $0x1948] sm:$0xff]
    %v1893 = vld [vmem:[#allocation6 + $0x1950] sm:$0xff]
    %v1894 = vld [vmem:[#allocation6 + $0x1958] sm:$0xff]
    %v1895 = vld [vmem:[#allocation6 + $0x1960] sm:$0xff]
    %v1896 = vld [vmem:[#allocation6 + $0x1968] sm:$0xff]
    %v1897 = vld [vmem:[#allocation6 + $0x1970] sm:$0xff]
    %v1898 = vld [vmem:[#allocation6 + $0x1978] sm:$0xff]
    %v1899 = vld [vmem:[#allocation6 + $0x1980] sm:$0xff]
    %v1900 = vld [vmem:[#allocation6 + $0x1988] sm:$0xff]
    %v1901 = vld [vmem:[#allocation6 + $0x1990] sm:$0xff]
    %v1902 = vld [vmem:[#allocation6 + $0x1998] sm:$0xff]
    %v1903 = vld [vmem:[#allocation6 + $0x19a0] sm:$0xff]
    %v1904 = vld [vmem:[#allocation6 + $0x19a8] sm:$0xff]
    %v1905 = vld [vmem:[#allocation6 + $0x19b0] sm:$0xff]
    %v1906 = vld [vmem:[#allocation6 + $0x19b8] sm:$0xff]
    %v1907 = vld [vmem:[#allocation6 + $0x19c0] sm:$0xff]
    %v1908 = vld [vmem:[#allocation6 + $0x19c8] sm:$0xff]
    %v1909 = vld [vmem:[#allocation6 + $0x19d0] sm:$0xff]
    %v1910 = vld [vmem:[#allocation6 + $0x19d8] sm:$0xff]
    %v1911 = vld [vmem:[#allocation6 + $0x19e0] sm:$0xff]
    %v1912 = vld [vmem:[#allocation6 + $0x19e8] sm:$0xff]
    %v1913 = vld [vmem:[#allocation6 + $0x19f0] sm:$0xff]
    %v1914 = vld [vmem:[#allocation6 + $0x19f8] sm:$0xff]
    %v1915 = vld [vmem:[#allocation6 + $0x1a00] sm:$0xff]
    %v1916 = vld [vmem:[#allocation6 + $0x1a08] sm:$0xff]
    %v1917 = vld [vmem:[#allocation6 + $0x1a10] sm:$0xff]
    %v1918 = vld [vmem:[#allocation6 + $0x1a18] sm:$0xff]
    %v1919 = vld [vmem:[#allocation6 + $0x1a20] sm:$0xff]
    %v1920 = vld [vmem:[#allocation6 + $0x1a28] sm:$0xff]
    %v1921 = vld [vmem:[#allocation6 + $0x1a30] sm:$0xff]
    %v1922 = vld [vmem:[#allocation6 + $0x1a38] sm:$0xff]
    %v1923 = vld [vmem:[#allocation6 + $0x1a40] sm:$0xff]
    %v1924 = vld [vmem:[#allocation6 + $0x1a48] sm:$0xff]
    %v1925 = vld [vmem:[#allocation6 + $0x1a50] sm:$0xff]
    %v1926 = vld [vmem:[#allocation6 + $0x1a58] sm:$0xff]
    %v1927 = vld [vmem:[#allocation6 + $0x1a60] sm:$0xff]
    %v1928 = vld [vmem:[#allocation6 + $0x1a68] sm:$0xff]
    %v1929 = vld [vmem:[#allocation6 + $0x1a70] sm:$0xff]
    %v1930 = vld [vmem:[#allocation6 + $0x1a78] sm:$0xff]
    %v1931 = vld [vmem:[#allocation6 + $0x1a80] sm:$0xff]
    %v1932 = vld [vmem:[#allocation6 + $0x1a88] sm:$0xff]
    %v1933 = vld [vmem:[#allocation6 + $0x1a90] sm:$0xff]
    %v1934 = vld [vmem:[#allocation6 + $0x1a98] sm:$0xff]
    %v1935 = vld [vmem:[#allocation6 + $0x1aa0] sm:$0xff]
    %v1936 = vld [vmem:[#allocation6 + $0x1aa8] sm:$0xff]
    %v1937 = vld [vmem:[#allocation6 + $0x1ab0] sm:$0xff]
    %v1938 = vld [vmem:[#allocation6 + $0x1ab8] sm:$0xff]
    %v1939 = vld [vmem:[#allocation6 + $0x1ac0] sm:$0xff]
    %v1940 = vld [vmem:[#allocation6 + $0x1ac8] sm:$0xff]
    %v1941 = vld [vmem:[#allocation6 + $0x1ad0] sm:$0xff]
    %v1942 = vld [vmem:[#allocation6 + $0x1ad8] sm:$0xff]
    %v1943 = vld [vmem:[#allocation6 + $0x1ae0] sm:$0xff]
    %v1944 = vld [vmem:[#allocation6 + $0x1ae8] sm:$0xff]
    %v1945 = vld [vmem:[#allocation6 + $0x1af0] sm:$0xff]
    %v1946 = vld [vmem:[#allocation6 + $0x1af8] sm:$0xff]
    %v1947 = vld [vmem:[#allocation6 + $0x1b00] sm:$0xff]
    %v1948 = vld [vmem:[#allocation6 + $0x1b08] sm:$0xff]
    %v1949 = vld [vmem:[#allocation6 + $0x1b10] sm:$0xff]
    %v1950 = vld [vmem:[#allocation6 + $0x1b18] sm:$0xff]
    %v1951 = vld [vmem:[#allocation6 + $0x1b20] sm:$0xff]
    %v1952 = vld [vmem:[#allocation6 + $0x1b28] sm:$0xff]
    %v1953 = vld [vmem:[#allocation6 + $0x1b30] sm:$0xff]
    %v1954 = vld [vmem:[#allocation6 + $0x1b38] sm:$0xff]
    %v1955 = vld [vmem:[#allocation6 + $0x1b40] sm:$0xff]
    %v1956 = vld [vmem:[#allocation6 + $0x1b48] sm:$0xff]
    %v1957 = vld [vmem:[#allocation6 + $0x1b50] sm:$0xff]
    %v1958 = vld [vmem:[#allocation6 + $0x1b58] sm:$0xff]
    %v1959 = vld [vmem:[#allocation6 + $0x1b60] sm:$0xff]
    %v1960 = vld [vmem:[#allocation6 + $0x1b68] sm:$0xff]
    %v1961 = vld [vmem:[#allocation6 + $0x1b70] sm:$0xff]
    %v1962 = vld [vmem:[#allocation6 + $0x1b78] sm:$0xff]
    %v1963 = vld [vmem:[#allocation6 + $0x1b80] sm:$0xff]
    %v1964 = vld [vmem:[#allocation6 + $0x1b88] sm:$0xff]
    %v1965 = vld [vmem:[#allocation6 + $0x1b90] sm:$0xff]
    %v1966 = vld [vmem:[#allocation6 + $0x1b98] sm:$0xff]
    %v1967 = vld [vmem:[#allocation6 + $0x1ba0] sm:$0xff]
    %v1968 = vld [vmem:[#allocation6 + $0x1ba8] sm:$0xff]
    %v1969 = vld [vmem:[#allocation6 + $0x1bb0] sm:$0xff]
    %v1970 = vld [vmem:[#allocation6 + $0x1bb8] sm:$0xff]
    %v1971 = vld [vmem:[#allocation6 + $0x1bc0] sm:$0xff]
    %v1972 = vld [vmem:[#allocation6 + $0x1bc8] sm:$0xff]
    %v1973 = vld [vmem:[#allocation6 + $0x1bd0] sm:$0xff]
    %v1974 = vld [vmem:[#allocation6 + $0x1bd8] sm:$0xff]
    %v1975 = vld [vmem:[#allocation6 + $0x1be0] sm:$0xff]
    %v1976 = vld [vmem:[#allocation6 + $0x1be8] sm:$0xff]
    %v1977 = vld [vmem:[#allocation6 + $0x1bf0] sm:$0xff]
    %v1978 = vld [vmem:[#allocation6 + $0x1bf8] sm:$0xff]
    %v1979 = vld [vmem:[#allocation6 + $0x1c00] sm:$0xff]
    %v1980 = vld [vmem:[#allocation6 + $0x1c08] sm:$0xff]
    %v1981 = vld [vmem:[#allocation6 + $0x1c10] sm:$0xff]
    %v1982 = vld [vmem:[#allocation6 + $0x1c18] sm:$0xff]
    %v1983 = vld [vmem:[#allocation6 + $0x1c20] sm:$0xff]
    %v1984 = vld [vmem:[#allocation6 + $0x1c28] sm:$0xff]
    %v1985 = vld [vmem:[#allocation6 + $0x1c30] sm:$0xff]
    %v1986 = vld [vmem:[#allocation6 + $0x1c38] sm:$0xff]
    %v1987 = vld [vmem:[#allocation6 + $0x1c40] sm:$0xff]
    %v1988 = vld [vmem:[#allocation6 + $0x1c48] sm:$0xff]
    %v1989 = vld [vmem:[#allocation6 + $0x1c50] sm:$0xff]
    %v1990 = vld [vmem:[#allocation6 + $0x1c58] sm:$0xff]
    %v1991 = vld [vmem:[#allocation6 + $0x1c60] sm:$0xff]
    %v1992 = vld [vmem:[#allocation6 + $0x1c68] sm:$0xff]
    %v1993 = vld [vmem:[#allocation6 + $0x1c70] sm:$0xff]
    %v1994 = vld [vmem:[#allocation6 + $0x1c78] sm:$0xff]
    %v1995 = vld [vmem:[#allocation6 + $0x1c80] sm:$0xff]
    %v1996 = vld [vmem:[#allocation6 + $0x1c88] sm:$0xff]
    %v1997 = vld [vmem:[#allocation6 + $0x1c90] sm:$0xff]
    %v1998 = vld [vmem:[#allocation6 + $0x1c98] sm:$0xff]
    %v1999 = vld [vmem:[#allocation6 + $0x1ca0] sm:$0xff]
    %v2000 = vld [vmem:[#allocation6 + $0x1ca8] sm:$0xff]
    %v2001 = vld [vmem:[#allocation6 + $0x1cb0] sm:$0xff]
    %v2002 = vld [vmem:[#allocation6 + $0x1cb8] sm:$0xff]
    %v2003 = vld [vmem:[#allocation6 + $0x1cc0] sm:$0xff]
    %v2004 = vld [vmem:[#allocation6 + $0x1cc8] sm:$0xff]
    %v2005 = vld [vmem:[#allocation6 + $0x1cd0] sm:$0xff]
    %v2006 = vld [vmem:[#allocation6 + $0x1cd8] sm:$0xff]
    %v2007 = vld [vmem:[#allocation6 + $0x1ce0] sm:$0xff]
    %v2008 = vld [vmem:[#allocation6 + $0x1ce8] sm:$0xff]
    %v2009 = vld [vmem:[#allocation6 + $0x1cf0] sm:$0xff]
    %v2010 = vld [vmem:[#allocation6 + $0x1cf8] sm:$0xff]
    %v2011 = vld [vmem:[#allocation6 + $0x1d00] sm:$0xff]
    %v2012 = vld [vmem:[#allocation6 + $0x1d08] sm:$0xff]
    %v2013 = vld [vmem:[#allocation6 + $0x1d10] sm:$0xff]
    %v2014 = vld [vmem:[#allocation6 + $0x1d18] sm:$0xff]
    %v2015 = vld [vmem:[#allocation6 + $0x1d20] sm:$0xff]
    %v2016 = vld [vmem:[#allocation6 + $0x1d28] sm:$0xff]
    %v2017 = vld [vmem:[#allocation6 + $0x1d30] sm:$0xff]
    %v2018 = vld [vmem:[#allocation6 + $0x1d38] sm:$0xff]
    %v2019 = vld [vmem:[#allocation6 + $0x1d40] sm:$0xff]
    %v2020 = vld [vmem:[#allocation6 + $0x1d48] sm:$0xff]
    %v2021 = vld [vmem:[#allocation6 + $0x1d50] sm:$0xff]
    %v2022 = vld [vmem:[#allocation6 + $0x1d58] sm:$0xff]
    %v2023 = vld [vmem:[#allocation6 + $0x1d60] sm:$0xff]
    %v2024 = vld [vmem:[#allocation6 + $0x1d68] sm:$0xff]
    %v2025 = vld [vmem:[#allocation6 + $0x1d70] sm:$0xff]
    %v2026 = vld [vmem:[#allocation6 + $0x1d78] sm:$0xff]
    %v2027 = vld [vmem:[#allocation6 + $0x1d80] sm:$0xff]
    %v2028 = vld [vmem:[#allocation6 + $0x1d88] sm:$0xff]
    %v2029 = vld [vmem:[#allocation6 + $0x1d90] sm:$0xff]
    %v2030 = vld [vmem:[#allocation6 + $0x1d98] sm:$0xff]
    %v2031 = vld [vmem:[#allocation6 + $0x1da0] sm:$0xff]
    %v2032 = vld [vmem:[#allocation6 + $0x1da8] sm:$0xff]
    %v2033 = vld [vmem:[#allocation6 + $0x1db0] sm:$0xff]
    %v2034 = vld [vmem:[#allocation6 + $0x1db8] sm:$0xff]
    %v2035 = vld [vmem:[#allocation6 + $0x1dc0] sm:$0xff]
    %v2036 = vld [vmem:[#allocation6 + $0x1dc8] sm:$0xff]
    %v2037 = vld [vmem:[#allocation6 + $0x1dd0] sm:$0xff]
    %v2038 = vld [vmem:[#allocation6 + $0x1dd8] sm:$0xff]
    %v2039 = vld [vmem:[#allocation6 + $0x1de0] sm:$0xff]
    %v2040 = vld [vmem:[#allocation6 + $0x1de8] sm:$0xff]
    %v2041 = vld [vmem:[#allocation6 + $0x1df0] sm:$0xff]
    %v2042 = vld [vmem:[#allocation6 + $0x1df8] sm:$0xff]
    %v2043 = vld [vmem:[#allocation6 + $0x1e00] sm:$0xff]
    %v2044 = vld [vmem:[#allocation6 + $0x1e08] sm:$0xff]
    %v2045 = vld [vmem:[#allocation6 + $0x1e10] sm:$0xff]
    %v2046 = vld [vmem:[#allocation6 + $0x1e18] sm:$0xff]
    %v2047 = vld [vmem:[#allocation6 + $0x1e20] sm:$0xff]
    %v2048 = vld [vmem:[#allocation6 + $0x1e28] sm:$0xff]
    %v2049 = vld [vmem:[#allocation6 + $0x1e30] sm:$0xff]
    %v2050 = vld [vmem:[#allocation6 + $0x1e38] sm:$0xff]
    %v2051 = vld [vmem:[#allocation6 + $0x1e40] sm:$0xff]
    %v2052 = vld [vmem:[#allocation6 + $0x1e48] sm:$0xff]
    %v2053 = vld [vmem:[#allocation6 + $0x1e50] sm:$0xff]
    %v2054 = vld [vmem:[#allocation6 + $0x1e58] sm:$0xff]
    %v2055 = vld [vmem:[#allocation6 + $0x1e60] sm:$0xff]
    %v2056 = vld [vmem:[#allocation6 + $0x1e68] sm:$0xff]
    %v2057 = vld [vmem:[#allocation6 + $0x1e70] sm:$0xff]
    %v2058 = vld [vmem:[#allocation6 + $0x1e78] sm:$0xff]
    %v2059 = vld [vmem:[#allocation6 + $0x1e80] sm:$0xff]
    %v2060 = vld [vmem:[#allocation6 + $0x1e88] sm:$0xff]
    %v2061 = vld [vmem:[#allocation6 + $0x1e90] sm:$0xff]
    %v2062 = vld [vmem:[#allocation6 + $0x1e98] sm:$0xff]
    %v2063 = vld [vmem:[#allocation6 + $0x1ea0] sm:$0xff]
    %v2064 = vld [vmem:[#allocation6 + $0x1ea8] sm:$0xff]
    %v2065 = vld [vmem:[#allocation6 + $0x1eb0] sm:$0xff]
    %v2066 = vld [vmem:[#allocation6 + $0x1eb8] sm:$0xff]
    %v2067 = vld [vmem:[#allocation6 + $0x1ec0] sm:$0xff]
    %v2068 = vld [vmem:[#allocation6 + $0x1ec8] sm:$0xff]
    %v2069 = vld [vmem:[#allocation6 + $0x1ed0] sm:$0xff]
    %v2070 = vld [vmem:[#allocation6 + $0x1ed8] sm:$0xff]
    %v2071 = vld [vmem:[#allocation6 + $0x1ee0] sm:$0xff]
    %v2072 = vld [vmem:[#allocation6 + $0x1ee8] sm:$0xff]
    %v2073 = vld [vmem:[#allocation6 + $0x1ef0] sm:$0xff]
    %v2074 = vld [vmem:[#allocation6 + $0x1ef8] sm:$0xff]
    %v2075 = vld [vmem:[#allocation6 + $0x1f00] sm:$0xff]
    %v2076 = vld [vmem:[#allocation6 + $0x1f08] sm:$0xff]
    %v2077 = vld [vmem:[#allocation6 + $0x1f10] sm:$0xff]
    %v2078 = vld [vmem:[#allocation6 + $0x1f18] sm:$0xff]
    %v2079 = vld [vmem:[#allocation6 + $0x1f20] sm:$0xff]
    %v2080 = vld [vmem:[#allocation6 + $0x1f28] sm:$0xff]
    %v2081 = vld [vmem:[#allocation6 + $0x1f30] sm:$0xff]
    %v2082 = vld [vmem:[#allocation6 + $0x1f38] sm:$0xff]
    %v2083 = vld [vmem:[#allocation6 + $0x1f40] sm:$0xff]
    %v2084 = vld [vmem:[#allocation6 + $0x1f48] sm:$0xff]
    %v2085 = vld [vmem:[#allocation6 + $0x1f50] sm:$0xff]
    %v2086 = vld [vmem:[#allocation6 + $0x1f58] sm:$0xff]
    %v2087 = vld [vmem:[#allocation6 + $0x1f60] sm:$0xff]
    %v2088 = vld [vmem:[#allocation6 + $0x1f68] sm:$0xff]
    %v2089 = vld [vmem:[#allocation6 + $0x1f70] sm:$0xff]
    %v2090 = vld [vmem:[#allocation6 + $0x1f78] sm:$0xff]
    %v2091 = vld [vmem:[#allocation6 + $0x1f80] sm:$0xff]
    %v2092 = vld [vmem:[#allocation6 + $0x1f88] sm:$0xff]
    %v2093 = vld [vmem:[#allocation6 + $0x1f90] sm:$0xff]
    %v2094 = vld [vmem:[#allocation6 + $0x1f98] sm:$0xff]
    %v2095 = vld [vmem:[#allocation6 + $0x1fa0] sm:$0xff]
    %v2096 = vld [vmem:[#allocation6 + $0x1fa8] sm:$0xff]
    %v2097 = vld [vmem:[#allocation6 + $0x1fb0] sm:$0xff]
    %v2098 = vld [vmem:[#allocation6 + $0x1fb8] sm:$0xff]
    %v2099 = vld [vmem:[#allocation6 + $0x1fc0] sm:$0xff]
    %v2100 = vld [vmem:[#allocation6 + $0x1fc8] sm:$0xff]
    %v2101 = vld [vmem:[#allocation6 + $0x1fd0] sm:$0xff]
    %v2102 = vld [vmem:[#allocation6 + $0x1fd8] sm:$0xff]
    %v2103 = vld [vmem:[#allocation6 + $0x1fe0] sm:$0xff]
    %v2104 = vld [vmem:[#allocation6 + $0x1fe8] sm:$0xff]
    %v2105 = vld [vmem:[#allocation6 + $0x1ff0] sm:$0xff]
    %v2106 = vld [vmem:[#allocation6 + $0x1ff8] sm:$0xff]
    %v2107 = vld [vmem:[#allocation7] sm:$0xff]
    %v2108 = vld [vmem:[#allocation7 + $0x8] sm:$0xff]
    %v2111 = vlaneseq
    %v2112 = vshrl.u32 %v2111, 7
    %v2113 = vsub.s32 0, %v2112
    %v2114 = vrot.slane %v2107, %v2113
    %v2115 = vlaneseq
    %v2116 = vshrl.u32 %v2115, 7
    %v2117 = vsub.s32 1, %v2116
    %v2118 = vrot.slane %v2107, %v2117
    %v2119 = vlaneseq
    %v2120 = vshrl.u32 %v2119, 7
    %v2121 = vsub.s32 2, %v2120
    %v2122 = vrot.slane %v2107, %v2121
    %v2123 = vlaneseq
    %v2124 = vshrl.u32 %v2123, 7
    %v2125 = vsub.s32 3, %v2124
    %v2126 = vrot.slane %v2107, %v2125
    %v2127 = vlaneseq
    %v2128 = vshrl.u32 %v2127, 7
    %v2129 = vsub.s32 4, %v2128
    %v2130 = vrot.slane %v2107, %v2129
    %v2131 = vlaneseq
    %v2132 = vshrl.u32 %v2131, 7
    %v2133 = vsub.s32 5, %v2132
    %v2134 = vrot.slane %v2107, %v2133
    %v2135 = vlaneseq
    %v2136 = vshrl.u32 %v2135, 7
    %v2137 = vsub.s32 6, %v2136
    %v2138 = vrot.slane %v2107, %v2137
    %v2139 = vlaneseq
    %v2140 = vshrl.u32 %v2139, 7
    %v2141 = vsub.s32 7, %v2140
    %v2142 = vrot.slane %v2107, %v2141
    %v2143 = vlaneseq
    %v2144 = vshrl.u32 %v2143, 7
    %v2145 = vsub.s32 0, %v2144
    %v2146 = vrot.slane %v2108, %v2145
    %v2147 = vlaneseq
    %v2148 = vshrl.u32 %v2147, 7
    %v2149 = vsub.s32 1, %v2148
    %v2150 = vrot.slane %v2108, %v2149
    %v2151 = vlaneseq
    %v2152 = vshrl.u32 %v2151, 7
    %v2153 = vsub.s32 2, %v2152
    %v2154 = vrot.slane %v2108, %v2153
    %v2155 = vlaneseq
    %v2156 = vshrl.u32 %v2155, 7
    %v2157 = vsub.s32 3, %v2156
    %v2158 = vrot.slane %v2108, %v2157
    %v2159 = vlaneseq
    %v2160 = vshrl.u32 %v2159, 7
    %v2161 = vsub.s32 4, %v2160
    %v2162 = vrot.slane %v2108, %v2161
    %v2163 = vlaneseq
    %v2164 = vshrl.u32 %v2163, 7
    %v2165 = vsub.s32 5, %v2164
    %v2166 = vrot.slane %v2108, %v2165
    %v2167 = vlaneseq
    %v2168 = vshrl.u32 %v2167, 7
    %v2169 = vsub.s32 6, %v2168
    %v2170 = vrot.slane %v2108, %v2169
    %v2171 = vlaneseq
    %v2172 = vshrl.u32 %v2171, 7
    %v2173 = vsub.s32 7, %v2172
    %v2174 = vrot.slane %v2108, %v2173
    %v3215 = vunpack.c.l.b16 %v1083
    %v3216 = vunpack.c.h.b16 %v1083
    %v3217 = vunpack.c.l.b16 %v1084
    %v3218 = vunpack.c.h.b16 %v1084
    %v3219 = vunpack.c.l.b16 %v1085
    %v3220 = vunpack.c.h.b16 %v1085
    %v3221 = vunpack.c.l.b16 %v1086
    %v3222 = vunpack.c.h.b16 %v1086
    %v3223 = vunpack.c.l.b16 %v1087
    %v3224 = vunpack.c.h.b16 %v1087
    %v3225 = vunpack.c.l.b16 %v1088
    %v3226 = vunpack.c.h.b16 %v1088
    %v3227 = vunpack.c.l.b16 %v1089
    %v3228 = vunpack.c.h.b16 %v1089
    %v3229 = vunpack.c.l.b16 %v1090
    %v3230 = vunpack.c.h.b16 %v1090
    %v3231 = vunpack.c.l.b16 %v1091
    %v3232 = vunpack.c.h.b16 %v1091
    %v3233 = vunpack.c.l.b16 %v1092
    %v3234 = vunpack.c.h.b16 %v1092
    %v3235 = vunpack.c.l.b16 %v1093
    %v3236 = vunpack.c.h.b16 %v1093
    %v3237 = vunpack.c.l.b16 %v1094
    %v3238 = vunpack.c.h.b16 %v1094
    %v3239 = vunpack.c.l.b16 %v1095
    %v3240 = vunpack.c.h.b16 %v1095
    %v3241 = vunpack.c.l.b16 %v1096
    %v3242 = vunpack.c.h.b16 %v1096
    %v3243 = vunpack.c.l.b16 %v1097
    %v3244 = vunpack.c.h.b16 %v1097
    %v3245 = vunpack.c.l.b16 %v1098
    %v3246 = vunpack.c.h.b16 %v1098
    %v3247 = vunpack.c.l.b16 %v1099
    %v3248 = vunpack.c.h.b16 %v1099
    %v3249 = vunpack.c.l.b16 %v1100
    %v3250 = vunpack.c.h.b16 %v1100
    %v3251 = vunpack.c.l.b16 %v1101
    %v3252 = vunpack.c.h.b16 %v1101
    %v3253 = vunpack.c.l.b16 %v1102
    %v3254 = vunpack.c.h.b16 %v1102
    %v3255 = vunpack.c.l.b16 %v1103
    %v3256 = vunpack.c.h.b16 %v1103
    %v3257 = vunpack.c.l.b16 %v1104
    %v3258 = vunpack.c.h.b16 %v1104
    %v3259 = vunpack.c.l.b16 %v1105
    %v3260 = vunpack.c.h.b16 %v1105
    %v3261 = vunpack.c.l.b16 %v1106
    %v3262 = vunpack.c.h.b16 %v1106
    %v3263 = vunpack.c.l.b16 %v1107
    %v3264 = vunpack.c.h.b16 %v1107
    %v3265 = vunpack.c.l.b16 %v1108
    %v3266 = vunpack.c.h.b16 %v1108
    %v3267 = vunpack.c.l.b16 %v1109
    %v3268 = vunpack.c.h.b16 %v1109
    %v3269 = vunpack.c.l.b16 %v1110
    %v3270 = vunpack.c.h.b16 %v1110
    %v3271 = vunpack.c.l.b16 %v1111
    %v3272 = vunpack.c.h.b16 %v1111
    %v3273 = vunpack.c.l.b16 %v1112
    %v3274 = vunpack.c.h.b16 %v1112
    %v3275 = vunpack.c.l.b16 %v1113
    %v3276 = vunpack.c.h.b16 %v1113
    %v3277 = vunpack.c.l.b16 %v1114
    %v3278 = vunpack.c.h.b16 %v1114
    %v3279 = vunpack.c.l.b16 %v1115
    %v3280 = vunpack.c.h.b16 %v1115
    %v3281 = vunpack.c.l.b16 %v1116
    %v3282 = vunpack.c.h.b16 %v1116
    %v3283 = vunpack.c.l.b16 %v1117
    %v3284 = vunpack.c.h.b16 %v1117
    %v3285 = vunpack.c.l.b16 %v1118
    %v3286 = vunpack.c.h.b16 %v1118
    %v3287 = vunpack.c.l.b16 %v1119
    %v3288 = vunpack.c.h.b16 %v1119
    %v3289 = vunpack.c.l.b16 %v1120
    %v3290 = vunpack.c.h.b16 %v1120
    %v3291 = vunpack.c.l.b16 %v1121
    %v3292 = vunpack.c.h.b16 %v1121
    %v3293 = vunpack.c.l.b16 %v1122
    %v3294 = vunpack.c.h.b16 %v1122
    %v3295 = vunpack.c.l.b16 %v1123
    %v3296 = vunpack.c.h.b16 %v1123
    %v3297 = vunpack.c.l.b16 %v1124
    %v3298 = vunpack.c.h.b16 %v1124
    %v3299 = vunpack.c.l.b16 %v1125
    %v3300 = vunpack.c.h.b16 %v1125
    %v3301 = vunpack.c.l.b16 %v1126
    %v3302 = vunpack.c.h.b16 %v1126
    %v3303 = vunpack.c.l.b16 %v1127
    %v3304 = vunpack.c.h.b16 %v1127
    %v3305 = vunpack.c.l.b16 %v1128
    %v3306 = vunpack.c.h.b16 %v1128
    %v3307 = vunpack.c.l.b16 %v1129
    %v3308 = vunpack.c.h.b16 %v1129
    %v3309 = vunpack.c.l.b16 %v1130
    %v3310 = vunpack.c.h.b16 %v1130
    %v3311 = vunpack.c.l.b16 %v1131
    %v3312 = vunpack.c.h.b16 %v1131
    %v3313 = vunpack.c.l.b16 %v1132
    %v3314 = vunpack.c.h.b16 %v1132
    %v3315 = vunpack.c.l.b16 %v1133
    %v3316 = vunpack.c.h.b16 %v1133
    %v3317 = vunpack.c.l.b16 %v1134
    %v3318 = vunpack.c.h.b16 %v1134
    %v3319 = vunpack.c.l.b16 %v1135
    %v3320 = vunpack.c.h.b16 %v1135
    %v3321 = vunpack.c.l.b16 %v1136
    %v3322 = vunpack.c.h.b16 %v1136
    %v3323 = vunpack.c.l.b16 %v1137
    %v3324 = vunpack.c.h.b16 %v1137
    %v3325 = vunpack.c.l.b16 %v1138
    %v3326 = vunpack.c.h.b16 %v1138
    %v3327 = vunpack.c.l.b16 %v1139
    %v3328 = vunpack.c.h.b16 %v1139
    %v3329 = vunpack.c.l.b16 %v1140
    %v3330 = vunpack.c.h.b16 %v1140
    %v3331 = vunpack.c.l.b16 %v1141
    %v3332 = vunpack.c.h.b16 %v1141
    %v3333 = vunpack.c.l.b16 %v1142
    %v3334 = vunpack.c.h.b16 %v1142
    %v3335 = vunpack.c.l.b16 %v1143
    %v3336 = vunpack.c.h.b16 %v1143
    %v3337 = vunpack.c.l.b16 %v1144
    %v3338 = vunpack.c.h.b16 %v1144
    %v3339 = vunpack.c.l.b16 %v1145
    %v3340 = vunpack.c.h.b16 %v1145
    %v3341 = vunpack.c.l.b16 %v1146
    %v3342 = vunpack.c.h.b16 %v1146
    %v3343 = vunpack.c.l.b16 %v1147
    %v3344 = vunpack.c.h.b16 %v1147
    %v3345 = vunpack.c.l.b16 %v1148
    %v3346 = vunpack.c.h.b16 %v1148
    %v3347 = vunpack.c.l.b16 %v1149
    %v3348 = vunpack.c.h.b16 %v1149
    %v3349 = vunpack.c.l.b16 %v1150
    %v3350 = vunpack.c.h.b16 %v1150
    %v3351 = vunpack.c.l.b16 %v1151
    %v3352 = vunpack.c.h.b16 %v1151
    %v3353 = vunpack.c.l.b16 %v1152
    %v3354 = vunpack.c.h.b16 %v1152
    %v3355 = vunpack.c.l.b16 %v1153
    %v3356 = vunpack.c.h.b16 %v1153
    %v3357 = vunpack.c.l.b16 %v1154
    %v3358 = vunpack.c.h.b16 %v1154
    %v3359 = vunpack.c.l.b16 %v1155
    %v3360 = vunpack.c.h.b16 %v1155
    %v3361 = vunpack.c.l.b16 %v1156
    %v3362 = vunpack.c.h.b16 %v1156
    %v3363 = vunpack.c.l.b16 %v1157
    %v3364 = vunpack.c.h.b16 %v1157
    %v3365 = vunpack.c.l.b16 %v1158
    %v3366 = vunpack.c.h.b16 %v1158
    %v3367 = vunpack.c.l.b16 %v1159
    %v3368 = vunpack.c.h.b16 %v1159
    %v3369 = vunpack.c.l.b16 %v1160
    %v3370 = vunpack.c.h.b16 %v1160
    %v3371 = vunpack.c.l.b16 %v1161
    %v3372 = vunpack.c.h.b16 %v1161
    %v3373 = vunpack.c.l.b16 %v1162
    %v3374 = vunpack.c.h.b16 %v1162
    %v3375 = vunpack.c.l.b16 %v1163
    %v3376 = vunpack.c.h.b16 %v1163
    %v3377 = vunpack.c.l.b16 %v1164
    %v3378 = vunpack.c.h.b16 %v1164
    %v3379 = vunpack.c.l.b16 %v1165
    %v3380 = vunpack.c.h.b16 %v1165
    %v3381 = vunpack.c.l.b16 %v1166
    %v3382 = vunpack.c.h.b16 %v1166
    %v3383 = vunpack.c.l.b16 %v1167
    %v3384 = vunpack.c.h.b16 %v1167
    %v3385 = vunpack.c.l.b16 %v1168
    %v3386 = vunpack.c.h.b16 %v1168
    %v3387 = vunpack.c.l.b16 %v1169
    %v3388 = vunpack.c.h.b16 %v1169
    %v3389 = vunpack.c.l.b16 %v1170
    %v3390 = vunpack.c.h.b16 %v1170
    %v3391 = vunpack.c.l.b16 %v1171
    %v3392 = vunpack.c.h.b16 %v1171
    %v3393 = vunpack.c.l.b16 %v1172
    %v3394 = vunpack.c.h.b16 %v1172
    %v3395 = vunpack.c.l.b16 %v1173
    %v3396 = vunpack.c.h.b16 %v1173
    %v3397 = vunpack.c.l.b16 %v1174
    %v3398 = vunpack.c.h.b16 %v1174
    %v3399 = vunpack.c.l.b16 %v1175
    %v3400 = vunpack.c.h.b16 %v1175
    %v3401 = vunpack.c.l.b16 %v1176
    %v3402 = vunpack.c.h.b16 %v1176
    %v3403 = vunpack.c.l.b16 %v1177
    %v3404 = vunpack.c.h.b16 %v1177
    %v3405 = vunpack.c.l.b16 %v1178
    %v3406 = vunpack.c.h.b16 %v1178
    %v3407 = vunpack.c.l.b16 %v1179
    %v3408 = vunpack.c.h.b16 %v1179
    %v3409 = vunpack.c.l.b16 %v1180
    %v3410 = vunpack.c.h.b16 %v1180
    %v3411 = vunpack.c.l.b16 %v1181
    %v3412 = vunpack.c.h.b16 %v1181
    %v3413 = vunpack.c.l.b16 %v1182
    %v3414 = vunpack.c.h.b16 %v1182
    %v3415 = vunpack.c.l.b16 %v1183
    %v3416 = vunpack.c.h.b16 %v1183
    %v3417 = vunpack.c.l.b16 %v1184
    %v3418 = vunpack.c.h.b16 %v1184
    %v3419 = vunpack.c.l.b16 %v1185
    %v3420 = vunpack.c.h.b16 %v1185
    %v3421 = vunpack.c.l.b16 %v1186
    %v3422 = vunpack.c.h.b16 %v1186
    %v3423 = vunpack.c.l.b16 %v1187
    %v3424 = vunpack.c.h.b16 %v1187
    %v3425 = vunpack.c.l.b16 %v1188
    %v3426 = vunpack.c.h.b16 %v1188
    %v3427 = vunpack.c.l.b16 %v1189
    %v3428 = vunpack.c.h.b16 %v1189
    %v3429 = vunpack.c.l.b16 %v1190
    %v3430 = vunpack.c.h.b16 %v1190
    %v3431 = vunpack.c.l.b16 %v1191
    %v3432 = vunpack.c.h.b16 %v1191
    %v3433 = vunpack.c.l.b16 %v1192
    %v3434 = vunpack.c.h.b16 %v1192
    %v3435 = vunpack.c.l.b16 %v1193
    %v3436 = vunpack.c.h.b16 %v1193
    %v3437 = vunpack.c.l.b16 %v1194
    %v3438 = vunpack.c.h.b16 %v1194
    %v3439 = vunpack.c.l.b16 %v1195
    %v3440 = vunpack.c.h.b16 %v1195
    %v3441 = vunpack.c.l.b16 %v1196
    %v3442 = vunpack.c.h.b16 %v1196
    %v3443 = vunpack.c.l.b16 %v1197
    %v3444 = vunpack.c.h.b16 %v1197
    %v3445 = vunpack.c.l.b16 %v1198
    %v3446 = vunpack.c.h.b16 %v1198
    %v3447 = vunpack.c.l.b16 %v1199
    %v3448 = vunpack.c.h.b16 %v1199
    %v3449 = vunpack.c.l.b16 %v1200
    %v3450 = vunpack.c.h.b16 %v1200
    %v3451 = vunpack.c.l.b16 %v1201
    %v3452 = vunpack.c.h.b16 %v1201
    %v3453 = vunpack.c.l.b16 %v1202
    %v3454 = vunpack.c.h.b16 %v1202
    %v3455 = vunpack.c.l.b16 %v1203
    %v3456 = vunpack.c.h.b16 %v1203
    %v3457 = vunpack.c.l.b16 %v1204
    %v3458 = vunpack.c.h.b16 %v1204
    %v3459 = vunpack.c.l.b16 %v1205
    %v3460 = vunpack.c.h.b16 %v1205
    %v3461 = vunpack.c.l.b16 %v1206
    %v3462 = vunpack.c.h.b16 %v1206
    %v3463 = vunpack.c.l.b16 %v1207
    %v3464 = vunpack.c.h.b16 %v1207
    %v3465 = vunpack.c.l.b16 %v1208
    %v3466 = vunpack.c.h.b16 %v1208
    %v3467 = vunpack.c.l.b16 %v1209
    %v3468 = vunpack.c.h.b16 %v1209
    %v3469 = vunpack.c.l.b16 %v1210
    %v3470 = vunpack.c.h.b16 %v1210
    %v3471 = vunpack.c.l.b16 %v1211
    %v3472 = vunpack.c.h.b16 %v1211
    %v3473 = vunpack.c.l.b16 %v1212
    %v3474 = vunpack.c.h.b16 %v1212
    %v3475 = vunpack.c.l.b16 %v1213
    %v3476 = vunpack.c.h.b16 %v1213
    %v3477 = vunpack.c.l.b16 %v1214
    %v3478 = vunpack.c.h.b16 %v1214
    %v3479 = vunpack.c.l.b16 %v1215
    %v3480 = vunpack.c.h.b16 %v1215
    %v3481 = vunpack.c.l.b16 %v1216
    %v3482 = vunpack.c.h.b16 %v1216
    %v3483 = vunpack.c.l.b16 %v1217
    %v3484 = vunpack.c.h.b16 %v1217
    %v3485 = vunpack.c.l.b16 %v1218
    %v3486 = vunpack.c.h.b16 %v1218
    %v3487 = vunpack.c.l.b16 %v1219
    %v3488 = vunpack.c.h.b16 %v1219
    %v3489 = vunpack.c.l.b16 %v1220
    %v3490 = vunpack.c.h.b16 %v1220
    %v3491 = vunpack.c.l.b16 %v1221
    %v3492 = vunpack.c.h.b16 %v1221
    %v3493 = vunpack.c.l.b16 %v1222
    %v3494 = vunpack.c.h.b16 %v1222
    %v3495 = vunpack.c.l.b16 %v1223
    %v3496 = vunpack.c.h.b16 %v1223
    %v3497 = vunpack.c.l.b16 %v1224
    %v3498 = vunpack.c.h.b16 %v1224
    %v3499 = vunpack.c.l.b16 %v1225
    %v3500 = vunpack.c.h.b16 %v1225
    %v3501 = vunpack.c.l.b16 %v1226
    %v3502 = vunpack.c.h.b16 %v1226
    %v3503 = vunpack.c.l.b16 %v1227
    %v3504 = vunpack.c.h.b16 %v1227
    %v3505 = vunpack.c.l.b16 %v1228
    %v3506 = vunpack.c.h.b16 %v1228
    %v3507 = vunpack.c.l.b16 %v1229
    %v3508 = vunpack.c.h.b16 %v1229
    %v3509 = vunpack.c.l.b16 %v1230
    %v3510 = vunpack.c.h.b16 %v1230
    %v3511 = vunpack.c.l.b16 %v1231
    %v3512 = vunpack.c.h.b16 %v1231
    %v3513 = vunpack.c.l.b16 %v1232
    %v3514 = vunpack.c.h.b16 %v1232
    %v3515 = vunpack.c.l.b16 %v1233
    %v3516 = vunpack.c.h.b16 %v1233
    %v3517 = vunpack.c.l.b16 %v1234
    %v3518 = vunpack.c.h.b16 %v1234
    %v3519 = vunpack.c.l.b16 %v1235
    %v3520 = vunpack.c.h.b16 %v1235
    %v3521 = vunpack.c.l.b16 %v1236
    %v3522 = vunpack.c.h.b16 %v1236
    %v3523 = vunpack.c.l.b16 %v1237
    %v3524 = vunpack.c.h.b16 %v1237
    %v3525 = vunpack.c.l.b16 %v1238
    %v3526 = vunpack.c.h.b16 %v1238
    %v3527 = vunpack.c.l.b16 %v1239
    %v3528 = vunpack.c.h.b16 %v1239
    %v3529 = vunpack.c.l.b16 %v1240
    %v3530 = vunpack.c.h.b16 %v1240
    %v3531 = vunpack.c.l.b16 %v1241
    %v3532 = vunpack.c.h.b16 %v1241
    %v3533 = vunpack.c.l.b16 %v1242
    %v3534 = vunpack.c.h.b16 %v1242
    %v3535 = vunpack.c.l.b16 %v1243
    %v3536 = vunpack.c.h.b16 %v1243
    %v3537 = vunpack.c.l.b16 %v1244
    %v3538 = vunpack.c.h.b16 %v1244
    %v3539 = vunpack.c.l.b16 %v1245
    %v3540 = vunpack.c.h.b16 %v1245
    %v3541 = vunpack.c.l.b16 %v1246
    %v3542 = vunpack.c.h.b16 %v1246
    %v3543 = vunpack.c.l.b16 %v1247
    %v3544 = vunpack.c.h.b16 %v1247
    %v3545 = vunpack.c.l.b16 %v1248
    %v3546 = vunpack.c.h.b16 %v1248
    %v3547 = vunpack.c.l.b16 %v1249
    %v3548 = vunpack.c.h.b16 %v1249
    %v3549 = vunpack.c.l.b16 %v1250
    %v3550 = vunpack.c.h.b16 %v1250
    %v3551 = vunpack.c.l.b16 %v1251
    %v3552 = vunpack.c.h.b16 %v1251
    %v3553 = vunpack.c.l.b16 %v1252
    %v3554 = vunpack.c.h.b16 %v1252
    %v3555 = vunpack.c.l.b16 %v1253
    %v3556 = vunpack.c.h.b16 %v1253
    %v3557 = vunpack.c.l.b16 %v1254
    %v3558 = vunpack.c.h.b16 %v1254
    %v3559 = vunpack.c.l.b16 %v1255
    %v3560 = vunpack.c.h.b16 %v1255
    %v3561 = vunpack.c.l.b16 %v1256
    %v3562 = vunpack.c.h.b16 %v1256
    %v3563 = vunpack.c.l.b16 %v1257
    %v3564 = vunpack.c.h.b16 %v1257
    %v3565 = vunpack.c.l.b16 %v1258
    %v3566 = vunpack.c.h.b16 %v1258
    %v3567 = vunpack.c.l.b16 %v1259
    %v3568 = vunpack.c.h.b16 %v1259
    %v3569 = vunpack.c.l.b16 %v1260
    %v3570 = vunpack.c.h.b16 %v1260
    %v3571 = vunpack.c.l.b16 %v1261
    %v3572 = vunpack.c.h.b16 %v1261
    %v3573 = vunpack.c.l.b16 %v1262
    %v3574 = vunpack.c.h.b16 %v1262
    %v3575 = vunpack.c.l.b16 %v1263
    %v3576 = vunpack.c.h.b16 %v1263
    %v3577 = vunpack.c.l.b16 %v1264
    %v3578 = vunpack.c.h.b16 %v1264
    %v3579 = vunpack.c.l.b16 %v1265
    %v3580 = vunpack.c.h.b16 %v1265
    %v3581 = vunpack.c.l.b16 %v1266
    %v3582 = vunpack.c.h.b16 %v1266
    %v3583 = vunpack.c.l.b16 %v1267
    %v3584 = vunpack.c.h.b16 %v1267
    %v3585 = vunpack.c.l.b16 %v1268
    %v3586 = vunpack.c.h.b16 %v1268
    %v3587 = vunpack.c.l.b16 %v1269
    %v3588 = vunpack.c.h.b16 %v1269
    %v3589 = vunpack.c.l.b16 %v1270
    %v3590 = vunpack.c.h.b16 %v1270
    %v3591 = vunpack.c.l.b16 %v1271
    %v3592 = vunpack.c.h.b16 %v1271
    %v3593 = vunpack.c.l.b16 %v1272
    %v3594 = vunpack.c.h.b16 %v1272
    %v3595 = vunpack.c.l.b16 %v1273
    %v3596 = vunpack.c.h.b16 %v1273
    %v3597 = vunpack.c.l.b16 %v1274
    %v3598 = vunpack.c.h.b16 %v1274
    %v3599 = vunpack.c.l.b16 %v1275
    %v3600 = vunpack.c.h.b16 %v1275
    %v3601 = vunpack.c.l.b16 %v1276
    %v3602 = vunpack.c.h.b16 %v1276
    %v3603 = vunpack.c.l.b16 %v1277
    %v3604 = vunpack.c.h.b16 %v1277
    %v3605 = vunpack.c.l.b16 %v1278
    %v3606 = vunpack.c.h.b16 %v1278
    %v3607 = vunpack.c.l.b16 %v1279
    %v3608 = vunpack.c.h.b16 %v1279
    %v3609 = vunpack.c.l.b16 %v1280
    %v3610 = vunpack.c.h.b16 %v1280
    %v3611 = vunpack.c.l.b16 %v1281
    %v3612 = vunpack.c.h.b16 %v1281
    %v3613 = vunpack.c.l.b16 %v1282
    %v3614 = vunpack.c.h.b16 %v1282
    %v3615 = vunpack.c.l.b16 %v1283
    %v3616 = vunpack.c.h.b16 %v1283
    %v3617 = vunpack.c.l.b16 %v1284
    %v3618 = vunpack.c.h.b16 %v1284
    %v3619 = vunpack.c.l.b16 %v1285
    %v3620 = vunpack.c.h.b16 %v1285
    %v3621 = vunpack.c.l.b16 %v1286
    %v3622 = vunpack.c.h.b16 %v1286
    %v3623 = vunpack.c.l.b16 %v1287
    %v3624 = vunpack.c.h.b16 %v1287
    %v3625 = vunpack.c.l.b16 %v1288
    %v3626 = vunpack.c.h.b16 %v1288
    %v3627 = vunpack.c.l.b16 %v1289
    %v3628 = vunpack.c.h.b16 %v1289
    %v3629 = vunpack.c.l.b16 %v1290
    %v3630 = vunpack.c.h.b16 %v1290
    %v3631 = vunpack.c.l.b16 %v1291
    %v3632 = vunpack.c.h.b16 %v1291
    %v3633 = vunpack.c.l.b16 %v1292
    %v3634 = vunpack.c.h.b16 %v1292
    %v3635 = vunpack.c.l.b16 %v1293
    %v3636 = vunpack.c.h.b16 %v1293
    %v3637 = vunpack.c.l.b16 %v1294
    %v3638 = vunpack.c.h.b16 %v1294
    %v3639 = vunpack.c.l.b16 %v1295
    %v3640 = vunpack.c.h.b16 %v1295
    %v3641 = vunpack.c.l.b16 %v1296
    %v3642 = vunpack.c.h.b16 %v1296
    %v3643 = vunpack.c.l.b16 %v1297
    %v3644 = vunpack.c.h.b16 %v1297
    %v3645 = vunpack.c.l.b16 %v1298
    %v3646 = vunpack.c.h.b16 %v1298
    %v3647 = vunpack.c.l.b16 %v1299
    %v3648 = vunpack.c.h.b16 %v1299
    %v3649 = vunpack.c.l.b16 %v1300
    %v3650 = vunpack.c.h.b16 %v1300
    %v3651 = vunpack.c.l.b16 %v1301
    %v3652 = vunpack.c.h.b16 %v1301
    %v3653 = vunpack.c.l.b16 %v1302
    %v3654 = vunpack.c.h.b16 %v1302
    %v3655 = vunpack.c.l.b16 %v1303
    %v3656 = vunpack.c.h.b16 %v1303
    %v3657 = vunpack.c.l.b16 %v1304
    %v3658 = vunpack.c.h.b16 %v1304
    %v3659 = vunpack.c.l.b16 %v1305
    %v3660 = vunpack.c.h.b16 %v1305
    %v3661 = vunpack.c.l.b16 %v1306
    %v3662 = vunpack.c.h.b16 %v1306
    %v3663 = vunpack.c.l.b16 %v1307
    %v3664 = vunpack.c.h.b16 %v1307
    %v3665 = vunpack.c.l.b16 %v1308
    %v3666 = vunpack.c.h.b16 %v1308
    %v3667 = vunpack.c.l.b16 %v1309
    %v3668 = vunpack.c.h.b16 %v1309
    %v3669 = vunpack.c.l.b16 %v1310
    %v3670 = vunpack.c.h.b16 %v1310
    %v3671 = vunpack.c.l.b16 %v1311
    %v3672 = vunpack.c.h.b16 %v1311
    %v3673 = vunpack.c.l.b16 %v1312
    %v3674 = vunpack.c.h.b16 %v1312
    %v3675 = vunpack.c.l.b16 %v1313
    %v3676 = vunpack.c.h.b16 %v1313
    %v3677 = vunpack.c.l.b16 %v1314
    %v3678 = vunpack.c.h.b16 %v1314
    %v3679 = vunpack.c.l.b16 %v1315
    %v3680 = vunpack.c.h.b16 %v1315
    %v3681 = vunpack.c.l.b16 %v1316
    %v3682 = vunpack.c.h.b16 %v1316
    %v3683 = vunpack.c.l.b16 %v1317
    %v3684 = vunpack.c.h.b16 %v1317
    %v3685 = vunpack.c.l.b16 %v1318
    %v3686 = vunpack.c.h.b16 %v1318
    %v3687 = vunpack.c.l.b16 %v1319
    %v3688 = vunpack.c.h.b16 %v1319
    %v3689 = vunpack.c.l.b16 %v1320
    %v3690 = vunpack.c.h.b16 %v1320
    %v3691 = vunpack.c.l.b16 %v1321
    %v3692 = vunpack.c.h.b16 %v1321
    %v3693 = vunpack.c.l.b16 %v1322
    %v3694 = vunpack.c.h.b16 %v1322
    %v3695 = vunpack.c.l.b16 %v1323
    %v3696 = vunpack.c.h.b16 %v1323
    %v3697 = vunpack.c.l.b16 %v1324
    %v3698 = vunpack.c.h.b16 %v1324
    %v3699 = vunpack.c.l.b16 %v1325
    %v3700 = vunpack.c.h.b16 %v1325
    %v3701 = vunpack.c.l.b16 %v1326
    %v3702 = vunpack.c.h.b16 %v1326
    %v3703 = vunpack.c.l.b16 %v1327
    %v3704 = vunpack.c.h.b16 %v1327
    %v3705 = vunpack.c.l.b16 %v1328
    %v3706 = vunpack.c.h.b16 %v1328
    %v3707 = vunpack.c.l.b16 %v1329
    %v3708 = vunpack.c.h.b16 %v1329
    %v3709 = vunpack.c.l.b16 %v1330
    %v3710 = vunpack.c.h.b16 %v1330
    %v3711 = vunpack.c.l.b16 %v1331
    %v3712 = vunpack.c.h.b16 %v1331
    %v3713 = vunpack.c.l.b16 %v1332
    %v3714 = vunpack.c.h.b16 %v1332
    %v3715 = vunpack.c.l.b16 %v1333
    %v3716 = vunpack.c.h.b16 %v1333
    %v3717 = vunpack.c.l.b16 %v1334
    %v3718 = vunpack.c.h.b16 %v1334
    %v3719 = vunpack.c.l.b16 %v1335
    %v3720 = vunpack.c.h.b16 %v1335
    %v3721 = vunpack.c.l.b16 %v1336
    %v3722 = vunpack.c.h.b16 %v1336
    %v3723 = vunpack.c.l.b16 %v1337
    %v3724 = vunpack.c.h.b16 %v1337
    %v3725 = vunpack.c.l.b16 %v1338
    %v3726 = vunpack.c.h.b16 %v1338
    %v3727 = vunpack.c.l.b16 %v1339
    %v3728 = vunpack.c.h.b16 %v1339
    %v3729 = vunpack.c.l.b16 %v1340
    %v3730 = vunpack.c.h.b16 %v1340
    %v3731 = vunpack.c.l.b16 %v1341
    %v3732 = vunpack.c.h.b16 %v1341
    %v3733 = vunpack.c.l.b16 %v1342
    %v3734 = vunpack.c.h.b16 %v1342
    %v3735 = vunpack.c.l.b16 %v1343
    %v3736 = vunpack.c.h.b16 %v1343
    %v3737 = vunpack.c.l.b16 %v1344
    %v3738 = vunpack.c.h.b16 %v1344
    %v3739 = vunpack.c.l.b16 %v1345
    %v3740 = vunpack.c.h.b16 %v1345
    %v3741 = vunpack.c.l.b16 %v1346
    %v3742 = vunpack.c.h.b16 %v1346
    %v3743 = vunpack.c.l.b16 %v1347
    %v3744 = vunpack.c.h.b16 %v1347
    %v3745 = vunpack.c.l.b16 %v1348
    %v3746 = vunpack.c.h.b16 %v1348
    %v3747 = vunpack.c.l.b16 %v1349
    %v3748 = vunpack.c.h.b16 %v1349
    %v3749 = vunpack.c.l.b16 %v1350
    %v3750 = vunpack.c.h.b16 %v1350
    %v3751 = vunpack.c.l.b16 %v1351
    %v3752 = vunpack.c.h.b16 %v1351
    %v3753 = vunpack.c.l.b16 %v1352
    %v3754 = vunpack.c.h.b16 %v1352
    %v3755 = vunpack.c.l.b16 %v1353
    %v3756 = vunpack.c.h.b16 %v1353
    %v3757 = vunpack.c.l.b16 %v1354
    %v3758 = vunpack.c.h.b16 %v1354
    %v3759 = vunpack.c.l.b16 %v1355
    %v3760 = vunpack.c.h.b16 %v1355
    %v3761 = vunpack.c.l.b16 %v1356
    %v3762 = vunpack.c.h.b16 %v1356
    %v3763 = vunpack.c.l.b16 %v1357
    %v3764 = vunpack.c.h.b16 %v1357
    %v3765 = vunpack.c.l.b16 %v1358
    %v3766 = vunpack.c.h.b16 %v1358
    %v3767 = vunpack.c.l.b16 %v1359
    %v3768 = vunpack.c.h.b16 %v1359
    %v3769 = vunpack.c.l.b16 %v1360
    %v3770 = vunpack.c.h.b16 %v1360
    %v3771 = vunpack.c.l.b16 %v1361
    %v3772 = vunpack.c.h.b16 %v1361
    %v3773 = vunpack.c.l.b16 %v1362
    %v3774 = vunpack.c.h.b16 %v1362
    %v3775 = vunpack.c.l.b16 %v1363
    %v3776 = vunpack.c.h.b16 %v1363
    %v3777 = vunpack.c.l.b16 %v1364
    %v3778 = vunpack.c.h.b16 %v1364
    %v3779 = vunpack.c.l.b16 %v1365
    %v3780 = vunpack.c.h.b16 %v1365
    %v3781 = vunpack.c.l.b16 %v1366
    %v3782 = vunpack.c.h.b16 %v1366
    %v3783 = vunpack.c.l.b16 %v1367
    %v3784 = vunpack.c.h.b16 %v1367
    %v3785 = vunpack.c.l.b16 %v1368
    %v3786 = vunpack.c.h.b16 %v1368
    %v3787 = vunpack.c.l.b16 %v1369
    %v3788 = vunpack.c.h.b16 %v1369
    %v3789 = vunpack.c.l.b16 %v1370
    %v3790 = vunpack.c.h.b16 %v1370
    %v3791 = vunpack.c.l.b16 %v1371
    %v3792 = vunpack.c.h.b16 %v1371
    %v3793 = vunpack.c.l.b16 %v1372
    %v3794 = vunpack.c.h.b16 %v1372
    %v3795 = vunpack.c.l.b16 %v1373
    %v3796 = vunpack.c.h.b16 %v1373
    %v3797 = vunpack.c.l.b16 %v1374
    %v3798 = vunpack.c.h.b16 %v1374
    %v3799 = vunpack.c.l.b16 %v1375
    %v3800 = vunpack.c.h.b16 %v1375
    %v3801 = vunpack.c.l.b16 %v1376
    %v3802 = vunpack.c.h.b16 %v1376
    %v3803 = vunpack.c.l.b16 %v1377
    %v3804 = vunpack.c.h.b16 %v1377
    %v3805 = vunpack.c.l.b16 %v1378
    %v3806 = vunpack.c.h.b16 %v1378
    %v3807 = vunpack.c.l.b16 %v1379
    %v3808 = vunpack.c.h.b16 %v1379
    %v3809 = vunpack.c.l.b16 %v1380
    %v3810 = vunpack.c.h.b16 %v1380
    %v3811 = vunpack.c.l.b16 %v1381
    %v3812 = vunpack.c.h.b16 %v1381
    %v3813 = vunpack.c.l.b16 %v1382
    %v3814 = vunpack.c.h.b16 %v1382
    %v3815 = vunpack.c.l.b16 %v1383
    %v3816 = vunpack.c.h.b16 %v1383
    %v3817 = vunpack.c.l.b16 %v1384
    %v3818 = vunpack.c.h.b16 %v1384
    %v3819 = vunpack.c.l.b16 %v1385
    %v3820 = vunpack.c.h.b16 %v1385
    %v3821 = vunpack.c.l.b16 %v1386
    %v3822 = vunpack.c.h.b16 %v1386
    %v3823 = vunpack.c.l.b16 %v1387
    %v3824 = vunpack.c.h.b16 %v1387
    %v3825 = vunpack.c.l.b16 %v1388
    %v3826 = vunpack.c.h.b16 %v1388
    %v3827 = vunpack.c.l.b16 %v1389
    %v3828 = vunpack.c.h.b16 %v1389
    %v3829 = vunpack.c.l.b16 %v1390
    %v3830 = vunpack.c.h.b16 %v1390
    %v3831 = vunpack.c.l.b16 %v1391
    %v3832 = vunpack.c.h.b16 %v1391
    %v3833 = vunpack.c.l.b16 %v1392
    %v3834 = vunpack.c.h.b16 %v1392
    %v3835 = vunpack.c.l.b16 %v1393
    %v3836 = vunpack.c.h.b16 %v1393
    %v3837 = vunpack.c.l.b16 %v1394
    %v3838 = vunpack.c.h.b16 %v1394
    %v3839 = vunpack.c.l.b16 %v1395
    %v3840 = vunpack.c.h.b16 %v1395
    %v3841 = vunpack.c.l.b16 %v1396
    %v3842 = vunpack.c.h.b16 %v1396
    %v3843 = vunpack.c.l.b16 %v1397
    %v3844 = vunpack.c.h.b16 %v1397
    %v3845 = vunpack.c.l.b16 %v1398
    %v3846 = vunpack.c.h.b16 %v1398
    %v3847 = vunpack.c.l.b16 %v1399
    %v3848 = vunpack.c.h.b16 %v1399
    %v3849 = vunpack.c.l.b16 %v1400
    %v3850 = vunpack.c.h.b16 %v1400
    %v3851 = vunpack.c.l.b16 %v1401
    %v3852 = vunpack.c.h.b16 %v1401
    %v3853 = vunpack.c.l.b16 %v1402
    %v3854 = vunpack.c.h.b16 %v1402
    %v3855 = vunpack.c.l.b16 %v1403
    %v3856 = vunpack.c.h.b16 %v1403
    %v3857 = vunpack.c.l.b16 %v1404
    %v3858 = vunpack.c.h.b16 %v1404
    %v3859 = vunpack.c.l.b16 %v1405
    %v3860 = vunpack.c.h.b16 %v1405
    %v3861 = vunpack.c.l.b16 %v1406
    %v3862 = vunpack.c.h.b16 %v1406
    %v3863 = vunpack.c.l.b16 %v1407
    %v3864 = vunpack.c.h.b16 %v1407
    %v3865 = vunpack.c.l.b16 %v1408
    %v3866 = vunpack.c.h.b16 %v1408
    %v3867 = vunpack.c.l.b16 %v1409
    %v3868 = vunpack.c.h.b16 %v1409
    %v3869 = vunpack.c.l.b16 %v1410
    %v3870 = vunpack.c.h.b16 %v1410
    %v3871 = vunpack.c.l.b16 %v1411
    %v3872 = vunpack.c.h.b16 %v1411
    %v3873 = vunpack.c.l.b16 %v1412
    %v3874 = vunpack.c.h.b16 %v1412
    %v3875 = vunpack.c.l.b16 %v1413
    %v3876 = vunpack.c.h.b16 %v1413
    %v3877 = vunpack.c.l.b16 %v1414
    %v3878 = vunpack.c.h.b16 %v1414
    %v3879 = vunpack.c.l.b16 %v1415
    %v3880 = vunpack.c.h.b16 %v1415
    %v3881 = vunpack.c.l.b16 %v1416
    %v3882 = vunpack.c.h.b16 %v1416
    %v3883 = vunpack.c.l.b16 %v1417
    %v3884 = vunpack.c.h.b16 %v1417
    %v3885 = vunpack.c.l.b16 %v1418
    %v3886 = vunpack.c.h.b16 %v1418
    %v3887 = vunpack.c.l.b16 %v1419
    %v3888 = vunpack.c.h.b16 %v1419
    %v3889 = vunpack.c.l.b16 %v1420
    %v3890 = vunpack.c.h.b16 %v1420
    %v3891 = vunpack.c.l.b16 %v1421
    %v3892 = vunpack.c.h.b16 %v1421
    %v3893 = vunpack.c.l.b16 %v1422
    %v3894 = vunpack.c.h.b16 %v1422
    %v3895 = vunpack.c.l.b16 %v1423
    %v3896 = vunpack.c.h.b16 %v1423
    %v3897 = vunpack.c.l.b16 %v1424
    %v3898 = vunpack.c.h.b16 %v1424
    %v3899 = vunpack.c.l.b16 %v1425
    %v3900 = vunpack.c.h.b16 %v1425
    %v3901 = vunpack.c.l.b16 %v1426
    %v3902 = vunpack.c.h.b16 %v1426
    %v3903 = vunpack.c.l.b16 %v1427
    %v3904 = vunpack.c.h.b16 %v1427
    %v3905 = vunpack.c.l.b16 %v1428
    %v3906 = vunpack.c.h.b16 %v1428
    %v3907 = vunpack.c.l.b16 %v1429
    %v3908 = vunpack.c.h.b16 %v1429
    %v3909 = vunpack.c.l.b16 %v1430
    %v3910 = vunpack.c.h.b16 %v1430
    %v3911 = vunpack.c.l.b16 %v1431
    %v3912 = vunpack.c.h.b16 %v1431
    %v3913 = vunpack.c.l.b16 %v1432
    %v3914 = vunpack.c.h.b16 %v1432
    %v3915 = vunpack.c.l.b16 %v1433
    %v3916 = vunpack.c.h.b16 %v1433
    %v3917 = vunpack.c.l.b16 %v1434
    %v3918 = vunpack.c.h.b16 %v1434
    %v3919 = vunpack.c.l.b16 %v1435
    %v3920 = vunpack.c.h.b16 %v1435
    %v3921 = vunpack.c.l.b16 %v1436
    %v3922 = vunpack.c.h.b16 %v1436
    %v3923 = vunpack.c.l.b16 %v1437
    %v3924 = vunpack.c.h.b16 %v1437
    %v3925 = vunpack.c.l.b16 %v1438
    %v3926 = vunpack.c.h.b16 %v1438
    %v3927 = vunpack.c.l.b16 %v1439
    %v3928 = vunpack.c.h.b16 %v1439
    %v3929 = vunpack.c.l.b16 %v1440
    %v3930 = vunpack.c.h.b16 %v1440
    %v3931 = vunpack.c.l.b16 %v1441
    %v3932 = vunpack.c.h.b16 %v1441
    %v3933 = vunpack.c.l.b16 %v1442
    %v3934 = vunpack.c.h.b16 %v1442
    %v3935 = vunpack.c.l.b16 %v1443
    %v3936 = vunpack.c.h.b16 %v1443
    %v3937 = vunpack.c.l.b16 %v1444
    %v3938 = vunpack.c.h.b16 %v1444
    %v3939 = vunpack.c.l.b16 %v1445
    %v3940 = vunpack.c.h.b16 %v1445
    %v3941 = vunpack.c.l.b16 %v1446
    %v3942 = vunpack.c.h.b16 %v1446
    %v3943 = vunpack.c.l.b16 %v1447
    %v3944 = vunpack.c.h.b16 %v1447
    %v3945 = vunpack.c.l.b16 %v1448
    %v3946 = vunpack.c.h.b16 %v1448
    %v3947 = vunpack.c.l.b16 %v1449
    %v3948 = vunpack.c.h.b16 %v1449
    %v3949 = vunpack.c.l.b16 %v1450
    %v3950 = vunpack.c.h.b16 %v1450
    %v3951 = vunpack.c.l.b16 %v1451
    %v3952 = vunpack.c.h.b16 %v1451
    %v3953 = vunpack.c.l.b16 %v1452
    %v3954 = vunpack.c.h.b16 %v1452
    %v3955 = vunpack.c.l.b16 %v1453
    %v3956 = vunpack.c.h.b16 %v1453
    %v3957 = vunpack.c.l.b16 %v1454
    %v3958 = vunpack.c.h.b16 %v1454
    %v3959 = vunpack.c.l.b16 %v1455
    %v3960 = vunpack.c.h.b16 %v1455
    %v3961 = vunpack.c.l.b16 %v1456
    %v3962 = vunpack.c.h.b16 %v1456
    %v3963 = vunpack.c.l.b16 %v1457
    %v3964 = vunpack.c.h.b16 %v1457
    %v3965 = vunpack.c.l.b16 %v1458
    %v3966 = vunpack.c.h.b16 %v1458
    %v3967 = vunpack.c.l.b16 %v1459
    %v3968 = vunpack.c.h.b16 %v1459
    %v3969 = vunpack.c.l.b16 %v1460
    %v3970 = vunpack.c.h.b16 %v1460
    %v3971 = vunpack.c.l.b16 %v1461
    %v3972 = vunpack.c.h.b16 %v1461
    %v3973 = vunpack.c.l.b16 %v1462
    %v3974 = vunpack.c.h.b16 %v1462
    %v3975 = vunpack.c.l.b16 %v1463
    %v3976 = vunpack.c.h.b16 %v1463
    %v3977 = vunpack.c.l.b16 %v1464
    %v3978 = vunpack.c.h.b16 %v1464
    %v3979 = vunpack.c.l.b16 %v1465
    %v3980 = vunpack.c.h.b16 %v1465
    %v3981 = vunpack.c.l.b16 %v1466
    %v3982 = vunpack.c.h.b16 %v1466
    %v3983 = vunpack.c.l.b16 %v1467
    %v3984 = vunpack.c.h.b16 %v1467
    %v3985 = vunpack.c.l.b16 %v1468
    %v3986 = vunpack.c.h.b16 %v1468
    %v3987 = vunpack.c.l.b16 %v1469
    %v3988 = vunpack.c.h.b16 %v1469
    %v3989 = vunpack.c.l.b16 %v1470
    %v3990 = vunpack.c.h.b16 %v1470
    %v3991 = vunpack.c.l.b16 %v1471
    %v3992 = vunpack.c.h.b16 %v1471
    %v3993 = vunpack.c.l.b16 %v1472
    %v3994 = vunpack.c.h.b16 %v1472
    %v3995 = vunpack.c.l.b16 %v1473
    %v3996 = vunpack.c.h.b16 %v1473
    %v3997 = vunpack.c.l.b16 %v1474
    %v3998 = vunpack.c.h.b16 %v1474
    %v3999 = vunpack.c.l.b16 %v1475
    %v4000 = vunpack.c.h.b16 %v1475
    %v4001 = vunpack.c.l.b16 %v1476
    %v4002 = vunpack.c.h.b16 %v1476
    %v4003 = vunpack.c.l.b16 %v1477
    %v4004 = vunpack.c.h.b16 %v1477
    %v4005 = vunpack.c.l.b16 %v1478
    %v4006 = vunpack.c.h.b16 %v1478
    %v4007 = vunpack.c.l.b16 %v1479
    %v4008 = vunpack.c.h.b16 %v1479
    %v4009 = vunpack.c.l.b16 %v1480
    %v4010 = vunpack.c.h.b16 %v1480
    %v4011 = vunpack.c.l.b16 %v1481
    %v4012 = vunpack.c.h.b16 %v1481
    %v4013 = vunpack.c.l.b16 %v1482
    %v4014 = vunpack.c.h.b16 %v1482
    %v4015 = vunpack.c.l.b16 %v1483
    %v4016 = vunpack.c.h.b16 %v1483
    %v4017 = vunpack.c.l.b16 %v1484
    %v4018 = vunpack.c.h.b16 %v1484
    %v4019 = vunpack.c.l.b16 %v1485
    %v4020 = vunpack.c.h.b16 %v1485
    %v4021 = vunpack.c.l.b16 %v1486
    %v4022 = vunpack.c.h.b16 %v1486
    %v4023 = vunpack.c.l.b16 %v1487
    %v4024 = vunpack.c.h.b16 %v1487
    %v4025 = vunpack.c.l.b16 %v1488
    %v4026 = vunpack.c.h.b16 %v1488
    %v4027 = vunpack.c.l.b16 %v1489
    %v4028 = vunpack.c.h.b16 %v1489
    %v4029 = vunpack.c.l.b16 %v1490
    %v4030 = vunpack.c.h.b16 %v1490
    %v4031 = vunpack.c.l.b16 %v1491
    %v4032 = vunpack.c.h.b16 %v1491
    %v4033 = vunpack.c.l.b16 %v1492
    %v4034 = vunpack.c.h.b16 %v1492
    %v4035 = vunpack.c.l.b16 %v1493
    %v4036 = vunpack.c.h.b16 %v1493
    %v4037 = vunpack.c.l.b16 %v1494
    %v4038 = vunpack.c.h.b16 %v1494
    %v4039 = vunpack.c.l.b16 %v1495
    %v4040 = vunpack.c.h.b16 %v1495
    %v4041 = vunpack.c.l.b16 %v1496
    %v4042 = vunpack.c.h.b16 %v1496
    %v4043 = vunpack.c.l.b16 %v1497
    %v4044 = vunpack.c.h.b16 %v1497
    %v4045 = vunpack.c.l.b16 %v1498
    %v4046 = vunpack.c.h.b16 %v1498
    %v4047 = vunpack.c.l.b16 %v1499
    %v4048 = vunpack.c.h.b16 %v1499
    %v4049 = vunpack.c.l.b16 %v1500
    %v4050 = vunpack.c.h.b16 %v1500
    %v4051 = vunpack.c.l.b16 %v1501
    %v4052 = vunpack.c.h.b16 %v1501
    %v4053 = vunpack.c.l.b16 %v1502
    %v4054 = vunpack.c.h.b16 %v1502
    %v4055 = vunpack.c.l.b16 %v1503
    %v4056 = vunpack.c.h.b16 %v1503
    %v4057 = vunpack.c.l.b16 %v1504
    %v4058 = vunpack.c.h.b16 %v1504
    %v4059 = vunpack.c.l.b16 %v1505
    %v4060 = vunpack.c.h.b16 %v1505
    %v4061 = vunpack.c.l.b16 %v1506
    %v4062 = vunpack.c.h.b16 %v1506
    %v4063 = vunpack.c.l.b16 %v1507
    %v4064 = vunpack.c.h.b16 %v1507
    %v4065 = vunpack.c.l.b16 %v1508
    %v4066 = vunpack.c.h.b16 %v1508
    %v4067 = vunpack.c.l.b16 %v1509
    %v4068 = vunpack.c.h.b16 %v1509
    %v4069 = vunpack.c.l.b16 %v1510
    %v4070 = vunpack.c.h.b16 %v1510
    %v4071 = vunpack.c.l.b16 %v1511
    %v4072 = vunpack.c.h.b16 %v1511
    %v4073 = vunpack.c.l.b16 %v1512
    %v4074 = vunpack.c.h.b16 %v1512
    %v4075 = vunpack.c.l.b16 %v1513
    %v4076 = vunpack.c.h.b16 %v1513
    %v4077 = vunpack.c.l.b16 %v1514
    %v4078 = vunpack.c.h.b16 %v1514
    %v4079 = vunpack.c.l.b16 %v1515
    %v4080 = vunpack.c.h.b16 %v1515
    %v4081 = vunpack.c.l.b16 %v1516
    %v4082 = vunpack.c.h.b16 %v1516
    %v4083 = vunpack.c.l.b16 %v1517
    %v4084 = vunpack.c.h.b16 %v1517
    %v4085 = vunpack.c.l.b16 %v1518
    %v4086 = vunpack.c.h.b16 %v1518
    %v4087 = vunpack.c.l.b16 %v1519
    %v4088 = vunpack.c.h.b16 %v1519
    %v4089 = vunpack.c.l.b16 %v1520
    %v4090 = vunpack.c.h.b16 %v1520
    %v4091 = vunpack.c.l.b16 %v1521
    %v4092 = vunpack.c.h.b16 %v1521
    %v4093 = vunpack.c.l.b16 %v1522
    %v4094 = vunpack.c.h.b16 %v1522
    %v4095 = vunpack.c.l.b16 %v1523
    %v4096 = vunpack.c.h.b16 %v1523
    %v4097 = vunpack.c.l.b16 %v1524
    %v4098 = vunpack.c.h.b16 %v1524
    %v4099 = vunpack.c.l.b16 %v1525
    %v4100 = vunpack.c.h.b16 %v1525
    %v4101 = vunpack.c.l.b16 %v1526
    %v4102 = vunpack.c.h.b16 %v1526
    %v4103 = vunpack.c.l.b16 %v1527
    %v4104 = vunpack.c.h.b16 %v1527
    %v4105 = vunpack.c.l.b16 %v1528
    %v4106 = vunpack.c.h.b16 %v1528
    %v4107 = vunpack.c.l.b16 %v1529
    %v4108 = vunpack.c.h.b16 %v1529
    %v4109 = vunpack.c.l.b16 %v1530
    %v4110 = vunpack.c.h.b16 %v1530
    %v4111 = vunpack.c.l.b16 %v1531
    %v4112 = vunpack.c.h.b16 %v1531
    %v4113 = vunpack.c.l.b16 %v1532
    %v4114 = vunpack.c.h.b16 %v1532
    %v4115 = vunpack.c.l.b16 %v1533
    %v4116 = vunpack.c.h.b16 %v1533
    %v4117 = vunpack.c.l.b16 %v1534
    %v4118 = vunpack.c.h.b16 %v1534
    %v4119 = vunpack.c.l.b16 %v1535
    %v4120 = vunpack.c.h.b16 %v1535
    %v4121 = vunpack.c.l.b16 %v1536
    %v4122 = vunpack.c.h.b16 %v1536
    %v4123 = vunpack.c.l.b16 %v1537
    %v4124 = vunpack.c.h.b16 %v1537
    %v4125 = vunpack.c.l.b16 %v1538
    %v4126 = vunpack.c.h.b16 %v1538
    %v4127 = vunpack.c.l.b16 %v1539
    %v4128 = vunpack.c.h.b16 %v1539
    %v4129 = vunpack.c.l.b16 %v1540
    %v4130 = vunpack.c.h.b16 %v1540
    %v4131 = vunpack.c.l.b16 %v1541
    %v4132 = vunpack.c.h.b16 %v1541
    %v4133 = vunpack.c.l.b16 %v1542
    %v4134 = vunpack.c.h.b16 %v1542
    %v4135 = vunpack.c.l.b16 %v1543
    %v4136 = vunpack.c.h.b16 %v1543
    %v4137 = vunpack.c.l.b16 %v1544
    %v4138 = vunpack.c.h.b16 %v1544
    %v4139 = vunpack.c.l.b16 %v1545
    %v4140 = vunpack.c.h.b16 %v1545
    %v4141 = vunpack.c.l.b16 %v1546
    %v4142 = vunpack.c.h.b16 %v1546
    %v4143 = vunpack.c.l.b16 %v1547
    %v4144 = vunpack.c.h.b16 %v1547
    %v4145 = vunpack.c.l.b16 %v1548
    %v4146 = vunpack.c.h.b16 %v1548
    %v4147 = vunpack.c.l.b16 %v1549
    %v4148 = vunpack.c.h.b16 %v1549
    %v4149 = vunpack.c.l.b16 %v1550
    %v4150 = vunpack.c.h.b16 %v1550
    %v4151 = vunpack.c.l.b16 %v1551
    %v4152 = vunpack.c.h.b16 %v1551
    %v4153 = vunpack.c.l.b16 %v1552
    %v4154 = vunpack.c.h.b16 %v1552
    %v4155 = vunpack.c.l.b16 %v1553
    %v4156 = vunpack.c.h.b16 %v1553
    %v4157 = vunpack.c.l.b16 %v1554
    %v4158 = vunpack.c.h.b16 %v1554
    %v4159 = vunpack.c.l.b16 %v1555
    %v4160 = vunpack.c.h.b16 %v1555
    %v4161 = vunpack.c.l.b16 %v1556
    %v4162 = vunpack.c.h.b16 %v1556
    %v4163 = vunpack.c.l.b16 %v1557
    %v4164 = vunpack.c.h.b16 %v1557
    %v4165 = vunpack.c.l.b16 %v1558
    %v4166 = vunpack.c.h.b16 %v1558
    %v4167 = vunpack.c.l.b16 %v1559
    %v4168 = vunpack.c.h.b16 %v1559
    %v4169 = vunpack.c.l.b16 %v1560
    %v4170 = vunpack.c.h.b16 %v1560
    %v4171 = vunpack.c.l.b16 %v1561
    %v4172 = vunpack.c.h.b16 %v1561
    %v4173 = vunpack.c.l.b16 %v1562
    %v4174 = vunpack.c.h.b16 %v1562
    %v4175 = vunpack.c.l.b16 %v1563
    %v4176 = vunpack.c.h.b16 %v1563
    %v4177 = vunpack.c.l.b16 %v1564
    %v4178 = vunpack.c.h.b16 %v1564
    %v4179 = vunpack.c.l.b16 %v1565
    %v4180 = vunpack.c.h.b16 %v1565
    %v4181 = vunpack.c.l.b16 %v1566
    %v4182 = vunpack.c.h.b16 %v1566
    %v4183 = vunpack.c.l.b16 %v1567
    %v4184 = vunpack.c.h.b16 %v1567
    %v4185 = vunpack.c.l.b16 %v1568
    %v4186 = vunpack.c.h.b16 %v1568
    %v4187 = vunpack.c.l.b16 %v1569
    %v4188 = vunpack.c.h.b16 %v1569
    %v4189 = vunpack.c.l.b16 %v1570
    %v4190 = vunpack.c.h.b16 %v1570
    %v4191 = vunpack.c.l.b16 %v1571
    %v4192 = vunpack.c.h.b16 %v1571
    %v4193 = vunpack.c.l.b16 %v1572
    %v4194 = vunpack.c.h.b16 %v1572
    %v4195 = vunpack.c.l.b16 %v1573
    %v4196 = vunpack.c.h.b16 %v1573
    %v4197 = vunpack.c.l.b16 %v1574
    %v4198 = vunpack.c.h.b16 %v1574
    %v4199 = vunpack.c.l.b16 %v1575
    %v4200 = vunpack.c.h.b16 %v1575
    %v4201 = vunpack.c.l.b16 %v1576
    %v4202 = vunpack.c.h.b16 %v1576
    %v4203 = vunpack.c.l.b16 %v1577
    %v4204 = vunpack.c.h.b16 %v1577
    %v4205 = vunpack.c.l.b16 %v1578
    %v4206 = vunpack.c.h.b16 %v1578
    %v4207 = vunpack.c.l.b16 %v1579
    %v4208 = vunpack.c.h.b16 %v1579
    %v4209 = vunpack.c.l.b16 %v1580
    %v4210 = vunpack.c.h.b16 %v1580
    %v4211 = vunpack.c.l.b16 %v1581
    %v4212 = vunpack.c.h.b16 %v1581
    %v4213 = vunpack.c.l.b16 %v1582
    %v4214 = vunpack.c.h.b16 %v1582
    %v4215 = vunpack.c.l.b16 %v1583
    %v4216 = vunpack.c.h.b16 %v1583
    %v4217 = vunpack.c.l.b16 %v1584
    %v4218 = vunpack.c.h.b16 %v1584
    %v4219 = vunpack.c.l.b16 %v1585
    %v4220 = vunpack.c.h.b16 %v1585
    %v4221 = vunpack.c.l.b16 %v1586
    %v4222 = vunpack.c.h.b16 %v1586
    %v4223 = vunpack.c.l.b16 %v1587
    %v4224 = vunpack.c.h.b16 %v1587
    %v4225 = vunpack.c.l.b16 %v1588
    %v4226 = vunpack.c.h.b16 %v1588
    %v4227 = vunpack.c.l.b16 %v1589
    %v4228 = vunpack.c.h.b16 %v1589
    %v4229 = vunpack.c.l.b16 %v1590
    %v4230 = vunpack.c.h.b16 %v1590
    %v4231 = vunpack.c.l.b16 %v1591
    %v4232 = vunpack.c.h.b16 %v1591
    %v4233 = vunpack.c.l.b16 %v1592
    %v4234 = vunpack.c.h.b16 %v1592
    %v4235 = vunpack.c.l.b16 %v1593
    %v4236 = vunpack.c.h.b16 %v1593
    %v4237 = vunpack.c.l.b16 %v1594
    %v4238 = vunpack.c.h.b16 %v1594
    %v4239 = vunpack.c.l.b16 %v1595
    %v4240 = vunpack.c.h.b16 %v1595
    %v4241 = vunpack.c.l.b16 %v1596
    %v4242 = vunpack.c.h.b16 %v1596
    %v4243 = vunpack.c.l.b16 %v1597
    %v4244 = vunpack.c.h.b16 %v1597
    %v4245 = vunpack.c.l.b16 %v1598
    %v4246 = vunpack.c.h.b16 %v1598
    %v4247 = vunpack.c.l.b16 %v1599
    %v4248 = vunpack.c.h.b16 %v1599
    %v4249 = vunpack.c.l.b16 %v1600
    %v4250 = vunpack.c.h.b16 %v1600
    %v4251 = vunpack.c.l.b16 %v1601
    %v4252 = vunpack.c.h.b16 %v1601
    %v4253 = vunpack.c.l.b16 %v1602
    %v4254 = vunpack.c.h.b16 %v1602
    %v4255 = vunpack.c.l.b16 %v1603
    %v4256 = vunpack.c.h.b16 %v1603
    %v4257 = vunpack.c.l.b16 %v1604
    %v4258 = vunpack.c.h.b16 %v1604
    %v4259 = vunpack.c.l.b16 %v1605
    %v4260 = vunpack.c.h.b16 %v1605
    %v4261 = vunpack.c.l.b16 %v1606
    %v4262 = vunpack.c.h.b16 %v1606
    %v4263 = vunpack.c.l.b16 %v1607
    %v4264 = vunpack.c.h.b16 %v1607
    %v4265 = vunpack.c.l.b16 %v1608
    %v4266 = vunpack.c.h.b16 %v1608
    %v4267 = vunpack.c.l.b16 %v1609
    %v4268 = vunpack.c.h.b16 %v1609
    %v4269 = vunpack.c.l.b16 %v1610
    %v4270 = vunpack.c.h.b16 %v1610
    %v4271 = vunpack.c.l.b16 %v1611
    %v4272 = vunpack.c.h.b16 %v1611
    %v4273 = vunpack.c.l.b16 %v1612
    %v4274 = vunpack.c.h.b16 %v1612
    %v4275 = vunpack.c.l.b16 %v1613
    %v4276 = vunpack.c.h.b16 %v1613
    %v4277 = vunpack.c.l.b16 %v1614
    %v4278 = vunpack.c.h.b16 %v1614
    %v4279 = vunpack.c.l.b16 %v1615
    %v4280 = vunpack.c.h.b16 %v1615
    %v4281 = vunpack.c.l.b16 %v1616
    %v4282 = vunpack.c.h.b16 %v1616
    %v4283 = vunpack.c.l.b16 %v1617
    %v4284 = vunpack.c.h.b16 %v1617
    %v4285 = vunpack.c.l.b16 %v1618
    %v4286 = vunpack.c.h.b16 %v1618
    %v4287 = vunpack.c.l.b16 %v1619
    %v4288 = vunpack.c.h.b16 %v1619
    %v4289 = vunpack.c.l.b16 %v1620
    %v4290 = vunpack.c.h.b16 %v1620
    %v4291 = vunpack.c.l.b16 %v1621
    %v4292 = vunpack.c.h.b16 %v1621
    %v4293 = vunpack.c.l.b16 %v1622
    %v4294 = vunpack.c.h.b16 %v1622
    %v4295 = vunpack.c.l.b16 %v1623
    %v4296 = vunpack.c.h.b16 %v1623
    %v4297 = vunpack.c.l.b16 %v1624
    %v4298 = vunpack.c.h.b16 %v1624
    %v4299 = vunpack.c.l.b16 %v1625
    %v4300 = vunpack.c.h.b16 %v1625
    %v4301 = vunpack.c.l.b16 %v1626
    %v4302 = vunpack.c.h.b16 %v1626
    %v4303 = vunpack.c.l.b16 %v1627
    %v4304 = vunpack.c.h.b16 %v1627
    %v4305 = vunpack.c.l.b16 %v1628
    %v4306 = vunpack.c.h.b16 %v1628
    %v4307 = vunpack.c.l.b16 %v1629
    %v4308 = vunpack.c.h.b16 %v1629
    %v4309 = vunpack.c.l.b16 %v1630
    %v4310 = vunpack.c.h.b16 %v1630
    %v4311 = vunpack.c.l.b16 %v1631
    %v4312 = vunpack.c.h.b16 %v1631
    %v4313 = vunpack.c.l.b16 %v1632
    %v4314 = vunpack.c.h.b16 %v1632
    %v4315 = vunpack.c.l.b16 %v1633
    %v4316 = vunpack.c.h.b16 %v1633
    %v4317 = vunpack.c.l.b16 %v1634
    %v4318 = vunpack.c.h.b16 %v1634
    %v4319 = vunpack.c.l.b16 %v1635
    %v4320 = vunpack.c.h.b16 %v1635
    %v4321 = vunpack.c.l.b16 %v1636
    %v4322 = vunpack.c.h.b16 %v1636
    %v4323 = vunpack.c.l.b16 %v1637
    %v4324 = vunpack.c.h.b16 %v1637
    %v4325 = vunpack.c.l.b16 %v1638
    %v4326 = vunpack.c.h.b16 %v1638
    %v4327 = vunpack.c.l.b16 %v1639
    %v4328 = vunpack.c.h.b16 %v1639
    %v4329 = vunpack.c.l.b16 %v1640
    %v4330 = vunpack.c.h.b16 %v1640
    %v4331 = vunpack.c.l.b16 %v1641
    %v4332 = vunpack.c.h.b16 %v1641
    %v4333 = vunpack.c.l.b16 %v1642
    %v4334 = vunpack.c.h.b16 %v1642
    %v4335 = vunpack.c.l.b16 %v1643
    %v4336 = vunpack.c.h.b16 %v1643
    %v4337 = vunpack.c.l.b16 %v1644
    %v4338 = vunpack.c.h.b16 %v1644
    %v4339 = vunpack.c.l.b16 %v1645
    %v4340 = vunpack.c.h.b16 %v1645
    %v4341 = vunpack.c.l.b16 %v1646
    %v4342 = vunpack.c.h.b16 %v1646
    %v4343 = vunpack.c.l.b16 %v1647
    %v4344 = vunpack.c.h.b16 %v1647
    %v4345 = vunpack.c.l.b16 %v1648
    %v4346 = vunpack.c.h.b16 %v1648
    %v4347 = vunpack.c.l.b16 %v1649
    %v4348 = vunpack.c.h.b16 %v1649
    %v4349 = vunpack.c.l.b16 %v1650
    %v4350 = vunpack.c.h.b16 %v1650
    %v4351 = vunpack.c.l.b16 %v1651
    %v4352 = vunpack.c.h.b16 %v1651
    %v4353 = vunpack.c.l.b16 %v1652
    %v4354 = vunpack.c.h.b16 %v1652
    %v4355 = vunpack.c.l.b16 %v1653
    %v4356 = vunpack.c.h.b16 %v1653
    %v4357 = vunpack.c.l.b16 %v1654
    %v4358 = vunpack.c.h.b16 %v1654
    %v4359 = vunpack.c.l.b16 %v1655
    %v4360 = vunpack.c.h.b16 %v1655
    %v4361 = vunpack.c.l.b16 %v1656
    %v4362 = vunpack.c.h.b16 %v1656
    %v4363 = vunpack.c.l.b16 %v1657
    %v4364 = vunpack.c.h.b16 %v1657
    %v4365 = vunpack.c.l.b16 %v1658
    %v4366 = vunpack.c.h.b16 %v1658
    %v4367 = vunpack.c.l.b16 %v1659
    %v4368 = vunpack.c.h.b16 %v1659
    %v4369 = vunpack.c.l.b16 %v1660
    %v4370 = vunpack.c.h.b16 %v1660
    %v4371 = vunpack.c.l.b16 %v1661
    %v4372 = vunpack.c.h.b16 %v1661
    %v4373 = vunpack.c.l.b16 %v1662
    %v4374 = vunpack.c.h.b16 %v1662
    %v4375 = vunpack.c.l.b16 %v1663
    %v4376 = vunpack.c.h.b16 %v1663
    %v4377 = vunpack.c.l.b16 %v1664
    %v4378 = vunpack.c.h.b16 %v1664
    %v4379 = vunpack.c.l.b16 %v1665
    %v4380 = vunpack.c.h.b16 %v1665
    %v4381 = vunpack.c.l.b16 %v1666
    %v4382 = vunpack.c.h.b16 %v1666
    %v4383 = vunpack.c.l.b16 %v1667
    %v4384 = vunpack.c.h.b16 %v1667
    %v4385 = vunpack.c.l.b16 %v1668
    %v4386 = vunpack.c.h.b16 %v1668
    %v4387 = vunpack.c.l.b16 %v1669
    %v4388 = vunpack.c.h.b16 %v1669
    %v4389 = vunpack.c.l.b16 %v1670
    %v4390 = vunpack.c.h.b16 %v1670
    %v4391 = vunpack.c.l.b16 %v1671
    %v4392 = vunpack.c.h.b16 %v1671
    %v4393 = vunpack.c.l.b16 %v1672
    %v4394 = vunpack.c.h.b16 %v1672
    %v4395 = vunpack.c.l.b16 %v1673
    %v4396 = vunpack.c.h.b16 %v1673
    %v4397 = vunpack.c.l.b16 %v1674
    %v4398 = vunpack.c.h.b16 %v1674
    %v4399 = vunpack.c.l.b16 %v1675
    %v4400 = vunpack.c.h.b16 %v1675
    %v4401 = vunpack.c.l.b16 %v1676
    %v4402 = vunpack.c.h.b16 %v1676
    %v4403 = vunpack.c.l.b16 %v1677
    %v4404 = vunpack.c.h.b16 %v1677
    %v4405 = vunpack.c.l.b16 %v1678
    %v4406 = vunpack.c.h.b16 %v1678
    %v4407 = vunpack.c.l.b16 %v1679
    %v4408 = vunpack.c.h.b16 %v1679
    %v4409 = vunpack.c.l.b16 %v1680
    %v4410 = vunpack.c.h.b16 %v1680
    %v4411 = vunpack.c.l.b16 %v1681
    %v4412 = vunpack.c.h.b16 %v1681
    %v4413 = vunpack.c.l.b16 %v1682
    %v4414 = vunpack.c.h.b16 %v1682
    %v4415 = vunpack.c.l.b16 %v1683
    %v4416 = vunpack.c.h.b16 %v1683
    %v4417 = vunpack.c.l.b16 %v1684
    %v4418 = vunpack.c.h.b16 %v1684
    %v4419 = vunpack.c.l.b16 %v1685
    %v4420 = vunpack.c.h.b16 %v1685
    %v4421 = vunpack.c.l.b16 %v1686
    %v4422 = vunpack.c.h.b16 %v1686
    %v4423 = vunpack.c.l.b16 %v1687
    %v4424 = vunpack.c.h.b16 %v1687
    %v4425 = vunpack.c.l.b16 %v1688
    %v4426 = vunpack.c.h.b16 %v1688
    %v4427 = vunpack.c.l.b16 %v1689
    %v4428 = vunpack.c.h.b16 %v1689
    %v4429 = vunpack.c.l.b16 %v1690
    %v4430 = vunpack.c.h.b16 %v1690
    %v4431 = vunpack.c.l.b16 %v1691
    %v4432 = vunpack.c.h.b16 %v1691
    %v4433 = vunpack.c.l.b16 %v1692
    %v4434 = vunpack.c.h.b16 %v1692
    %v4435 = vunpack.c.l.b16 %v1693
    %v4436 = vunpack.c.h.b16 %v1693
    %v4437 = vunpack.c.l.b16 %v1694
    %v4438 = vunpack.c.h.b16 %v1694
    %v4439 = vunpack.c.l.b16 %v1695
    %v4440 = vunpack.c.h.b16 %v1695
    %v4441 = vunpack.c.l.b16 %v1696
    %v4442 = vunpack.c.h.b16 %v1696
    %v4443 = vunpack.c.l.b16 %v1697
    %v4444 = vunpack.c.h.b16 %v1697
    %v4445 = vunpack.c.l.b16 %v1698
    %v4446 = vunpack.c.h.b16 %v1698
    %v4447 = vunpack.c.l.b16 %v1699
    %v4448 = vunpack.c.h.b16 %v1699
    %v4449 = vunpack.c.l.b16 %v1700
    %v4450 = vunpack.c.h.b16 %v1700
    %v4451 = vunpack.c.l.b16 %v1701
    %v4452 = vunpack.c.h.b16 %v1701
    %v4453 = vunpack.c.l.b16 %v1702
    %v4454 = vunpack.c.h.b16 %v1702
    %v4455 = vunpack.c.l.b16 %v1703
    %v4456 = vunpack.c.h.b16 %v1703
    %v4457 = vunpack.c.l.b16 %v1704
    %v4458 = vunpack.c.h.b16 %v1704
    %v4459 = vunpack.c.l.b16 %v1705
    %v4460 = vunpack.c.h.b16 %v1705
    %v4461 = vunpack.c.l.b16 %v1706
    %v4462 = vunpack.c.h.b16 %v1706
    %v4463 = vunpack.c.l.b16 %v1707
    %v4464 = vunpack.c.h.b16 %v1707
    %v4465 = vunpack.c.l.b16 %v1708
    %v4466 = vunpack.c.h.b16 %v1708
    %v4467 = vunpack.c.l.b16 %v1709
    %v4468 = vunpack.c.h.b16 %v1709
    %v4469 = vunpack.c.l.b16 %v1710
    %v4470 = vunpack.c.h.b16 %v1710
    %v4471 = vunpack.c.l.b16 %v1711
    %v4472 = vunpack.c.h.b16 %v1711
    %v4473 = vunpack.c.l.b16 %v1712
    %v4474 = vunpack.c.h.b16 %v1712
    %v4475 = vunpack.c.l.b16 %v1713
    %v4476 = vunpack.c.h.b16 %v1713
    %v4477 = vunpack.c.l.b16 %v1714
    %v4478 = vunpack.c.h.b16 %v1714
    %v4479 = vunpack.c.l.b16 %v1715
    %v4480 = vunpack.c.h.b16 %v1715
    %v4481 = vunpack.c.l.b16 %v1716
    %v4482 = vunpack.c.h.b16 %v1716
    %v4483 = vunpack.c.l.b16 %v1717
    %v4484 = vunpack.c.h.b16 %v1717
    %v4485 = vunpack.c.l.b16 %v1718
    %v4486 = vunpack.c.h.b16 %v1718
    %v4487 = vunpack.c.l.b16 %v1719
    %v4488 = vunpack.c.h.b16 %v1719
    %v4489 = vunpack.c.l.b16 %v1720
    %v4490 = vunpack.c.h.b16 %v1720
    %v4491 = vunpack.c.l.b16 %v1721
    %v4492 = vunpack.c.h.b16 %v1721
    %v4493 = vunpack.c.l.b16 %v1722
    %v4494 = vunpack.c.h.b16 %v1722
    %v4495 = vunpack.c.l.b16 %v1723
    %v4496 = vunpack.c.h.b16 %v1723
    %v4497 = vunpack.c.l.b16 %v1724
    %v4498 = vunpack.c.h.b16 %v1724
    %v4499 = vunpack.c.l.b16 %v1725
    %v4500 = vunpack.c.h.b16 %v1725
    %v4501 = vunpack.c.l.b16 %v1726
    %v4502 = vunpack.c.h.b16 %v1726
    %v4503 = vunpack.c.l.b16 %v1727
    %v4504 = vunpack.c.h.b16 %v1727
    %v4505 = vunpack.c.l.b16 %v1728
    %v4506 = vunpack.c.h.b16 %v1728
    %v4507 = vunpack.c.l.b16 %v1729
    %v4508 = vunpack.c.h.b16 %v1729
    %v4509 = vunpack.c.l.b16 %v1730
    %v4510 = vunpack.c.h.b16 %v1730
    %v4511 = vunpack.c.l.b16 %v1731
    %v4512 = vunpack.c.h.b16 %v1731
    %v4513 = vunpack.c.l.b16 %v1732
    %v4514 = vunpack.c.h.b16 %v1732
    %v4515 = vunpack.c.l.b16 %v1733
    %v4516 = vunpack.c.h.b16 %v1733
    %v4517 = vunpack.c.l.b16 %v1734
    %v4518 = vunpack.c.h.b16 %v1734
    %v4519 = vunpack.c.l.b16 %v1735
    %v4520 = vunpack.c.h.b16 %v1735
    %v4521 = vunpack.c.l.b16 %v1736
    %v4522 = vunpack.c.h.b16 %v1736
    %v4523 = vunpack.c.l.b16 %v1737
    %v4524 = vunpack.c.h.b16 %v1737
    %v4525 = vunpack.c.l.b16 %v1738
    %v4526 = vunpack.c.h.b16 %v1738
    %v4527 = vunpack.c.l.b16 %v1739
    %v4528 = vunpack.c.h.b16 %v1739
    %v4529 = vunpack.c.l.b16 %v1740
    %v4530 = vunpack.c.h.b16 %v1740
    %v4531 = vunpack.c.l.b16 %v1741
    %v4532 = vunpack.c.h.b16 %v1741
    %v4533 = vunpack.c.l.b16 %v1742
    %v4534 = vunpack.c.h.b16 %v1742
    %v4535 = vunpack.c.l.b16 %v1743
    %v4536 = vunpack.c.h.b16 %v1743
    %v4537 = vunpack.c.l.b16 %v1744
    %v4538 = vunpack.c.h.b16 %v1744
    %v4539 = vunpack.c.l.b16 %v1745
    %v4540 = vunpack.c.h.b16 %v1745
    %v4541 = vunpack.c.l.b16 %v1746
    %v4542 = vunpack.c.h.b16 %v1746
    %v4543 = vunpack.c.l.b16 %v1747
    %v4544 = vunpack.c.h.b16 %v1747
    %v4545 = vunpack.c.l.b16 %v1748
    %v4546 = vunpack.c.h.b16 %v1748
    %v4547 = vunpack.c.l.b16 %v1749
    %v4548 = vunpack.c.h.b16 %v1749
    %v4549 = vunpack.c.l.b16 %v1750
    %v4550 = vunpack.c.h.b16 %v1750
    %v4551 = vunpack.c.l.b16 %v1751
    %v4552 = vunpack.c.h.b16 %v1751
    %v4553 = vunpack.c.l.b16 %v1752
    %v4554 = vunpack.c.h.b16 %v1752
    %v4555 = vunpack.c.l.b16 %v1753
    %v4556 = vunpack.c.h.b16 %v1753
    %v4557 = vunpack.c.l.b16 %v1754
    %v4558 = vunpack.c.h.b16 %v1754
    %v4559 = vunpack.c.l.b16 %v1755
    %v4560 = vunpack.c.h.b16 %v1755
    %v4561 = vunpack.c.l.b16 %v1756
    %v4562 = vunpack.c.h.b16 %v1756
    %v4563 = vunpack.c.l.b16 %v1757
    %v4564 = vunpack.c.h.b16 %v1757
    %v4565 = vunpack.c.l.b16 %v1758
    %v4566 = vunpack.c.h.b16 %v1758
    %v4567 = vunpack.c.l.b16 %v1759
    %v4568 = vunpack.c.h.b16 %v1759
    %v4569 = vunpack.c.l.b16 %v1760
    %v4570 = vunpack.c.h.b16 %v1760
    %v4571 = vunpack.c.l.b16 %v1761
    %v4572 = vunpack.c.h.b16 %v1761
    %v4573 = vunpack.c.l.b16 %v1762
    %v4574 = vunpack.c.h.b16 %v1762
    %v4575 = vunpack.c.l.b16 %v1763
    %v4576 = vunpack.c.h.b16 %v1763
    %v4577 = vunpack.c.l.b16 %v1764
    %v4578 = vunpack.c.h.b16 %v1764
    %v4579 = vunpack.c.l.b16 %v1765
    %v4580 = vunpack.c.h.b16 %v1765
    %v4581 = vunpack.c.l.b16 %v1766
    %v4582 = vunpack.c.h.b16 %v1766
    %v4583 = vunpack.c.l.b16 %v1767
    %v4584 = vunpack.c.h.b16 %v1767
    %v4585 = vunpack.c.l.b16 %v1768
    %v4586 = vunpack.c.h.b16 %v1768
    %v4587 = vunpack.c.l.b16 %v1769
    %v4588 = vunpack.c.h.b16 %v1769
    %v4589 = vunpack.c.l.b16 %v1770
    %v4590 = vunpack.c.h.b16 %v1770
    %v4591 = vunpack.c.l.b16 %v1771
    %v4592 = vunpack.c.h.b16 %v1771
    %v4593 = vunpack.c.l.b16 %v1772
    %v4594 = vunpack.c.h.b16 %v1772
    %v4595 = vunpack.c.l.b16 %v1773
    %v4596 = vunpack.c.h.b16 %v1773
    %v4597 = vunpack.c.l.b16 %v1774
    %v4598 = vunpack.c.h.b16 %v1774
    %v4599 = vunpack.c.l.b16 %v1775
    %v4600 = vunpack.c.h.b16 %v1775
    %v4601 = vunpack.c.l.b16 %v1776
    %v4602 = vunpack.c.h.b16 %v1776
    %v4603 = vunpack.c.l.b16 %v1777
    %v4604 = vunpack.c.h.b16 %v1777
    %v4605 = vunpack.c.l.b16 %v1778
    %v4606 = vunpack.c.h.b16 %v1778
    %v4607 = vunpack.c.l.b16 %v1779
    %v4608 = vunpack.c.h.b16 %v1779
    %v4609 = vunpack.c.l.b16 %v1780
    %v4610 = vunpack.c.h.b16 %v1780
    %v4611 = vunpack.c.l.b16 %v1781
    %v4612 = vunpack.c.h.b16 %v1781
    %v4613 = vunpack.c.l.b16 %v1782
    %v4614 = vunpack.c.h.b16 %v1782
    %v4615 = vunpack.c.l.b16 %v1783
    %v4616 = vunpack.c.h.b16 %v1783
    %v4617 = vunpack.c.l.b16 %v1784
    %v4618 = vunpack.c.h.b16 %v1784
    %v4619 = vunpack.c.l.b16 %v1785
    %v4620 = vunpack.c.h.b16 %v1785
    %v4621 = vunpack.c.l.b16 %v1786
    %v4622 = vunpack.c.h.b16 %v1786
    %v4623 = vunpack.c.l.b16 %v1787
    %v4624 = vunpack.c.h.b16 %v1787
    %v4625 = vunpack.c.l.b16 %v1788
    %v4626 = vunpack.c.h.b16 %v1788
    %v4627 = vunpack.c.l.b16 %v1789
    %v4628 = vunpack.c.h.b16 %v1789
    %v4629 = vunpack.c.l.b16 %v1790
    %v4630 = vunpack.c.h.b16 %v1790
    %v4631 = vunpack.c.l.b16 %v1791
    %v4632 = vunpack.c.h.b16 %v1791
    %v4633 = vunpack.c.l.b16 %v1792
    %v4634 = vunpack.c.h.b16 %v1792
    %v4635 = vunpack.c.l.b16 %v1793
    %v4636 = vunpack.c.h.b16 %v1793
    %v4637 = vunpack.c.l.b16 %v1794
    %v4638 = vunpack.c.h.b16 %v1794
    %v4639 = vunpack.c.l.b16 %v1795
    %v4640 = vunpack.c.h.b16 %v1795
    %v4641 = vunpack.c.l.b16 %v1796
    %v4642 = vunpack.c.h.b16 %v1796
    %v4643 = vunpack.c.l.b16 %v1797
    %v4644 = vunpack.c.h.b16 %v1797
    %v4645 = vunpack.c.l.b16 %v1798
    %v4646 = vunpack.c.h.b16 %v1798
    %v4647 = vunpack.c.l.b16 %v1799
    %v4648 = vunpack.c.h.b16 %v1799
    %v4649 = vunpack.c.l.b16 %v1800
    %v4650 = vunpack.c.h.b16 %v1800
    %v4651 = vunpack.c.l.b16 %v1801
    %v4652 = vunpack.c.h.b16 %v1801
    %v4653 = vunpack.c.l.b16 %v1802
    %v4654 = vunpack.c.h.b16 %v1802
    %v4655 = vunpack.c.l.b16 %v1803
    %v4656 = vunpack.c.h.b16 %v1803
    %v4657 = vunpack.c.l.b16 %v1804
    %v4658 = vunpack.c.h.b16 %v1804
    %v4659 = vunpack.c.l.b16 %v1805
    %v4660 = vunpack.c.h.b16 %v1805
    %v4661 = vunpack.c.l.b16 %v1806
    %v4662 = vunpack.c.h.b16 %v1806
    %v4663 = vunpack.c.l.b16 %v1807
    %v4664 = vunpack.c.h.b16 %v1807
    %v4665 = vunpack.c.l.b16 %v1808
    %v4666 = vunpack.c.h.b16 %v1808
    %v4667 = vunpack.c.l.b16 %v1809
    %v4668 = vunpack.c.h.b16 %v1809
    %v4669 = vunpack.c.l.b16 %v1810
    %v4670 = vunpack.c.h.b16 %v1810
    %v4671 = vunpack.c.l.b16 %v1811
    %v4672 = vunpack.c.h.b16 %v1811
    %v4673 = vunpack.c.l.b16 %v1812
    %v4674 = vunpack.c.h.b16 %v1812
    %v4675 = vunpack.c.l.b16 %v1813
    %v4676 = vunpack.c.h.b16 %v1813
    %v4677 = vunpack.c.l.b16 %v1814
    %v4678 = vunpack.c.h.b16 %v1814
    %v4679 = vunpack.c.l.b16 %v1815
    %v4680 = vunpack.c.h.b16 %v1815
    %v4681 = vunpack.c.l.b16 %v1816
    %v4682 = vunpack.c.h.b16 %v1816
    %v4683 = vunpack.c.l.b16 %v1817
    %v4684 = vunpack.c.h.b16 %v1817
    %v4685 = vunpack.c.l.b16 %v1818
    %v4686 = vunpack.c.h.b16 %v1818
    %v4687 = vunpack.c.l.b16 %v1819
    %v4688 = vunpack.c.h.b16 %v1819
    %v4689 = vunpack.c.l.b16 %v1820
    %v4690 = vunpack.c.h.b16 %v1820
    %v4691 = vunpack.c.l.b16 %v1821
    %v4692 = vunpack.c.h.b16 %v1821
    %v4693 = vunpack.c.l.b16 %v1822
    %v4694 = vunpack.c.h.b16 %v1822
    %v4695 = vunpack.c.l.b16 %v1823
    %v4696 = vunpack.c.h.b16 %v1823
    %v4697 = vunpack.c.l.b16 %v1824
    %v4698 = vunpack.c.h.b16 %v1824
    %v4699 = vunpack.c.l.b16 %v1825
    %v4700 = vunpack.c.h.b16 %v1825
    %v4701 = vunpack.c.l.b16 %v1826
    %v4702 = vunpack.c.h.b16 %v1826
    %v4703 = vunpack.c.l.b16 %v1827
    %v4704 = vunpack.c.h.b16 %v1827
    %v4705 = vunpack.c.l.b16 %v1828
    %v4706 = vunpack.c.h.b16 %v1828
    %v4707 = vunpack.c.l.b16 %v1829
    %v4708 = vunpack.c.h.b16 %v1829
    %v4709 = vunpack.c.l.b16 %v1830
    %v4710 = vunpack.c.h.b16 %v1830
    %v4711 = vunpack.c.l.b16 %v1831
    %v4712 = vunpack.c.h.b16 %v1831
    %v4713 = vunpack.c.l.b16 %v1832
    %v4714 = vunpack.c.h.b16 %v1832
    %v4715 = vunpack.c.l.b16 %v1833
    %v4716 = vunpack.c.h.b16 %v1833
    %v4717 = vunpack.c.l.b16 %v1834
    %v4718 = vunpack.c.h.b16 %v1834
    %v4719 = vunpack.c.l.b16 %v1835
    %v4720 = vunpack.c.h.b16 %v1835
    %v4721 = vunpack.c.l.b16 %v1836
    %v4722 = vunpack.c.h.b16 %v1836
    %v4723 = vunpack.c.l.b16 %v1837
    %v4724 = vunpack.c.h.b16 %v1837
    %v4725 = vunpack.c.l.b16 %v1838
    %v4726 = vunpack.c.h.b16 %v1838
    %v4727 = vunpack.c.l.b16 %v1839
    %v4728 = vunpack.c.h.b16 %v1839
    %v4729 = vunpack.c.l.b16 %v1840
    %v4730 = vunpack.c.h.b16 %v1840
    %v4731 = vunpack.c.l.b16 %v1841
    %v4732 = vunpack.c.h.b16 %v1841
    %v4733 = vunpack.c.l.b16 %v1842
    %v4734 = vunpack.c.h.b16 %v1842
    %v4735 = vunpack.c.l.b16 %v1843
    %v4736 = vunpack.c.h.b16 %v1843
    %v4737 = vunpack.c.l.b16 %v1844
    %v4738 = vunpack.c.h.b16 %v1844
    %v4739 = vunpack.c.l.b16 %v1845
    %v4740 = vunpack.c.h.b16 %v1845
    %v4741 = vunpack.c.l.b16 %v1846
    %v4742 = vunpack.c.h.b16 %v1846
    %v4743 = vunpack.c.l.b16 %v1847
    %v4744 = vunpack.c.h.b16 %v1847
    %v4745 = vunpack.c.l.b16 %v1848
    %v4746 = vunpack.c.h.b16 %v1848
    %v4747 = vunpack.c.l.b16 %v1849
    %v4748 = vunpack.c.h.b16 %v1849
    %v4749 = vunpack.c.l.b16 %v1850
    %v4750 = vunpack.c.h.b16 %v1850
    %v4751 = vunpack.c.l.b16 %v1851
    %v4752 = vunpack.c.h.b16 %v1851
    %v4753 = vunpack.c.l.b16 %v1852
    %v4754 = vunpack.c.h.b16 %v1852
    %v4755 = vunpack.c.l.b16 %v1853
    %v4756 = vunpack.c.h.b16 %v1853
    %v4757 = vunpack.c.l.b16 %v1854
    %v4758 = vunpack.c.h.b16 %v1854
    %v4759 = vunpack.c.l.b16 %v1855
    %v4760 = vunpack.c.h.b16 %v1855
    %v4761 = vunpack.c.l.b16 %v1856
    %v4762 = vunpack.c.h.b16 %v1856
    %v4763 = vunpack.c.l.b16 %v1857
    %v4764 = vunpack.c.h.b16 %v1857
    %v4765 = vunpack.c.l.b16 %v1858
    %v4766 = vunpack.c.h.b16 %v1858
    %v4767 = vunpack.c.l.b16 %v1859
    %v4768 = vunpack.c.h.b16 %v1859
    %v4769 = vunpack.c.l.b16 %v1860
    %v4770 = vunpack.c.h.b16 %v1860
    %v4771 = vunpack.c.l.b16 %v1861
    %v4772 = vunpack.c.h.b16 %v1861
    %v4773 = vunpack.c.l.b16 %v1862
    %v4774 = vunpack.c.h.b16 %v1862
    %v4775 = vunpack.c.l.b16 %v1863
    %v4776 = vunpack.c.h.b16 %v1863
    %v4777 = vunpack.c.l.b16 %v1864
    %v4778 = vunpack.c.h.b16 %v1864
    %v4779 = vunpack.c.l.b16 %v1865
    %v4780 = vunpack.c.h.b16 %v1865
    %v4781 = vunpack.c.l.b16 %v1866
    %v4782 = vunpack.c.h.b16 %v1866
    %v4783 = vunpack.c.l.b16 %v1867
    %v4784 = vunpack.c.h.b16 %v1867
    %v4785 = vunpack.c.l.b16 %v1868
    %v4786 = vunpack.c.h.b16 %v1868
    %v4787 = vunpack.c.l.b16 %v1869
    %v4788 = vunpack.c.h.b16 %v1869
    %v4789 = vunpack.c.l.b16 %v1870
    %v4790 = vunpack.c.h.b16 %v1870
    %v4791 = vunpack.c.l.b16 %v1871
    %v4792 = vunpack.c.h.b16 %v1871
    %v4793 = vunpack.c.l.b16 %v1872
    %v4794 = vunpack.c.h.b16 %v1872
    %v4795 = vunpack.c.l.b16 %v1873
    %v4796 = vunpack.c.h.b16 %v1873
    %v4797 = vunpack.c.l.b16 %v1874
    %v4798 = vunpack.c.h.b16 %v1874
    %v4799 = vunpack.c.l.b16 %v1875
    %v4800 = vunpack.c.h.b16 %v1875
    %v4801 = vunpack.c.l.b16 %v1876
    %v4802 = vunpack.c.h.b16 %v1876
    %v4803 = vunpack.c.l.b16 %v1877
    %v4804 = vunpack.c.h.b16 %v1877
    %v4805 = vunpack.c.l.b16 %v1878
    %v4806 = vunpack.c.h.b16 %v1878
    %v4807 = vunpack.c.l.b16 %v1879
    %v4808 = vunpack.c.h.b16 %v1879
    %v4809 = vunpack.c.l.b16 %v1880
    %v4810 = vunpack.c.h.b16 %v1880
    %v4811 = vunpack.c.l.b16 %v1881
    %v4812 = vunpack.c.h.b16 %v1881
    %v4813 = vunpack.c.l.b16 %v1882
    %v4814 = vunpack.c.h.b16 %v1882
    %v4815 = vunpack.c.l.b16 %v1883
    %v4816 = vunpack.c.h.b16 %v1883
    %v4817 = vunpack.c.l.b16 %v1884
    %v4818 = vunpack.c.h.b16 %v1884
    %v4819 = vunpack.c.l.b16 %v1885
    %v4820 = vunpack.c.h.b16 %v1885
    %v4821 = vunpack.c.l.b16 %v1886
    %v4822 = vunpack.c.h.b16 %v1886
    %v4823 = vunpack.c.l.b16 %v1887
    %v4824 = vunpack.c.h.b16 %v1887
    %v4825 = vunpack.c.l.b16 %v1888
    %v4826 = vunpack.c.h.b16 %v1888
    %v4827 = vunpack.c.l.b16 %v1889
    %v4828 = vunpack.c.h.b16 %v1889
    %v4829 = vunpack.c.l.b16 %v1890
    %v4830 = vunpack.c.h.b16 %v1890
    %v4831 = vunpack.c.l.b16 %v1891
    %v4832 = vunpack.c.h.b16 %v1891
    %v4833 = vunpack.c.l.b16 %v1892
    %v4834 = vunpack.c.h.b16 %v1892
    %v4835 = vunpack.c.l.b16 %v1893
    %v4836 = vunpack.c.h.b16 %v1893
    %v4837 = vunpack.c.l.b16 %v1894
    %v4838 = vunpack.c.h.b16 %v1894
    %v4839 = vunpack.c.l.b16 %v1895
    %v4840 = vunpack.c.h.b16 %v1895
    %v4841 = vunpack.c.l.b16 %v1896
    %v4842 = vunpack.c.h.b16 %v1896
    %v4843 = vunpack.c.l.b16 %v1897
    %v4844 = vunpack.c.h.b16 %v1897
    %v4845 = vunpack.c.l.b16 %v1898
    %v4846 = vunpack.c.h.b16 %v1898
    %v4847 = vunpack.c.l.b16 %v1899
    %v4848 = vunpack.c.h.b16 %v1899
    %v4849 = vunpack.c.l.b16 %v1900
    %v4850 = vunpack.c.h.b16 %v1900
    %v4851 = vunpack.c.l.b16 %v1901
    %v4852 = vunpack.c.h.b16 %v1901
    %v4853 = vunpack.c.l.b16 %v1902
    %v4854 = vunpack.c.h.b16 %v1902
    %v4855 = vunpack.c.l.b16 %v1903
    %v4856 = vunpack.c.h.b16 %v1903
    %v4857 = vunpack.c.l.b16 %v1904
    %v4858 = vunpack.c.h.b16 %v1904
    %v4859 = vunpack.c.l.b16 %v1905
    %v4860 = vunpack.c.h.b16 %v1905
    %v4861 = vunpack.c.l.b16 %v1906
    %v4862 = vunpack.c.h.b16 %v1906
    %v4863 = vunpack.c.l.b16 %v1907
    %v4864 = vunpack.c.h.b16 %v1907
    %v4865 = vunpack.c.l.b16 %v1908
    %v4866 = vunpack.c.h.b16 %v1908
    %v4867 = vunpack.c.l.b16 %v1909
    %v4868 = vunpack.c.h.b16 %v1909
    %v4869 = vunpack.c.l.b16 %v1910
    %v4870 = vunpack.c.h.b16 %v1910
    %v4871 = vunpack.c.l.b16 %v1911
    %v4872 = vunpack.c.h.b16 %v1911
    %v4873 = vunpack.c.l.b16 %v1912
    %v4874 = vunpack.c.h.b16 %v1912
    %v4875 = vunpack.c.l.b16 %v1913
    %v4876 = vunpack.c.h.b16 %v1913
    %v4877 = vunpack.c.l.b16 %v1914
    %v4878 = vunpack.c.h.b16 %v1914
    %v4879 = vunpack.c.l.b16 %v1915
    %v4880 = vunpack.c.h.b16 %v1915
    %v4881 = vunpack.c.l.b16 %v1916
    %v4882 = vunpack.c.h.b16 %v1916
    %v4883 = vunpack.c.l.b16 %v1917
    %v4884 = vunpack.c.h.b16 %v1917
    %v4885 = vunpack.c.l.b16 %v1918
    %v4886 = vunpack.c.h.b16 %v1918
    %v4887 = vunpack.c.l.b16 %v1919
    %v4888 = vunpack.c.h.b16 %v1919
    %v4889 = vunpack.c.l.b16 %v1920
    %v4890 = vunpack.c.h.b16 %v1920
    %v4891 = vunpack.c.l.b16 %v1921
    %v4892 = vunpack.c.h.b16 %v1921
    %v4893 = vunpack.c.l.b16 %v1922
    %v4894 = vunpack.c.h.b16 %v1922
    %v4895 = vunpack.c.l.b16 %v1923
    %v4896 = vunpack.c.h.b16 %v1923
    %v4897 = vunpack.c.l.b16 %v1924
    %v4898 = vunpack.c.h.b16 %v1924
    %v4899 = vunpack.c.l.b16 %v1925
    %v4900 = vunpack.c.h.b16 %v1925
    %v4901 = vunpack.c.l.b16 %v1926
    %v4902 = vunpack.c.h.b16 %v1926
    %v4903 = vunpack.c.l.b16 %v1927
    %v4904 = vunpack.c.h.b16 %v1927
    %v4905 = vunpack.c.l.b16 %v1928
    %v4906 = vunpack.c.h.b16 %v1928
    %v4907 = vunpack.c.l.b16 %v1929
    %v4908 = vunpack.c.h.b16 %v1929
    %v4909 = vunpack.c.l.b16 %v1930
    %v4910 = vunpack.c.h.b16 %v1930
    %v4911 = vunpack.c.l.b16 %v1931
    %v4912 = vunpack.c.h.b16 %v1931
    %v4913 = vunpack.c.l.b16 %v1932
    %v4914 = vunpack.c.h.b16 %v1932
    %v4915 = vunpack.c.l.b16 %v1933
    %v4916 = vunpack.c.h.b16 %v1933
    %v4917 = vunpack.c.l.b16 %v1934
    %v4918 = vunpack.c.h.b16 %v1934
    %v4919 = vunpack.c.l.b16 %v1935
    %v4920 = vunpack.c.h.b16 %v1935
    %v4921 = vunpack.c.l.b16 %v1936
    %v4922 = vunpack.c.h.b16 %v1936
    %v4923 = vunpack.c.l.b16 %v1937
    %v4924 = vunpack.c.h.b16 %v1937
    %v4925 = vunpack.c.l.b16 %v1938
    %v4926 = vunpack.c.h.b16 %v1938
    %v4927 = vunpack.c.l.b16 %v1939
    %v4928 = vunpack.c.h.b16 %v1939
    %v4929 = vunpack.c.l.b16 %v1940
    %v4930 = vunpack.c.h.b16 %v1940
    %v4931 = vunpack.c.l.b16 %v1941
    %v4932 = vunpack.c.h.b16 %v1941
    %v4933 = vunpack.c.l.b16 %v1942
    %v4934 = vunpack.c.h.b16 %v1942
    %v4935 = vunpack.c.l.b16 %v1943
    %v4936 = vunpack.c.h.b16 %v1943
    %v4937 = vunpack.c.l.b16 %v1944
    %v4938 = vunpack.c.h.b16 %v1944
    %v4939 = vunpack.c.l.b16 %v1945
    %v4940 = vunpack.c.h.b16 %v1945
    %v4941 = vunpack.c.l.b16 %v1946
    %v4942 = vunpack.c.h.b16 %v1946
    %v4943 = vunpack.c.l.b16 %v1947
    %v4944 = vunpack.c.h.b16 %v1947
    %v4945 = vunpack.c.l.b16 %v1948
    %v4946 = vunpack.c.h.b16 %v1948
    %v4947 = vunpack.c.l.b16 %v1949
    %v4948 = vunpack.c.h.b16 %v1949
    %v4949 = vunpack.c.l.b16 %v1950
    %v4950 = vunpack.c.h.b16 %v1950
    %v4951 = vunpack.c.l.b16 %v1951
    %v4952 = vunpack.c.h.b16 %v1951
    %v4953 = vunpack.c.l.b16 %v1952
    %v4954 = vunpack.c.h.b16 %v1952
    %v4955 = vunpack.c.l.b16 %v1953
    %v4956 = vunpack.c.h.b16 %v1953
    %v4957 = vunpack.c.l.b16 %v1954
    %v4958 = vunpack.c.h.b16 %v1954
    %v4959 = vunpack.c.l.b16 %v1955
    %v4960 = vunpack.c.h.b16 %v1955
    %v4961 = vunpack.c.l.b16 %v1956
    %v4962 = vunpack.c.h.b16 %v1956
    %v4963 = vunpack.c.l.b16 %v1957
    %v4964 = vunpack.c.h.b16 %v1957
    %v4965 = vunpack.c.l.b16 %v1958
    %v4966 = vunpack.c.h.b16 %v1958
    %v4967 = vunpack.c.l.b16 %v1959
    %v4968 = vunpack.c.h.b16 %v1959
    %v4969 = vunpack.c.l.b16 %v1960
    %v4970 = vunpack.c.h.b16 %v1960
    %v4971 = vunpack.c.l.b16 %v1961
    %v4972 = vunpack.c.h.b16 %v1961
    %v4973 = vunpack.c.l.b16 %v1962
    %v4974 = vunpack.c.h.b16 %v1962
    %v4975 = vunpack.c.l.b16 %v1963
    %v4976 = vunpack.c.h.b16 %v1963
    %v4977 = vunpack.c.l.b16 %v1964
    %v4978 = vunpack.c.h.b16 %v1964
    %v4979 = vunpack.c.l.b16 %v1965
    %v4980 = vunpack.c.h.b16 %v1965
    %v4981 = vunpack.c.l.b16 %v1966
    %v4982 = vunpack.c.h.b16 %v1966
    %v4983 = vunpack.c.l.b16 %v1967
    %v4984 = vunpack.c.h.b16 %v1967
    %v4985 = vunpack.c.l.b16 %v1968
    %v4986 = vunpack.c.h.b16 %v1968
    %v4987 = vunpack.c.l.b16 %v1969
    %v4988 = vunpack.c.h.b16 %v1969
    %v4989 = vunpack.c.l.b16 %v1970
    %v4990 = vunpack.c.h.b16 %v1970
    %v4991 = vunpack.c.l.b16 %v1971
    %v4992 = vunpack.c.h.b16 %v1971
    %v4993 = vunpack.c.l.b16 %v1972
    %v4994 = vunpack.c.h.b16 %v1972
    %v4995 = vunpack.c.l.b16 %v1973
    %v4996 = vunpack.c.h.b16 %v1973
    %v4997 = vunpack.c.l.b16 %v1974
    %v4998 = vunpack.c.h.b16 %v1974
    %v4999 = vunpack.c.l.b16 %v1975
    %v5000 = vunpack.c.h.b16 %v1975
    %v5001 = vunpack.c.l.b16 %v1976
    %v5002 = vunpack.c.h.b16 %v1976
    %v5003 = vunpack.c.l.b16 %v1977
    %v5004 = vunpack.c.h.b16 %v1977
    %v5005 = vunpack.c.l.b16 %v1978
    %v5006 = vunpack.c.h.b16 %v1978
    %v5007 = vunpack.c.l.b16 %v1979
    %v5008 = vunpack.c.h.b16 %v1979
    %v5009 = vunpack.c.l.b16 %v1980
    %v5010 = vunpack.c.h.b16 %v1980
    %v5011 = vunpack.c.l.b16 %v1981
    %v5012 = vunpack.c.h.b16 %v1981
    %v5013 = vunpack.c.l.b16 %v1982
    %v5014 = vunpack.c.h.b16 %v1982
    %v5015 = vunpack.c.l.b16 %v1983
    %v5016 = vunpack.c.h.b16 %v1983
    %v5017 = vunpack.c.l.b16 %v1984
    %v5018 = vunpack.c.h.b16 %v1984
    %v5019 = vunpack.c.l.b16 %v1985
    %v5020 = vunpack.c.h.b16 %v1985
    %v5021 = vunpack.c.l.b16 %v1986
    %v5022 = vunpack.c.h.b16 %v1986
    %v5023 = vunpack.c.l.b16 %v1987
    %v5024 = vunpack.c.h.b16 %v1987
    %v5025 = vunpack.c.l.b16 %v1988
    %v5026 = vunpack.c.h.b16 %v1988
    %v5027 = vunpack.c.l.b16 %v1989
    %v5028 = vunpack.c.h.b16 %v1989
    %v5029 = vunpack.c.l.b16 %v1990
    %v5030 = vunpack.c.h.b16 %v1990
    %v5031 = vunpack.c.l.b16 %v1991
    %v5032 = vunpack.c.h.b16 %v1991
    %v5033 = vunpack.c.l.b16 %v1992
    %v5034 = vunpack.c.h.b16 %v1992
    %v5035 = vunpack.c.l.b16 %v1993
    %v5036 = vunpack.c.h.b16 %v1993
    %v5037 = vunpack.c.l.b16 %v1994
    %v5038 = vunpack.c.h.b16 %v1994
    %v5039 = vunpack.c.l.b16 %v1995
    %v5040 = vunpack.c.h.b16 %v1995
    %v5041 = vunpack.c.l.b16 %v1996
    %v5042 = vunpack.c.h.b16 %v1996
    %v5043 = vunpack.c.l.b16 %v1997
    %v5044 = vunpack.c.h.b16 %v1997
    %v5045 = vunpack.c.l.b16 %v1998
    %v5046 = vunpack.c.h.b16 %v1998
    %v5047 = vunpack.c.l.b16 %v1999
    %v5048 = vunpack.c.h.b16 %v1999
    %v5049 = vunpack.c.l.b16 %v2000
    %v5050 = vunpack.c.h.b16 %v2000
    %v5051 = vunpack.c.l.b16 %v2001
    %v5052 = vunpack.c.h.b16 %v2001
    %v5053 = vunpack.c.l.b16 %v2002
    %v5054 = vunpack.c.h.b16 %v2002
    %v5055 = vunpack.c.l.b16 %v2003
    %v5056 = vunpack.c.h.b16 %v2003
    %v5057 = vunpack.c.l.b16 %v2004
    %v5058 = vunpack.c.h.b16 %v2004
    %v5059 = vunpack.c.l.b16 %v2005
    %v5060 = vunpack.c.h.b16 %v2005
    %v5061 = vunpack.c.l.b16 %v2006
    %v5062 = vunpack.c.h.b16 %v2006
    %v5063 = vunpack.c.l.b16 %v2007
    %v5064 = vunpack.c.h.b16 %v2007
    %v5065 = vunpack.c.l.b16 %v2008
    %v5066 = vunpack.c.h.b16 %v2008
    %v5067 = vunpack.c.l.b16 %v2009
    %v5068 = vunpack.c.h.b16 %v2009
    %v5069 = vunpack.c.l.b16 %v2010
    %v5070 = vunpack.c.h.b16 %v2010
    %v5071 = vunpack.c.l.b16 %v2011
    %v5072 = vunpack.c.h.b16 %v2011
    %v5073 = vunpack.c.l.b16 %v2012
    %v5074 = vunpack.c.h.b16 %v2012
    %v5075 = vunpack.c.l.b16 %v2013
    %v5076 = vunpack.c.h.b16 %v2013
    %v5077 = vunpack.c.l.b16 %v2014
    %v5078 = vunpack.c.h.b16 %v2014
    %v5079 = vunpack.c.l.b16 %v2015
    %v5080 = vunpack.c.h.b16 %v2015
    %v5081 = vunpack.c.l.b16 %v2016
    %v5082 = vunpack.c.h.b16 %v2016
    %v5083 = vunpack.c.l.b16 %v2017
    %v5084 = vunpack.c.h.b16 %v2017
    %v5085 = vunpack.c.l.b16 %v2018
    %v5086 = vunpack.c.h.b16 %v2018
    %v5087 = vunpack.c.l.b16 %v2019
    %v5088 = vunpack.c.h.b16 %v2019
    %v5089 = vunpack.c.l.b16 %v2020
    %v5090 = vunpack.c.h.b16 %v2020
    %v5091 = vunpack.c.l.b16 %v2021
    %v5092 = vunpack.c.h.b16 %v2021
    %v5093 = vunpack.c.l.b16 %v2022
    %v5094 = vunpack.c.h.b16 %v2022
    %v5095 = vunpack.c.l.b16 %v2023
    %v5096 = vunpack.c.h.b16 %v2023
    %v5097 = vunpack.c.l.b16 %v2024
    %v5098 = vunpack.c.h.b16 %v2024
    %v5099 = vunpack.c.l.b16 %v2025
    %v5100 = vunpack.c.h.b16 %v2025
    %v5101 = vunpack.c.l.b16 %v2026
    %v5102 = vunpack.c.h.b16 %v2026
    %v5103 = vunpack.c.l.b16 %v2027
    %v5104 = vunpack.c.h.b16 %v2027
    %v5105 = vunpack.c.l.b16 %v2028
    %v5106 = vunpack.c.h.b16 %v2028
    %v5107 = vunpack.c.l.b16 %v2029
    %v5108 = vunpack.c.h.b16 %v2029
    %v5109 = vunpack.c.l.b16 %v2030
    %v5110 = vunpack.c.h.b16 %v2030
    %v5111 = vunpack.c.l.b16 %v2031
    %v5112 = vunpack.c.h.b16 %v2031
    %v5113 = vunpack.c.l.b16 %v2032
    %v5114 = vunpack.c.h.b16 %v2032
    %v5115 = vunpack.c.l.b16 %v2033
    %v5116 = vunpack.c.h.b16 %v2033
    %v5117 = vunpack.c.l.b16 %v2034
    %v5118 = vunpack.c.h.b16 %v2034
    %v5119 = vunpack.c.l.b16 %v2035
    %v5120 = vunpack.c.h.b16 %v2035
    %v5121 = vunpack.c.l.b16 %v2036
    %v5122 = vunpack.c.h.b16 %v2036
    %v5123 = vunpack.c.l.b16 %v2037
    %v5124 = vunpack.c.h.b16 %v2037
    %v5125 = vunpack.c.l.b16 %v2038
    %v5126 = vunpack.c.h.b16 %v2038
    %v5127 = vunpack.c.l.b16 %v2039
    %v5128 = vunpack.c.h.b16 %v2039
    %v5129 = vunpack.c.l.b16 %v2040
    %v5130 = vunpack.c.h.b16 %v2040
    %v5131 = vunpack.c.l.b16 %v2041
    %v5132 = vunpack.c.h.b16 %v2041
    %v5133 = vunpack.c.l.b16 %v2042
    %v5134 = vunpack.c.h.b16 %v2042
    %v5135 = vunpack.c.l.b16 %v2043
    %v5136 = vunpack.c.h.b16 %v2043
    %v5137 = vunpack.c.l.b16 %v2044
    %v5138 = vunpack.c.h.b16 %v2044
    %v5139 = vunpack.c.l.b16 %v2045
    %v5140 = vunpack.c.h.b16 %v2045
    %v5141 = vunpack.c.l.b16 %v2046
    %v5142 = vunpack.c.h.b16 %v2046
    %v5143 = vunpack.c.l.b16 %v2047
    %v5144 = vunpack.c.h.b16 %v2047
    %v5145 = vunpack.c.l.b16 %v2048
    %v5146 = vunpack.c.h.b16 %v2048
    %v5147 = vunpack.c.l.b16 %v2049
    %v5148 = vunpack.c.h.b16 %v2049
    %v5149 = vunpack.c.l.b16 %v2050
    %v5150 = vunpack.c.h.b16 %v2050
    %v5151 = vunpack.c.l.b16 %v2051
    %v5152 = vunpack.c.h.b16 %v2051
    %v5153 = vunpack.c.l.b16 %v2052
    %v5154 = vunpack.c.h.b16 %v2052
    %v5155 = vunpack.c.l.b16 %v2053
    %v5156 = vunpack.c.h.b16 %v2053
    %v5157 = vunpack.c.l.b16 %v2054
    %v5158 = vunpack.c.h.b16 %v2054
    %v5159 = vunpack.c.l.b16 %v2055
    %v5160 = vunpack.c.h.b16 %v2055
    %v5161 = vunpack.c.l.b16 %v2056
    %v5162 = vunpack.c.h.b16 %v2056
    %v5163 = vunpack.c.l.b16 %v2057
    %v5164 = vunpack.c.h.b16 %v2057
    %v5165 = vunpack.c.l.b16 %v2058
    %v5166 = vunpack.c.h.b16 %v2058
    %v5167 = vunpack.c.l.b16 %v2059
    %v5168 = vunpack.c.h.b16 %v2059
    %v5169 = vunpack.c.l.b16 %v2060
    %v5170 = vunpack.c.h.b16 %v2060
    %v5171 = vunpack.c.l.b16 %v2061
    %v5172 = vunpack.c.h.b16 %v2061
    %v5173 = vunpack.c.l.b16 %v2062
    %v5174 = vunpack.c.h.b16 %v2062
    %v5175 = vunpack.c.l.b16 %v2063
    %v5176 = vunpack.c.h.b16 %v2063
    %v5177 = vunpack.c.l.b16 %v2064
    %v5178 = vunpack.c.h.b16 %v2064
    %v5179 = vunpack.c.l.b16 %v2065
    %v5180 = vunpack.c.h.b16 %v2065
    %v5181 = vunpack.c.l.b16 %v2066
    %v5182 = vunpack.c.h.b16 %v2066
    %v5183 = vunpack.c.l.b16 %v2067
    %v5184 = vunpack.c.h.b16 %v2067
    %v5185 = vunpack.c.l.b16 %v2068
    %v5186 = vunpack.c.h.b16 %v2068
    %v5187 = vunpack.c.l.b16 %v2069
    %v5188 = vunpack.c.h.b16 %v2069
    %v5189 = vunpack.c.l.b16 %v2070
    %v5190 = vunpack.c.h.b16 %v2070
    %v5191 = vunpack.c.l.b16 %v2071
    %v5192 = vunpack.c.h.b16 %v2071
    %v5193 = vunpack.c.l.b16 %v2072
    %v5194 = vunpack.c.h.b16 %v2072
    %v5195 = vunpack.c.l.b16 %v2073
    %v5196 = vunpack.c.h.b16 %v2073
    %v5197 = vunpack.c.l.b16 %v2074
    %v5198 = vunpack.c.h.b16 %v2074
    %v5199 = vunpack.c.l.b16 %v2075
    %v5200 = vunpack.c.h.b16 %v2075
    %v5201 = vunpack.c.l.b16 %v2076
    %v5202 = vunpack.c.h.b16 %v2076
    %v5203 = vunpack.c.l.b16 %v2077
    %v5204 = vunpack.c.h.b16 %v2077
    %v5205 = vunpack.c.l.b16 %v2078
    %v5206 = vunpack.c.h.b16 %v2078
    %v5207 = vunpack.c.l.b16 %v2079
    %v5208 = vunpack.c.h.b16 %v2079
    %v5209 = vunpack.c.l.b16 %v2080
    %v5210 = vunpack.c.h.b16 %v2080
    %v5211 = vunpack.c.l.b16 %v2081
    %v5212 = vunpack.c.h.b16 %v2081
    %v5213 = vunpack.c.l.b16 %v2082
    %v5214 = vunpack.c.h.b16 %v2082
    %v5215 = vunpack.c.l.b16 %v2083
    %v5216 = vunpack.c.h.b16 %v2083
    %v5217 = vunpack.c.l.b16 %v2084
    %v5218 = vunpack.c.h.b16 %v2084
    %v5219 = vunpack.c.l.b16 %v2085
    %v5220 = vunpack.c.h.b16 %v2085
    %v5221 = vunpack.c.l.b16 %v2086
    %v5222 = vunpack.c.h.b16 %v2086
    %v5223 = vunpack.c.l.b16 %v2087
    %v5224 = vunpack.c.h.b16 %v2087
    %v5225 = vunpack.c.l.b16 %v2088
    %v5226 = vunpack.c.h.b16 %v2088
    %v5227 = vunpack.c.l.b16 %v2089
    %v5228 = vunpack.c.h.b16 %v2089
    %v5229 = vunpack.c.l.b16 %v2090
    %v5230 = vunpack.c.h.b16 %v2090
    %v5231 = vunpack.c.l.b16 %v2091
    %v5232 = vunpack.c.h.b16 %v2091
    %v5233 = vunpack.c.l.b16 %v2092
    %v5234 = vunpack.c.h.b16 %v2092
    %v5235 = vunpack.c.l.b16 %v2093
    %v5236 = vunpack.c.h.b16 %v2093
    %v5237 = vunpack.c.l.b16 %v2094
    %v5238 = vunpack.c.h.b16 %v2094
    %v5239 = vunpack.c.l.b16 %v2095
    %v5240 = vunpack.c.h.b16 %v2095
    %v5241 = vunpack.c.l.b16 %v2096
    %v5242 = vunpack.c.h.b16 %v2096
    %v5243 = vunpack.c.l.b16 %v2097
    %v5244 = vunpack.c.h.b16 %v2097
    %v5245 = vunpack.c.l.b16 %v2098
    %v5246 = vunpack.c.h.b16 %v2098
    %v5247 = vunpack.c.l.b16 %v2099
    %v5248 = vunpack.c.h.b16 %v2099
    %v5249 = vunpack.c.l.b16 %v2100
    %v5250 = vunpack.c.h.b16 %v2100
    %v5251 = vunpack.c.l.b16 %v2101
    %v5252 = vunpack.c.h.b16 %v2101
    %v5253 = vunpack.c.l.b16 %v2102
    %v5254 = vunpack.c.h.b16 %v2102
    %v5255 = vunpack.c.l.b16 %v2103
    %v5256 = vunpack.c.h.b16 %v2103
    %v5257 = vunpack.c.l.b16 %v2104
    %v5258 = vunpack.c.h.b16 %v2104
    %v5259 = vunpack.c.l.b16 %v2105
    %v5260 = vunpack.c.h.b16 %v2105
    %v5261 = vunpack.c.l.b16 %v2106
    %v5262 = vunpack.c.h.b16 %v2106
    %v5263 = vpack.c.b16 %v3231, %v3215
    %v5264 = vpack.c.b16 %v3232, %v3216
    %v5265 = vpack.c.b16 %v3233, %v3217
    %v5266 = vpack.c.b16 %v3234, %v3218
    %v5267 = vpack.c.b16 %v3235, %v3219
    %v5268 = vpack.c.b16 %v3236, %v3220
    %v5269 = vpack.c.b16 %v3237, %v3221
    %v5270 = vpack.c.b16 %v3238, %v3222
    %v5271 = vpack.c.b16 %v3239, %v3223
    %v5272 = vpack.c.b16 %v3240, %v3224
    %v5273 = vpack.c.b16 %v3241, %v3225
    %v5274 = vpack.c.b16 %v3242, %v3226
    %v5275 = vpack.c.b16 %v3243, %v3227
    %v5276 = vpack.c.b16 %v3244, %v3228
    %v5277 = vpack.c.b16 %v3245, %v3229
    %v5278 = vpack.c.b16 %v3246, %v3230
    %v5279 = vpack.c.b16 %v3263, %v3247
    %v5280 = vpack.c.b16 %v3264, %v3248
    %v5281 = vpack.c.b16 %v3265, %v3249
    %v5282 = vpack.c.b16 %v3266, %v3250
    %v5283 = vpack.c.b16 %v3267, %v3251
    %v5284 = vpack.c.b16 %v3268, %v3252
    %v5285 = vpack.c.b16 %v3269, %v3253
    %v5286 = vpack.c.b16 %v3270, %v3254
    %v5287 = vpack.c.b16 %v3271, %v3255
    %v5288 = vpack.c.b16 %v3272, %v3256
    %v5289 = vpack.c.b16 %v3273, %v3257
    %v5290 = vpack.c.b16 %v3274, %v3258
    %v5291 = vpack.c.b16 %v3275, %v3259
    %v5292 = vpack.c.b16 %v3276, %v3260
    %v5293 = vpack.c.b16 %v3277, %v3261
    %v5294 = vpack.c.b16 %v3278, %v3262
    %v5295 = vpack.c.b16 %v3295, %v3279
    %v5296 = vpack.c.b16 %v3296, %v3280
    %v5297 = vpack.c.b16 %v3297, %v3281
    %v5298 = vpack.c.b16 %v3298, %v3282
    %v5299 = vpack.c.b16 %v3299, %v3283
    %v5300 = vpack.c.b16 %v3300, %v3284
    %v5301 = vpack.c.b16 %v3301, %v3285
    %v5302 = vpack.c.b16 %v3302, %v3286
    %v5303 = vpack.c.b16 %v3303, %v3287
    %v5304 = vpack.c.b16 %v3304, %v3288
    %v5305 = vpack.c.b16 %v3305, %v3289
    %v5306 = vpack.c.b16 %v3306, %v3290
    %v5307 = vpack.c.b16 %v3307, %v3291
    %v5308 = vpack.c.b16 %v3308, %v3292
    %v5309 = vpack.c.b16 %v3309, %v3293
    %v5310 = vpack.c.b16 %v3310, %v3294
    %v5311 = vpack.c.b16 %v3327, %v3311
    %v5312 = vpack.c.b16 %v3328, %v3312
    %v5313 = vpack.c.b16 %v3329, %v3313
    %v5314 = vpack.c.b16 %v3330, %v3314
    %v5315 = vpack.c.b16 %v3331, %v3315
    %v5316 = vpack.c.b16 %v3332, %v3316
    %v5317 = vpack.c.b16 %v3333, %v3317
    %v5318 = vpack.c.b16 %v3334, %v3318
    %v5319 = vpack.c.b16 %v3335, %v3319
    %v5320 = vpack.c.b16 %v3336, %v3320
    %v5321 = vpack.c.b16 %v3337, %v3321
    %v5322 = vpack.c.b16 %v3338, %v3322
    %v5323 = vpack.c.b16 %v3339, %v3323
    %v5324 = vpack.c.b16 %v3340, %v3324
    %v5325 = vpack.c.b16 %v3341, %v3325
    %v5326 = vpack.c.b16 %v3342, %v3326
    %v5327 = vpack.c.b16 %v3359, %v3343
    %v5328 = vpack.c.b16 %v3360, %v3344
    %v5329 = vpack.c.b16 %v3361, %v3345
    %v5330 = vpack.c.b16 %v3362, %v3346
    %v5331 = vpack.c.b16 %v3363, %v3347
    %v5332 = vpack.c.b16 %v3364, %v3348
    %v5333 = vpack.c.b16 %v3365, %v3349
    %v5334 = vpack.c.b16 %v3366, %v3350
    %v5335 = vpack.c.b16 %v3367, %v3351
    %v5336 = vpack.c.b16 %v3368, %v3352
    %v5337 = vpack.c.b16 %v3369, %v3353
    %v5338 = vpack.c.b16 %v3370, %v3354
    %v5339 = vpack.c.b16 %v3371, %v3355
    %v5340 = vpack.c.b16 %v3372, %v3356
    %v5341 = vpack.c.b16 %v3373, %v3357
    %v5342 = vpack.c.b16 %v3374, %v3358
    %v5343 = vpack.c.b16 %v3391, %v3375
    %v5344 = vpack.c.b16 %v3392, %v3376
    %v5345 = vpack.c.b16 %v3393, %v3377
    %v5346 = vpack.c.b16 %v3394, %v3378
    %v5347 = vpack.c.b16 %v3395, %v3379
    %v5348 = vpack.c.b16 %v3396, %v3380
    %v5349 = vpack.c.b16 %v3397, %v3381
    %v5350 = vpack.c.b16 %v3398, %v3382
    %v5351 = vpack.c.b16 %v3399, %v3383
    %v5352 = vpack.c.b16 %v3400, %v3384
    %v5353 = vpack.c.b16 %v3401, %v3385
    %v5354 = vpack.c.b16 %v3402, %v3386
    %v5355 = vpack.c.b16 %v3403, %v3387
    %v5356 = vpack.c.b16 %v3404, %v3388
    %v5357 = vpack.c.b16 %v3405, %v3389
    %v5358 = vpack.c.b16 %v3406, %v3390
    %v5359 = vpack.c.b16 %v3423, %v3407
    %v5360 = vpack.c.b16 %v3424, %v3408
    %v5361 = vpack.c.b16 %v3425, %v3409
    %v5362 = vpack.c.b16 %v3426, %v3410
    %v5363 = vpack.c.b16 %v3427, %v3411
    %v5364 = vpack.c.b16 %v3428, %v3412
    %v5365 = vpack.c.b16 %v3429, %v3413
    %v5366 = vpack.c.b16 %v3430, %v3414
    %v5367 = vpack.c.b16 %v3431, %v3415
    %v5368 = vpack.c.b16 %v3432, %v3416
    %v5369 = vpack.c.b16 %v3433, %v3417
    %v5370 = vpack.c.b16 %v3434, %v3418
    %v5371 = vpack.c.b16 %v3435, %v3419
    %v5372 = vpack.c.b16 %v3436, %v3420
    %v5373 = vpack.c.b16 %v3437, %v3421
    %v5374 = vpack.c.b16 %v3438, %v3422
    %v5375 = vpack.c.b16 %v3455, %v3439
    %v5376 = vpack.c.b16 %v3456, %v3440
    %v5377 = vpack.c.b16 %v3457, %v3441
    %v5378 = vpack.c.b16 %v3458, %v3442
    %v5379 = vpack.c.b16 %v3459, %v3443
    %v5380 = vpack.c.b16 %v3460, %v3444
    %v5381 = vpack.c.b16 %v3461, %v3445
    %v5382 = vpack.c.b16 %v3462, %v3446
    %v5383 = vpack.c.b16 %v3463, %v3447
    %v5384 = vpack.c.b16 %v3464, %v3448
    %v5385 = vpack.c.b16 %v3465, %v3449
    %v5386 = vpack.c.b16 %v3466, %v3450
    %v5387 = vpack.c.b16 %v3467, %v3451
    %v5388 = vpack.c.b16 %v3468, %v3452
    %v5389 = vpack.c.b16 %v3469, %v3453
    %v5390 = vpack.c.b16 %v3470, %v3454
    %v5391 = vpack.c.b16 %v3487, %v3471
    %v5392 = vpack.c.b16 %v3488, %v3472
    %v5393 = vpack.c.b16 %v3489, %v3473
    %v5394 = vpack.c.b16 %v3490, %v3474
    %v5395 = vpack.c.b16 %v3491, %v3475
    %v5396 = vpack.c.b16 %v3492, %v3476
    %v5397 = vpack.c.b16 %v3493, %v3477
    %v5398 = vpack.c.b16 %v3494, %v3478
    %v5399 = vpack.c.b16 %v3495, %v3479
    %v5400 = vpack.c.b16 %v3496, %v3480
    %v5401 = vpack.c.b16 %v3497, %v3481
    %v5402 = vpack.c.b16 %v3498, %v3482
    %v5403 = vpack.c.b16 %v3499, %v3483
    %v5404 = vpack.c.b16 %v3500, %v3484
    %v5405 = vpack.c.b16 %v3501, %v3485
    %v5406 = vpack.c.b16 %v3502, %v3486
    %v5407 = vpack.c.b16 %v3519, %v3503
    %v5408 = vpack.c.b16 %v3520, %v3504
    %v5409 = vpack.c.b16 %v3521, %v3505
    %v5410 = vpack.c.b16 %v3522, %v3506
    %v5411 = vpack.c.b16 %v3523, %v3507
    %v5412 = vpack.c.b16 %v3524, %v3508
    %v5413 = vpack.c.b16 %v3525, %v3509
    %v5414 = vpack.c.b16 %v3526, %v3510
    %v5415 = vpack.c.b16 %v3527, %v3511
    %v5416 = vpack.c.b16 %v3528, %v3512
    %v5417 = vpack.c.b16 %v3529, %v3513
    %v5418 = vpack.c.b16 %v3530, %v3514
    %v5419 = vpack.c.b16 %v3531, %v3515
    %v5420 = vpack.c.b16 %v3532, %v3516
    %v5421 = vpack.c.b16 %v3533, %v3517
    %v5422 = vpack.c.b16 %v3534, %v3518
    %v5423 = vpack.c.b16 %v3551, %v3535
    %v5424 = vpack.c.b16 %v3552, %v3536
    %v5425 = vpack.c.b16 %v3553, %v3537
    %v5426 = vpack.c.b16 %v3554, %v3538
    %v5427 = vpack.c.b16 %v3555, %v3539
    %v5428 = vpack.c.b16 %v3556, %v3540
    %v5429 = vpack.c.b16 %v3557, %v3541
    %v5430 = vpack.c.b16 %v3558, %v3542
    %v5431 = vpack.c.b16 %v3559, %v3543
    %v5432 = vpack.c.b16 %v3560, %v3544
    %v5433 = vpack.c.b16 %v3561, %v3545
    %v5434 = vpack.c.b16 %v3562, %v3546
    %v5435 = vpack.c.b16 %v3563, %v3547
    %v5436 = vpack.c.b16 %v3564, %v3548
    %v5437 = vpack.c.b16 %v3565, %v3549
    %v5438 = vpack.c.b16 %v3566, %v3550
    %v5439 = vpack.c.b16 %v3583, %v3567
    %v5440 = vpack.c.b16 %v3584, %v3568
    %v5441 = vpack.c.b16 %v3585, %v3569
    %v5442 = vpack.c.b16 %v3586, %v3570
    %v5443 = vpack.c.b16 %v3587, %v3571
    %v5444 = vpack.c.b16 %v3588, %v3572
    %v5445 = vpack.c.b16 %v3589, %v3573
    %v5446 = vpack.c.b16 %v3590, %v3574
    %v5447 = vpack.c.b16 %v3591, %v3575
    %v5448 = vpack.c.b16 %v3592, %v3576
    %v5449 = vpack.c.b16 %v3593, %v3577
    %v5450 = vpack.c.b16 %v3594, %v3578
    %v5451 = vpack.c.b16 %v3595, %v3579
    %v5452 = vpack.c.b16 %v3596, %v3580
    %v5453 = vpack.c.b16 %v3597, %v3581
    %v5454 = vpack.c.b16 %v3598, %v3582
    %v5455 = vpack.c.b16 %v3615, %v3599
    %v5456 = vpack.c.b16 %v3616, %v3600
    %v5457 = vpack.c.b16 %v3617, %v3601
    %v5458 = vpack.c.b16 %v3618, %v3602
    %v5459 = vpack.c.b16 %v3619, %v3603
    %v5460 = vpack.c.b16 %v3620, %v3604
    %v5461 = vpack.c.b16 %v3621, %v3605
    %v5462 = vpack.c.b16 %v3622, %v3606
    %v5463 = vpack.c.b16 %v3623, %v3607
    %v5464 = vpack.c.b16 %v3624, %v3608
    %v5465 = vpack.c.b16 %v3625, %v3609
    %v5466 = vpack.c.b16 %v3626, %v3610
    %v5467 = vpack.c.b16 %v3627, %v3611
    %v5468 = vpack.c.b16 %v3628, %v3612
    %v5469 = vpack.c.b16 %v3629, %v3613
    %v5470 = vpack.c.b16 %v3630, %v3614
    %v5471 = vpack.c.b16 %v3647, %v3631
    %v5472 = vpack.c.b16 %v3648, %v3632
    %v5473 = vpack.c.b16 %v3649, %v3633
    %v5474 = vpack.c.b16 %v3650, %v3634
    %v5475 = vpack.c.b16 %v3651, %v3635
    %v5476 = vpack.c.b16 %v3652, %v3636
    %v5477 = vpack.c.b16 %v3653, %v3637
    %v5478 = vpack.c.b16 %v3654, %v3638
    %v5479 = vpack.c.b16 %v3655, %v3639
    %v5480 = vpack.c.b16 %v3656, %v3640
    %v5481 = vpack.c.b16 %v3657, %v3641
    %v5482 = vpack.c.b16 %v3658, %v3642
    %v5483 = vpack.c.b16 %v3659, %v3643
    %v5484 = vpack.c.b16 %v3660, %v3644
    %v5485 = vpack.c.b16 %v3661, %v3645
    %v5486 = vpack.c.b16 %v3662, %v3646
    %v5487 = vpack.c.b16 %v3679, %v3663
    %v5488 = vpack.c.b16 %v3680, %v3664
    %v5489 = vpack.c.b16 %v3681, %v3665
    %v5490 = vpack.c.b16 %v3682, %v3666
    %v5491 = vpack.c.b16 %v3683, %v3667
    %v5492 = vpack.c.b16 %v3684, %v3668
    %v5493 = vpack.c.b16 %v3685, %v3669
    %v5494 = vpack.c.b16 %v3686, %v3670
    %v5495 = vpack.c.b16 %v3687, %v3671
    %v5496 = vpack.c.b16 %v3688, %v3672
    %v5497 = vpack.c.b16 %v3689, %v3673
    %v5498 = vpack.c.b16 %v3690, %v3674
    %v5499 = vpack.c.b16 %v3691, %v3675
    %v5500 = vpack.c.b16 %v3692, %v3676
    %v5501 = vpack.c.b16 %v3693, %v3677
    %v5502 = vpack.c.b16 %v3694, %v3678
    %v5503 = vpack.c.b16 %v3711, %v3695
    %v5504 = vpack.c.b16 %v3712, %v3696
    %v5505 = vpack.c.b16 %v3713, %v3697
    %v5506 = vpack.c.b16 %v3714, %v3698
    %v5507 = vpack.c.b16 %v3715, %v3699
    %v5508 = vpack.c.b16 %v3716, %v3700
    %v5509 = vpack.c.b16 %v3717, %v3701
    %v5510 = vpack.c.b16 %v3718, %v3702
    %v5511 = vpack.c.b16 %v3719, %v3703
    %v5512 = vpack.c.b16 %v3720, %v3704
    %v5513 = vpack.c.b16 %v3721, %v3705
    %v5514 = vpack.c.b16 %v3722, %v3706
    %v5515 = vpack.c.b16 %v3723, %v3707
    %v5516 = vpack.c.b16 %v3724, %v3708
    %v5517 = vpack.c.b16 %v3725, %v3709
    %v5518 = vpack.c.b16 %v3726, %v3710
    %v5519 = vpack.c.b16 %v3743, %v3727
    %v5520 = vpack.c.b16 %v3744, %v3728
    %v5521 = vpack.c.b16 %v3745, %v3729
    %v5522 = vpack.c.b16 %v3746, %v3730
    %v5523 = vpack.c.b16 %v3747, %v3731
    %v5524 = vpack.c.b16 %v3748, %v3732
    %v5525 = vpack.c.b16 %v3749, %v3733
    %v5526 = vpack.c.b16 %v3750, %v3734
    %v5527 = vpack.c.b16 %v3751, %v3735
    %v5528 = vpack.c.b16 %v3752, %v3736
    %v5529 = vpack.c.b16 %v3753, %v3737
    %v5530 = vpack.c.b16 %v3754, %v3738
    %v5531 = vpack.c.b16 %v3755, %v3739
    %v5532 = vpack.c.b16 %v3756, %v3740
    %v5533 = vpack.c.b16 %v3757, %v3741
    %v5534 = vpack.c.b16 %v3758, %v3742
    %v5535 = vpack.c.b16 %v3775, %v3759
    %v5536 = vpack.c.b16 %v3776, %v3760
    %v5537 = vpack.c.b16 %v3777, %v3761
    %v5538 = vpack.c.b16 %v3778, %v3762
    %v5539 = vpack.c.b16 %v3779, %v3763
    %v5540 = vpack.c.b16 %v3780, %v3764
    %v5541 = vpack.c.b16 %v3781, %v3765
    %v5542 = vpack.c.b16 %v3782, %v3766
    %v5543 = vpack.c.b16 %v3783, %v3767
    %v5544 = vpack.c.b16 %v3784, %v3768
    %v5545 = vpack.c.b16 %v3785, %v3769
    %v5546 = vpack.c.b16 %v3786, %v3770
    %v5547 = vpack.c.b16 %v3787, %v3771
    %v5548 = vpack.c.b16 %v3788, %v3772
    %v5549 = vpack.c.b16 %v3789, %v3773
    %v5550 = vpack.c.b16 %v3790, %v3774
    %v5551 = vpack.c.b16 %v3807, %v3791
    %v5552 = vpack.c.b16 %v3808, %v3792
    %v5553 = vpack.c.b16 %v3809, %v3793
    %v5554 = vpack.c.b16 %v3810, %v3794
    %v5555 = vpack.c.b16 %v3811, %v3795
    %v5556 = vpack.c.b16 %v3812, %v3796
    %v5557 = vpack.c.b16 %v3813, %v3797
    %v5558 = vpack.c.b16 %v3814, %v3798
    %v5559 = vpack.c.b16 %v3815, %v3799
    %v5560 = vpack.c.b16 %v3816, %v3800
    %v5561 = vpack.c.b16 %v3817, %v3801
    %v5562 = vpack.c.b16 %v3818, %v3802
    %v5563 = vpack.c.b16 %v3819, %v3803
    %v5564 = vpack.c.b16 %v3820, %v3804
    %v5565 = vpack.c.b16 %v3821, %v3805
    %v5566 = vpack.c.b16 %v3822, %v3806
    %v5567 = vpack.c.b16 %v3839, %v3823
    %v5568 = vpack.c.b16 %v3840, %v3824
    %v5569 = vpack.c.b16 %v3841, %v3825
    %v5570 = vpack.c.b16 %v3842, %v3826
    %v5571 = vpack.c.b16 %v3843, %v3827
    %v5572 = vpack.c.b16 %v3844, %v3828
    %v5573 = vpack.c.b16 %v3845, %v3829
    %v5574 = vpack.c.b16 %v3846, %v3830
    %v5575 = vpack.c.b16 %v3847, %v3831
    %v5576 = vpack.c.b16 %v3848, %v3832
    %v5577 = vpack.c.b16 %v3849, %v3833
    %v5578 = vpack.c.b16 %v3850, %v3834
    %v5579 = vpack.c.b16 %v3851, %v3835
    %v5580 = vpack.c.b16 %v3852, %v3836
    %v5581 = vpack.c.b16 %v3853, %v3837
    %v5582 = vpack.c.b16 %v3854, %v3838
    %v5583 = vpack.c.b16 %v3871, %v3855
    %v5584 = vpack.c.b16 %v3872, %v3856
    %v5585 = vpack.c.b16 %v3873, %v3857
    %v5586 = vpack.c.b16 %v3874, %v3858
    %v5587 = vpack.c.b16 %v3875, %v3859
    %v5588 = vpack.c.b16 %v3876, %v3860
    %v5589 = vpack.c.b16 %v3877, %v3861
    %v5590 = vpack.c.b16 %v3878, %v3862
    %v5591 = vpack.c.b16 %v3879, %v3863
    %v5592 = vpack.c.b16 %v3880, %v3864
    %v5593 = vpack.c.b16 %v3881, %v3865
    %v5594 = vpack.c.b16 %v3882, %v3866
    %v5595 = vpack.c.b16 %v3883, %v3867
    %v5596 = vpack.c.b16 %v3884, %v3868
    %v5597 = vpack.c.b16 %v3885, %v3869
    %v5598 = vpack.c.b16 %v3886, %v3870
    %v5599 = vpack.c.b16 %v3903, %v3887
    %v5600 = vpack.c.b16 %v3904, %v3888
    %v5601 = vpack.c.b16 %v3905, %v3889
    %v5602 = vpack.c.b16 %v3906, %v3890
    %v5603 = vpack.c.b16 %v3907, %v3891
    %v5604 = vpack.c.b16 %v3908, %v3892
    %v5605 = vpack.c.b16 %v3909, %v3893
    %v5606 = vpack.c.b16 %v3910, %v3894
    %v5607 = vpack.c.b16 %v3911, %v3895
    %v5608 = vpack.c.b16 %v3912, %v3896
    %v5609 = vpack.c.b16 %v3913, %v3897
    %v5610 = vpack.c.b16 %v3914, %v3898
    %v5611 = vpack.c.b16 %v3915, %v3899
    %v5612 = vpack.c.b16 %v3916, %v3900
    %v5613 = vpack.c.b16 %v3917, %v3901
    %v5614 = vpack.c.b16 %v3918, %v3902
    %v5615 = vpack.c.b16 %v3935, %v3919
    %v5616 = vpack.c.b16 %v3936, %v3920
    %v5617 = vpack.c.b16 %v3937, %v3921
    %v5618 = vpack.c.b16 %v3938, %v3922
    %v5619 = vpack.c.b16 %v3939, %v3923
    %v5620 = vpack.c.b16 %v3940, %v3924
    %v5621 = vpack.c.b16 %v3941, %v3925
    %v5622 = vpack.c.b16 %v3942, %v3926
    %v5623 = vpack.c.b16 %v3943, %v3927
    %v5624 = vpack.c.b16 %v3944, %v3928
    %v5625 = vpack.c.b16 %v3945, %v3929
    %v5626 = vpack.c.b16 %v3946, %v3930
    %v5627 = vpack.c.b16 %v3947, %v3931
    %v5628 = vpack.c.b16 %v3948, %v3932
    %v5629 = vpack.c.b16 %v3949, %v3933
    %v5630 = vpack.c.b16 %v3950, %v3934
    %v5631 = vpack.c.b16 %v3967, %v3951
    %v5632 = vpack.c.b16 %v3968, %v3952
    %v5633 = vpack.c.b16 %v3969, %v3953
    %v5634 = vpack.c.b16 %v3970, %v3954
    %v5635 = vpack.c.b16 %v3971, %v3955
    %v5636 = vpack.c.b16 %v3972, %v3956
    %v5637 = vpack.c.b16 %v3973, %v3957
    %v5638 = vpack.c.b16 %v3974, %v3958
    %v5639 = vpack.c.b16 %v3975, %v3959
    %v5640 = vpack.c.b16 %v3976, %v3960
    %v5641 = vpack.c.b16 %v3977, %v3961
    %v5642 = vpack.c.b16 %v3978, %v3962
    %v5643 = vpack.c.b16 %v3979, %v3963
    %v5644 = vpack.c.b16 %v3980, %v3964
    %v5645 = vpack.c.b16 %v3981, %v3965
    %v5646 = vpack.c.b16 %v3982, %v3966
    %v5647 = vpack.c.b16 %v3999, %v3983
    %v5648 = vpack.c.b16 %v4000, %v3984
    %v5649 = vpack.c.b16 %v4001, %v3985
    %v5650 = vpack.c.b16 %v4002, %v3986
    %v5651 = vpack.c.b16 %v4003, %v3987
    %v5652 = vpack.c.b16 %v4004, %v3988
    %v5653 = vpack.c.b16 %v4005, %v3989
    %v5654 = vpack.c.b16 %v4006, %v3990
    %v5655 = vpack.c.b16 %v4007, %v3991
    %v5656 = vpack.c.b16 %v4008, %v3992
    %v5657 = vpack.c.b16 %v4009, %v3993
    %v5658 = vpack.c.b16 %v4010, %v3994
    %v5659 = vpack.c.b16 %v4011, %v3995
    %v5660 = vpack.c.b16 %v4012, %v3996
    %v5661 = vpack.c.b16 %v4013, %v3997
    %v5662 = vpack.c.b16 %v4014, %v3998
    %v5663 = vpack.c.b16 %v4031, %v4015
    %v5664 = vpack.c.b16 %v4032, %v4016
    %v5665 = vpack.c.b16 %v4033, %v4017
    %v5666 = vpack.c.b16 %v4034, %v4018
    %v5667 = vpack.c.b16 %v4035, %v4019
    %v5668 = vpack.c.b16 %v4036, %v4020
    %v5669 = vpack.c.b16 %v4037, %v4021
    %v5670 = vpack.c.b16 %v4038, %v4022
    %v5671 = vpack.c.b16 %v4039, %v4023
    %v5672 = vpack.c.b16 %v4040, %v4024
    %v5673 = vpack.c.b16 %v4041, %v4025
    %v5674 = vpack.c.b16 %v4042, %v4026
    %v5675 = vpack.c.b16 %v4043, %v4027
    %v5676 = vpack.c.b16 %v4044, %v4028
    %v5677 = vpack.c.b16 %v4045, %v4029
    %v5678 = vpack.c.b16 %v4046, %v4030
    %v5679 = vpack.c.b16 %v4063, %v4047
    %v5680 = vpack.c.b16 %v4064, %v4048
    %v5681 = vpack.c.b16 %v4065, %v4049
    %v5682 = vpack.c.b16 %v4066, %v4050
    %v5683 = vpack.c.b16 %v4067, %v4051
    %v5684 = vpack.c.b16 %v4068, %v4052
    %v5685 = vpack.c.b16 %v4069, %v4053
    %v5686 = vpack.c.b16 %v4070, %v4054
    %v5687 = vpack.c.b16 %v4071, %v4055
    %v5688 = vpack.c.b16 %v4072, %v4056
    %v5689 = vpack.c.b16 %v4073, %v4057
    %v5690 = vpack.c.b16 %v4074, %v4058
    %v5691 = vpack.c.b16 %v4075, %v4059
    %v5692 = vpack.c.b16 %v4076, %v4060
    %v5693 = vpack.c.b16 %v4077, %v4061
    %v5694 = vpack.c.b16 %v4078, %v4062
    %v5695 = vpack.c.b16 %v4095, %v4079
    %v5696 = vpack.c.b16 %v4096, %v4080
    %v5697 = vpack.c.b16 %v4097, %v4081
    %v5698 = vpack.c.b16 %v4098, %v4082
    %v5699 = vpack.c.b16 %v4099, %v4083
    %v5700 = vpack.c.b16 %v4100, %v4084
    %v5701 = vpack.c.b16 %v4101, %v4085
    %v5702 = vpack.c.b16 %v4102, %v4086
    %v5703 = vpack.c.b16 %v4103, %v4087
    %v5704 = vpack.c.b16 %v4104, %v4088
    %v5705 = vpack.c.b16 %v4105, %v4089
    %v5706 = vpack.c.b16 %v4106, %v4090
    %v5707 = vpack.c.b16 %v4107, %v4091
    %v5708 = vpack.c.b16 %v4108, %v4092
    %v5709 = vpack.c.b16 %v4109, %v4093
    %v5710 = vpack.c.b16 %v4110, %v4094
    %v5711 = vpack.c.b16 %v4127, %v4111
    %v5712 = vpack.c.b16 %v4128, %v4112
    %v5713 = vpack.c.b16 %v4129, %v4113
    %v5714 = vpack.c.b16 %v4130, %v4114
    %v5715 = vpack.c.b16 %v4131, %v4115
    %v5716 = vpack.c.b16 %v4132, %v4116
    %v5717 = vpack.c.b16 %v4133, %v4117
    %v5718 = vpack.c.b16 %v4134, %v4118
    %v5719 = vpack.c.b16 %v4135, %v4119
    %v5720 = vpack.c.b16 %v4136, %v4120
    %v5721 = vpack.c.b16 %v4137, %v4121
    %v5722 = vpack.c.b16 %v4138, %v4122
    %v5723 = vpack.c.b16 %v4139, %v4123
    %v5724 = vpack.c.b16 %v4140, %v4124
    %v5725 = vpack.c.b16 %v4141, %v4125
    %v5726 = vpack.c.b16 %v4142, %v4126
    %v5727 = vpack.c.b16 %v4159, %v4143
    %v5728 = vpack.c.b16 %v4160, %v4144
    %v5729 = vpack.c.b16 %v4161, %v4145
    %v5730 = vpack.c.b16 %v4162, %v4146
    %v5731 = vpack.c.b16 %v4163, %v4147
    %v5732 = vpack.c.b16 %v4164, %v4148
    %v5733 = vpack.c.b16 %v4165, %v4149
    %v5734 = vpack.c.b16 %v4166, %v4150
    %v5735 = vpack.c.b16 %v4167, %v4151
    %v5736 = vpack.c.b16 %v4168, %v4152
    %v5737 = vpack.c.b16 %v4169, %v4153
    %v5738 = vpack.c.b16 %v4170, %v4154
    %v5739 = vpack.c.b16 %v4171, %v4155
    %v5740 = vpack.c.b16 %v4172, %v4156
    %v5741 = vpack.c.b16 %v4173, %v4157
    %v5742 = vpack.c.b16 %v4174, %v4158
    %v5743 = vpack.c.b16 %v4191, %v4175
    %v5744 = vpack.c.b16 %v4192, %v4176
    %v5745 = vpack.c.b16 %v4193, %v4177
    %v5746 = vpack.c.b16 %v4194, %v4178
    %v5747 = vpack.c.b16 %v4195, %v4179
    %v5748 = vpack.c.b16 %v4196, %v4180
    %v5749 = vpack.c.b16 %v4197, %v4181
    %v5750 = vpack.c.b16 %v4198, %v4182
    %v5751 = vpack.c.b16 %v4199, %v4183
    %v5752 = vpack.c.b16 %v4200, %v4184
    %v5753 = vpack.c.b16 %v4201, %v4185
    %v5754 = vpack.c.b16 %v4202, %v4186
    %v5755 = vpack.c.b16 %v4203, %v4187
    %v5756 = vpack.c.b16 %v4204, %v4188
    %v5757 = vpack.c.b16 %v4205, %v4189
    %v5758 = vpack.c.b16 %v4206, %v4190
    %v5759 = vpack.c.b16 %v4223, %v4207
    %v5760 = vpack.c.b16 %v4224, %v4208
    %v5761 = vpack.c.b16 %v4225, %v4209
    %v5762 = vpack.c.b16 %v4226, %v4210
    %v5763 = vpack.c.b16 %v4227, %v4211
    %v5764 = vpack.c.b16 %v4228, %v4212
    %v5765 = vpack.c.b16 %v4229, %v4213
    %v5766 = vpack.c.b16 %v4230, %v4214
    %v5767 = vpack.c.b16 %v4231, %v4215
    %v5768 = vpack.c.b16 %v4232, %v4216
    %v5769 = vpack.c.b16 %v4233, %v4217
    %v5770 = vpack.c.b16 %v4234, %v4218
    %v5771 = vpack.c.b16 %v4235, %v4219
    %v5772 = vpack.c.b16 %v4236, %v4220
    %v5773 = vpack.c.b16 %v4237, %v4221
    %v5774 = vpack.c.b16 %v4238, %v4222
    %v5775 = vpack.c.b16 %v4255, %v4239
    %v5776 = vpack.c.b16 %v4256, %v4240
    %v5777 = vpack.c.b16 %v4257, %v4241
    %v5778 = vpack.c.b16 %v4258, %v4242
    %v5779 = vpack.c.b16 %v4259, %v4243
    %v5780 = vpack.c.b16 %v4260, %v4244
    %v5781 = vpack.c.b16 %v4261, %v4245
    %v5782 = vpack.c.b16 %v4262, %v4246
    %v5783 = vpack.c.b16 %v4263, %v4247
    %v5784 = vpack.c.b16 %v4264, %v4248
    %v5785 = vpack.c.b16 %v4265, %v4249
    %v5786 = vpack.c.b16 %v4266, %v4250
    %v5787 = vpack.c.b16 %v4267, %v4251
    %v5788 = vpack.c.b16 %v4268, %v4252
    %v5789 = vpack.c.b16 %v4269, %v4253
    %v5790 = vpack.c.b16 %v4270, %v4254
    %v5791 = vpack.c.b16 %v4287, %v4271
    %v5792 = vpack.c.b16 %v4288, %v4272
    %v5793 = vpack.c.b16 %v4289, %v4273
    %v5794 = vpack.c.b16 %v4290, %v4274
    %v5795 = vpack.c.b16 %v4291, %v4275
    %v5796 = vpack.c.b16 %v4292, %v4276
    %v5797 = vpack.c.b16 %v4293, %v4277
    %v5798 = vpack.c.b16 %v4294, %v4278
    %v5799 = vpack.c.b16 %v4295, %v4279
    %v5800 = vpack.c.b16 %v4296, %v4280
    %v5801 = vpack.c.b16 %v4297, %v4281
    %v5802 = vpack.c.b16 %v4298, %v4282
    %v5803 = vpack.c.b16 %v4299, %v4283
    %v5804 = vpack.c.b16 %v4300, %v4284
    %v5805 = vpack.c.b16 %v4301, %v4285
    %v5806 = vpack.c.b16 %v4302, %v4286
    %v5807 = vpack.c.b16 %v4319, %v4303
    %v5808 = vpack.c.b16 %v4320, %v4304
    %v5809 = vpack.c.b16 %v4321, %v4305
    %v5810 = vpack.c.b16 %v4322, %v4306
    %v5811 = vpack.c.b16 %v4323, %v4307
    %v5812 = vpack.c.b16 %v4324, %v4308
    %v5813 = vpack.c.b16 %v4325, %v4309
    %v5814 = vpack.c.b16 %v4326, %v4310
    %v5815 = vpack.c.b16 %v4327, %v4311
    %v5816 = vpack.c.b16 %v4328, %v4312
    %v5817 = vpack.c.b16 %v4329, %v4313
    %v5818 = vpack.c.b16 %v4330, %v4314
    %v5819 = vpack.c.b16 %v4331, %v4315
    %v5820 = vpack.c.b16 %v4332, %v4316
    %v5821 = vpack.c.b16 %v4333, %v4317
    %v5822 = vpack.c.b16 %v4334, %v4318
    %v5823 = vpack.c.b16 %v4351, %v4335
    %v5824 = vpack.c.b16 %v4352, %v4336
    %v5825 = vpack.c.b16 %v4353, %v4337
    %v5826 = vpack.c.b16 %v4354, %v4338
    %v5827 = vpack.c.b16 %v4355, %v4339
    %v5828 = vpack.c.b16 %v4356, %v4340
    %v5829 = vpack.c.b16 %v4357, %v4341
    %v5830 = vpack.c.b16 %v4358, %v4342
    %v5831 = vpack.c.b16 %v4359, %v4343
    %v5832 = vpack.c.b16 %v4360, %v4344
    %v5833 = vpack.c.b16 %v4361, %v4345
    %v5834 = vpack.c.b16 %v4362, %v4346
    %v5835 = vpack.c.b16 %v4363, %v4347
    %v5836 = vpack.c.b16 %v4364, %v4348
    %v5837 = vpack.c.b16 %v4365, %v4349
    %v5838 = vpack.c.b16 %v4366, %v4350
    %v5839 = vpack.c.b16 %v4383, %v4367
    %v5840 = vpack.c.b16 %v4384, %v4368
    %v5841 = vpack.c.b16 %v4385, %v4369
    %v5842 = vpack.c.b16 %v4386, %v4370
    %v5843 = vpack.c.b16 %v4387, %v4371
    %v5844 = vpack.c.b16 %v4388, %v4372
    %v5845 = vpack.c.b16 %v4389, %v4373
    %v5846 = vpack.c.b16 %v4390, %v4374
    %v5847 = vpack.c.b16 %v4391, %v4375
    %v5848 = vpack.c.b16 %v4392, %v4376
    %v5849 = vpack.c.b16 %v4393, %v4377
    %v5850 = vpack.c.b16 %v4394, %v4378
    %v5851 = vpack.c.b16 %v4395, %v4379
    %v5852 = vpack.c.b16 %v4396, %v4380
    %v5853 = vpack.c.b16 %v4397, %v4381
    %v5854 = vpack.c.b16 %v4398, %v4382
    %v5855 = vpack.c.b16 %v4415, %v4399
    %v5856 = vpack.c.b16 %v4416, %v4400
    %v5857 = vpack.c.b16 %v4417, %v4401
    %v5858 = vpack.c.b16 %v4418, %v4402
    %v5859 = vpack.c.b16 %v4419, %v4403
    %v5860 = vpack.c.b16 %v4420, %v4404
    %v5861 = vpack.c.b16 %v4421, %v4405
    %v5862 = vpack.c.b16 %v4422, %v4406
    %v5863 = vpack.c.b16 %v4423, %v4407
    %v5864 = vpack.c.b16 %v4424, %v4408
    %v5865 = vpack.c.b16 %v4425, %v4409
    %v5866 = vpack.c.b16 %v4426, %v4410
    %v5867 = vpack.c.b16 %v4427, %v4411
    %v5868 = vpack.c.b16 %v4428, %v4412
    %v5869 = vpack.c.b16 %v4429, %v4413
    %v5870 = vpack.c.b16 %v4430, %v4414
    %v5871 = vpack.c.b16 %v4447, %v4431
    %v5872 = vpack.c.b16 %v4448, %v4432
    %v5873 = vpack.c.b16 %v4449, %v4433
    %v5874 = vpack.c.b16 %v4450, %v4434
    %v5875 = vpack.c.b16 %v4451, %v4435
    %v5876 = vpack.c.b16 %v4452, %v4436
    %v5877 = vpack.c.b16 %v4453, %v4437
    %v5878 = vpack.c.b16 %v4454, %v4438
    %v5879 = vpack.c.b16 %v4455, %v4439
    %v5880 = vpack.c.b16 %v4456, %v4440
    %v5881 = vpack.c.b16 %v4457, %v4441
    %v5882 = vpack.c.b16 %v4458, %v4442
    %v5883 = vpack.c.b16 %v4459, %v4443
    %v5884 = vpack.c.b16 %v4460, %v4444
    %v5885 = vpack.c.b16 %v4461, %v4445
    %v5886 = vpack.c.b16 %v4462, %v4446
    %v5887 = vpack.c.b16 %v4479, %v4463
    %v5888 = vpack.c.b16 %v4480, %v4464
    %v5889 = vpack.c.b16 %v4481, %v4465
    %v5890 = vpack.c.b16 %v4482, %v4466
    %v5891 = vpack.c.b16 %v4483, %v4467
    %v5892 = vpack.c.b16 %v4484, %v4468
    %v5893 = vpack.c.b16 %v4485, %v4469
    %v5894 = vpack.c.b16 %v4486, %v4470
    %v5895 = vpack.c.b16 %v4487, %v4471
    %v5896 = vpack.c.b16 %v4488, %v4472
    %v5897 = vpack.c.b16 %v4489, %v4473
    %v5898 = vpack.c.b16 %v4490, %v4474
    %v5899 = vpack.c.b16 %v4491, %v4475
    %v5900 = vpack.c.b16 %v4492, %v4476
    %v5901 = vpack.c.b16 %v4493, %v4477
    %v5902 = vpack.c.b16 %v4494, %v4478
    %v5903 = vpack.c.b16 %v4511, %v4495
    %v5904 = vpack.c.b16 %v4512, %v4496
    %v5905 = vpack.c.b16 %v4513, %v4497
    %v5906 = vpack.c.b16 %v4514, %v4498
    %v5907 = vpack.c.b16 %v4515, %v4499
    %v5908 = vpack.c.b16 %v4516, %v4500
    %v5909 = vpack.c.b16 %v4517, %v4501
    %v5910 = vpack.c.b16 %v4518, %v4502
    %v5911 = vpack.c.b16 %v4519, %v4503
    %v5912 = vpack.c.b16 %v4520, %v4504
    %v5913 = vpack.c.b16 %v4521, %v4505
    %v5914 = vpack.c.b16 %v4522, %v4506
    %v5915 = vpack.c.b16 %v4523, %v4507
    %v5916 = vpack.c.b16 %v4524, %v4508
    %v5917 = vpack.c.b16 %v4525, %v4509
    %v5918 = vpack.c.b16 %v4526, %v4510
    %v5919 = vpack.c.b16 %v4543, %v4527
    %v5920 = vpack.c.b16 %v4544, %v4528
    %v5921 = vpack.c.b16 %v4545, %v4529
    %v5922 = vpack.c.b16 %v4546, %v4530
    %v5923 = vpack.c.b16 %v4547, %v4531
    %v5924 = vpack.c.b16 %v4548, %v4532
    %v5925 = vpack.c.b16 %v4549, %v4533
    %v5926 = vpack.c.b16 %v4550, %v4534
    %v5927 = vpack.c.b16 %v4551, %v4535
    %v5928 = vpack.c.b16 %v4552, %v4536
    %v5929 = vpack.c.b16 %v4553, %v4537
    %v5930 = vpack.c.b16 %v4554, %v4538
    %v5931 = vpack.c.b16 %v4555, %v4539
    %v5932 = vpack.c.b16 %v4556, %v4540
    %v5933 = vpack.c.b16 %v4557, %v4541
    %v5934 = vpack.c.b16 %v4558, %v4542
    %v5935 = vpack.c.b16 %v4575, %v4559
    %v5936 = vpack.c.b16 %v4576, %v4560
    %v5937 = vpack.c.b16 %v4577, %v4561
    %v5938 = vpack.c.b16 %v4578, %v4562
    %v5939 = vpack.c.b16 %v4579, %v4563
    %v5940 = vpack.c.b16 %v4580, %v4564
    %v5941 = vpack.c.b16 %v4581, %v4565
    %v5942 = vpack.c.b16 %v4582, %v4566
    %v5943 = vpack.c.b16 %v4583, %v4567
    %v5944 = vpack.c.b16 %v4584, %v4568
    %v5945 = vpack.c.b16 %v4585, %v4569
    %v5946 = vpack.c.b16 %v4586, %v4570
    %v5947 = vpack.c.b16 %v4587, %v4571
    %v5948 = vpack.c.b16 %v4588, %v4572
    %v5949 = vpack.c.b16 %v4589, %v4573
    %v5950 = vpack.c.b16 %v4590, %v4574
    %v5951 = vpack.c.b16 %v4607, %v4591
    %v5952 = vpack.c.b16 %v4608, %v4592
    %v5953 = vpack.c.b16 %v4609, %v4593
    %v5954 = vpack.c.b16 %v4610, %v4594
    %v5955 = vpack.c.b16 %v4611, %v4595
    %v5956 = vpack.c.b16 %v4612, %v4596
    %v5957 = vpack.c.b16 %v4613, %v4597
    %v5958 = vpack.c.b16 %v4614, %v4598
    %v5959 = vpack.c.b16 %v4615, %v4599
    %v5960 = vpack.c.b16 %v4616, %v4600
    %v5961 = vpack.c.b16 %v4617, %v4601
    %v5962 = vpack.c.b16 %v4618, %v4602
    %v5963 = vpack.c.b16 %v4619, %v4603
    %v5964 = vpack.c.b16 %v4620, %v4604
    %v5965 = vpack.c.b16 %v4621, %v4605
    %v5966 = vpack.c.b16 %v4622, %v4606
    %v5967 = vpack.c.b16 %v4639, %v4623
    %v5968 = vpack.c.b16 %v4640, %v4624
    %v5969 = vpack.c.b16 %v4641, %v4625
    %v5970 = vpack.c.b16 %v4642, %v4626
    %v5971 = vpack.c.b16 %v4643, %v4627
    %v5972 = vpack.c.b16 %v4644, %v4628
    %v5973 = vpack.c.b16 %v4645, %v4629
    %v5974 = vpack.c.b16 %v4646, %v4630
    %v5975 = vpack.c.b16 %v4647, %v4631
    %v5976 = vpack.c.b16 %v4648, %v4632
    %v5977 = vpack.c.b16 %v4649, %v4633
    %v5978 = vpack.c.b16 %v4650, %v4634
    %v5979 = vpack.c.b16 %v4651, %v4635
    %v5980 = vpack.c.b16 %v4652, %v4636
    %v5981 = vpack.c.b16 %v4653, %v4637
    %v5982 = vpack.c.b16 %v4654, %v4638
    %v5983 = vpack.c.b16 %v4671, %v4655
    %v5984 = vpack.c.b16 %v4672, %v4656
    %v5985 = vpack.c.b16 %v4673, %v4657
    %v5986 = vpack.c.b16 %v4674, %v4658
    %v5987 = vpack.c.b16 %v4675, %v4659
    %v5988 = vpack.c.b16 %v4676, %v4660
    %v5989 = vpack.c.b16 %v4677, %v4661
    %v5990 = vpack.c.b16 %v4678, %v4662
    %v5991 = vpack.c.b16 %v4679, %v4663
    %v5992 = vpack.c.b16 %v4680, %v4664
    %v5993 = vpack.c.b16 %v4681, %v4665
    %v5994 = vpack.c.b16 %v4682, %v4666
    %v5995 = vpack.c.b16 %v4683, %v4667
    %v5996 = vpack.c.b16 %v4684, %v4668
    %v5997 = vpack.c.b16 %v4685, %v4669
    %v5998 = vpack.c.b16 %v4686, %v4670
    %v5999 = vpack.c.b16 %v4703, %v4687
    %v6000 = vpack.c.b16 %v4704, %v4688
    %v6001 = vpack.c.b16 %v4705, %v4689
    %v6002 = vpack.c.b16 %v4706, %v4690
    %v6003 = vpack.c.b16 %v4707, %v4691
    %v6004 = vpack.c.b16 %v4708, %v4692
    %v6005 = vpack.c.b16 %v4709, %v4693
    %v6006 = vpack.c.b16 %v4710, %v4694
    %v6007 = vpack.c.b16 %v4711, %v4695
    %v6008 = vpack.c.b16 %v4712, %v4696
    %v6009 = vpack.c.b16 %v4713, %v4697
    %v6010 = vpack.c.b16 %v4714, %v4698
    %v6011 = vpack.c.b16 %v4715, %v4699
    %v6012 = vpack.c.b16 %v4716, %v4700
    %v6013 = vpack.c.b16 %v4717, %v4701
    %v6014 = vpack.c.b16 %v4718, %v4702
    %v6015 = vpack.c.b16 %v4735, %v4719
    %v6016 = vpack.c.b16 %v4736, %v4720
    %v6017 = vpack.c.b16 %v4737, %v4721
    %v6018 = vpack.c.b16 %v4738, %v4722
    %v6019 = vpack.c.b16 %v4739, %v4723
    %v6020 = vpack.c.b16 %v4740, %v4724
    %v6021 = vpack.c.b16 %v4741, %v4725
    %v6022 = vpack.c.b16 %v4742, %v4726
    %v6023 = vpack.c.b16 %v4743, %v4727
    %v6024 = vpack.c.b16 %v4744, %v4728
    %v6025 = vpack.c.b16 %v4745, %v4729
    %v6026 = vpack.c.b16 %v4746, %v4730
    %v6027 = vpack.c.b16 %v4747, %v4731
    %v6028 = vpack.c.b16 %v4748, %v4732
    %v6029 = vpack.c.b16 %v4749, %v4733
    %v6030 = vpack.c.b16 %v4750, %v4734
    %v6031 = vpack.c.b16 %v4767, %v4751
    %v6032 = vpack.c.b16 %v4768, %v4752
    %v6033 = vpack.c.b16 %v4769, %v4753
    %v6034 = vpack.c.b16 %v4770, %v4754
    %v6035 = vpack.c.b16 %v4771, %v4755
    %v6036 = vpack.c.b16 %v4772, %v4756
    %v6037 = vpack.c.b16 %v4773, %v4757
    %v6038 = vpack.c.b16 %v4774, %v4758
    %v6039 = vpack.c.b16 %v4775, %v4759
    %v6040 = vpack.c.b16 %v4776, %v4760
    %v6041 = vpack.c.b16 %v4777, %v4761
    %v6042 = vpack.c.b16 %v4778, %v4762
    %v6043 = vpack.c.b16 %v4779, %v4763
    %v6044 = vpack.c.b16 %v4780, %v4764
    %v6045 = vpack.c.b16 %v4781, %v4765
    %v6046 = vpack.c.b16 %v4782, %v4766
    %v6047 = vpack.c.b16 %v4799, %v4783
    %v6048 = vpack.c.b16 %v4800, %v4784
    %v6049 = vpack.c.b16 %v4801, %v4785
    %v6050 = vpack.c.b16 %v4802, %v4786
    %v6051 = vpack.c.b16 %v4803, %v4787
    %v6052 = vpack.c.b16 %v4804, %v4788
    %v6053 = vpack.c.b16 %v4805, %v4789
    %v6054 = vpack.c.b16 %v4806, %v4790
    %v6055 = vpack.c.b16 %v4807, %v4791
    %v6056 = vpack.c.b16 %v4808, %v4792
    %v6057 = vpack.c.b16 %v4809, %v4793
    %v6058 = vpack.c.b16 %v4810, %v4794
    %v6059 = vpack.c.b16 %v4811, %v4795
    %v6060 = vpack.c.b16 %v4812, %v4796
    %v6061 = vpack.c.b16 %v4813, %v4797
    %v6062 = vpack.c.b16 %v4814, %v4798
    %v6063 = vpack.c.b16 %v4831, %v4815
    %v6064 = vpack.c.b16 %v4832, %v4816
    %v6065 = vpack.c.b16 %v4833, %v4817
    %v6066 = vpack.c.b16 %v4834, %v4818
    %v6067 = vpack.c.b16 %v4835, %v4819
    %v6068 = vpack.c.b16 %v4836, %v4820
    %v6069 = vpack.c.b16 %v4837, %v4821
    %v6070 = vpack.c.b16 %v4838, %v4822
    %v6071 = vpack.c.b16 %v4839, %v4823
    %v6072 = vpack.c.b16 %v4840, %v4824
    %v6073 = vpack.c.b16 %v4841, %v4825
    %v6074 = vpack.c.b16 %v4842, %v4826
    %v6075 = vpack.c.b16 %v4843, %v4827
    %v6076 = vpack.c.b16 %v4844, %v4828
    %v6077 = vpack.c.b16 %v4845, %v4829
    %v6078 = vpack.c.b16 %v4846, %v4830
    %v6079 = vpack.c.b16 %v4863, %v4847
    %v6080 = vpack.c.b16 %v4864, %v4848
    %v6081 = vpack.c.b16 %v4865, %v4849
    %v6082 = vpack.c.b16 %v4866, %v4850
    %v6083 = vpack.c.b16 %v4867, %v4851
    %v6084 = vpack.c.b16 %v4868, %v4852
    %v6085 = vpack.c.b16 %v4869, %v4853
    %v6086 = vpack.c.b16 %v4870, %v4854
    %v6087 = vpack.c.b16 %v4871, %v4855
    %v6088 = vpack.c.b16 %v4872, %v4856
    %v6089 = vpack.c.b16 %v4873, %v4857
    %v6090 = vpack.c.b16 %v4874, %v4858
    %v6091 = vpack.c.b16 %v4875, %v4859
    %v6092 = vpack.c.b16 %v4876, %v4860
    %v6093 = vpack.c.b16 %v4877, %v4861
    %v6094 = vpack.c.b16 %v4878, %v4862
    %v6095 = vpack.c.b16 %v4895, %v4879
    %v6096 = vpack.c.b16 %v4896, %v4880
    %v6097 = vpack.c.b16 %v4897, %v4881
    %v6098 = vpack.c.b16 %v4898, %v4882
    %v6099 = vpack.c.b16 %v4899, %v4883
    %v6100 = vpack.c.b16 %v4900, %v4884
    %v6101 = vpack.c.b16 %v4901, %v4885
    %v6102 = vpack.c.b16 %v4902, %v4886
    %v6103 = vpack.c.b16 %v4903, %v4887
    %v6104 = vpack.c.b16 %v4904, %v4888
    %v6105 = vpack.c.b16 %v4905, %v4889
    %v6106 = vpack.c.b16 %v4906, %v4890
    %v6107 = vpack.c.b16 %v4907, %v4891
    %v6108 = vpack.c.b16 %v4908, %v4892
    %v6109 = vpack.c.b16 %v4909, %v4893
    %v6110 = vpack.c.b16 %v4910, %v4894
    %v6111 = vpack.c.b16 %v4927, %v4911
    %v6112 = vpack.c.b16 %v4928, %v4912
    %v6113 = vpack.c.b16 %v4929, %v4913
    %v6114 = vpack.c.b16 %v4930, %v4914
    %v6115 = vpack.c.b16 %v4931, %v4915
    %v6116 = vpack.c.b16 %v4932, %v4916
    %v6117 = vpack.c.b16 %v4933, %v4917
    %v6118 = vpack.c.b16 %v4934, %v4918
    %v6119 = vpack.c.b16 %v4935, %v4919
    %v6120 = vpack.c.b16 %v4936, %v4920
    %v6121 = vpack.c.b16 %v4937, %v4921
    %v6122 = vpack.c.b16 %v4938, %v4922
    %v6123 = vpack.c.b16 %v4939, %v4923
    %v6124 = vpack.c.b16 %v4940, %v4924
    %v6125 = vpack.c.b16 %v4941, %v4925
    %v6126 = vpack.c.b16 %v4942, %v4926
    %v6127 = vpack.c.b16 %v4959, %v4943
    %v6128 = vpack.c.b16 %v4960, %v4944
    %v6129 = vpack.c.b16 %v4961, %v4945
    %v6130 = vpack.c.b16 %v4962, %v4946
    %v6131 = vpack.c.b16 %v4963, %v4947
    %v6132 = vpack.c.b16 %v4964, %v4948
    %v6133 = vpack.c.b16 %v4965, %v4949
    %v6134 = vpack.c.b16 %v4966, %v4950
    %v6135 = vpack.c.b16 %v4967, %v4951
    %v6136 = vpack.c.b16 %v4968, %v4952
    %v6137 = vpack.c.b16 %v4969, %v4953
    %v6138 = vpack.c.b16 %v4970, %v4954
    %v6139 = vpack.c.b16 %v4971, %v4955
    %v6140 = vpack.c.b16 %v4972, %v4956
    %v6141 = vpack.c.b16 %v4973, %v4957
    %v6142 = vpack.c.b16 %v4974, %v4958
    %v6143 = vpack.c.b16 %v4991, %v4975
    %v6144 = vpack.c.b16 %v4992, %v4976
    %v6145 = vpack.c.b16 %v4993, %v4977
    %v6146 = vpack.c.b16 %v4994, %v4978
    %v6147 = vpack.c.b16 %v4995, %v4979
    %v6148 = vpack.c.b16 %v4996, %v4980
    %v6149 = vpack.c.b16 %v4997, %v4981
    %v6150 = vpack.c.b16 %v4998, %v4982
    %v6151 = vpack.c.b16 %v4999, %v4983
    %v6152 = vpack.c.b16 %v5000, %v4984
    %v6153 = vpack.c.b16 %v5001, %v4985
    %v6154 = vpack.c.b16 %v5002, %v4986
    %v6155 = vpack.c.b16 %v5003, %v4987
    %v6156 = vpack.c.b16 %v5004, %v4988
    %v6157 = vpack.c.b16 %v5005, %v4989
    %v6158 = vpack.c.b16 %v5006, %v4990
    %v6159 = vpack.c.b16 %v5023, %v5007
    %v6160 = vpack.c.b16 %v5024, %v5008
    %v6161 = vpack.c.b16 %v5025, %v5009
    %v6162 = vpack.c.b16 %v5026, %v5010
    %v6163 = vpack.c.b16 %v5027, %v5011
    %v6164 = vpack.c.b16 %v5028, %v5012
    %v6165 = vpack.c.b16 %v5029, %v5013
    %v6166 = vpack.c.b16 %v5030, %v5014
    %v6167 = vpack.c.b16 %v5031, %v5015
    %v6168 = vpack.c.b16 %v5032, %v5016
    %v6169 = vpack.c.b16 %v5033, %v5017
    %v6170 = vpack.c.b16 %v5034, %v5018
    %v6171 = vpack.c.b16 %v5035, %v5019
    %v6172 = vpack.c.b16 %v5036, %v5020
    %v6173 = vpack.c.b16 %v5037, %v5021
    %v6174 = vpack.c.b16 %v5038, %v5022
    %v6175 = vpack.c.b16 %v5055, %v5039
    %v6176 = vpack.c.b16 %v5056, %v5040
    %v6177 = vpack.c.b16 %v5057, %v5041
    %v6178 = vpack.c.b16 %v5058, %v5042
    %v6179 = vpack.c.b16 %v5059, %v5043
    %v6180 = vpack.c.b16 %v5060, %v5044
    %v6181 = vpack.c.b16 %v5061, %v5045
    %v6182 = vpack.c.b16 %v5062, %v5046
    %v6183 = vpack.c.b16 %v5063, %v5047
    %v6184 = vpack.c.b16 %v5064, %v5048
    %v6185 = vpack.c.b16 %v5065, %v5049
    %v6186 = vpack.c.b16 %v5066, %v5050
    %v6187 = vpack.c.b16 %v5067, %v5051
    %v6188 = vpack.c.b16 %v5068, %v5052
    %v6189 = vpack.c.b16 %v5069, %v5053
    %v6190 = vpack.c.b16 %v5070, %v5054
    %v6191 = vpack.c.b16 %v5087, %v5071
    %v6192 = vpack.c.b16 %v5088, %v5072
    %v6193 = vpack.c.b16 %v5089, %v5073
    %v6194 = vpack.c.b16 %v5090, %v5074
    %v6195 = vpack.c.b16 %v5091, %v5075
    %v6196 = vpack.c.b16 %v5092, %v5076
    %v6197 = vpack.c.b16 %v5093, %v5077
    %v6198 = vpack.c.b16 %v5094, %v5078
    %v6199 = vpack.c.b16 %v5095, %v5079
    %v6200 = vpack.c.b16 %v5096, %v5080
    %v6201 = vpack.c.b16 %v5097, %v5081
    %v6202 = vpack.c.b16 %v5098, %v5082
    %v6203 = vpack.c.b16 %v5099, %v5083
    %v6204 = vpack.c.b16 %v5100, %v5084
    %v6205 = vpack.c.b16 %v5101, %v5085
    %v6206 = vpack.c.b16 %v5102, %v5086
    %v6207 = vpack.c.b16 %v5119, %v5103
    %v6208 = vpack.c.b16 %v5120, %v5104
    %v6209 = vpack.c.b16 %v5121, %v5105
    %v6210 = vpack.c.b16 %v5122, %v5106
    %v6211 = vpack.c.b16 %v5123, %v5107
    %v6212 = vpack.c.b16 %v5124, %v5108
    %v6213 = vpack.c.b16 %v5125, %v5109
    %v6214 = vpack.c.b16 %v5126, %v5110
    %v6215 = vpack.c.b16 %v5127, %v5111
    %v6216 = vpack.c.b16 %v5128, %v5112
    %v6217 = vpack.c.b16 %v5129, %v5113
    %v6218 = vpack.c.b16 %v5130, %v5114
    %v6219 = vpack.c.b16 %v5131, %v5115
    %v6220 = vpack.c.b16 %v5132, %v5116
    %v6221 = vpack.c.b16 %v5133, %v5117
    %v6222 = vpack.c.b16 %v5134, %v5118
    %v6223 = vpack.c.b16 %v5151, %v5135
    %v6224 = vpack.c.b16 %v5152, %v5136
    %v6225 = vpack.c.b16 %v5153, %v5137
    %v6226 = vpack.c.b16 %v5154, %v5138
    %v6227 = vpack.c.b16 %v5155, %v5139
    %v6228 = vpack.c.b16 %v5156, %v5140
    %v6229 = vpack.c.b16 %v5157, %v5141
    %v6230 = vpack.c.b16 %v5158, %v5142
    %v6231 = vpack.c.b16 %v5159, %v5143
    %v6232 = vpack.c.b16 %v5160, %v5144
    %v6233 = vpack.c.b16 %v5161, %v5145
    %v6234 = vpack.c.b16 %v5162, %v5146
    %v6235 = vpack.c.b16 %v5163, %v5147
    %v6236 = vpack.c.b16 %v5164, %v5148
    %v6237 = vpack.c.b16 %v5165, %v5149
    %v6238 = vpack.c.b16 %v5166, %v5150
    %v6239 = vpack.c.b16 %v5183, %v5167
    %v6240 = vpack.c.b16 %v5184, %v5168
    %v6241 = vpack.c.b16 %v5185, %v5169
    %v6242 = vpack.c.b16 %v5186, %v5170
    %v6243 = vpack.c.b16 %v5187, %v5171
    %v6244 = vpack.c.b16 %v5188, %v5172
    %v6245 = vpack.c.b16 %v5189, %v5173
    %v6246 = vpack.c.b16 %v5190, %v5174
    %v6247 = vpack.c.b16 %v5191, %v5175
    %v6248 = vpack.c.b16 %v5192, %v5176
    %v6249 = vpack.c.b16 %v5193, %v5177
    %v6250 = vpack.c.b16 %v5194, %v5178
    %v6251 = vpack.c.b16 %v5195, %v5179
    %v6252 = vpack.c.b16 %v5196, %v5180
    %v6253 = vpack.c.b16 %v5197, %v5181
    %v6254 = vpack.c.b16 %v5198, %v5182
    %v6255 = vpack.c.b16 %v5215, %v5199
    %v6256 = vpack.c.b16 %v5216, %v5200
    %v6257 = vpack.c.b16 %v5217, %v5201
    %v6258 = vpack.c.b16 %v5218, %v5202
    %v6259 = vpack.c.b16 %v5219, %v5203
    %v6260 = vpack.c.b16 %v5220, %v5204
    %v6261 = vpack.c.b16 %v5221, %v5205
    %v6262 = vpack.c.b16 %v5222, %v5206
    %v6263 = vpack.c.b16 %v5223, %v5207
    %v6264 = vpack.c.b16 %v5224, %v5208
    %v6265 = vpack.c.b16 %v5225, %v5209
    %v6266 = vpack.c.b16 %v5226, %v5210
    %v6267 = vpack.c.b16 %v5227, %v5211
    %v6268 = vpack.c.b16 %v5228, %v5212
    %v6269 = vpack.c.b16 %v5229, %v5213
    %v6270 = vpack.c.b16 %v5230, %v5214
    %v6271 = vpack.c.b16 %v5247, %v5231
    %v6272 = vpack.c.b16 %v5248, %v5232
    %v6273 = vpack.c.b16 %v5249, %v5233
    %v6274 = vpack.c.b16 %v5250, %v5234
    %v6275 = vpack.c.b16 %v5251, %v5235
    %v6276 = vpack.c.b16 %v5252, %v5236
    %v6277 = vpack.c.b16 %v5253, %v5237
    %v6278 = vpack.c.b16 %v5254, %v5238
    %v6279 = vpack.c.b16 %v5255, %v5239
    %v6280 = vpack.c.b16 %v5256, %v5240
    %v6281 = vpack.c.b16 %v5257, %v5241
    %v6282 = vpack.c.b16 %v5258, %v5242
    %v6283 = vpack.c.b16 %v5259, %v5243
    %v6284 = vpack.c.b16 %v5260, %v5244
    %v6285 = vpack.c.b16 %v5261, %v5245
    %v6286 = vpack.c.b16 %v5262, %v5246
    %7311 = vmatprep.subr.bf16.mxu0 %v5264
    %7312 = vmatpush1.bf16.msra.mxu0 %v5263
    %7313 = vmatprep.subr.bf16.mxu0 %v5280
    %7314 = vmatpush1.bf16.msra.mxu0 %v5279
    %7315 = vmatprep.subr.bf16.mxu0 %v5296
    %7316 = vmatpush1.bf16.msra.mxu0 %v5295
    %7317 = vmatprep.subr.bf16.mxu0 %v5312
    %7318 = vmatpush1.bf16.msra.mxu0 %v5311
    %7319 = vmatprep.subr.bf16.mxu0 %v5328
    %7320 = vmatpush1.bf16.msra.mxu0 %v5327
    %7321 = vmatprep.subr.bf16.mxu0 %v5344
    %7322 = vmatpush1.bf16.msra.mxu0 %v5343
    %7323 = vmatprep.subr.bf16.mxu0 %v5360
    %7324 = vmatpush1.bf16.msra.mxu0 %v5359
    %7325 = vmatprep.subr.bf16.mxu0 %v5376
    %7326 = vmatpush1.bf16.msra.mxu0 %v5375
    %7327 = vmatprep.subr.bf16.mxu0 %v5392
    %7328 = vmatpush1.bf16.msra.mxu0 %v5391
    %7329 = vmatprep.subr.bf16.mxu0 %v5408
    %7330 = vmatpush1.bf16.msra.mxu0 %v5407
    %7331 = vmatprep.subr.bf16.mxu0 %v5424
    %7332 = vmatpush1.bf16.msra.mxu0 %v5423
    %7333 = vmatprep.subr.bf16.mxu0 %v5440
    %7334 = vmatpush1.bf16.msra.mxu0 %v5439
    %7335 = vmatprep.subr.bf16.mxu0 %v5456
    %7336 = vmatpush1.bf16.msra.mxu0 %v5455
    %7337 = vmatprep.subr.bf16.mxu0 %v5472
    %7338 = vmatpush1.bf16.msra.mxu0 %v5471
    %7339 = vmatprep.subr.bf16.mxu0 %v5488
    %7340 = vmatpush1.bf16.msra.mxu0 %v5487
    %7341 = vmatprep.subr.bf16.mxu0 %v5504
    %7342 = vmatpush1.bf16.msra.mxu0 %v5503
    %7343 = vmatprep.mubr.bf16.mxu0 %v1076
    %7344 = vmatmul.mubr.bf16.gmra.mrb[0].mxu0 %v1075
    %v7345 = vpop.f32.mrb[0].mxu0
    %v7346 = vadd.f32 %v2114, %v7345
    %v7347 = vpop.f32.mrb[0].mxu0
    %v7348 = vadd.f32 %v2118, %v7347
    %v7349 = vpop.f32.mrb[0].mxu0
    %v7350 = vpop.f32.mrb[0].mxu0
    %7351 = vdwg.mxu0
    %7352 = vmatprep.subr.bf16.mxu0 %v5520
    %7353 = vmatpush1.bf16.msra.mxu0 %v5519
    %7354 = vmatprep.subr.bf16.mxu0 %v5536
    %7355 = vmatpush1.bf16.msra.mxu0 %v5535
    %7356 = vmatprep.subr.bf16.mxu0 %v5552
    %7357 = vmatpush1.bf16.msra.mxu0 %v5551
    %7358 = vmatprep.subr.bf16.mxu0 %v5568
    %7359 = vmatpush1.bf16.msra.mxu0 %v5567
    %7360 = vmatprep.subr.bf16.mxu0 %v5584
    %7361 = vmatpush1.bf16.msra.mxu0 %v5583
    %7362 = vmatprep.subr.bf16.mxu0 %v5600
    %7363 = vmatpush1.bf16.msra.mxu0 %v5599
    %7364 = vmatprep.subr.bf16.mxu0 %v5616
    %7365 = vmatpush1.bf16.msra.mxu0 %v5615
    %7366 = vmatprep.subr.bf16.mxu0 %v5632
    %7367 = vmatpush1.bf16.msra.mxu0 %v5631
    %7368 = vmatprep.subr.bf16.mxu0 %v5648
    %7369 = vmatpush1.bf16.msra.mxu0 %v5647
    %7370 = vmatprep.subr.bf16.mxu0 %v5664
    %7371 = vmatpush1.bf16.msra.mxu0 %v5663
    %7372 = vmatprep.subr.bf16.mxu0 %v5680
    %7373 = vmatpush1.bf16.msra.mxu0 %v5679
    %7374 = vmatprep.subr.bf16.mxu0 %v5696
    %7375 = vmatpush1.bf16.msra.mxu0 %v5695
    %7376 = vmatprep.subr.bf16.mxu0 %v5712
    %7377 = vmatpush1.bf16.msra.mxu0 %v5711
    %7378 = vmatprep.subr.bf16.mxu0 %v5728
    %7379 = vmatpush1.bf16.msra.mxu0 %v5727
    %7380 = vmatprep.subr.bf16.mxu0 %v5744
    %7381 = vmatpush1.bf16.msra.mxu0 %v5743
    %7382 = vmatprep.subr.bf16.mxu0 %v5760
    %7383 = vmatpush1.bf16.msra.mxu0 %v5759
    %7384 = vmatprep.mubr.bf16.mxu0 %v1078
    %7385 = vmatmul.mubr.bf16.gmra.mrb[0].mxu0 %v1077
    %v7386 = vpop.f32.mrb[0].mxu0
    %v7387 = vadd.f32 %v7346, %v7386
    %v7388 = vpop.f32.mrb[0].mxu0
    %v7389 = vadd.f32 %v7348, %v7388
    %v7390 = vpop.f32.mrb[0].mxu0
    %v7391 = vpop.f32.mrb[0].mxu0
    %7392 = vdwg.mxu0
    %7393 = vmatprep.subr.bf16.mxu0 %v5776
    %7394 = vmatpush1.bf16.msra.mxu0 %v5775
    %7395 = vmatprep.subr.bf16.mxu0 %v5792
    %7396 = vmatpush1.bf16.msra.mxu0 %v5791
    %7397 = vmatprep.subr.bf16.mxu0 %v5808
    %7398 = vmatpush1.bf16.msra.mxu0 %v5807
    %7399 = vmatprep.subr.bf16.mxu0 %v5824
    %7400 = vmatpush1.bf16.msra.mxu0 %v5823
    %7401 = vmatprep.subr.bf16.mxu0 %v5840
    %7402 = vmatpush1.bf16.msra.mxu0 %v5839
    %7403 = vmatprep.subr.bf16.mxu0 %v5856
    %7404 = vmatpush1.bf16.msra.mxu0 %v5855
    %7405 = vmatprep.subr.bf16.mxu0 %v5872
    %7406 = vmatpush1.bf16.msra.mxu0 %v5871
    %7407 = vmatprep.subr.bf16.mxu0 %v5888
    %7408 = vmatpush1.bf16.msra.mxu0 %v5887
    %7409 = vmatprep.subr.bf16.mxu0 %v5904
    %7410 = vmatpush1.bf16.msra.mxu0 %v5903
    %7411 = vmatprep.subr.bf16.mxu0 %v5920
    %7412 = vmatpush1.bf16.msra.mxu0 %v5919
    %7413 = vmatprep.subr.bf16.mxu0 %v5936
    %7414 = vmatpush1.bf16.msra.mxu0 %v5935
    %7415 = vmatprep.subr.bf16.mxu0 %v5952
    %7416 = vmatpush1.bf16.msra.mxu0 %v5951
    %7417 = vmatprep.subr.bf16.mxu0 %v5968
    %7418 = vmatpush1.bf16.msra.mxu0 %v5967
    %7419 = vmatprep.subr.bf16.mxu0 %v5984
    %7420 = vmatpush1.bf16.msra.mxu0 %v5983
    %7421 = vmatprep.subr.bf16.mxu0 %v6000
    %7422 = vmatpush1.bf16.msra.mxu0 %v5999
    %7423 = vmatprep.subr.bf16.mxu0 %v6016
    %7424 = vmatpush1.bf16.msra.mxu0 %v6015
    %7425 = vmatprep.mubr.bf16.mxu0 %v1080
    %7426 = vmatmul.mubr.bf16.gmra.mrb[0].mxu0 %v1079
    %v7427 = vpop.f32.mrb[0].mxu0
    %v7428 = vadd.f32 %v7387, %v7427
    %v7429 = vpop.f32.mrb[0].mxu0
    %v7430 = vadd.f32 %v7389, %v7429
    %v7431 = vpop.f32.mrb[0].mxu0
    %v7432 = vpop.f32.mrb[0].mxu0
    %7433 = vdwg.mxu0
    %7434 = vmatprep.subr.bf16.mxu0 %v6032
    %7435 = vmatpush1.bf16.msra.mxu0 %v6031
    %7436 = vmatprep.subr.bf16.mxu0 %v6048
    %7437 = vmatpush1.bf16.msra.mxu0 %v6047
    %7438 = vmatprep.subr.bf16.mxu0 %v6064
    %7439 = vmatpush1.bf16.msra.mxu0 %v6063
    %7440 = vmatprep.subr.bf16.mxu0 %v6080
    %7441 = vmatpush1.bf16.msra.mxu0 %v6079
    %7442 = vmatprep.subr.bf16.mxu0 %v6096
    %7443 = vmatpush1.bf16.msra.mxu0 %v6095
    %7444 = vmatprep.subr.bf16.mxu0 %v6112
    %7445 = vmatpush1.bf16.msra.mxu0 %v6111
    %7446 = vmatprep.subr.bf16.mxu0 %v6128
    %7447 = vmatpush1.bf16.msra.mxu0 %v6127
    %7448 = vmatprep.subr.bf16.mxu0 %v6144
    %7449 = vmatpush1.bf16.msra.mxu0 %v6143
    %7450 = vmatprep.subr.bf16.mxu0 %v6160
    %7451 = vmatpush1.bf16.msra.mxu0 %v6159
    %7452 = vmatprep.subr.bf16.mxu0 %v6176
    %7453 = vmatpush1.bf16.msra.mxu0 %v6175
    %7454 = vmatprep.subr.bf16.mxu0 %v6192
    %7455 = vmatpush1.bf16.msra.mxu0 %v6191
    %7456 = vmatprep.subr.bf16.mxu0 %v6208
    %7457 = vmatpush1.bf16.msra.mxu0 %v6207
    %7458 = vmatprep.subr.bf16.mxu0 %v6224
    %7459 = vmatpush1.bf16.msra.mxu0 %v6223
    %7460 = vmatprep.subr.bf16.mxu0 %v6240
    %7461 = vmatpush1.bf16.msra.mxu0 %v6239
    %7462 = vmatprep.subr.bf16.mxu0 %v6256
    %7463 = vmatpush1.bf16.msra.mxu0 %v6255
    %7464 = vmatprep.subr.bf16.mxu0 %v6272
    %7465 = vmatpush1.bf16.msra.mxu0 %v6271
    %7466 = vmatprep.mubr.bf16.mxu0 %v1082
    %7467 = vmatmul.mubr.bf16.gmra.mrb[0].mxu0 %v1081
    %v7468 = vpop.f32.mrb[0].mxu0
    %v7469 = vadd.f32 %v7428, %v7468
    %v7470 = vpop.f32.mrb[0].mxu0
    %v7471 = vadd.f32 %v7430, %v7470
    %v7472 = vpop.f32.mrb[0].mxu0
    %v7473 = vpop.f32.mrb[0].mxu0
    %7474 = vdwg.mxu0
    %7475 = vmatprep.subr.bf16.mxu0 %v5266
    %7476 = vmatpush1.bf16.msra.mxu0 %v5265
    %7477 = vmatprep.subr.bf16.mxu0 %v5282
    %7478 = vmatpush1.bf16.msra.mxu0 %v5281
    %7479 = vmatprep.subr.bf16.mxu0 %v5298
    %7480 = vmatpush1.bf16.msra.mxu0 %v5297
    %7481 = vmatprep.subr.bf16.mxu0 %v5314
    %7482 = vmatpush1.bf16.msra.mxu0 %v5313
    %7483 = vmatprep.subr.bf16.mxu0 %v5330
    %7484 = vmatpush1.bf16.msra.mxu0 %v5329
    %7485 = vmatprep.subr.bf16.mxu0 %v5346
    %7486 = vmatpush1.bf16.msra.mxu0 %v5345
    %7487 = vmatprep.subr.bf16.mxu0 %v5362
    %7488 = vmatpush1.bf16.msra.mxu0 %v5361
    %7489 = vmatprep.subr.bf16.mxu0 %v5378
    %7490 = vmatpush1.bf16.msra.mxu0 %v5377
    %7491 = vmatprep.subr.bf16.mxu0 %v5394
    %7492 = vmatpush1.bf16.msra.mxu0 %v5393
    %7493 = vmatprep.subr.bf16.mxu0 %v5410
    %7494 = vmatpush1.bf16.msra.mxu0 %v5409
    %7495 = vmatprep.subr.bf16.mxu0 %v5426
    %7496 = vmatpush1.bf16.msra.mxu0 %v5425
    %7497 = vmatprep.subr.bf16.mxu0 %v5442
    %7498 = vmatpush1.bf16.msra.mxu0 %v5441
    %7499 = vmatprep.subr.bf16.mxu0 %v5458
    %7500 = vmatpush1.bf16.msra.mxu0 %v5457
    %7501 = vmatprep.subr.bf16.mxu0 %v5474
    %7502 = vmatpush1.bf16.msra.mxu0 %v5473
    %7503 = vmatprep.subr.bf16.mxu0 %v5490
    %7504 = vmatpush1.bf16.msra.mxu0 %v5489
    %7505 = vmatprep.subr.bf16.mxu0 %v5506
    %7506 = vmatpush1.bf16.msra.mxu0 %v5505
    %7507 = vmatprep.mubr.bf16.mxu0 %v1076
    %7508 = vmatmul.mubr.bf16.gmra.mrb[0].mxu0 %v1075
    %v7509 = vpop.f32.mrb[0].mxu0
    %v7510 = vadd.f32 %v2122, %v7509
    %v7511 = vpop.f32.mrb[0].mxu0
    %v7512 = vadd.f32 %v2126, %v7511
    %v7513 = vpop.f32.mrb[0].mxu0
    %v7514 = vpop.f32.mrb[0].mxu0
    %7515 = vdwg.mxu0
    %7516 = vmatprep.subr.bf16.mxu0 %v5522
    %7517 = vmatpush1.bf16.msra.mxu0 %v5521
    %7518 = vmatprep.subr.bf16.mxu0 %v5538
    %7519 = vmatpush1.bf16.msra.mxu0 %v5537
    %7520 = vmatprep.subr.bf16.mxu0 %v5554
    %7521 = vmatpush1.bf16.msra.mxu0 %v5553
    %7522 = vmatprep.subr.bf16.mxu0 %v5570
    %7523 = vmatpush1.bf16.msra.mxu0 %v5569
    %7524 = vmatprep.subr.bf16.mxu0 %v5586
    %7525 = vmatpush1.bf16.msra.mxu0 %v5585
    %7526 = vmatprep.subr.bf16.mxu0 %v5602
    %7527 = vmatpush1.bf16.msra.mxu0 %v5601
    %7528 = vmatprep.subr.bf16.mxu0 %v5618
    %7529 = vmatpush1.bf16.msra.mxu0 %v5617
    %7530 = vmatprep.subr.bf16.mxu0 %v5634
    %7531 = vmatpush1.bf16.msra.mxu0 %v5633
    %7532 = vmatprep.subr.bf16.mxu0 %v5650
    %7533 = vmatpush1.bf16.msra.mxu0 %v5649
    %7534 = vmatprep.subr.bf16.mxu0 %v5666
    %7535 = vmatpush1.bf16.msra.mxu0 %v5665
    %7536 = vmatprep.subr.bf16.mxu0 %v5682
    %7537 = vmatpush1.bf16.msra.mxu0 %v5681
    %7538 = vmatprep.subr.bf16.mxu0 %v5698
    %7539 = vmatpush1.bf16.msra.mxu0 %v5697
    %7540 = vmatprep.subr.bf16.mxu0 %v5714
    %7541 = vmatpush1.bf16.msra.mxu0 %v5713
    %7542 = vmatprep.subr.bf16.mxu0 %v5730
    %7543 = vmatpush1.bf16.msra.mxu0 %v5729
    %7544 = vmatprep.subr.bf16.mxu0 %v5746
    %7545 = vmatpush1.bf16.msra.mxu0 %v5745
    %7546 = vmatprep.subr.bf16.mxu0 %v5762
    %7547 = vmatpush1.bf16.msra.mxu0 %v5761
    %7548 = vmatprep.mubr.bf16.mxu0 %v1078
    %7549 = vmatmul.mubr.bf16.gmra.mrb[0].mxu0 %v1077
    %v7550 = vpop.f32.mrb[0].mxu0
    %v7551 = vadd.f32 %v7510, %v7550
    %v7552 = vpop.f32.mrb[0].mxu0
    %v7553 = vadd.f32 %v7512, %v7552
    %v7554 = vpop.f32.mrb[0].mxu0
    %v7555 = vpop.f32.mrb[0].mxu0
    %7556 = vdwg.mxu0
    %7557 = vmatprep.subr.bf16.mxu0 %v5778
    %7558 = vmatpush1.bf16.msra.mxu0 %v5777
    %7559 = vmatprep.subr.bf16.mxu0 %v5794
    %7560 = vmatpush1.bf16.msra.mxu0 %v5793
    %7561 = vmatprep.subr.bf16.mxu0 %v5810
    %7562 = vmatpush1.bf16.msra.mxu0 %v5809
    %7563 = vmatprep.subr.bf16.mxu0 %v5826
    %7564 = vmatpush1.bf16.msra.mxu0 %v5825
    %7565 = vmatprep.subr.bf16.mxu0 %v5842
    %7566 = vmatpush1.bf16.msra.mxu0 %v5841
    %7567 = vmatprep.subr.bf16.mxu0 %v5858
    %7568 = vmatpush1.bf16.msra.mxu0 %v5857
    %7569 = vmatprep.subr.bf16.mxu0 %v5874
    %7570 = vmatpush1.bf16.msra.mxu0 %v5873
    %7571 = vmatprep.subr.bf16.mxu0 %v5890
    %7572 = vmatpush1.bf16.msra.mxu0 %v5889
    %7573 = vmatprep.subr.bf16.mxu0 %v5906
    %7574 = vmatpush1.bf16.msra.mxu0 %v5905
    %7575 = vmatprep.subr.bf16.mxu0 %v5922
    %7576 = vmatpush1.bf16.msra.mxu0 %v5921
    %7577 = vmatprep.subr.bf16.mxu0 %v5938
    %7578 = vmatpush1.bf16.msra.mxu0 %v5937
    %7579 = vmatprep.subr.bf16.mxu0 %v5954
    %7580 = vmatpush1.bf16.msra.mxu0 %v5953
    %7581 = vmatprep.subr.bf16.mxu0 %v5970
    %7582 = vmatpush1.bf16.msra.mxu0 %v5969
    %7583 = vmatprep.subr.bf16.mxu0 %v5986
    %7584 = vmatpush1.bf16.msra.mxu0 %v5985
    %7585 = vmatprep.subr.bf16.mxu0 %v6002
    %7586 = vmatpush1.bf16.msra.mxu0 %v6001
    %7587 = vmatprep.subr.bf16.mxu0 %v6018
    %7588 = vmatpush1.bf16.msra.mxu0 %v6017
    %7589 = vmatprep.mubr.bf16.mxu0 %v1080
    %7590 = vmatmul.mubr.bf16.gmra.mrb[0].mxu0 %v1079
    %v7591 = vpop.f32.mrb[0].mxu0
    %v7592 = vadd.f32 %v7551, %v7591
    %v7593 = vpop.f32.mrb[0].mxu0
    %v7594 = vadd.f32 %v7553, %v7593
    %v7595 = vpop.f32.mrb[0].mxu0
    %v7596 = vpop.f32.mrb[0].mxu0
    %7597 = vdwg.mxu0
    %7598 = vmatprep.subr.bf16.mxu0 %v6034
    %7599 = vmatpush1.bf16.msra.mxu0 %v6033
    %7600 = vmatprep.subr.bf16.mxu0 %v6050
    %7601 = vmatpush1.bf16.msra.mxu0 %v6049
    %7602 = vmatprep.subr.bf16.mxu0 %v6066
    %7603 = vmatpush1.bf16.msra.mxu0 %v6065
    %7604 = vmatprep.subr.bf16.mxu0 %v6082
    %7605 = vmatpush1.bf16.msra.mxu0 %v6081
    %7606 = vmatprep.subr.bf16.mxu0 %v6098
    %7607 = vmatpush1.bf16.msra.mxu0 %v6097
    %7608 = vmatprep.subr.bf16.mxu0 %v6114
    %7609 = vmatpush1.bf16.msra.mxu0 %v6113
    %7610 = vmatprep.subr.bf16.mxu0 %v6130
    %7611 = vmatpush1.bf16.msra.mxu0 %v6129
    %7612 = vmatprep.subr.bf16.mxu0 %v6146
    %7613 = vmatpush1.bf16.msra.mxu0 %v6145
    %7614 = vmatprep.subr.bf16.mxu0 %v6162
    %7615 = vmatpush1.bf16.msra.mxu0 %v6161
    %7616 = vmatprep.subr.bf16.mxu0 %v6178
    %7617 = vmatpush1.bf16.msra.mxu0 %v6177
    %7618 = vmatprep.subr.bf16.mxu0 %v6194
    %7619 = vmatpush1.bf16.msra.mxu0 %v6193
    %7620 = vmatprep.subr.bf16.mxu0 %v6210
    %7621 = vmatpush1.bf16.msra.mxu0 %v6209
    %7622 = vmatprep.subr.bf16.mxu0 %v6226
    %7623 = vmatpush1.bf16.msra.mxu0 %v6225
    %7624 = vmatprep.subr.bf16.mxu0 %v6242
    %7625 = vmatpush1.bf16.msra.mxu0 %v6241
    %7626 = vmatprep.subr.bf16.mxu0 %v6258
    %7627 = vmatpush1.bf16.msra.mxu0 %v6257
    %7628 = vmatprep.subr.bf16.mxu0 %v6274
    %7629 = vmatpush1.bf16.msra.mxu0 %v6273
    %7630 = vmatprep.mubr.bf16.mxu0 %v1082
    %7631 = vmatmul.mubr.bf16.gmra.mrb[0].mxu0 %v1081
    %v7632 = vpop.f32.mrb[0].mxu0
    %v7633 = vadd.f32 %v7592, %v7632
    %v7634 = vpop.f32.mrb[0].mxu0
    %v7635 = vadd.f32 %v7594, %v7634
    %v7636 = vpop.f32.mrb[0].mxu0
    %v7637 = vpop.f32.mrb[0].mxu0
    %7638 = vdwg.mxu0
    %7639 = vmatprep.subr.bf16.mxu0 %v5268
    %7640 = vmatpush1.bf16.msra.mxu0 %v5267
    %7641 = vmatprep.subr.bf16.mxu0 %v5284
    %7642 = vmatpush1.bf16.msra.mxu0 %v5283
    %7643 = vmatprep.subr.bf16.mxu0 %v5300
    %7644 = vmatpush1.bf16.msra.mxu0 %v5299
    %7645 = vmatprep.subr.bf16.mxu0 %v5316
    %7646 = vmatpush1.bf16.msra.mxu0 %v5315
    %7647 = vmatprep.subr.bf16.mxu0 %v5332
    %7648 = vmatpush1.bf16.msra.mxu0 %v5331
    %7649 = vmatprep.subr.bf16.mxu0 %v5348
    %7650 = vmatpush1.bf16.msra.mxu0 %v5347
    %7651 = vmatprep.subr.bf16.mxu0 %v5364
    %7652 = vmatpush1.bf16.msra.mxu0 %v5363
    %7653 = vmatprep.subr.bf16.mxu0 %v5380
    %7654 = vmatpush1.bf16.msra.mxu0 %v5379
    %7655 = vmatprep.subr.bf16.mxu0 %v5396
    %7656 = vmatpush1.bf16.msra.mxu0 %v5395
    %7657 = vmatprep.subr.bf16.mxu0 %v5412
    %7658 = vmatpush1.bf16.msra.mxu0 %v5411
    %7659 = vmatprep.subr.bf16.mxu0 %v5428
    %7660 = vmatpush1.bf16.msra.mxu0 %v5427
    %7661 = vmatprep.subr.bf16.mxu0 %v5444
    %7662 = vmatpush1.bf16.msra.mxu0 %v5443
    %7663 = vmatprep.subr.bf16.mxu0 %v5460
    %7664 = vmatpush1.bf16.msra.mxu0 %v5459
    %7665 = vmatprep.subr.bf16.mxu0 %v5476
    %7666 = vmatpush1.bf16.msra.mxu0 %v5475
    %7667 = vmatprep.subr.bf16.mxu0 %v5492
    %7668 = vmatpush1.bf16.msra.mxu0 %v5491
    %7669 = vmatprep.subr.bf16.mxu0 %v5508
    %7670 = vmatpush1.bf16.msra.mxu0 %v5507
    %7671 = vmatprep.mubr.bf16.mxu0 %v1076
    %7672 = vmatmul.mubr.bf16.gmra.mrb[0].mxu0 %v1075
    %v7673 = vpop.f32.mrb[0].mxu0
    %v7674 = vadd.f32 %v2130, %v7673
    %v7675 = vpop.f32.mrb[0].mxu0
    %v7676 = vadd.f32 %v2134, %v7675
    %v7677 = vpop.f32.mrb[0].mxu0
    %v7678 = vpop.f32.mrb[0].mxu0
    %7679 = vdwg.mxu0
    %7680 = vmatprep.subr.bf16.mxu0 %v5524
    %7681 = vmatpush1.bf16.msra.mxu0 %v5523
    %7682 = vmatprep.subr.bf16.mxu0 %v5540
    %7683 = vmatpush1.bf16.msra.mxu0 %v5539
    %7684 = vmatprep.subr.bf16.mxu0 %v5556
    %7685 = vmatpush1.bf16.msra.mxu0 %v5555
    %7686 = vmatprep.subr.bf16.mxu0 %v5572
    %7687 = vmatpush1.bf16.msra.mxu0 %v5571
    %7688 = vmatprep.subr.bf16.mxu0 %v5588
    %7689 = vmatpush1.bf16.msra.mxu0 %v5587
    %7690 = vmatprep.subr.bf16.mxu0 %v5604
    %7691 = vmatpush1.bf16.msra.mxu0 %v5603
    %7692 = vmatprep.subr.bf16.mxu0 %v5620
    %7693 = vmatpush1.bf16.msra.mxu0 %v5619
    %7694 = vmatprep.subr.bf16.mxu0 %v5636
    %7695 = vmatpush1.bf16.msra.mxu0 %v5635
    %7696 = vmatprep.subr.bf16.mxu0 %v5652
    %7697 = vmatpush1.bf16.msra.mxu0 %v5651
    %7698 = vmatprep.subr.bf16.mxu0 %v5668
    %7699 = vmatpush1.bf16.msra.mxu0 %v5667
    %7700 = vmatprep.subr.bf16.mxu0 %v5684
    %7701 = vmatpush1.bf16.msra.mxu0 %v5683
    %7702 = vmatprep.subr.bf16.mxu0 %v5700
    %7703 = vmatpush1.bf16.msra.mxu0 %v5699
    %7704 = vmatprep.subr.bf16.mxu0 %v5716
    %7705 = vmatpush1.bf16.msra.mxu0 %v5715
    %7706 = vmatprep.subr.bf16.mxu0 %v5732
    %7707 = vmatpush1.bf16.msra.mxu0 %v5731
    %7708 = vmatprep.subr.bf16.mxu0 %v5748
    %7709 = vmatpush1.bf16.msra.mxu0 %v5747
    %7710 = vmatprep.subr.bf16.mxu0 %v5764
    %7711 = vmatpush1.bf16.msra.mxu0 %v5763
    %7712 = vmatprep.mubr.bf16.mxu0 %v1078
    %7713 = vmatmul.mubr.bf16.gmra.mrb[0].mxu0 %v1077
    %v7714 = vpop.f32.mrb[0].mxu0
    %v7715 = vadd.f32 %v7674, %v7714
    %v7716 = vpop.f32.mrb[0].mxu0
    %v7717 = vadd.f32 %v7676, %v7716
    %v7718 = vpop.f32.mrb[0].mxu0
    %v7719 = vpop.f32.mrb[0].mxu0
    %7720 = vdwg.mxu0
    %7721 = vmatprep.subr.bf16.mxu0 %v5780
    %7722 = vmatpush1.bf16.msra.mxu0 %v5779
    %7723 = vmatprep.subr.bf16.mxu0 %v5796
    %7724 = vmatpush1.bf16.msra.mxu0 %v5795
    %7725 = vmatprep.subr.bf16.mxu0 %v5812
    %7726 = vmatpush1.bf16.msra.mxu0 %v5811
    %7727 = vmatprep.subr.bf16.mxu0 %v5828
    %7728 = vmatpush1.bf16.msra.mxu0 %v5827
    %7729 = vmatprep.subr.bf16.mxu0 %v5844
    %7730 = vmatpush1.bf16.msra.mxu0 %v5843
    %7731 = vmatprep.subr.bf16.mxu0 %v5860
    %7732 = vmatpush1.bf16.msra.mxu0 %v5859
    %7733 = vmatprep.subr.bf16.mxu0 %v5876
    %7734 = vmatpush1.bf16.msra.mxu0 %v5875
    %7735 = vmatprep.subr.bf16.mxu0 %v5892
    %7736 = vmatpush1.bf16.msra.mxu0 %v5891
    %7737 = vmatprep.subr.bf16.mxu0 %v5908
    %7738 = vmatpush1.bf16.msra.mxu0 %v5907
    %7739 = vmatprep.subr.bf16.mxu0 %v5924
    %7740 = vmatpush1.bf16.msra.mxu0 %v5923
    %7741 = vmatprep.subr.bf16.mxu0 %v5940
    %7742 = vmatpush1.bf16.msra.mxu0 %v5939
    %7743 = vmatprep.subr.bf16.mxu0 %v5956
    %7744 = vmatpush1.bf16.msra.mxu0 %v5955
    %7745 = vmatprep.subr.bf16.mxu0 %v5972
    %7746 = vmatpush1.bf16.msra.mxu0 %v5971
    %7747 = vmatprep.subr.bf16.mxu0 %v5988
    %7748 = vmatpush1.bf16.msra.mxu0 %v5987
    %7749 = vmatprep.subr.bf16.mxu0 %v6004
    %7750 = vmatpush1.bf16.msra.mxu0 %v6003
    %7751 = vmatprep.subr.bf16.mxu0 %v6020
    %7752 = vmatpush1.bf16.msra.mxu0 %v6019
    %7753 = vmatprep.mubr.bf16.mxu0 %v1080
    %7754 = vmatmul.mubr.bf16.gmra.mrb[0].mxu0 %v1079
    %v7755 = vpop.f32.mrb[0].mxu0
    %v7756 = vadd.f32 %v7715, %v7755
    %v7757 = vpop.f32.mrb[0].mxu0
    %v7758 = vadd.f32 %v7717, %v7757
    %v7759 = vpop.f32.mrb[0].mxu0
    %v7760 = vpop.f32.mrb[0].mxu0
    %7761 = vdwg.mxu0
    %7762 = vmatprep.subr.bf16.mxu0 %v6036
    %7763 = vmatpush1.bf16.msra.mxu0 %v6035
    %7764 = vmatprep.subr.bf16.mxu0 %v6052
    %7765 = vmatpush1.bf16.msra.mxu0 %v6051
    %7766 = vmatprep.subr.bf16.mxu0 %v6068
    %7767 = vmatpush1.bf16.msra.mxu0 %v6067
    %7768 = vmatprep.subr.bf16.mxu0 %v6084
    %7769 = vmatpush1.bf16.msra.mxu0 %v6083
    %7770 = vmatprep.subr.bf16.mxu0 %v6100
    %7771 = vmatpush1.bf16.msra.mxu0 %v6099
    %7772 = vmatprep.subr.bf16.mxu0 %v6116
    %7773 = vmatpush1.bf16.msra.mxu0 %v6115
    %7774 = vmatprep.subr.bf16.mxu0 %v6132
    %7775 = vmatpush1.bf16.msra.mxu0 %v6131
    %7776 = vmatprep.subr.bf16.mxu0 %v6148
    %7777 = vmatpush1.bf16.msra.mxu0 %v6147
    %7778 = vmatprep.subr.bf16.mxu0 %v6164
    %7779 = vmatpush1.bf16.msra.mxu0 %v6163
    %7780 = vmatprep.subr.bf16.mxu0 %v6180
    %7781 = vmatpush1.bf16.msra.mxu0 %v6179
    %7782 = vmatprep.subr.bf16.mxu0 %v6196
    %7783 = vmatpush1.bf16.msra.mxu0 %v6195
    %7784 = vmatprep.subr.bf16.mxu0 %v6212
    %7785 = vmatpush1.bf16.msra.mxu0 %v6211
    %7786 = vmatprep.subr.bf16.mxu0 %v6228
    %7787 = vmatpush1.bf16.msra.mxu0 %v6227
    %7788 = vmatprep.subr.bf16.mxu0 %v6244
    %7789 = vmatpush1.bf16.msra.mxu0 %v6243
    %7790 = vmatprep.subr.bf16.mxu0 %v6260
    %7791 = vmatpush1.bf16.msra.mxu0 %v6259
    %7792 = vmatprep.subr.bf16.mxu0 %v6276
    %7793 = vmatpush1.bf16.msra.mxu0 %v6275
    %7794 = vmatprep.mubr.bf16.mxu0 %v1082
    %7795 = vmatmul.mubr.bf16.gmra.mrb[0].mxu0 %v1081
    %v7796 = vpop.f32.mrb[0].mxu0
    %v7797 = vadd.f32 %v7756, %v7796
    %v7798 = vpop.f32.mrb[0].mxu0
    %v7799 = vadd.f32 %v7758, %v7798
    %v7800 = vpop.f32.mrb[0].mxu0
    %v7801 = vpop.f32.mrb[0].mxu0
    %7802 = vdwg.mxu0
    %7803 = vmatprep.subr.bf16.mxu0 %v5270
    %7804 = vmatpush1.bf16.msra.mxu0 %v5269
    %7805 = vmatprep.subr.bf16.mxu0 %v5286
    %7806 = vmatpush1.bf16.msra.mxu0 %v5285
    %7807 = vmatprep.subr.bf16.mxu0 %v5302
    %7808 = vmatpush1.bf16.msra.mxu0 %v5301
    %7809 = vmatprep.subr.bf16.mxu0 %v5318
    %7810 = vmatpush1.bf16.msra.mxu0 %v5317
    %7811 = vmatprep.subr.bf16.mxu0 %v5334
    %7812 = vmatpush1.bf16.msra.mxu0 %v5333
    %7813 = vmatprep.subr.bf16.mxu0 %v5350
    %7814 = vmatpush1.bf16.msra.mxu0 %v5349
    %7815 = vmatprep.subr.bf16.mxu0 %v5366
    %7816 = vmatpush1.bf16.msra.mxu0 %v5365
    %7817 = vmatprep.subr.bf16.mxu0 %v5382
    %7818 = vmatpush1.bf16.msra.mxu0 %v5381
    %7819 = vmatprep.subr.bf16.mxu0 %v5398
    %7820 = vmatpush1.bf16.msra.mxu0 %v5397
    %7821 = vmatprep.subr.bf16.mxu0 %v5414
    %7822 = vmatpush1.bf16.msra.mxu0 %v5413
    %7823 = vmatprep.subr.bf16.mxu0 %v5430
    %7824 = vmatpush1.bf16.msra.mxu0 %v5429
    %7825 = vmatprep.subr.bf16.mxu0 %v5446
    %7826 = vmatpush1.bf16.msra.mxu0 %v5445
    %7827 = vmatprep.subr.bf16.mxu0 %v5462
    %7828 = vmatpush1.bf16.msra.mxu0 %v5461
    %7829 = vmatprep.subr.bf16.mxu0 %v5478
    %7830 = vmatpush1.bf16.msra.mxu0 %v5477
    %7831 = vmatprep.subr.bf16.mxu0 %v5494
    %7832 = vmatpush1.bf16.msra.mxu0 %v5493
    %7833 = vmatprep.subr.bf16.mxu0 %v5510
    %7834 = vmatpush1.bf16.msra.mxu0 %v5509
    %7835 = vmatprep.mubr.bf16.mxu0 %v1076
    %7836 = vmatmul.mubr.bf16.gmra.mrb[0].mxu0 %v1075
    %v7837 = vpop.f32.mrb[0].mxu0
    %v7838 = vadd.f32 %v2138, %v7837
    %v7839 = vpop.f32.mrb[0].mxu0
    %v7840 = vadd.f32 %v2142, %v7839
    %v7841 = vpop.f32.mrb[0].mxu0
    %v7842 = vpop.f32.mrb[0].mxu0
    %7843 = vdwg.mxu0
    %7844 = vmatprep.subr.bf16.mxu0 %v5526
    %7845 = vmatpush1.bf16.msra.mxu0 %v5525
    %7846 = vmatprep.subr.bf16.mxu0 %v5542
    %7847 = vmatpush1.bf16.msra.mxu0 %v5541
    %7848 = vmatprep.subr.bf16.mxu0 %v5558
    %7849 = vmatpush1.bf16.msra.mxu0 %v5557
    %7850 = vmatprep.subr.bf16.mxu0 %v5574
    %7851 = vmatpush1.bf16.msra.mxu0 %v5573
    %7852 = vmatprep.subr.bf16.mxu0 %v5590
    %7853 = vmatpush1.bf16.msra.mxu0 %v5589
    %7854 = vmatprep.subr.bf16.mxu0 %v5606
    %7855 = vmatpush1.bf16.msra.mxu0 %v5605
    %7856 = vmatprep.subr.bf16.mxu0 %v5622
    %7857 = vmatpush1.bf16.msra.mxu0 %v5621
    %7858 = vmatprep.subr.bf16.mxu0 %v5638
    %7859 = vmatpush1.bf16.msra.mxu0 %v5637
    %7860 = vmatprep.subr.bf16.mxu0 %v5654
    %7861 = vmatpush1.bf16.msra.mxu0 %v5653
    %7862 = vmatprep.subr.bf16.mxu0 %v5670
    %7863 = vmatpush1.bf16.msra.mxu0 %v5669
    %7864 = vmatprep.subr.bf16.mxu0 %v5686
    %7865 = vmatpush1.bf16.msra.mxu0 %v5685
    %7866 = vmatprep.subr.bf16.mxu0 %v5702
    %7867 = vmatpush1.bf16.msra.mxu0 %v5701
    %7868 = vmatprep.subr.bf16.mxu0 %v5718
    %7869 = vmatpush1.bf16.msra.mxu0 %v5717
    %7870 = vmatprep.subr.bf16.mxu0 %v5734
    %7871 = vmatpush1.bf16.msra.mxu0 %v5733
    %7872 = vmatprep.subr.bf16.mxu0 %v5750
    %7873 = vmatpush1.bf16.msra.mxu0 %v5749
    %7874 = vmatprep.subr.bf16.mxu0 %v5766
    %7875 = vmatpush1.bf16.msra.mxu0 %v5765
    %7876 = vmatprep.mubr.bf16.mxu0 %v1078
    %7877 = vmatmul.mubr.bf16.gmra.mrb[0].mxu0 %v1077
    %v7878 = vpop.f32.mrb[0].mxu0
    %v7879 = vadd.f32 %v7838, %v7878
    %v7880 = vpop.f32.mrb[0].mxu0
    %v7881 = vadd.f32 %v7840, %v7880
    %v7882 = vpop.f32.mrb[0].mxu0
    %v7883 = vpop.f32.mrb[0].mxu0
    %7884 = vdwg.mxu0
    %7885 = vmatprep.subr.bf16.mxu0 %v5782
    %7886 = vmatpush1.bf16.msra.mxu0 %v5781
    %7887 = vmatprep.subr.bf16.mxu0 %v5798
    %7888 = vmatpush1.bf16.msra.mxu0 %v5797
    %7889 = vmatprep.subr.bf16.mxu0 %v5814
    %7890 = vmatpush1.bf16.msra.mxu0 %v5813
    %7891 = vmatprep.subr.bf16.mxu0 %v5830
    %7892 = vmatpush1.bf16.msra.mxu0 %v5829
    %7893 = vmatprep.subr.bf16.mxu0 %v5846
    %7894 = vmatpush1.bf16.msra.mxu0 %v5845
    %7895 = vmatprep.subr.bf16.mxu0 %v5862
    %7896 = vmatpush1.bf16.msra.mxu0 %v5861
    %7897 = vmatprep.subr.bf16.mxu0 %v5878
    %7898 = vmatpush1.bf16.msra.mxu0 %v5877
    %7899 = vmatprep.subr.bf16.mxu0 %v5894
    %7900 = vmatpush1.bf16.msra.mxu0 %v5893
    %7901 = vmatprep.subr.bf16.mxu0 %v5910
    %7902 = vmatpush1.bf16.msra.mxu0 %v5909
    %7903 = vmatprep.subr.bf16.mxu0 %v5926
    %7904 = vmatpush1.bf16.msra.mxu0 %v5925
    %7905 = vmatprep.subr.bf16.mxu0 %v5942
    %7906 = vmatpush1.bf16.msra.mxu0 %v5941
    %7907 = vmatprep.subr.bf16.mxu0 %v5958
    %7908 = vmatpush1.bf16.msra.mxu0 %v5957
    %7909 = vmatprep.subr.bf16.mxu0 %v5974
    %7910 = vmatpush1.bf16.msra.mxu0 %v5973
    %7911 = vmatprep.subr.bf16.mxu0 %v5990
    %7912 = vmatpush1.bf16.msra.mxu0 %v5989
    %7913 = vmatprep.subr.bf16.mxu0 %v6006
    %7914 = vmatpush1.bf16.msra.mxu0 %v6005
    %7915 = vmatprep.subr.bf16.mxu0 %v6022
    %7916 = vmatpush1.bf16.msra.mxu0 %v6021
    %7917 = vmatprep.mubr.bf16.mxu0 %v1080
    %7918 = vmatmul.mubr.bf16.gmra.mrb[0].mxu0 %v1079
    %v7919 = vpop.f32.mrb[0].mxu0
    %v7920 = vadd.f32 %v7879, %v7919
    %v7921 = vpop.f32.mrb[0].mxu0
    %v7922 = vadd.f32 %v7881, %v7921
    %v7923 = vpop.f32.mrb[0].mxu0
    %v7924 = vpop.f32.mrb[0].mxu0
    %7925 = vdwg.mxu0
    %7926 = vmatprep.subr.bf16.mxu0 %v6038
    %7927 = vmatpush1.bf16.msra.mxu0 %v6037
    %7928 = vmatprep.subr.bf16.mxu0 %v6054
    %7929 = vmatpush1.bf16.msra.mxu0 %v6053
    %7930 = vmatprep.subr.bf16.mxu0 %v6070
    %7931 = vmatpush1.bf16.msra.mxu0 %v6069
    %7932 = vmatprep.subr.bf16.mxu0 %v6086
    %7933 = vmatpush1.bf16.msra.mxu0 %v6085
    %7934 = vmatprep.subr.bf16.mxu0 %v6102
    %7935 = vmatpush1.bf16.msra.mxu0 %v6101
    %7936 = vmatprep.subr.bf16.mxu0 %v6118
    %7937 = vmatpush1.bf16.msra.mxu0 %v6117
    %7938 = vmatprep.subr.bf16.mxu0 %v6134
    %7939 = vmatpush1.bf16.msra.mxu0 %v6133
    %7940 = vmatprep.subr.bf16.mxu0 %v6150
    %7941 = vmatpush1.bf16.msra.mxu0 %v6149
    %7942 = vmatprep.subr.bf16.mxu0 %v6166
    %7943 = vmatpush1.bf16.msra.mxu0 %v6165
    %7944 = vmatprep.subr.bf16.mxu0 %v6182
    %7945 = vmatpush1.bf16.msra.mxu0 %v6181
    %7946 = vmatprep.subr.bf16.mxu0 %v6198
    %7947 = vmatpush1.bf16.msra.mxu0 %v6197
    %7948 = vmatprep.subr.bf16.mxu0 %v6214
    %7949 = vmatpush1.bf16.msra.mxu0 %v6213
    %7950 = vmatprep.subr.bf16.mxu0 %v6230
    %7951 = vmatpush1.bf16.msra.mxu0 %v6229
    %7952 = vmatprep.subr.bf16.mxu0 %v6246
    %7953 = vmatpush1.bf16.msra.mxu0 %v6245
    %7954 = vmatprep.subr.bf16.mxu0 %v6262
    %7955 = vmatpush1.bf16.msra.mxu0 %v6261
    %7956 = vmatprep.subr.bf16.mxu0 %v6278
    %7957 = vmatpush1.bf16.msra.mxu0 %v6277
    %7958 = vmatprep.mubr.bf16.mxu0 %v1082
    %7959 = vmatmul.mubr.bf16.gmra.mrb[0].mxu0 %v1081
    %v7960 = vpop.f32.mrb[0].mxu0
    %v7961 = vadd.f32 %v7920, %v7960
    %v7962 = vpop.f32.mrb[0].mxu0
    %v7963 = vadd.f32 %v7922, %v7962
    %v7964 = vpop.f32.mrb[0].mxu0
    %v7965 = vpop.f32.mrb[0].mxu0
    %7966 = vdwg.mxu0
    %7967 = vmatprep.subr.bf16.mxu0 %v5272
    %7968 = vmatpush1.bf16.msra.mxu0 %v5271
    %7969 = vmatprep.subr.bf16.mxu0 %v5288
    %7970 = vmatpush1.bf16.msra.mxu0 %v5287
    %7971 = vmatprep.subr.bf16.mxu0 %v5304
    %7972 = vmatpush1.bf16.msra.mxu0 %v5303
    %7973 = vmatprep.subr.bf16.mxu0 %v5320
    %7974 = vmatpush1.bf16.msra.mxu0 %v5319
    %7975 = vmatprep.subr.bf16.mxu0 %v5336
    %7976 = vmatpush1.bf16.msra.mxu0 %v5335
    %7977 = vmatprep.subr.bf16.mxu0 %v5352
    %7978 = vmatpush1.bf16.msra.mxu0 %v5351
    %7979 = vmatprep.subr.bf16.mxu0 %v5368
    %7980 = vmatpush1.bf16.msra.mxu0 %v5367
    %7981 = vmatprep.subr.bf16.mxu0 %v5384
    %7982 = vmatpush1.bf16.msra.mxu0 %v5383
    %7983 = vmatprep.subr.bf16.mxu0 %v5400
    %7984 = vmatpush1.bf16.msra.mxu0 %v5399
    %7985 = vmatprep.subr.bf16.mxu0 %v5416
    %7986 = vmatpush1.bf16.msra.mxu0 %v5415
    %7987 = vmatprep.subr.bf16.mxu0 %v5432
    %7988 = vmatpush1.bf16.msra.mxu0 %v5431
    %7989 = vmatprep.subr.bf16.mxu0 %v5448
    %7990 = vmatpush1.bf16.msra.mxu0 %v5447
    %7991 = vmatprep.subr.bf16.mxu0 %v5464
    %7992 = vmatpush1.bf16.msra.mxu0 %v5463
    %7993 = vmatprep.subr.bf16.mxu0 %v5480
    %7994 = vmatpush1.bf16.msra.mxu0 %v5479
    %7995 = vmatprep.subr.bf16.mxu0 %v5496
    %7996 = vmatpush1.bf16.msra.mxu0 %v5495
    %7997 = vmatprep.subr.bf16.mxu0 %v5512
    %7998 = vmatpush1.bf16.msra.mxu0 %v5511
    %7999 = vmatprep.mubr.bf16.mxu0 %v1076
    %8000 = vmatmul.mubr.bf16.gmra.mrb[0].mxu0 %v1075
    %v8001 = vpop.f32.mrb[0].mxu0
    %v8002 = vadd.f32 %v2146, %v8001
    %v8003 = vpop.f32.mrb[0].mxu0
    %v8004 = vadd.f32 %v2150, %v8003
    %v8005 = vpop.f32.mrb[0].mxu0
    %v8006 = vpop.f32.mrb[0].mxu0
    %8007 = vdwg.mxu0
    %8008 = vmatprep.subr.bf16.mxu0 %v5528
    %8009 = vmatpush1.bf16.msra.mxu0 %v5527
    %8010 = vmatprep.subr.bf16.mxu0 %v5544
    %8011 = vmatpush1.bf16.msra.mxu0 %v5543
    %8012 = vmatprep.subr.bf16.mxu0 %v5560
    %8013 = vmatpush1.bf16.msra.mxu0 %v5559
    %8014 = vmatprep.subr.bf16.mxu0 %v5576
    %8015 = vmatpush1.bf16.msra.mxu0 %v5575
    %8016 = vmatprep.subr.bf16.mxu0 %v5592
    %8017 = vmatpush1.bf16.msra.mxu0 %v5591
    %8018 = vmatprep.subr.bf16.mxu0 %v5608
    %8019 = vmatpush1.bf16.msra.mxu0 %v5607
    %8020 = vmatprep.subr.bf16.mxu0 %v5624
    %8021 = vmatpush1.bf16.msra.mxu0 %v5623
    %8022 = vmatprep.subr.bf16.mxu0 %v5640
    %8023 = vmatpush1.bf16.msra.mxu0 %v5639
    %8024 = vmatprep.subr.bf16.mxu0 %v5656
    %8025 = vmatpush1.bf16.msra.mxu0 %v5655
    %8026 = vmatprep.subr.bf16.mxu0 %v5672
    %8027 = vmatpush1.bf16.msra.mxu0 %v5671
    %8028 = vmatprep.subr.bf16.mxu0 %v5688
    %8029 = vmatpush1.bf16.msra.mxu0 %v5687
    %8030 = vmatprep.subr.bf16.mxu0 %v5704
    %8031 = vmatpush1.bf16.msra.mxu0 %v5703
    %8032 = vmatprep.subr.bf16.mxu0 %v5720
    %8033 = vmatpush1.bf16.msra.mxu0 %v5719
    %8034 = vmatprep.subr.bf16.mxu0 %v5736
    %8035 = vmatpush1.bf16.msra.mxu0 %v5735
    %8036 = vmatprep.subr.bf16.mxu0 %v5752
    %8037 = vmatpush1.bf16.msra.mxu0 %v5751
    %8038 = vmatprep.subr.bf16.mxu0 %v5768
    %8039 = vmatpush1.bf16.msra.mxu0 %v5767
    %8040 = vmatprep.mubr.bf16.mxu0 %v1078
    %8041 = vmatmul.mubr.bf16.gmra.mrb[0].mxu0 %v1077
    %v8042 = vpop.f32.mrb[0].mxu0
    %v8043 = vadd.f32 %v8002, %v8042
    %v8044 = vpop.f32.mrb[0].mxu0
    %v8045 = vadd.f32 %v8004, %v8044
    %v8046 = vpop.f32.mrb[0].mxu0
    %v8047 = vpop.f32.mrb[0].mxu0
    %8048 = vdwg.mxu0
    %8049 = vmatprep.subr.bf16.mxu0 %v5784
    %8050 = vmatpush1.bf16.msra.mxu0 %v5783
    %8051 = vmatprep.subr.bf16.mxu0 %v5800
    %8052 = vmatpush1.bf16.msra.mxu0 %v5799
    %8053 = vmatprep.subr.bf16.mxu0 %v5816
    %8054 = vmatpush1.bf16.msra.mxu0 %v5815
    %8055 = vmatprep.subr.bf16.mxu0 %v5832
    %8056 = vmatpush1.bf16.msra.mxu0 %v5831
    %8057 = vmatprep.subr.bf16.mxu0 %v5848
    %8058 = vmatpush1.bf16.msra.mxu0 %v5847
    %8059 = vmatprep.subr.bf16.mxu0 %v5864
    %8060 = vmatpush1.bf16.msra.mxu0 %v5863
    %8061 = vmatprep.subr.bf16.mxu0 %v5880
    %8062 = vmatpush1.bf16.msra.mxu0 %v5879
    %8063 = vmatprep.subr.bf16.mxu0 %v5896
    %8064 = vmatpush1.bf16.msra.mxu0 %v5895
    %8065 = vmatprep.subr.bf16.mxu0 %v5912
    %8066 = vmatpush1.bf16.msra.mxu0 %v5911
    %8067 = vmatprep.subr.bf16.mxu0 %v5928
    %8068 = vmatpush1.bf16.msra.mxu0 %v5927
    %8069 = vmatprep.subr.bf16.mxu0 %v5944
    %8070 = vmatpush1.bf16.msra.mxu0 %v5943
    %8071 = vmatprep.subr.bf16.mxu0 %v5960
    %8072 = vmatpush1.bf16.msra.mxu0 %v5959
    %8073 = vmatprep.subr.bf16.mxu0 %v5976
    %8074 = vmatpush1.bf16.msra.mxu0 %v5975
    %8075 = vmatprep.subr.bf16.mxu0 %v5992
    %8076 = vmatpush1.bf16.msra.mxu0 %v5991
    %8077 = vmatprep.subr.bf16.mxu0 %v6008
    %8078 = vmatpush1.bf16.msra.mxu0 %v6007
    %8079 = vmatprep.subr.bf16.mxu0 %v6024
    %8080 = vmatpush1.bf16.msra.mxu0 %v6023
    %8081 = vmatprep.mubr.bf16.mxu0 %v1080
    %8082 = vmatmul.mubr.bf16.gmra.mrb[0].mxu0 %v1079
    %v8083 = vpop.f32.mrb[0].mxu0
    %v8084 = vadd.f32 %v8043, %v8083
    %v8085 = vpop.f32.mrb[0].mxu0
    %v8086 = vadd.f32 %v8045, %v8085
    %v8087 = vpop.f32.mrb[0].mxu0
    %v8088 = vpop.f32.mrb[0].mxu0
    %8089 = vdwg.mxu0
    %8090 = vmatprep.subr.bf16.mxu0 %v6040
    %8091 = vmatpush1.bf16.msra.mxu0 %v6039
    %8092 = vmatprep.subr.bf16.mxu0 %v6056
    %8093 = vmatpush1.bf16.msra.mxu0 %v6055
    %8094 = vmatprep.subr.bf16.mxu0 %v6072
    %8095 = vmatpush1.bf16.msra.mxu0 %v6071
    %8096 = vmatprep.subr.bf16.mxu0 %v6088
    %8097 = vmatpush1.bf16.msra.mxu0 %v6087
    %8098 = vmatprep.subr.bf16.mxu0 %v6104
    %8099 = vmatpush1.bf16.msra.mxu0 %v6103
    %8100 = vmatprep.subr.bf16.mxu0 %v6120
    %8101 = vmatpush1.bf16.msra.mxu0 %v6119
    %8102 = vmatprep.subr.bf16.mxu0 %v6136
    %8103 = vmatpush1.bf16.msra.mxu0 %v6135
    %8104 = vmatprep.subr.bf16.mxu0 %v6152
    %8105 = vmatpush1.bf16.msra.mxu0 %v6151
    %8106 = vmatprep.subr.bf16.mxu0 %v6168
    %8107 = vmatpush1.bf16.msra.mxu0 %v6167
    %8108 = vmatprep.subr.bf16.mxu0 %v6184
    %8109 = vmatpush1.bf16.msra.mxu0 %v6183
    %8110 = vmatprep.subr.bf16.mxu0 %v6200
    %8111 = vmatpush1.bf16.msra.mxu0 %v6199
    %8112 = vmatprep.subr.bf16.mxu0 %v6216
    %8113 = vmatpush1.bf16.msra.mxu0 %v6215
    %8114 = vmatprep.subr.bf16.mxu0 %v6232
    %8115 = vmatpush1.bf16.msra.mxu0 %v6231
    %8116 = vmatprep.subr.bf16.mxu0 %v6248
    %8117 = vmatpush1.bf16.msra.mxu0 %v6247
    %8118 = vmatprep.subr.bf16.mxu0 %v6264
    %8119 = vmatpush1.bf16.msra.mxu0 %v6263
    %8120 = vmatprep.subr.bf16.mxu0 %v6280
    %8121 = vmatpush1.bf16.msra.mxu0 %v6279
    %8122 = vmatprep.mubr.bf16.mxu0 %v1082
    %8123 = vmatmul.mubr.bf16.gmra.mrb[0].mxu0 %v1081
    %v8124 = vpop.f32.mrb[0].mxu0
    %v8125 = vadd.f32 %v8084, %v8124
    %v8126 = vpop.f32.mrb[0].mxu0
    %v8127 = vadd.f32 %v8086, %v8126
    %v8128 = vpop.f32.mrb[0].mxu0
    %v8129 = vpop.f32.mrb[0].mxu0
    %8130 = vdwg.mxu0
    %8131 = vmatprep.subr.bf16.mxu0 %v5274
    %8132 = vmatpush1.bf16.msra.mxu0 %v5273
    %8133 = vmatprep.subr.bf16.mxu0 %v5290
    %8134 = vmatpush1.bf16.msra.mxu0 %v5289
    %8135 = vmatprep.subr.bf16.mxu0 %v5306
    %8136 = vmatpush1.bf16.msra.mxu0 %v5305
    %8137 = vmatprep.subr.bf16.mxu0 %v5322
    %8138 = vmatpush1.bf16.msra.mxu0 %v5321
    %8139 = vmatprep.subr.bf16.mxu0 %v5338
    %8140 = vmatpush1.bf16.msra.mxu0 %v5337
    %8141 = vmatprep.subr.bf16.mxu0 %v5354
    %8142 = vmatpush1.bf16.msra.mxu0 %v5353
    %8143 = vmatprep.subr.bf16.mxu0 %v5370
    %8144 = vmatpush1.bf16.msra.mxu0 %v5369
    %8145 = vmatprep.subr.bf16.mxu0 %v5386
    %8146 = vmatpush1.bf16.msra.mxu0 %v5385
    %8147 = vmatprep.subr.bf16.mxu0 %v5402
    %8148 = vmatpush1.bf16.msra.mxu0 %v5401
    %8149 = vmatprep.subr.bf16.mxu0 %v5418
    %8150 = vmatpush1.bf16.msra.mxu0 %v5417
    %8151 = vmatprep.subr.bf16.mxu0 %v5434
    %8152 = vmatpush1.bf16.msra.mxu0 %v5433
    %8153 = vmatprep.subr.bf16.mxu0 %v5450
    %8154 = vmatpush1.bf16.msra.mxu0 %v5449
    %8155 = vmatprep.subr.bf16.mxu0 %v5466
    %8156 = vmatpush1.bf16.msra.mxu0 %v5465
    %8157 = vmatprep.subr.bf16.mxu0 %v5482
    %8158 = vmatpush1.bf16.msra.mxu0 %v5481
    %8159 = vmatprep.subr.bf16.mxu0 %v5498
    %8160 = vmatpush1.bf16.msra.mxu0 %v5497
    %8161 = vmatprep.subr.bf16.mxu0 %v5514
    %8162 = vmatpush1.bf16.msra.mxu0 %v5513
    %8163 = vmatprep.mubr.bf16.mxu0 %v1076
    %8164 = vmatmul.mubr.bf16.gmra.mrb[0].mxu0 %v1075
    %v8165 = vpop.f32.mrb[0].mxu0
    %v8166 = vadd.f32 %v2154, %v8165
    %v8167 = vpop.f32.mrb[0].mxu0
    %v8168 = vadd.f32 %v2158, %v8167
    %v8169 = vpop.f32.mrb[0].mxu0
    %v8170 = vpop.f32.mrb[0].mxu0
    %8171 = vdwg.mxu0
    %8172 = vmatprep.subr.bf16.mxu0 %v5530
    %8173 = vmatpush1.bf16.msra.mxu0 %v5529
    %8174 = vmatprep.subr.bf16.mxu0 %v5546
    %8175 = vmatpush1.bf16.msra.mxu0 %v5545
    %8176 = vmatprep.subr.bf16.mxu0 %v5562
    %8177 = vmatpush1.bf16.msra.mxu0 %v5561
    %8178 = vmatprep.subr.bf16.mxu0 %v5578
    %8179 = vmatpush1.bf16.msra.mxu0 %v5577
    %8180 = vmatprep.subr.bf16.mxu0 %v5594
    %8181 = vmatpush1.bf16.msra.mxu0 %v5593
    %8182 = vmatprep.subr.bf16.mxu0 %v5610
    %8183 = vmatpush1.bf16.msra.mxu0 %v5609
    %8184 = vmatprep.subr.bf16.mxu0 %v5626
    %8185 = vmatpush1.bf16.msra.mxu0 %v5625
    %8186 = vmatprep.subr.bf16.mxu0 %v5642
    %8187 = vmatpush1.bf16.msra.mxu0 %v5641
    %8188 = vmatprep.subr.bf16.mxu0 %v5658
    %8189 = vmatpush1.bf16.msra.mxu0 %v5657
    %8190 = vmatprep.subr.bf16.mxu0 %v5674
    %8191 = vmatpush1.bf16.msra.mxu0 %v5673
    %8192 = vmatprep.subr.bf16.mxu0 %v5690
    %8193 = vmatpush1.bf16.msra.mxu0 %v5689
    %8194 = vmatprep.subr.bf16.mxu0 %v5706
    %8195 = vmatpush1.bf16.msra.mxu0 %v5705
    %8196 = vmatprep.subr.bf16.mxu0 %v5722
    %8197 = vmatpush1.bf16.msra.mxu0 %v5721
    %8198 = vmatprep.subr.bf16.mxu0 %v5738
    %8199 = vmatpush1.bf16.msra.mxu0 %v5737
    %8200 = vmatprep.subr.bf16.mxu0 %v5754
    %8201 = vmatpush1.bf16.msra.mxu0 %v5753
    %8202 = vmatprep.subr.bf16.mxu0 %v5770
    %8203 = vmatpush1.bf16.msra.mxu0 %v5769
    %8204 = vmatprep.mubr.bf16.mxu0 %v1078
    %8205 = vmatmul.mubr.bf16.gmra.mrb[0].mxu0 %v1077
    %v8206 = vpop.f32.mrb[0].mxu0
    %v8207 = vadd.f32 %v8166, %v8206
    %v8208 = vpop.f32.mrb[0].mxu0
    %v8209 = vadd.f32 %v8168, %v8208
    %v8210 = vpop.f32.mrb[0].mxu0
    %v8211 = vpop.f32.mrb[0].mxu0
    %8212 = vdwg.mxu0
    %8213 = vmatprep.subr.bf16.mxu0 %v5786
    %8214 = vmatpush1.bf16.msra.mxu0 %v5785
    %8215 = vmatprep.subr.bf16.mxu0 %v5802
    %8216 = vmatpush1.bf16.msra.mxu0 %v5801
    %8217 = vmatprep.subr.bf16.mxu0 %v5818
    %8218 = vmatpush1.bf16.msra.mxu0 %v5817
    %8219 = vmatprep.subr.bf16.mxu0 %v5834
    %8220 = vmatpush1.bf16.msra.mxu0 %v5833
    %8221 = vmatprep.subr.bf16.mxu0 %v5850
    %8222 = vmatpush1.bf16.msra.mxu0 %v5849
    %8223 = vmatprep.subr.bf16.mxu0 %v5866
    %8224 = vmatpush1.bf16.msra.mxu0 %v5865
    %8225 = vmatprep.subr.bf16.mxu0 %v5882
    %8226 = vmatpush1.bf16.msra.mxu0 %v5881
    %8227 = vmatprep.subr.bf16.mxu0 %v5898
    %8228 = vmatpush1.bf16.msra.mxu0 %v5897
    %8229 = vmatprep.subr.bf16.mxu0 %v5914
    %8230 = vmatpush1.bf16.msra.mxu0 %v5913
    %8231 = vmatprep.subr.bf16.mxu0 %v5930
    %8232 = vmatpush1.bf16.msra.mxu0 %v5929
    %8233 = vmatprep.subr.bf16.mxu0 %v5946
    %8234 = vmatpush1.bf16.msra.mxu0 %v5945
    %8235 = vmatprep.subr.bf16.mxu0 %v5962
    %8236 = vmatpush1.bf16.msra.mxu0 %v5961
    %8237 = vmatprep.subr.bf16.mxu0 %v5978
    %8238 = vmatpush1.bf16.msra.mxu0 %v5977
    %8239 = vmatprep.subr.bf16.mxu0 %v5994
    %8240 = vmatpush1.bf16.msra.mxu0 %v5993
    %8241 = vmatprep.subr.bf16.mxu0 %v6010
    %8242 = vmatpush1.bf16.msra.mxu0 %v6009
    %8243 = vmatprep.subr.bf16.mxu0 %v6026
    %8244 = vmatpush1.bf16.msra.mxu0 %v6025
    %8245 = vmatprep.mubr.bf16.mxu0 %v1080
    %8246 = vmatmul.mubr.bf16.gmra.mrb[0].mxu0 %v1079
    %v8247 = vpop.f32.mrb[0].mxu0
    %v8248 = vadd.f32 %v8207, %v8247
    %v8249 = vpop.f32.mrb[0].mxu0
    %v8250 = vadd.f32 %v8209, %v8249
    %v8251 = vpop.f32.mrb[0].mxu0
    %v8252 = vpop.f32.mrb[0].mxu0
    %8253 = vdwg.mxu0
    %8254 = vmatprep.subr.bf16.mxu0 %v6042
    %8255 = vmatpush1.bf16.msra.mxu0 %v6041
    %8256 = vmatprep.subr.bf16.mxu0 %v6058
    %8257 = vmatpush1.bf16.msra.mxu0 %v6057
    %8258 = vmatprep.subr.bf16.mxu0 %v6074
    %8259 = vmatpush1.bf16.msra.mxu0 %v6073
    %8260 = vmatprep.subr.bf16.mxu0 %v6090
    %8261 = vmatpush1.bf16.msra.mxu0 %v6089
    %8262 = vmatprep.subr.bf16.mxu0 %v6106
    %8263 = vmatpush1.bf16.msra.mxu0 %v6105
    %8264 = vmatprep.subr.bf16.mxu0 %v6122
    %8265 = vmatpush1.bf16.msra.mxu0 %v6121
    %8266 = vmatprep.subr.bf16.mxu0 %v6138
    %8267 = vmatpush1.bf16.msra.mxu0 %v6137
    %8268 = vmatprep.subr.bf16.mxu0 %v6154
    %8269 = vmatpush1.bf16.msra.mxu0 %v6153
    %8270 = vmatprep.subr.bf16.mxu0 %v6170
    %8271 = vmatpush1.bf16.msra.mxu0 %v6169
    %8272 = vmatprep.subr.bf16.mxu0 %v6186
    %8273 = vmatpush1.bf16.msra.mxu0 %v6185
    %8274 = vmatprep.subr.bf16.mxu0 %v6202
    %8275 = vmatpush1.bf16.msra.mxu0 %v6201
    %8276 = vmatprep.subr.bf16.mxu0 %v6218
    %8277 = vmatpush1.bf16.msra.mxu0 %v6217
    %8278 = vmatprep.subr.bf16.mxu0 %v6234
    %8279 = vmatpush1.bf16.msra.mxu0 %v6233
    %8280 = vmatprep.subr.bf16.mxu0 %v6250
    %8281 = vmatpush1.bf16.msra.mxu0 %v6249
    %8282 = vmatprep.subr.bf16.mxu0 %v6266
    %8283 = vmatpush1.bf16.msra.mxu0 %v6265
    %8284 = vmatprep.subr.bf16.mxu0 %v6282
    %8285 = vmatpush1.bf16.msra.mxu0 %v6281
    %8286 = vmatprep.mubr.bf16.mxu0 %v1082
    %8287 = vmatmul.mubr.bf16.gmra.mrb[0].mxu0 %v1081
    %v8288 = vpop.f32.mrb[0].mxu0
    %v8289 = vadd.f32 %v8248, %v8288
    %v8290 = vpop.f32.mrb[0].mxu0
    %v8291 = vadd.f32 %v8250, %v8290
    %v8292 = vpop.f32.mrb[0].mxu0
    %v8293 = vpop.f32.mrb[0].mxu0
    %8294 = vdwg.mxu0
    %8295 = vmatprep.subr.bf16.mxu0 %v5276
    %8296 = vmatpush1.bf16.msra.mxu0 %v5275
    %8297 = vmatprep.subr.bf16.mxu0 %v5292
    %8298 = vmatpush1.bf16.msra.mxu0 %v5291
    %8299 = vmatprep.subr.bf16.mxu0 %v5308
    %8300 = vmatpush1.bf16.msra.mxu0 %v5307
    %8301 = vmatprep.subr.bf16.mxu0 %v5324
    %8302 = vmatpush1.bf16.msra.mxu0 %v5323
    %8303 = vmatprep.subr.bf16.mxu0 %v5340
    %8304 = vmatpush1.bf16.msra.mxu0 %v5339
    %8305 = vmatprep.subr.bf16.mxu0 %v5356
    %8306 = vmatpush1.bf16.msra.mxu0 %v5355
    %8307 = vmatprep.subr.bf16.mxu0 %v5372
    %8308 = vmatpush1.bf16.msra.mxu0 %v5371
    %8309 = vmatprep.subr.bf16.mxu0 %v5388
    %8310 = vmatpush1.bf16.msra.mxu0 %v5387
    %8311 = vmatprep.subr.bf16.mxu0 %v5404
    %8312 = vmatpush1.bf16.msra.mxu0 %v5403
    %8313 = vmatprep.subr.bf16.mxu0 %v5420
    %8314 = vmatpush1.bf16.msra.mxu0 %v5419
    %8315 = vmatprep.subr.bf16.mxu0 %v5436
    %8316 = vmatpush1.bf16.msra.mxu0 %v5435
    %8317 = vmatprep.subr.bf16.mxu0 %v5452
    %8318 = vmatpush1.bf16.msra.mxu0 %v5451
    %8319 = vmatprep.subr.bf16.mxu0 %v5468
    %8320 = vmatpush1.bf16.msra.mxu0 %v5467
    %8321 = vmatprep.subr.bf16.mxu0 %v5484
    %8322 = vmatpush1.bf16.msra.mxu0 %v5483
    %8323 = vmatprep.subr.bf16.mxu0 %v5500
    %8324 = vmatpush1.bf16.msra.mxu0 %v5499
    %8325 = vmatprep.subr.bf16.mxu0 %v5516
    %8326 = vmatpush1.bf16.msra.mxu0 %v5515
    %8327 = vmatprep.mubr.bf16.mxu0 %v1076
    %8328 = vmatmul.mubr.bf16.gmra.mrb[0].mxu0 %v1075
    %v8329 = vpop.f32.mrb[0].mxu0
    %v8330 = vadd.f32 %v2162, %v8329
    %v8331 = vpop.f32.mrb[0].mxu0
    %v8332 = vadd.f32 %v2166, %v8331
    %v8333 = vpop.f32.mrb[0].mxu0
    %v8334 = vpop.f32.mrb[0].mxu0
    %8335 = vdwg.mxu0
    %8336 = vmatprep.subr.bf16.mxu0 %v5532
    %8337 = vmatpush1.bf16.msra.mxu0 %v5531
    %8338 = vmatprep.subr.bf16.mxu0 %v5548
    %8339 = vmatpush1.bf16.msra.mxu0 %v5547
    %8340 = vmatprep.subr.bf16.mxu0 %v5564
    %8341 = vmatpush1.bf16.msra.mxu0 %v5563
    %8342 = vmatprep.subr.bf16.mxu0 %v5580
    %8343 = vmatpush1.bf16.msra.mxu0 %v5579
    %8344 = vmatprep.subr.bf16.mxu0 %v5596
    %8345 = vmatpush1.bf16.msra.mxu0 %v5595
    %8346 = vmatprep.subr.bf16.mxu0 %v5612
    %8347 = vmatpush1.bf16.msra.mxu0 %v5611
    %8348 = vmatprep.subr.bf16.mxu0 %v5628
    %8349 = vmatpush1.bf16.msra.mxu0 %v5627
    %8350 = vmatprep.subr.bf16.mxu0 %v5644
    %8351 = vmatpush1.bf16.msra.mxu0 %v5643
    %8352 = vmatprep.subr.bf16.mxu0 %v5660
    %8353 = vmatpush1.bf16.msra.mxu0 %v5659
    %8354 = vmatprep.subr.bf16.mxu0 %v5676
    %8355 = vmatpush1.bf16.msra.mxu0 %v5675
    %8356 = vmatprep.subr.bf16.mxu0 %v5692
    %8357 = vmatpush1.bf16.msra.mxu0 %v5691
    %8358 = vmatprep.subr.bf16.mxu0 %v5708
    %8359 = vmatpush1.bf16.msra.mxu0 %v5707
    %8360 = vmatprep.subr.bf16.mxu0 %v5724
    %8361 = vmatpush1.bf16.msra.mxu0 %v5723
    %8362 = vmatprep.subr.bf16.mxu0 %v5740
    %8363 = vmatpush1.bf16.msra.mxu0 %v5739
    %8364 = vmatprep.subr.bf16.mxu0 %v5756
    %8365 = vmatpush1.bf16.msra.mxu0 %v5755
    %8366 = vmatprep.subr.bf16.mxu0 %v5772
    %8367 = vmatpush1.bf16.msra.mxu0 %v5771
    %8368 = vmatprep.mubr.bf16.mxu0 %v1078
    %8369 = vmatmul.mubr.bf16.gmra.mrb[0].mxu0 %v1077
    %v8370 = vpop.f32.mrb[0].mxu0
    %v8371 = vadd.f32 %v8330, %v8370
    %v8372 = vpop.f32.mrb[0].mxu0
    %v8373 = vadd.f32 %v8332, %v8372
    %v8374 = vpop.f32.mrb[0].mxu0
    %v8375 = vpop.f32.mrb[0].mxu0
    %8376 = vdwg.mxu0
    %8377 = vmatprep.subr.bf16.mxu0 %v5788
    %8378 = vmatpush1.bf16.msra.mxu0 %v5787
    %8379 = vmatprep.subr.bf16.mxu0 %v5804
    %8380 = vmatpush1.bf16.msra.mxu0 %v5803
    %8381 = vmatprep.subr.bf16.mxu0 %v5820
    %8382 = vmatpush1.bf16.msra.mxu0 %v5819
    %8383 = vmatprep.subr.bf16.mxu0 %v5836
    %8384 = vmatpush1.bf16.msra.mxu0 %v5835
    %8385 = vmatprep.subr.bf16.mxu0 %v5852
    %8386 = vmatpush1.bf16.msra.mxu0 %v5851
    %8387 = vmatprep.subr.bf16.mxu0 %v5868
    %8388 = vmatpush1.bf16.msra.mxu0 %v5867
    %8389 = vmatprep.subr.bf16.mxu0 %v5884
    %8390 = vmatpush1.bf16.msra.mxu0 %v5883
    %8391 = vmatprep.subr.bf16.mxu0 %v5900
    %8392 = vmatpush1.bf16.msra.mxu0 %v5899
    %8393 = vmatprep.subr.bf16.mxu0 %v5916
    %8394 = vmatpush1.bf16.msra.mxu0 %v5915
    %8395 = vmatprep.subr.bf16.mxu0 %v5932
    %8396 = vmatpush1.bf16.msra.mxu0 %v5931
    %8397 = vmatprep.subr.bf16.mxu0 %v5948
    %8398 = vmatpush1.bf16.msra.mxu0 %v5947
    %8399 = vmatprep.subr.bf16.mxu0 %v5964
    %8400 = vmatpush1.bf16.msra.mxu0 %v5963
    %8401 = vmatprep.subr.bf16.mxu0 %v5980
    %8402 = vmatpush1.bf16.msra.mxu0 %v5979
    %8403 = vmatprep.subr.bf16.mxu0 %v5996
    %8404 = vmatpush1.bf16.msra.mxu0 %v5995
    %8405 = vmatprep.subr.bf16.mxu0 %v6012
    %8406 = vmatpush1.bf16.msra.mxu0 %v6011
    %8407 = vmatprep.subr.bf16.mxu0 %v6028
    %8408 = vmatpush1.bf16.msra.mxu0 %v6027
    %8409 = vmatprep.mubr.bf16.mxu0 %v1080
    %8410 = vmatmul.mubr.bf16.gmra.mrb[0].mxu0 %v1079
    %v8411 = vpop.f32.mrb[0].mxu0
    %v8412 = vadd.f32 %v8371, %v8411
    %v8413 = vpop.f32.mrb[0].mxu0
    %v8414 = vadd.f32 %v8373, %v8413
    %v8415 = vpop.f32.mrb[0].mxu0
    %v8416 = vpop.f32.mrb[0].mxu0
    %8417 = vdwg.mxu0
    %8418 = vmatprep.subr.bf16.mxu0 %v6044
    %8419 = vmatpush1.bf16.msra.mxu0 %v6043
    %8420 = vmatprep.subr.bf16.mxu0 %v6060
    %8421 = vmatpush1.bf16.msra.mxu0 %v6059
    %8422 = vmatprep.subr.bf16.mxu0 %v6076
    %8423 = vmatpush1.bf16.msra.mxu0 %v6075
    %8424 = vmatprep.subr.bf16.mxu0 %v6092
    %8425 = vmatpush1.bf16.msra.mxu0 %v6091
    %8426 = vmatprep.subr.bf16.mxu0 %v6108
    %8427 = vmatpush1.bf16.msra.mxu0 %v6107
    %8428 = vmatprep.subr.bf16.mxu0 %v6124
    %8429 = vmatpush1.bf16.msra.mxu0 %v6123
    %8430 = vmatprep.subr.bf16.mxu0 %v6140
    %8431 = vmatpush1.bf16.msra.mxu0 %v6139
    %8432 = vmatprep.subr.bf16.mxu0 %v6156
    %8433 = vmatpush1.bf16.msra.mxu0 %v6155
    %8434 = vmatprep.subr.bf16.mxu0 %v6172
    %8435 = vmatpush1.bf16.msra.mxu0 %v6171
    %8436 = vmatprep.subr.bf16.mxu0 %v6188
    %8437 = vmatpush1.bf16.msra.mxu0 %v6187
    %8438 = vmatprep.subr.bf16.mxu0 %v6204
    %8439 = vmatpush1.bf16.msra.mxu0 %v6203
    %8440 = vmatprep.subr.bf16.mxu0 %v6220
    %8441 = vmatpush1.bf16.msra.mxu0 %v6219
    %8442 = vmatprep.subr.bf16.mxu0 %v6236
    %8443 = vmatpush1.bf16.msra.mxu0 %v6235
    %8444 = vmatprep.subr.bf16.mxu0 %v6252
    %8445 = vmatpush1.bf16.msra.mxu0 %v6251
    %8446 = vmatprep.subr.bf16.mxu0 %v6268
    %8447 = vmatpush1.bf16.msra.mxu0 %v6267
    %8448 = vmatprep.subr.bf16.mxu0 %v6284
    %8449 = vmatpush1.bf16.msra.mxu0 %v6283
    %8450 = vmatprep.mubr.bf16.mxu0 %v1082
    %8451 = vmatmul.mubr.bf16.gmra.mrb[0].mxu0 %v1081
    %v8452 = vpop.f32.mrb[0].mxu0
    %v8453 = vadd.f32 %v8412, %v8452
    %v8454 = vpop.f32.mrb[0].mxu0
    %v8455 = vadd.f32 %v8414, %v8454
    %v8456 = vpop.f32.mrb[0].mxu0
    %v8457 = vpop.f32.mrb[0].mxu0
    %8458 = vdwg.mxu0
    %8459 = vmatprep.subr.bf16.mxu0 %v5278
    %8460 = vmatpush1.bf16.msra.mxu0 %v5277
    %8461 = vmatprep.subr.bf16.mxu0 %v5294
    %8462 = vmatpush1.bf16.msra.mxu0 %v5293
    %8463 = vmatprep.subr.bf16.mxu0 %v5310
    %8464 = vmatpush1.bf16.msra.mxu0 %v5309
    %8465 = vmatprep.subr.bf16.mxu0 %v5326
    %8466 = vmatpush1.bf16.msra.mxu0 %v5325
    %8467 = vmatprep.subr.bf16.mxu0 %v5342
    %8468 = vmatpush1.bf16.msra.mxu0 %v5341
    %8469 = vmatprep.subr.bf16.mxu0 %v5358
    %8470 = vmatpush1.bf16.msra.mxu0 %v5357
    %8471 = vmatprep.subr.bf16.mxu0 %v5374
    %8472 = vmatpush1.bf16.msra.mxu0 %v5373
    %8473 = vmatprep.subr.bf16.mxu0 %v5390
    %8474 = vmatpush1.bf16.msra.mxu0 %v5389
    %8475 = vmatprep.subr.bf16.mxu0 %v5406
    %8476 = vmatpush1.bf16.msra.mxu0 %v5405
    %8477 = vmatprep.subr.bf16.mxu0 %v5422
    %8478 = vmatpush1.bf16.msra.mxu0 %v5421
    %8479 = vmatprep.subr.bf16.mxu0 %v5438
    %8480 = vmatpush1.bf16.msra.mxu0 %v5437
    %8481 = vmatprep.subr.bf16.mxu0 %v5454
    %8482 = vmatpush1.bf16.msra.mxu0 %v5453
    %8483 = vmatprep.subr.bf16.mxu0 %v5470
    %8484 = vmatpush1.bf16.msra.mxu0 %v5469
    %8485 = vmatprep.subr.bf16.mxu0 %v5486
    %8486 = vmatpush1.bf16.msra.mxu0 %v5485
    %8487 = vmatprep.subr.bf16.mxu0 %v5502
    %8488 = vmatpush1.bf16.msra.mxu0 %v5501
    %8489 = vmatprep.subr.bf16.mxu0 %v5518
    %8490 = vmatpush1.bf16.msra.mxu0 %v5517
    %8491 = vmatprep.mubr.bf16.mxu0 %v1076
    %8492 = vmatmul.mubr.bf16.gmra.mrb[0].mxu0 %v1075
    %v8493 = vpop.f32.mrb[0].mxu0
    %v8494 = vadd.f32 %v2170, %v8493
    %v8495 = vpop.f32.mrb[0].mxu0
    %v8496 = vadd.f32 %v2174, %v8495
    %v8497 = vpop.f32.mrb[0].mxu0
    %v8498 = vpop.f32.mrb[0].mxu0
    %8499 = vdwg.mxu0
    %8500 = vmatprep.subr.bf16.mxu0 %v5534
    %8501 = vmatpush1.bf16.msra.mxu0 %v5533
    %8502 = vmatprep.subr.bf16.mxu0 %v5550
    %8503 = vmatpush1.bf16.msra.mxu0 %v5549
    %8504 = vmatprep.subr.bf16.mxu0 %v5566
    %8505 = vmatpush1.bf16.msra.mxu0 %v5565
    %8506 = vmatprep.subr.bf16.mxu0 %v5582
    %8507 = vmatpush1.bf16.msra.mxu0 %v5581
    %8508 = vmatprep.subr.bf16.mxu0 %v5598
    %8509 = vmatpush1.bf16.msra.mxu0 %v5597
    %8510 = vmatprep.subr.bf16.mxu0 %v5614
    %8511 = vmatpush1.bf16.msra.mxu0 %v5613
    %8512 = vmatprep.subr.bf16.mxu0 %v5630
    %8513 = vmatpush1.bf16.msra.mxu0 %v5629
    %8514 = vmatprep.subr.bf16.mxu0 %v5646
    %8515 = vmatpush1.bf16.msra.mxu0 %v5645
    %8516 = vmatprep.subr.bf16.mxu0 %v5662
    %8517 = vmatpush1.bf16.msra.mxu0 %v5661
    %8518 = vmatprep.subr.bf16.mxu0 %v5678
    %8519 = vmatpush1.bf16.msra.mxu0 %v5677
    %8520 = vmatprep.subr.bf16.mxu0 %v5694
    %8521 = vmatpush1.bf16.msra.mxu0 %v5693
    %8522 = vmatprep.subr.bf16.mxu0 %v5710
    %8523 = vmatpush1.bf16.msra.mxu0 %v5709
    %8524 = vmatprep.subr.bf16.mxu0 %v5726
    %8525 = vmatpush1.bf16.msra.mxu0 %v5725
    %8526 = vmatprep.subr.bf16.mxu0 %v5742
    %8527 = vmatpush1.bf16.msra.mxu0 %v5741
    %8528 = vmatprep.subr.bf16.mxu0 %v5758
    %8529 = vmatpush1.bf16.msra.mxu0 %v5757
    %8530 = vmatprep.subr.bf16.mxu0 %v5774
    %8531 = vmatpush1.bf16.msra.mxu0 %v5773
    %8532 = vmatprep.mubr.bf16.mxu0 %v1078
    %8533 = vmatmul.mubr.bf16.gmra.mrb[0].mxu0 %v1077
    %v8534 = vpop.f32.mrb[0].mxu0
    %v8535 = vadd.f32 %v8494, %v8534
    %v8536 = vpop.f32.mrb[0].mxu0
    %v8537 = vadd.f32 %v8496, %v8536
    %v8538 = vpop.f32.mrb[0].mxu0
    %v8539 = vpop.f32.mrb[0].mxu0
    %8540 = vdwg.mxu0
    %8541 = vmatprep.subr.bf16.mxu0 %v5790
    %8542 = vmatpush1.bf16.msra.mxu0 %v5789
    %8543 = vmatprep.subr.bf16.mxu0 %v5806
    %8544 = vmatpush1.bf16.msra.mxu0 %v5805
    %8545 = vmatprep.subr.bf16.mxu0 %v5822
    %8546 = vmatpush1.bf16.msra.mxu0 %v5821
    %8547 = vmatprep.subr.bf16.mxu0 %v5838
    %8548 = vmatpush1.bf16.msra.mxu0 %v5837
    %8549 = vmatprep.subr.bf16.mxu0 %v5854
    %8550 = vmatpush1.bf16.msra.mxu0 %v5853
    %8551 = vmatprep.subr.bf16.mxu0 %v5870
    %8552 = vmatpush1.bf16.msra.mxu0 %v5869
    %8553 = vmatprep.subr.bf16.mxu0 %v5886
    %8554 = vmatpush1.bf16.msra.mxu0 %v5885
    %8555 = vmatprep.subr.bf16.mxu0 %v5902
    %8556 = vmatpush1.bf16.msra.mxu0 %v5901
    %8557 = vmatprep.subr.bf16.mxu0 %v5918
    %8558 = vmatpush1.bf16.msra.mxu0 %v5917
    %8559 = vmatprep.subr.bf16.mxu0 %v5934
    %8560 = vmatpush1.bf16.msra.mxu0 %v5933
    %8561 = vmatprep.subr.bf16.mxu0 %v5950
    %8562 = vmatpush1.bf16.msra.mxu0 %v5949
    %8563 = vmatprep.subr.bf16.mxu0 %v5966
    %8564 = vmatpush1.bf16.msra.mxu0 %v5965
    %8565 = vmatprep.subr.bf16.mxu0 %v5982
    %8566 = vmatpush1.bf16.msra.mxu0 %v5981
    %8567 = vmatprep.subr.bf16.mxu0 %v5998
    %8568 = vmatpush1.bf16.msra.mxu0 %v5997
    %8569 = vmatprep.subr.bf16.mxu0 %v6014
    %8570 = vmatpush1.bf16.msra.mxu0 %v6013
    %8571 = vmatprep.subr.bf16.mxu0 %v6030
    %8572 = vmatpush1.bf16.msra.mxu0 %v6029
    %8573 = vmatprep.mubr.bf16.mxu0 %v1080
    %8574 = vmatmul.mubr.bf16.gmra.mrb[0].mxu0 %v1079
    %v8575 = vpop.f32.mrb[0].mxu0
    %v8576 = vadd.f32 %v8535, %v8575
    %v8577 = vpop.f32.mrb[0].mxu0
    %v8578 = vadd.f32 %v8537, %v8577
    %v8579 = vpop.f32.mrb[0].mxu0
    %v8580 = vpop.f32.mrb[0].mxu0
    %8581 = vdwg.mxu0
    %8582 = vmatprep.subr.bf16.mxu0 %v6046
    %8583 = vmatpush1.bf16.msra.mxu0 %v6045
    %8584 = vmatprep.subr.bf16.mxu0 %v6062
    %8585 = vmatpush1.bf16.msra.mxu0 %v6061
    %8586 = vmatprep.subr.bf16.mxu0 %v6078
    %8587 = vmatpush1.bf16.msra.mxu0 %v6077
    %8588 = vmatprep.subr.bf16.mxu0 %v6094
    %8589 = vmatpush1.bf16.msra.mxu0 %v6093
    %8590 = vmatprep.subr.bf16.mxu0 %v6110
    %8591 = vmatpush1.bf16.msra.mxu0 %v6109
    %8592 = vmatprep.subr.bf16.mxu0 %v6126
    %8593 = vmatpush1.bf16.msra.mxu0 %v6125
    %8594 = vmatprep.subr.bf16.mxu0 %v6142
    %8595 = vmatpush1.bf16.msra.mxu0 %v6141
    %8596 = vmatprep.subr.bf16.mxu0 %v6158
    %8597 = vmatpush1.bf16.msra.mxu0 %v6157
    %8598 = vmatprep.subr.bf16.mxu0 %v6174
    %8599 = vmatpush1.bf16.msra.mxu0 %v6173
    %8600 = vmatprep.subr.bf16.mxu0 %v6190
    %8601 = vmatpush1.bf16.msra.mxu0 %v6189
    %8602 = vmatprep.subr.bf16.mxu0 %v6206
    %8603 = vmatpush1.bf16.msra.mxu0 %v6205
    %8604 = vmatprep.subr.bf16.mxu0 %v6222
    %8605 = vmatpush1.bf16.msra.mxu0 %v6221
    %8606 = vmatprep.subr.bf16.mxu0 %v6238
    %8607 = vmatpush1.bf16.msra.mxu0 %v6237
    %8608 = vmatprep.subr.bf16.mxu0 %v6254
    %8609 = vmatpush1.bf16.msra.mxu0 %v6253
    %8610 = vmatprep.subr.bf16.mxu0 %v6270
    %8611 = vmatpush1.bf16.msra.mxu0 %v6269
    %8612 = vmatprep.subr.bf16.mxu0 %v6286
    %8613 = vmatpush1.bf16.msra.mxu0 %v6285
    %8614 = vmatprep.mubr.bf16.mxu0 %v1082
    %8615 = vmatmul.mubr.bf16.gmra.mrb[0].mxu0 %v1081
    %v8616 = vpop.f32.mrb[0].mxu0
    %v8617 = vadd.f32 %v8576, %v8616
    %v8618 = vpop.f32.mrb[0].mxu0
    %v8619 = vadd.f32 %v8578, %v8618
    %v8620 = vpop.f32.mrb[0].mxu0
    %v8621 = vpop.f32.mrb[0].mxu0
    %8622 = vdwg.mxu0
    %v8623 = vmax.f32 %v7469, 0.0
    %v8624 = vmax.f32 %v7471, 0.0
    %v8625 = vmax.f32 %v7633, 0.0
    %v8626 = vmax.f32 %v7635, 0.0
    %v8627 = vmax.f32 %v7797, 0.0
    %v8628 = vmax.f32 %v7799, 0.0
    %v8629 = vmax.f32 %v7961, 0.0
    %v8630 = vmax.f32 %v7963, 0.0
    %v8631 = vmax.f32 %v8125, 0.0
    %v8632 = vmax.f32 %v8127, 0.0
    %v8633 = vmax.f32 %v8289, 0.0
    %v8634 = vmax.f32 %v8291, 0.0
    %v8635 = vmax.f32 %v8453, 0.0
    %v8636 = vmax.f32 %v8455, 0.0
    %v8637 = vmax.f32 %v8617, 0.0
    %v8638 = vmax.f32 %v8619, 0.0
    %v8639 = vpack.c.bf16 %v8623, %v8623
    %v8640 = vpack.c.bf16 %v8624, %v8624
    %v8641 = vpack.c.bf16 %v8625, %v8625
    %v8642 = vpack.c.bf16 %v8626, %v8626
    %v8643 = vpack.c.bf16 %v8627, %v8627
    %v8644 = vpack.c.bf16 %v8628, %v8628
    %v8645 = vpack.c.bf16 %v8629, %v8629
    %v8646 = vpack.c.bf16 %v8630, %v8630
    %v8647 = vpack.c.bf16 %v8631, %v8631
    %v8648 = vpack.c.bf16 %v8632, %v8632
    %v8649 = vpack.c.bf16 %v8633, %v8633
    %v8650 = vpack.c.bf16 %v8634, %v8634
    %v8651 = vpack.c.bf16 %v8635, %v8635
    %v8652 = vpack.c.bf16 %v8636, %v8636
    %v8653 = vpack.c.bf16 %v8637, %v8637
    %v8654 = vpack.c.bf16 %v8638, %v8638
    %v8655 = vld [vmem:[%s5] sm:$0xf]
    %v8656 = vld [vmem:[%s5 + $0x4] sm:$0xf]
    %v8657 = vld [vmem:[%s5 + $0x8] sm:$0xf]
    %v8658 = vld [vmem:[%s5 + $0xc] sm:$0xf]
    %v8659 = vld [vmem:[%s5 + $0x10] sm:$0xf]
    %v8660 = vld [vmem:[%s5 + $0x14] sm:$0xf]
    %v8661 = vld [vmem:[%s5 + $0x18] sm:$0xf]
    %v8662 = vld [vmem:[%s5 + $0x1c] sm:$0xf]
    %v8663 = vld [vmem:[%s5 + $0x20] sm:$0xf]
    %v8664 = vld [vmem:[%s5 + $0x24] sm:$0xf]
    %v8665 = vld [vmem:[%s5 + $0x28] sm:$0xf]
    %v8666 = vld [vmem:[%s5 + $0x2c] sm:$0xf]
    %v8667 = vld [vmem:[%s5 + $0x30] sm:$0xf]
    %v8668 = vld [vmem:[%s5 + $0x34] sm:$0xf]
    %v8669 = vld [vmem:[%s5 + $0x38] sm:$0xf]
    %v8670 = vld [vmem:[%s5 + $0x3c] sm:$0xf]
    %v8671 = vld [vmem:[%s5 + $0x40] sm:$0xf]
    %v8672 = vld [vmem:[%s5 + $0x44] sm:$0xf]
    %v8673 = vld [vmem:[%s5 + $0x48] sm:$0xf]
    %v8674 = vld [vmem:[%s5 + $0x4c] sm:$0xf]
    %v8675 = vld [vmem:[%s5 + $0x50] sm:$0xf]
    %v8676 = vld [vmem:[%s5 + $0x54] sm:$0xf]
    %v8677 = vld [vmem:[%s5 + $0x58] sm:$0xf]
    %v8678 = vld [vmem:[%s5 + $0x5c] sm:$0xf]
    %v8679 = vld [vmem:[%s5 + $0x60] sm:$0xf]
    %v8680 = vld [vmem:[%s5 + $0x64] sm:$0xf]
    %v8681 = vld [vmem:[%s5 + $0x68] sm:$0xf]
    %v8682 = vld [vmem:[%s5 + $0x6c] sm:$0xf]
    %v8683 = vld [vmem:[%s5 + $0x70] sm:$0xf]
    %v8684 = vld [vmem:[%s5 + $0x74] sm:$0xf]
    %v8685 = vld [vmem:[%s5 + $0x78] sm:$0xf]
    %v8686 = vld [vmem:[%s5 + $0x7c] sm:$0xf]
    %v8687 = vld [vmem:[%s5 + $0x80] sm:$0xf]
    %v8688 = vld [vmem:[%s5 + $0x84] sm:$0xf]
    %v8689 = vld [vmem:[%s5 + $0x88] sm:$0xf]
    %v8690 = vld [vmem:[%s5 + $0x8c] sm:$0xf]
    %v8691 = vld [vmem:[%s5 + $0x90] sm:$0xf]
    %v8692 = vld [vmem:[%s5 + $0x94] sm:$0xf]
    %v8693 = vld [vmem:[%s5 + $0x98] sm:$0xf]
    %v8694 = vld [vmem:[%s5 + $0x9c] sm:$0xf]
    %v8695 = vld [vmem:[%s5 + $0xa0] sm:$0xf]
    %v8696 = vld [vmem:[%s5 + $0xa4] sm:$0xf]
    %v8697 = vld [vmem:[%s5 + $0xa8] sm:$0xf]
    %v8698 = vld [vmem:[%s5 + $0xac] sm:$0xf]
    %v8699 = vld [vmem:[%s5 + $0xb0] sm:$0xf]
    %v8700 = vld [vmem:[%s5 + $0xb4] sm:$0xf]
    %v8701 = vld [vmem:[%s5 + $0xb8] sm:$0xf]
    %v8702 = vld [vmem:[%s5 + $0xbc] sm:$0xf]
    %v8703 = vld [vmem:[%s5 + $0xc0] sm:$0xf]
    %v8704 = vld [vmem:[%s5 + $0xc4] sm:$0xf]
    %v8705 = vld [vmem:[%s5 + $0xc8] sm:$0xf]
    %v8706 = vld [vmem:[%s5 + $0xcc] sm:$0xf]
    %v8707 = vld [vmem:[%s5 + $0xd0] sm:$0xf]
    %v8708 = vld [vmem:[%s5 + $0xd4] sm:$0xf]
    %v8709 = vld [vmem:[%s5 + $0xd8] sm:$0xf]
    %v8710 = vld [vmem:[%s5 + $0xdc] sm:$0xf]
    %v8711 = vld [vmem:[%s5 + $0xe0] sm:$0xf]
    %v8712 = vld [vmem:[%s5 + $0xe4] sm:$0xf]
    %v8713 = vld [vmem:[%s5 + $0xe8] sm:$0xf]
    %v8714 = vld [vmem:[%s5 + $0xec] sm:$0xf]
    %v8715 = vld [vmem:[%s5 + $0xf0] sm:$0xf]
    %v8716 = vld [vmem:[%s5 + $0xf4] sm:$0xf]
    %v8717 = vld [vmem:[%s5 + $0xf8] sm:$0xf]
    %v8718 = vld [vmem:[%s5 + $0xfc] sm:$0xf]
    %v8719 = vld [vmem:[%s5 + $0x100] sm:$0xf]
    %v8720 = vld [vmem:[%s5 + $0x104] sm:$0xf]
    %v8721 = vld [vmem:[%s5 + $0x108] sm:$0xf]
    %v8722 = vld [vmem:[%s5 + $0x10c] sm:$0xf]
    %v8723 = vld [vmem:[%s5 + $0x110] sm:$0xf]
    %v8724 = vld [vmem:[%s5 + $0x114] sm:$0xf]
    %v8725 = vld [vmem:[%s5 + $0x118] sm:$0xf]
    %v8726 = vld [vmem:[%s5 + $0x11c] sm:$0xf]
    %v8727 = vld [vmem:[%s5 + $0x120] sm:$0xf]
    %v8728 = vld [vmem:[%s5 + $0x124] sm:$0xf]
    %v8729 = vld [vmem:[%s5 + $0x128] sm:$0xf]
    %v8730 = vld [vmem:[%s5 + $0x12c] sm:$0xf]
    %v8731 = vld [vmem:[%s5 + $0x130] sm:$0xf]
    %v8732 = vld [vmem:[%s5 + $0x134] sm:$0xf]
    %v8733 = vld [vmem:[%s5 + $0x138] sm:$0xf]
    %v8734 = vld [vmem:[%s5 + $0x13c] sm:$0xf]
    %v8735 = vld [vmem:[%s5 + $0x140] sm:$0xf]
    %v8736 = vld [vmem:[%s5 + $0x144] sm:$0xf]
    %v8737 = vld [vmem:[%s5 + $0x148] sm:$0xf]
    %v8738 = vld [vmem:[%s5 + $0x14c] sm:$0xf]
    %v8739 = vld [vmem:[%s5 + $0x150] sm:$0xf]
    %v8740 = vld [vmem:[%s5 + $0x154] sm:$0xf]
    %v8741 = vld [vmem:[%s5 + $0x158] sm:$0xf]
    %v8742 = vld [vmem:[%s5 + $0x15c] sm:$0xf]
    %v8743 = vld [vmem:[%s5 + $0x160] sm:$0xf]
    %v8744 = vld [vmem:[%s5 + $0x164] sm:$0xf]
    %v8745 = vld [vmem:[%s5 + $0x168] sm:$0xf]
    %v8746 = vld [vmem:[%s5 + $0x16c] sm:$0xf]
    %v8747 = vld [vmem:[%s5 + $0x170] sm:$0xf]
    %v8748 = vld [vmem:[%s5 + $0x174] sm:$0xf]
    %v8749 = vld [vmem:[%s5 + $0x178] sm:$0xf]
    %v8750 = vld [vmem:[%s5 + $0x17c] sm:$0xf]
    %v8751 = vld [vmem:[%s5 + $0x180] sm:$0xf]
    %v8752 = vld [vmem:[%s5 + $0x184] sm:$0xf]
    %v8753 = vld [vmem:[%s5 + $0x188] sm:$0xf]
    %v8754 = vld [vmem:[%s5 + $0x18c] sm:$0xf]
    %v8755 = vld [vmem:[%s5 + $0x190] sm:$0xf]
    %v8756 = vld [vmem:[%s5 + $0x194] sm:$0xf]
    %v8757 = vld [vmem:[%s5 + $0x198] sm:$0xf]
    %v8758 = vld [vmem:[%s5 + $0x19c] sm:$0xf]
    %v8759 = vld [vmem:[%s5 + $0x1a0] sm:$0xf]
    %v8760 = vld [vmem:[%s5 + $0x1a4] sm:$0xf]
    %v8761 = vld [vmem:[%s5 + $0x1a8] sm:$0xf]
    %v8762 = vld [vmem:[%s5 + $0x1ac] sm:$0xf]
    %v8763 = vld [vmem:[%s5 + $0x1b0] sm:$0xf]
    %v8764 = vld [vmem:[%s5 + $0x1b4] sm:$0xf]
    %v8765 = vld [vmem:[%s5 + $0x1b8] sm:$0xf]
    %v8766 = vld [vmem:[%s5 + $0x1bc] sm:$0xf]
    %v8767 = vld [vmem:[%s5 + $0x1c0] sm:$0xf]
    %v8768 = vld [vmem:[%s5 + $0x1c4] sm:$0xf]
    %v8769 = vld [vmem:[%s5 + $0x1c8] sm:$0xf]
    %v8770 = vld [vmem:[%s5 + $0x1cc] sm:$0xf]
    %v8771 = vld [vmem:[%s5 + $0x1d0] sm:$0xf]
    %v8772 = vld [vmem:[%s5 + $0x1d4] sm:$0xf]
    %v8773 = vld [vmem:[%s5 + $0x1d8] sm:$0xf]
    %v8774 = vld [vmem:[%s5 + $0x1dc] sm:$0xf]
    %v8775 = vld [vmem:[%s5 + $0x1e0] sm:$0xf]
    %v8776 = vld [vmem:[%s5 + $0x1e4] sm:$0xf]
    %v8777 = vld [vmem:[%s5 + $0x1e8] sm:$0xf]
    %v8778 = vld [vmem:[%s5 + $0x1ec] sm:$0xf]
    %v8779 = vld [vmem:[%s5 + $0x1f0] sm:$0xf]
    %v8780 = vld [vmem:[%s5 + $0x1f4] sm:$0xf]
    %v8781 = vld [vmem:[%s5 + $0x1f8] sm:$0xf]
    %v8782 = vld [vmem:[%s5 + $0x1fc] sm:$0xf]
    %v8783 = vld [vmem:[%s5 + $0x200] sm:$0xf]
    %v8784 = vld [vmem:[%s5 + $0x204] sm:$0xf]
    %v8785 = vld [vmem:[%s5 + $0x208] sm:$0xf]
    %v8786 = vld [vmem:[%s5 + $0x20c] sm:$0xf]
    %v8787 = vld [vmem:[%s5 + $0x210] sm:$0xf]
    %v8788 = vld [vmem:[%s5 + $0x214] sm:$0xf]
    %v8789 = vld [vmem:[%s5 + $0x218] sm:$0xf]
    %v8790 = vld [vmem:[%s5 + $0x21c] sm:$0xf]
    %v8791 = vld [vmem:[%s5 + $0x220] sm:$0xf]
    %v8792 = vld [vmem:[%s5 + $0x224] sm:$0xf]
    %v8793 = vld [vmem:[%s5 + $0x228] sm:$0xf]
    %v8794 = vld [vmem:[%s5 + $0x22c] sm:$0xf]
    %v8795 = vld [vmem:[%s5 + $0x230] sm:$0xf]
    %v8796 = vld [vmem:[%s5 + $0x234] sm:$0xf]
    %v8797 = vld [vmem:[%s5 + $0x238] sm:$0xf]
    %v8798 = vld [vmem:[%s5 + $0x23c] sm:$0xf]
    %v8799 = vld [vmem:[%s5 + $0x240] sm:$0xf]
    %v8800 = vld [vmem:[%s5 + $0x244] sm:$0xf]
    %v8801 = vld [vmem:[%s5 + $0x248] sm:$0xf]
    %v8802 = vld [vmem:[%s5 + $0x24c] sm:$0xf]
    %v8803 = vld [vmem:[%s5 + $0x250] sm:$0xf]
    %v8804 = vld [vmem:[%s5 + $0x254] sm:$0xf]
    %v8805 = vld [vmem:[%s5 + $0x258] sm:$0xf]
    %v8806 = vld [vmem:[%s5 + $0x25c] sm:$0xf]
    %v8807 = vld [vmem:[%s5 + $0x260] sm:$0xf]
    %v8808 = vld [vmem:[%s5 + $0x264] sm:$0xf]
    %v8809 = vld [vmem:[%s5 + $0x268] sm:$0xf]
    %v8810 = vld [vmem:[%s5 + $0x26c] sm:$0xf]
    %v8811 = vld [vmem:[%s5 + $0x270] sm:$0xf]
    %v8812 = vld [vmem:[%s5 + $0x274] sm:$0xf]
    %v8813 = vld [vmem:[%s5 + $0x278] sm:$0xf]
    %v8814 = vld [vmem:[%s5 + $0x27c] sm:$0xf]
    %v8815 = vld [vmem:[%s5 + $0x280] sm:$0xf]
    %v8816 = vld [vmem:[%s5 + $0x284] sm:$0xf]
    %v8817 = vld [vmem:[%s5 + $0x288] sm:$0xf]
    %v8818 = vld [vmem:[%s5 + $0x28c] sm:$0xf]
    %v8819 = vld [vmem:[%s5 + $0x290] sm:$0xf]
    %v8820 = vld [vmem:[%s5 + $0x294] sm:$0xf]
    %v8821 = vld [vmem:[%s5 + $0x298] sm:$0xf]
    %v8822 = vld [vmem:[%s5 + $0x29c] sm:$0xf]
    %v8823 = vld [vmem:[%s5 + $0x2a0] sm:$0xf]
    %v8824 = vld [vmem:[%s5 + $0x2a4] sm:$0xf]
    %v8825 = vld [vmem:[%s5 + $0x2a8] sm:$0xf]
    %v8826 = vld [vmem:[%s5 + $0x2ac] sm:$0xf]
    %v8827 = vld [vmem:[%s5 + $0x2b0] sm:$0xf]
    %v8828 = vld [vmem:[%s5 + $0x2b4] sm:$0xf]
    %v8829 = vld [vmem:[%s5 + $0x2b8] sm:$0xf]
    %v8830 = vld [vmem:[%s5 + $0x2bc] sm:$0xf]
    %v8831 = vld [vmem:[%s5 + $0x2c0] sm:$0xf]
    %v8832 = vld [vmem:[%s5 + $0x2c4] sm:$0xf]
    %v8833 = vld [vmem:[%s5 + $0x2c8] sm:$0xf]
    %v8834 = vld [vmem:[%s5 + $0x2cc] sm:$0xf]
    %v8835 = vld [vmem:[%s5 + $0x2d0] sm:$0xf]
    %v8836 = vld [vmem:[%s5 + $0x2d4] sm:$0xf]
    %v8837 = vld [vmem:[%s5 + $0x2d8] sm:$0xf]
    %v8838 = vld [vmem:[%s5 + $0x2dc] sm:$0xf]
    %v8839 = vld [vmem:[%s5 + $0x2e0] sm:$0xf]
    %v8840 = vld [vmem:[%s5 + $0x2e4] sm:$0xf]
    %v8841 = vld [vmem:[%s5 + $0x2e8] sm:$0xf]
    %v8842 = vld [vmem:[%s5 + $0x2ec] sm:$0xf]
    %v8843 = vld [vmem:[%s5 + $0x2f0] sm:$0xf]
    %v8844 = vld [vmem:[%s5 + $0x2f4] sm:$0xf]
    %v8845 = vld [vmem:[%s5 + $0x2f8] sm:$0xf]
    %v8846 = vld [vmem:[%s5 + $0x2fc] sm:$0xf]
    %v8847 = vld [vmem:[%s5 + $0x300] sm:$0xf]
    %v8848 = vld [vmem:[%s5 + $0x304] sm:$0xf]
    %v8849 = vld [vmem:[%s5 + $0x308] sm:$0xf]
    %v8850 = vld [vmem:[%s5 + $0x30c] sm:$0xf]
    %v8851 = vld [vmem:[%s5 + $0x310] sm:$0xf]
    %v8852 = vld [vmem:[%s5 + $0x314] sm:$0xf]
    %v8853 = vld [vmem:[%s5 + $0x318] sm:$0xf]
    %v8854 = vld [vmem:[%s5 + $0x31c] sm:$0xf]
    %v8855 = vld [vmem:[%s5 + $0x320] sm:$0xf]
    %v8856 = vld [vmem:[%s5 + $0x324] sm:$0xf]
    %v8857 = vld [vmem:[%s5 + $0x328] sm:$0xf]
    %v8858 = vld [vmem:[%s5 + $0x32c] sm:$0xf]
    %v8859 = vld [vmem:[%s5 + $0x330] sm:$0xf]
    %v8860 = vld [vmem:[%s5 + $0x334] sm:$0xf]
    %v8861 = vld [vmem:[%s5 + $0x338] sm:$0xf]
    %v8862 = vld [vmem:[%s5 + $0x33c] sm:$0xf]
    %v8863 = vld [vmem:[%s5 + $0x340] sm:$0xf]
    %v8864 = vld [vmem:[%s5 + $0x344] sm:$0xf]
    %v8865 = vld [vmem:[%s5 + $0x348] sm:$0xf]
    %v8866 = vld [vmem:[%s5 + $0x34c] sm:$0xf]
    %v8867 = vld [vmem:[%s5 + $0x350] sm:$0xf]
    %v8868 = vld [vmem:[%s5 + $0x354] sm:$0xf]
    %v8869 = vld [vmem:[%s5 + $0x358] sm:$0xf]
    %v8870 = vld [vmem:[%s5 + $0x35c] sm:$0xf]
    %v8871 = vld [vmem:[%s5 + $0x360] sm:$0xf]
    %v8872 = vld [vmem:[%s5 + $0x364] sm:$0xf]
    %v8873 = vld [vmem:[%s5 + $0x368] sm:$0xf]
    %v8874 = vld [vmem:[%s5 + $0x36c] sm:$0xf]
    %v8875 = vld [vmem:[%s5 + $0x370] sm:$0xf]
    %v8876 = vld [vmem:[%s5 + $0x374] sm:$0xf]
    %v8877 = vld [vmem:[%s5 + $0x378] sm:$0xf]
    %v8878 = vld [vmem:[%s5 + $0x37c] sm:$0xf]
    %v8879 = vld [vmem:[%s5 + $0x380] sm:$0xf]
    %v8880 = vld [vmem:[%s5 + $0x384] sm:$0xf]
    %v8881 = vld [vmem:[%s5 + $0x388] sm:$0xf]
    %v8882 = vld [vmem:[%s5 + $0x38c] sm:$0xf]
    %v8883 = vld [vmem:[%s5 + $0x390] sm:$0xf]
    %v8884 = vld [vmem:[%s5 + $0x394] sm:$0xf]
    %v8885 = vld [vmem:[%s5 + $0x398] sm:$0xf]
    %v8886 = vld [vmem:[%s5 + $0x39c] sm:$0xf]
    %v8887 = vld [vmem:[%s5 + $0x3a0] sm:$0xf]
    %v8888 = vld [vmem:[%s5 + $0x3a4] sm:$0xf]
    %v8889 = vld [vmem:[%s5 + $0x3a8] sm:$0xf]
    %v8890 = vld [vmem:[%s5 + $0x3ac] sm:$0xf]
    %v8891 = vld [vmem:[%s5 + $0x3b0] sm:$0xf]
    %v8892 = vld [vmem:[%s5 + $0x3b4] sm:$0xf]
    %v8893 = vld [vmem:[%s5 + $0x3b8] sm:$0xf]
    %v8894 = vld [vmem:[%s5 + $0x3bc] sm:$0xf]
    %v8895 = vld [vmem:[%s5 + $0x3c0] sm:$0xf]
    %v8896 = vld [vmem:[%s5 + $0x3c4] sm:$0xf]
    %v8897 = vld [vmem:[%s5 + $0x3c8] sm:$0xf]
    %v8898 = vld [vmem:[%s5 + $0x3cc] sm:$0xf]
    %v8899 = vld [vmem:[%s5 + $0x3d0] sm:$0xf]
    %v8900 = vld [vmem:[%s5 + $0x3d4] sm:$0xf]
    %v8901 = vld [vmem:[%s5 + $0x3d8] sm:$0xf]
    %v8902 = vld [vmem:[%s5 + $0x3dc] sm:$0xf]
    %v8903 = vld [vmem:[%s5 + $0x3e0] sm:$0xf]
    %v8904 = vld [vmem:[%s5 + $0x3e4] sm:$0xf]
    %v8905 = vld [vmem:[%s5 + $0x3e8] sm:$0xf]
    %v8906 = vld [vmem:[%s5 + $0x3ec] sm:$0xf]
    %v8907 = vld [vmem:[%s5 + $0x3f0] sm:$0xf]
    %v8908 = vld [vmem:[%s5 + $0x3f4] sm:$0xf]
    %v8909 = vld [vmem:[%s5 + $0x3f8] sm:$0xf]
    %v8910 = vld [vmem:[%s5 + $0x3fc] sm:$0xf]
    %v8911 = vld [vmem:[#allocation9] sm:$0x1]
    %v8913 = vlaneseq
    %v8914 = vshrl.u32 %v8913, 7
    %v8915 = vsub.s32 0, %v8914
    %v8916 = vrot.slane %v8911, %v8915
    %v9174 = vunpack.c.l.b16 %v8655
    %v9175 = vunpack.c.l.b16 %v8656
    %v9176 = vunpack.c.l.b16 %v8657
    %v9177 = vunpack.c.l.b16 %v8658
    %v9178 = vunpack.c.l.b16 %v8659
    %v9179 = vunpack.c.l.b16 %v8660
    %v9180 = vunpack.c.l.b16 %v8661
    %v9181 = vunpack.c.l.b16 %v8662
    %v9182 = vunpack.c.l.b16 %v8663
    %v9183 = vunpack.c.l.b16 %v8664
    %v9184 = vunpack.c.l.b16 %v8665
    %v9185 = vunpack.c.l.b16 %v8666
    %v9186 = vunpack.c.l.b16 %v8667
    %v9187 = vunpack.c.l.b16 %v8668
    %v9188 = vunpack.c.l.b16 %v8669
    %v9189 = vunpack.c.l.b16 %v8670
    %v9190 = vunpack.c.l.b16 %v8671
    %v9191 = vunpack.c.l.b16 %v8672
    %v9192 = vunpack.c.l.b16 %v8673
    %v9193 = vunpack.c.l.b16 %v8674
    %v9194 = vunpack.c.l.b16 %v8675
    %v9195 = vunpack.c.l.b16 %v8676
    %v9196 = vunpack.c.l.b16 %v8677
    %v9197 = vunpack.c.l.b16 %v8678
    %v9198 = vunpack.c.l.b16 %v8679
    %v9199 = vunpack.c.l.b16 %v8680
    %v9200 = vunpack.c.l.b16 %v8681
    %v9201 = vunpack.c.l.b16 %v8682
    %v9202 = vunpack.c.l.b16 %v8683
    %v9203 = vunpack.c.l.b16 %v8684
    %v9204 = vunpack.c.l.b16 %v8685
    %v9205 = vunpack.c.l.b16 %v8686
    %v9206 = vunpack.c.l.b16 %v8687
    %v9207 = vunpack.c.l.b16 %v8688
    %v9208 = vunpack.c.l.b16 %v8689
    %v9209 = vunpack.c.l.b16 %v8690
    %v9210 = vunpack.c.l.b16 %v8691
    %v9211 = vunpack.c.l.b16 %v8692
    %v9212 = vunpack.c.l.b16 %v8693
    %v9213 = vunpack.c.l.b16 %v8694
    %v9214 = vunpack.c.l.b16 %v8695
    %v9215 = vunpack.c.l.b16 %v8696
    %v9216 = vunpack.c.l.b16 %v8697
    %v9217 = vunpack.c.l.b16 %v8698
    %v9218 = vunpack.c.l.b16 %v8699
    %v9219 = vunpack.c.l.b16 %v8700
    %v9220 = vunpack.c.l.b16 %v8701
    %v9221 = vunpack.c.l.b16 %v8702
    %v9222 = vunpack.c.l.b16 %v8703
    %v9223 = vunpack.c.l.b16 %v8704
    %v9224 = vunpack.c.l.b16 %v8705
    %v9225 = vunpack.c.l.b16 %v8706
    %v9226 = vunpack.c.l.b16 %v8707
    %v9227 = vunpack.c.l.b16 %v8708
    %v9228 = vunpack.c.l.b16 %v8709
    %v9229 = vunpack.c.l.b16 %v8710
    %v9230 = vunpack.c.l.b16 %v8711
    %v9231 = vunpack.c.l.b16 %v8712
    %v9232 = vunpack.c.l.b16 %v8713
    %v9233 = vunpack.c.l.b16 %v8714
    %v9234 = vunpack.c.l.b16 %v8715
    %v9235 = vunpack.c.l.b16 %v8716
    %v9236 = vunpack.c.l.b16 %v8717
    %v9237 = vunpack.c.l.b16 %v8718
    %v9238 = vunpack.c.l.b16 %v8719
    %v9239 = vunpack.c.l.b16 %v8720
    %v9240 = vunpack.c.l.b16 %v8721
    %v9241 = vunpack.c.l.b16 %v8722
    %v9242 = vunpack.c.l.b16 %v8723
    %v9243 = vunpack.c.l.b16 %v8724
    %v9244 = vunpack.c.l.b16 %v8725
    %v9245 = vunpack.c.l.b16 %v8726
    %v9246 = vunpack.c.l.b16 %v8727
    %v9247 = vunpack.c.l.b16 %v8728
    %v9248 = vunpack.c.l.b16 %v8729
    %v9249 = vunpack.c.l.b16 %v8730
    %v9250 = vunpack.c.l.b16 %v8731
    %v9251 = vunpack.c.l.b16 %v8732
    %v9252 = vunpack.c.l.b16 %v8733
    %v9253 = vunpack.c.l.b16 %v8734
    %v9254 = vunpack.c.l.b16 %v8735
    %v9255 = vunpack.c.l.b16 %v8736
    %v9256 = vunpack.c.l.b16 %v8737
    %v9257 = vunpack.c.l.b16 %v8738
    %v9258 = vunpack.c.l.b16 %v8739
    %v9259 = vunpack.c.l.b16 %v8740
    %v9260 = vunpack.c.l.b16 %v8741
    %v9261 = vunpack.c.l.b16 %v8742
    %v9262 = vunpack.c.l.b16 %v8743
    %v9263 = vunpack.c.l.b16 %v8744
    %v9264 = vunpack.c.l.b16 %v8745
    %v9265 = vunpack.c.l.b16 %v8746
    %v9266 = vunpack.c.l.b16 %v8747
    %v9267 = vunpack.c.l.b16 %v8748
    %v9268 = vunpack.c.l.b16 %v8749
    %v9269 = vunpack.c.l.b16 %v8750
    %v9270 = vunpack.c.l.b16 %v8751
    %v9271 = vunpack.c.l.b16 %v8752
    %v9272 = vunpack.c.l.b16 %v8753
    %v9273 = vunpack.c.l.b16 %v8754
    %v9274 = vunpack.c.l.b16 %v8755
    %v9275 = vunpack.c.l.b16 %v8756
    %v9276 = vunpack.c.l.b16 %v8757
    %v9277 = vunpack.c.l.b16 %v8758
    %v9278 = vunpack.c.l.b16 %v8759
    %v9279 = vunpack.c.l.b16 %v8760
    %v9280 = vunpack.c.l.b16 %v8761
    %v9281 = vunpack.c.l.b16 %v8762
    %v9282 = vunpack.c.l.b16 %v8763
    %v9283 = vunpack.c.l.b16 %v8764
    %v9284 = vunpack.c.l.b16 %v8765
    %v9285 = vunpack.c.l.b16 %v8766
    %v9286 = vunpack.c.l.b16 %v8767
    %v9287 = vunpack.c.l.b16 %v8768
    %v9288 = vunpack.c.l.b16 %v8769
    %v9289 = vunpack.c.l.b16 %v8770
    %v9290 = vunpack.c.l.b16 %v8771
    %v9291 = vunpack.c.l.b16 %v8772
    %v9292 = vunpack.c.l.b16 %v8773
    %v9293 = vunpack.c.l.b16 %v8774
    %v9294 = vunpack.c.l.b16 %v8775
    %v9295 = vunpack.c.l.b16 %v8776
    %v9296 = vunpack.c.l.b16 %v8777
    %v9297 = vunpack.c.l.b16 %v8778
    %v9298 = vunpack.c.l.b16 %v8779
    %v9299 = vunpack.c.l.b16 %v8780
    %v9300 = vunpack.c.l.b16 %v8781
    %v9301 = vunpack.c.l.b16 %v8782
    %v9302 = vunpack.c.l.b16 %v8783
    %v9303 = vunpack.c.l.b16 %v8784
    %v9304 = vunpack.c.l.b16 %v8785
    %v9305 = vunpack.c.l.b16 %v8786
    %v9306 = vunpack.c.l.b16 %v8787
    %v9307 = vunpack.c.l.b16 %v8788
    %v9308 = vunpack.c.l.b16 %v8789
    %v9309 = vunpack.c.l.b16 %v8790
    %v9310 = vunpack.c.l.b16 %v8791
    %v9311 = vunpack.c.l.b16 %v8792
    %v9312 = vunpack.c.l.b16 %v8793
    %v9313 = vunpack.c.l.b16 %v8794
    %v9314 = vunpack.c.l.b16 %v8795
    %v9315 = vunpack.c.l.b16 %v8796
    %v9316 = vunpack.c.l.b16 %v8797
    %v9317 = vunpack.c.l.b16 %v8798
    %v9318 = vunpack.c.l.b16 %v8799
    %v9319 = vunpack.c.l.b16 %v8800
    %v9320 = vunpack.c.l.b16 %v8801
    %v9321 = vunpack.c.l.b16 %v8802
    %v9322 = vunpack.c.l.b16 %v8803
    %v9323 = vunpack.c.l.b16 %v8804
    %v9324 = vunpack.c.l.b16 %v8805
    %v9325 = vunpack.c.l.b16 %v8806
    %v9326 = vunpack.c.l.b16 %v8807
    %v9327 = vunpack.c.l.b16 %v8808
    %v9328 = vunpack.c.l.b16 %v8809
    %v9329 = vunpack.c.l.b16 %v8810
    %v9330 = vunpack.c.l.b16 %v8811
    %v9331 = vunpack.c.l.b16 %v8812
    %v9332 = vunpack.c.l.b16 %v8813
    %v9333 = vunpack.c.l.b16 %v8814
    %v9334 = vunpack.c.l.b16 %v8815
    %v9335 = vunpack.c.l.b16 %v8816
    %v9336 = vunpack.c.l.b16 %v8817
    %v9337 = vunpack.c.l.b16 %v8818
    %v9338 = vunpack.c.l.b16 %v8819
    %v9339 = vunpack.c.l.b16 %v8820
    %v9340 = vunpack.c.l.b16 %v8821
    %v9341 = vunpack.c.l.b16 %v8822
    %v9342 = vunpack.c.l.b16 %v8823
    %v9343 = vunpack.c.l.b16 %v8824
    %v9344 = vunpack.c.l.b16 %v8825
    %v9345 = vunpack.c.l.b16 %v8826
    %v9346 = vunpack.c.l.b16 %v8827
    %v9347 = vunpack.c.l.b16 %v8828
    %v9348 = vunpack.c.l.b16 %v8829
    %v9349 = vunpack.c.l.b16 %v8830
    %v9350 = vunpack.c.l.b16 %v8831
    %v9351 = vunpack.c.l.b16 %v8832
    %v9352 = vunpack.c.l.b16 %v8833
    %v9353 = vunpack.c.l.b16 %v8834
    %v9354 = vunpack.c.l.b16 %v8835
    %v9355 = vunpack.c.l.b16 %v8836
    %v9356 = vunpack.c.l.b16 %v8837
    %v9357 = vunpack.c.l.b16 %v8838
    %v9358 = vunpack.c.l.b16 %v8839
    %v9359 = vunpack.c.l.b16 %v8840
    %v9360 = vunpack.c.l.b16 %v8841
    %v9361 = vunpack.c.l.b16 %v8842
    %v9362 = vunpack.c.l.b16 %v8843
    %v9363 = vunpack.c.l.b16 %v8844
    %v9364 = vunpack.c.l.b16 %v8845
    %v9365 = vunpack.c.l.b16 %v8846
    %v9366 = vunpack.c.l.b16 %v8847
    %v9367 = vunpack.c.l.b16 %v8848
    %v9368 = vunpack.c.l.b16 %v8849
    %v9369 = vunpack.c.l.b16 %v8850
    %v9370 = vunpack.c.l.b16 %v8851
    %v9371 = vunpack.c.l.b16 %v8852
    %v9372 = vunpack.c.l.b16 %v8853
    %v9373 = vunpack.c.l.b16 %v8854
    %v9374 = vunpack.c.l.b16 %v8855
    %v9375 = vunpack.c.l.b16 %v8856
    %v9376 = vunpack.c.l.b16 %v8857
    %v9377 = vunpack.c.l.b16 %v8858
    %v9378 = vunpack.c.l.b16 %v8859
    %v9379 = vunpack.c.l.b16 %v8860
    %v9380 = vunpack.c.l.b16 %v8861
    %v9381 = vunpack.c.l.b16 %v8862
    %v9382 = vunpack.c.l.b16 %v8863
    %v9383 = vunpack.c.l.b16 %v8864
    %v9384 = vunpack.c.l.b16 %v8865
    %v9385 = vunpack.c.l.b16 %v8866
    %v9386 = vunpack.c.l.b16 %v8867
    %v9387 = vunpack.c.l.b16 %v8868
    %v9388 = vunpack.c.l.b16 %v8869
    %v9389 = vunpack.c.l.b16 %v8870
    %v9390 = vunpack.c.l.b16 %v8871
    %v9391 = vunpack.c.l.b16 %v8872
    %v9392 = vunpack.c.l.b16 %v8873
    %v9393 = vunpack.c.l.b16 %v8874
    %v9394 = vunpack.c.l.b16 %v8875
    %v9395 = vunpack.c.l.b16 %v8876
    %v9396 = vunpack.c.l.b16 %v8877
    %v9397 = vunpack.c.l.b16 %v8878
    %v9398 = vunpack.c.l.b16 %v8879
    %v9399 = vunpack.c.l.b16 %v8880
    %v9400 = vunpack.c.l.b16 %v8881
    %v9401 = vunpack.c.l.b16 %v8882
    %v9402 = vunpack.c.l.b16 %v8883
    %v9403 = vunpack.c.l.b16 %v8884
    %v9404 = vunpack.c.l.b16 %v8885
    %v9405 = vunpack.c.l.b16 %v8886
    %v9406 = vunpack.c.l.b16 %v8887
    %v9407 = vunpack.c.l.b16 %v8888
    %v9408 = vunpack.c.l.b16 %v8889
    %v9409 = vunpack.c.l.b16 %v8890
    %v9410 = vunpack.c.l.b16 %v8891
    %v9411 = vunpack.c.l.b16 %v8892
    %v9412 = vunpack.c.l.b16 %v8893
    %v9413 = vunpack.c.l.b16 %v8894
    %v9414 = vunpack.c.l.b16 %v8895
    %v9415 = vunpack.c.l.b16 %v8896
    %v9416 = vunpack.c.l.b16 %v8897
    %v9417 = vunpack.c.l.b16 %v8898
    %v9418 = vunpack.c.l.b16 %v8899
    %v9419 = vunpack.c.l.b16 %v8900
    %v9420 = vunpack.c.l.b16 %v8901
    %v9421 = vunpack.c.l.b16 %v8902
    %v9422 = vunpack.c.l.b16 %v8903
    %v9423 = vunpack.c.l.b16 %v8904
    %v9424 = vunpack.c.l.b16 %v8905
    %v9425 = vunpack.c.l.b16 %v8906
    %v9426 = vunpack.c.l.b16 %v8907
    %v9427 = vunpack.c.l.b16 %v8908
    %v9428 = vunpack.c.l.b16 %v8909
    %v9429 = vunpack.c.l.b16 %v8910
    %v9430 = vpack.c.b16 %v9175, %v9174
    %v9431 = vpack.c.b16 %v9177, %v9176
    %v9432 = vpack.c.b16 %v9179, %v9178
    %v9433 = vpack.c.b16 %v9181, %v9180
    %v9434 = vpack.c.b16 %v9183, %v9182
    %v9435 = vpack.c.b16 %v9185, %v9184
    %v9436 = vpack.c.b16 %v9187, %v9186
    %v9437 = vpack.c.b16 %v9189, %v9188
    %v9438 = vpack.c.b16 %v9191, %v9190
    %v9439 = vpack.c.b16 %v9193, %v9192
    %v9440 = vpack.c.b16 %v9195, %v9194
    %v9441 = vpack.c.b16 %v9197, %v9196
    %v9442 = vpack.c.b16 %v9199, %v9198
    %v9443 = vpack.c.b16 %v9201, %v9200
    %v9444 = vpack.c.b16 %v9203, %v9202
    %v9445 = vpack.c.b16 %v9205, %v9204
    %v9446 = vpack.c.b16 %v9207, %v9206
    %v9447 = vpack.c.b16 %v9209, %v9208
    %v9448 = vpack.c.b16 %v9211, %v9210
    %v9449 = vpack.c.b16 %v9213, %v9212
    %v9450 = vpack.c.b16 %v9215, %v9214
    %v9451 = vpack.c.b16 %v9217, %v9216
    %v9452 = vpack.c.b16 %v9219, %v9218
    %v9453 = vpack.c.b16 %v9221, %v9220
    %v9454 = vpack.c.b16 %v9223, %v9222
    %v9455 = vpack.c.b16 %v9225, %v9224
    %v9456 = vpack.c.b16 %v9227, %v9226
    %v9457 = vpack.c.b16 %v9229, %v9228
    %v9458 = vpack.c.b16 %v9231, %v9230
    %v9459 = vpack.c.b16 %v9233, %v9232
    %v9460 = vpack.c.b16 %v9235, %v9234
    %v9461 = vpack.c.b16 %v9237, %v9236
    %v9462 = vpack.c.b16 %v9239, %v9238
    %v9463 = vpack.c.b16 %v9241, %v9240
    %v9464 = vpack.c.b16 %v9243, %v9242
    %v9465 = vpack.c.b16 %v9245, %v9244
    %v9466 = vpack.c.b16 %v9247, %v9246
    %v9467 = vpack.c.b16 %v9249, %v9248
    %v9468 = vpack.c.b16 %v9251, %v9250
    %v9469 = vpack.c.b16 %v9253, %v9252
    %v9470 = vpack.c.b16 %v9255, %v9254
    %v9471 = vpack.c.b16 %v9257, %v9256
    %v9472 = vpack.c.b16 %v9259, %v9258
    %v9473 = vpack.c.b16 %v9261, %v9260
    %v9474 = vpack.c.b16 %v9263, %v9262
    %v9475 = vpack.c.b16 %v9265, %v9264
    %v9476 = vpack.c.b16 %v9267, %v9266
    %v9477 = vpack.c.b16 %v9269, %v9268
    %v9478 = vpack.c.b16 %v9271, %v9270
    %v9479 = vpack.c.b16 %v9273, %v9272
    %v9480 = vpack.c.b16 %v9275, %v9274
    %v9481 = vpack.c.b16 %v9277, %v9276
    %v9482 = vpack.c.b16 %v9279, %v9278
    %v9483 = vpack.c.b16 %v9281, %v9280
    %v9484 = vpack.c.b16 %v9283, %v9282
    %v9485 = vpack.c.b16 %v9285, %v9284
    %v9486 = vpack.c.b16 %v9287, %v9286
    %v9487 = vpack.c.b16 %v9289, %v9288
    %v9488 = vpack.c.b16 %v9291, %v9290
    %v9489 = vpack.c.b16 %v9293, %v9292
    %v9490 = vpack.c.b16 %v9295, %v9294
    %v9491 = vpack.c.b16 %v9297, %v9296
    %v9492 = vpack.c.b16 %v9299, %v9298
    %v9493 = vpack.c.b16 %v9301, %v9300
    %v9494 = vpack.c.b16 %v9303, %v9302
    %v9495 = vpack.c.b16 %v9305, %v9304
    %v9496 = vpack.c.b16 %v9307, %v9306
    %v9497 = vpack.c.b16 %v9309, %v9308
    %v9498 = vpack.c.b16 %v9311, %v9310
    %v9499 = vpack.c.b16 %v9313, %v9312
    %v9500 = vpack.c.b16 %v9315, %v9314
    %v9501 = vpack.c.b16 %v9317, %v9316
    %v9502 = vpack.c.b16 %v9319, %v9318
    %v9503 = vpack.c.b16 %v9321, %v9320
    %v9504 = vpack.c.b16 %v9323, %v9322
    %v9505 = vpack.c.b16 %v9325, %v9324
    %v9506 = vpack.c.b16 %v9327, %v9326
    %v9507 = vpack.c.b16 %v9329, %v9328
    %v9508 = vpack.c.b16 %v9331, %v9330
    %v9509 = vpack.c.b16 %v9333, %v9332
    %v9510 = vpack.c.b16 %v9335, %v9334
    %v9511 = vpack.c.b16 %v9337, %v9336
    %v9512 = vpack.c.b16 %v9339, %v9338
    %v9513 = vpack.c.b16 %v9341, %v9340
    %v9514 = vpack.c.b16 %v9343, %v9342
    %v9515 = vpack.c.b16 %v9345, %v9344
    %v9516 = vpack.c.b16 %v9347, %v9346
    %v9517 = vpack.c.b16 %v9349, %v9348
    %v9518 = vpack.c.b16 %v9351, %v9350
    %v9519 = vpack.c.b16 %v9353, %v9352
    %v9520 = vpack.c.b16 %v9355, %v9354
    %v9521 = vpack.c.b16 %v9357, %v9356
    %v9522 = vpack.c.b16 %v9359, %v9358
    %v9523 = vpack.c.b16 %v9361, %v9360
    %v9524 = vpack.c.b16 %v9363, %v9362
    %v9525 = vpack.c.b16 %v9365, %v9364
    %v9526 = vpack.c.b16 %v9367, %v9366
    %v9527 = vpack.c.b16 %v9369, %v9368
    %v9528 = vpack.c.b16 %v9371, %v9370
    %v9529 = vpack.c.b16 %v9373, %v9372
    %v9530 = vpack.c.b16 %v9375, %v9374
    %v9531 = vpack.c.b16 %v9377, %v9376
    %v9532 = vpack.c.b16 %v9379, %v9378
    %v9533 = vpack.c.b16 %v9381, %v9380
    %v9534 = vpack.c.b16 %v9383, %v9382
    %v9535 = vpack.c.b16 %v9385, %v9384
    %v9536 = vpack.c.b16 %v9387, %v9386
    %v9537 = vpack.c.b16 %v9389, %v9388
    %v9538 = vpack.c.b16 %v9391, %v9390
    %v9539 = vpack.c.b16 %v9393, %v9392
    %v9540 = vpack.c.b16 %v9395, %v9394
    %v9541 = vpack.c.b16 %v9397, %v9396
    %v9542 = vpack.c.b16 %v9399, %v9398
    %v9543 = vpack.c.b16 %v9401, %v9400
    %v9544 = vpack.c.b16 %v9403, %v9402
    %v9545 = vpack.c.b16 %v9405, %v9404
    %v9546 = vpack.c.b16 %v9407, %v9406
    %v9547 = vpack.c.b16 %v9409, %v9408
    %v9548 = vpack.c.b16 %v9411, %v9410
    %v9549 = vpack.c.b16 %v9413, %v9412
    %v9550 = vpack.c.b16 %v9415, %v9414
    %v9551 = vpack.c.b16 %v9417, %v9416
    %v9552 = vpack.c.b16 %v9419, %v9418
    %v9553 = vpack.c.b16 %v9421, %v9420
    %v9554 = vpack.c.b16 %v9423, %v9422
    %v9555 = vpack.c.b16 %v9425, %v9424
    %v9556 = vpack.c.b16 %v9427, %v9426
    %v9557 = vpack.c.b16 %v9429, %v9428
    %9686 = vmatprep.subr.bf16.mxu0 0
    %9687 = vmatpush1.bf16.msra.mxu0 %v9430
    %9688 = vmatprep.subr.bf16.mxu0 0
    %9689 = vmatpush1.bf16.msra.mxu0 %v9431
    %9690 = vmatprep.subr.bf16.mxu0 0
    %9691 = vmatpush1.bf16.msra.mxu0 %v9432
    %9692 = vmatprep.subr.bf16.mxu0 0
    %9693 = vmatpush1.bf16.msra.mxu0 %v9433
    %9694 = vmatprep.subr.bf16.mxu0 0
    %9695 = vmatpush1.bf16.msra.mxu0 %v9434
    %9696 = vmatprep.subr.bf16.mxu0 0
    %9697 = vmatpush1.bf16.msra.mxu0 %v9435
    %9698 = vmatprep.subr.bf16.mxu0 0
    %9699 = vmatpush1.bf16.msra.mxu0 %v9436
    %9700 = vmatprep.subr.bf16.mxu0 0
    %9701 = vmatpush1.bf16.msra.mxu0 %v9437
    %9702 = vmatprep.subr.bf16.mxu0 0
    %9703 = vmatpush1.bf16.msra.mxu0 %v9438
    %9704 = vmatprep.subr.bf16.mxu0 0
    %9705 = vmatpush1.bf16.msra.mxu0 %v9439
    %9706 = vmatprep.subr.bf16.mxu0 0
    %9707 = vmatpush1.bf16.msra.mxu0 %v9440
    %9708 = vmatprep.subr.bf16.mxu0 0
    %9709 = vmatpush1.bf16.msra.mxu0 %v9441
    %9710 = vmatprep.subr.bf16.mxu0 0
    %9711 = vmatpush1.bf16.msra.mxu0 %v9442
    %9712 = vmatprep.subr.bf16.mxu0 0
    %9713 = vmatpush1.bf16.msra.mxu0 %v9443
    %9714 = vmatprep.subr.bf16.mxu0 0
    %9715 = vmatpush1.bf16.msra.mxu0 %v9444
    %9716 = vmatprep.subr.bf16.mxu0 0
    %9717 = vmatpush1.bf16.msra.mxu0 %v9445
    %9718 = vmatprep.mubr.bf16.mxu0 %v8640
    %9719 = vmatmul.mubr.bf16.gmra.mrb[0].mxu0 %v8639
    %v9720 = vpop.f32.mrb[0].mxu0
    %v9721 = vadd.f32 %v8916, %v9720
    %v9722 = vpop.f32.mrb[0].mxu0
    %v9723 = vpop.f32.mrb[0].mxu0
    %v9724 = vpop.f32.mrb[0].mxu0
    %9725 = vdwg.mxu0
    %9726 = vmatprep.subr.bf16.mxu0 0
    %9727 = vmatpush1.bf16.msra.mxu0 %v9446
    %9728 = vmatprep.subr.bf16.mxu0 0
    %9729 = vmatpush1.bf16.msra.mxu0 %v9447
    %9730 = vmatprep.subr.bf16.mxu0 0
    %9731 = vmatpush1.bf16.msra.mxu0 %v9448
    %9732 = vmatprep.subr.bf16.mxu0 0
    %9733 = vmatpush1.bf16.msra.mxu0 %v9449
    %9734 = vmatprep.subr.bf16.mxu0 0
    %9735 = vmatpush1.bf16.msra.mxu0 %v9450
    %9736 = vmatprep.subr.bf16.mxu0 0
    %9737 = vmatpush1.bf16.msra.mxu0 %v9451
    %9738 = vmatprep.subr.bf16.mxu0 0
    %9739 = vmatpush1.bf16.msra.mxu0 %v9452
    %9740 = vmatprep.subr.bf16.mxu0 0
    %9741 = vmatpush1.bf16.msra.mxu0 %v9453
    %9742 = vmatprep.subr.bf16.mxu0 0
    %9743 = vmatpush1.bf16.msra.mxu0 %v9454
    %9744 = vmatprep.subr.bf16.mxu0 0
    %9745 = vmatpush1.bf16.msra.mxu0 %v9455
    %9746 = vmatprep.subr.bf16.mxu0 0
    %9747 = vmatpush1.bf16.msra.mxu0 %v9456
    %9748 = vmatprep.subr.bf16.mxu0 0
    %9749 = vmatpush1.bf16.msra.mxu0 %v9457
    %9750 = vmatprep.subr.bf16.mxu0 0
    %9751 = vmatpush1.bf16.msra.mxu0 %v9458
    %9752 = vmatprep.subr.bf16.mxu0 0
    %9753 = vmatpush1.bf16.msra.mxu0 %v9459
    %9754 = vmatprep.subr.bf16.mxu0 0
    %9755 = vmatpush1.bf16.msra.mxu0 %v9460
    %9756 = vmatprep.subr.bf16.mxu0 0
    %9757 = vmatpush1.bf16.msra.mxu0 %v9461
    %9758 = vmatprep.mubr.bf16.mxu0 %v8642
    %9759 = vmatmul.mubr.bf16.gmra.mrb[0].mxu0 %v8641
    %v9760 = vpop.f32.mrb[0].mxu0
    %v9761 = vadd.f32 %v9721, %v9760
    %v9762 = vpop.f32.mrb[0].mxu0
    %v9763 = vpop.f32.mrb[0].mxu0
    %v9764 = vpop.f32.mrb[0].mxu0
    %9765 = vdwg.mxu0
    %9766 = vmatprep.subr.bf16.mxu0 0
    %9767 = vmatpush1.bf16.msra.mxu0 %v9462
    %9768 = vmatprep.subr.bf16.mxu0 0
    %9769 = vmatpush1.bf16.msra.mxu0 %v9463
    %9770 = vmatprep.subr.bf16.mxu0 0
    %9771 = vmatpush1.bf16.msra.mxu0 %v9464
    %9772 = vmatprep.subr.bf16.mxu0 0
    %9773 = vmatpush1.bf16.msra.mxu0 %v9465
    %9774 = vmatprep.subr.bf16.mxu0 0
    %9775 = vmatpush1.bf16.msra.mxu0 %v9466
    %9776 = vmatprep.subr.bf16.mxu0 0
    %9777 = vmatpush1.bf16.msra.mxu0 %v9467
    %9778 = vmatprep.subr.bf16.mxu0 0
    %9779 = vmatpush1.bf16.msra.mxu0 %v9468
    %9780 = vmatprep.subr.bf16.mxu0 0
    %9781 = vmatpush1.bf16.msra.mxu0 %v9469
    %9782 = vmatprep.subr.bf16.mxu0 0
    %9783 = vmatpush1.bf16.msra.mxu0 %v9470
    %9784 = vmatprep.subr.bf16.mxu0 0
    %9785 = vmatpush1.bf16.msra.mxu0 %v9471
    %9786 = vmatprep.subr.bf16.mxu0 0
    %9787 = vmatpush1.bf16.msra.mxu0 %v9472
    %9788 = vmatprep.subr.bf16.mxu0 0
    %9789 = vmatpush1.bf16.msra.mxu0 %v9473
    %9790 = vmatprep.subr.bf16.mxu0 0
    %9791 = vmatpush1.bf16.msra.mxu0 %v9474
    %9792 = vmatprep.subr.bf16.mxu0 0
    %9793 = vmatpush1.bf16.msra.mxu0 %v9475
    %9794 = vmatprep.subr.bf16.mxu0 0
    %9795 = vmatpush1.bf16.msra.mxu0 %v9476
    %9796 = vmatprep.subr.bf16.mxu0 0
    %9797 = vmatpush1.bf16.msra.mxu0 %v9477
    %9798 = vmatprep.mubr.bf16.mxu0 %v8644
    %9799 = vmatmul.mubr.bf16.gmra.mrb[0].mxu0 %v8643
    %v9800 = vpop.f32.mrb[0].mxu0
    %v9801 = vadd.f32 %v9761, %v9800
    %v9802 = vpop.f32.mrb[0].mxu0
    %v9803 = vpop.f32.mrb[0].mxu0
    %v9804 = vpop.f32.mrb[0].mxu0
    %9805 = vdwg.mxu0
    %9806 = vmatprep.subr.bf16.mxu0 0
    %9807 = vmatpush1.bf16.msra.mxu0 %v9478
    %9808 = vmatprep.subr.bf16.mxu0 0
    %9809 = vmatpush1.bf16.msra.mxu0 %v9479
    %9810 = vmatprep.subr.bf16.mxu0 0
    %9811 = vmatpush1.bf16.msra.mxu0 %v9480
    %9812 = vmatprep.subr.bf16.mxu0 0
    %9813 = vmatpush1.bf16.msra.mxu0 %v9481
    %9814 = vmatprep.subr.bf16.mxu0 0
    %9815 = vmatpush1.bf16.msra.mxu0 %v9482
    %9816 = vmatprep.subr.bf16.mxu0 0
    %9817 = vmatpush1.bf16.msra.mxu0 %v9483
    %9818 = vmatprep.subr.bf16.mxu0 0
    %9819 = vmatpush1.bf16.msra.mxu0 %v9484
    %9820 = vmatprep.subr.bf16.mxu0 0
    %9821 = vmatpush1.bf16.msra.mxu0 %v9485
    %9822 = vmatprep.subr.bf16.mxu0 0
    %9823 = vmatpush1.bf16.msra.mxu0 %v9486
    %9824 = vmatprep.subr.bf16.mxu0 0
    %9825 = vmatpush1.bf16.msra.mxu0 %v9487
    %9826 = vmatprep.subr.bf16.mxu0 0
    %9827 = vmatpush1.bf16.msra.mxu0 %v9488
    %9828 = vmatprep.subr.bf16.mxu0 0
    %9829 = vmatpush1.bf16.msra.mxu0 %v9489
    %9830 = vmatprep.subr.bf16.mxu0 0
    %9831 = vmatpush1.bf16.msra.mxu0 %v9490
    %9832 = vmatprep.subr.bf16.mxu0 0
    %9833 = vmatpush1.bf16.msra.mxu0 %v9491
    %9834 = vmatprep.subr.bf16.mxu0 0
    %9835 = vmatpush1.bf16.msra.mxu0 %v9492
    %9836 = vmatprep.subr.bf16.mxu0 0
    %9837 = vmatpush1.bf16.msra.mxu0 %v9493
    %9838 = vmatprep.mubr.bf16.mxu0 %v8646
    %9839 = vmatmul.mubr.bf16.gmra.mrb[0].mxu0 %v8645
    %v9840 = vpop.f32.mrb[0].mxu0
    %v9841 = vadd.f32 %v9801, %v9840
    %v9842 = vpop.f32.mrb[0].mxu0
    %v9843 = vpop.f32.mrb[0].mxu0
    %v9844 = vpop.f32.mrb[0].mxu0
    %9845 = vdwg.mxu0
    %9846 = vmatprep.subr.bf16.mxu0 0
    %9847 = vmatpush1.bf16.msra.mxu0 %v9494
    %9848 = vmatprep.subr.bf16.mxu0 0
    %9849 = vmatpush1.bf16.msra.mxu0 %v9495
    %9850 = vmatprep.subr.bf16.mxu0 0
    %9851 = vmatpush1.bf16.msra.mxu0 %v9496
    %9852 = vmatprep.subr.bf16.mxu0 0
    %9853 = vmatpush1.bf16.msra.mxu0 %v9497
    %9854 = vmatprep.subr.bf16.mxu0 0
    %9855 = vmatpush1.bf16.msra.mxu0 %v9498
    %9856 = vmatprep.subr.bf16.mxu0 0
    %9857 = vmatpush1.bf16.msra.mxu0 %v9499
    %9858 = vmatprep.subr.bf16.mxu0 0
    %9859 = vmatpush1.bf16.msra.mxu0 %v9500
    %9860 = vmatprep.subr.bf16.mxu0 0
    %9861 = vmatpush1.bf16.msra.mxu0 %v9501
    %9862 = vmatprep.subr.bf16.mxu0 0
    %9863 = vmatpush1.bf16.msra.mxu0 %v9502
    %9864 = vmatprep.subr.bf16.mxu0 0
    %9865 = vmatpush1.bf16.msra.mxu0 %v9503
    %9866 = vmatprep.subr.bf16.mxu0 0
    %9867 = vmatpush1.bf16.msra.mxu0 %v9504
    %9868 = vmatprep.subr.bf16.mxu0 0
    %9869 = vmatpush1.bf16.msra.mxu0 %v9505
    %9870 = vmatprep.subr.bf16.mxu0 0
    %9871 = vmatpush1.bf16.msra.mxu0 %v9506
    %9872 = vmatprep.subr.bf16.mxu0 0
    %9873 = vmatpush1.bf16.msra.mxu0 %v9507
    %9874 = vmatprep.subr.bf16.mxu0 0
    %9875 = vmatpush1.bf16.msra.mxu0 %v9508
    %9876 = vmatprep.subr.bf16.mxu0 0
    %9877 = vmatpush1.bf16.msra.mxu0 %v9509
    %9878 = vmatprep.mubr.bf16.mxu0 %v8648
    %9879 = vmatmul.mubr.bf16.gmra.mrb[0].mxu0 %v8647
    %v9880 = vpop.f32.mrb[0].mxu0
    %v9881 = vadd.f32 %v9841, %v9880
    %v9882 = vpop.f32.mrb[0].mxu0
    %v9883 = vpop.f32.mrb[0].mxu0
    %v9884 = vpop.f32.mrb[0].mxu0
    %9885 = vdwg.mxu0
    %9886 = vmatprep.subr.bf16.mxu0 0
    %9887 = vmatpush1.bf16.msra.mxu0 %v9510
    %9888 = vmatprep.subr.bf16.mxu0 0
    %9889 = vmatpush1.bf16.msra.mxu0 %v9511
    %9890 = vmatprep.subr.bf16.mxu0 0
    %9891 = vmatpush1.bf16.msra.mxu0 %v9512
    %9892 = vmatprep.subr.bf16.mxu0 0
    %9893 = vmatpush1.bf16.msra.mxu0 %v9513
    %9894 = vmatprep.subr.bf16.mxu0 0
    %9895 = vmatpush1.bf16.msra.mxu0 %v9514
    %9896 = vmatprep.subr.bf16.mxu0 0
    %9897 = vmatpush1.bf16.msra.mxu0 %v9515
    %9898 = vmatprep.subr.bf16.mxu0 0
    %9899 = vmatpush1.bf16.msra.mxu0 %v9516
    %9900 = vmatprep.subr.bf16.mxu0 0
    %9901 = vmatpush1.bf16.msra.mxu0 %v9517
    %9902 = vmatprep.subr.bf16.mxu0 0
    %9903 = vmatpush1.bf16.msra.mxu0 %v9518
    %9904 = vmatprep.subr.bf16.mxu0 0
    %9905 = vmatpush1.bf16.msra.mxu0 %v9519
    %9906 = vmatprep.subr.bf16.mxu0 0
    %9907 = vmatpush1.bf16.msra.mxu0 %v9520
    %9908 = vmatprep.subr.bf16.mxu0 0
    %9909 = vmatpush1.bf16.msra.mxu0 %v9521
    %9910 = vmatprep.subr.bf16.mxu0 0
    %9911 = vmatpush1.bf16.msra.mxu0 %v9522
    %9912 = vmatprep.subr.bf16.mxu0 0
    %9913 = vmatpush1.bf16.msra.mxu0 %v9523
    %9914 = vmatprep.subr.bf16.mxu0 0
    %9915 = vmatpush1.bf16.msra.mxu0 %v9524
    %9916 = vmatprep.subr.bf16.mxu0 0
    %9917 = vmatpush1.bf16.msra.mxu0 %v9525
    %9918 = vmatprep.mubr.bf16.mxu0 %v8650
    %9919 = vmatmul.mubr.bf16.gmra.mrb[0].mxu0 %v8649
    %v9920 = vpop.f32.mrb[0].mxu0
    %v9921 = vadd.f32 %v9881, %v9920
    %v9922 = vpop.f32.mrb[0].mxu0
    %v9923 = vpop.f32.mrb[0].mxu0
    %v9924 = vpop.f32.mrb[0].mxu0
    %9925 = vdwg.mxu0
    %9926 = vmatprep.subr.bf16.mxu0 0
    %9927 = vmatpush1.bf16.msra.mxu0 %v9526
    %9928 = vmatprep.subr.bf16.mxu0 0
    %9929 = vmatpush1.bf16.msra.mxu0 %v9527
    %9930 = vmatprep.subr.bf16.mxu0 0
    %9931 = vmatpush1.bf16.msra.mxu0 %v9528
    %9932 = vmatprep.subr.bf16.mxu0 0
    %9933 = vmatpush1.bf16.msra.mxu0 %v9529
    %9934 = vmatprep.subr.bf16.mxu0 0
    %9935 = vmatpush1.bf16.msra.mxu0 %v9530
    %9936 = vmatprep.subr.bf16.mxu0 0
    %9937 = vmatpush1.bf16.msra.mxu0 %v9531
    %9938 = vmatprep.subr.bf16.mxu0 0
    %9939 = vmatpush1.bf16.msra.mxu0 %v9532
    %9940 = vmatprep.subr.bf16.mxu0 0
    %9941 = vmatpush1.bf16.msra.mxu0 %v9533
    %9942 = vmatprep.subr.bf16.mxu0 0
    %9943 = vmatpush1.bf16.msra.mxu0 %v9534
    %9944 = vmatprep.subr.bf16.mxu0 0
    %9945 = vmatpush1.bf16.msra.mxu0 %v9535
    %9946 = vmatprep.subr.bf16.mxu0 0
    %9947 = vmatpush1.bf16.msra.mxu0 %v9536
    %9948 = vmatprep.subr.bf16.mxu0 0
    %9949 = vmatpush1.bf16.msra.mxu0 %v9537
    %9950 = vmatprep.subr.bf16.mxu0 0
    %9951 = vmatpush1.bf16.msra.mxu0 %v9538
    %9952 = vmatprep.subr.bf16.mxu0 0
    %9953 = vmatpush1.bf16.msra.mxu0 %v9539
    %9954 = vmatprep.subr.bf16.mxu0 0
    %9955 = vmatpush1.bf16.msra.mxu0 %v9540
    %9956 = vmatprep.subr.bf16.mxu0 0
    %9957 = vmatpush1.bf16.msra.mxu0 %v9541
    %9958 = vmatprep.mubr.bf16.mxu0 %v8652
    %9959 = vmatmul.mubr.bf16.gmra.mrb[0].mxu0 %v8651
    %v9960 = vpop.f32.mrb[0].mxu0
    %v9961 = vadd.f32 %v9921, %v9960
    %v9962 = vpop.f32.mrb[0].mxu0
    %v9963 = vpop.f32.mrb[0].mxu0
    %v9964 = vpop.f32.mrb[0].mxu0
    %9965 = vdwg.mxu0
    %9966 = vmatprep.subr.bf16.mxu0 0
    %9967 = vmatpush1.bf16.msra.mxu0 %v9542
    %9968 = vmatprep.subr.bf16.mxu0 0
    %9969 = vmatpush1.bf16.msra.mxu0 %v9543
    %9970 = vmatprep.subr.bf16.mxu0 0
    %9971 = vmatpush1.bf16.msra.mxu0 %v9544
    %9972 = vmatprep.subr.bf16.mxu0 0
    %9973 = vmatpush1.bf16.msra.mxu0 %v9545
    %9974 = vmatprep.subr.bf16.mxu0 0
    %9975 = vmatpush1.bf16.msra.mxu0 %v9546
    %9976 = vmatprep.subr.bf16.mxu0 0
    %9977 = vmatpush1.bf16.msra.mxu0 %v9547
    %9978 = vmatprep.subr.bf16.mxu0 0
    %9979 = vmatpush1.bf16.msra.mxu0 %v9548
    %9980 = vmatprep.subr.bf16.mxu0 0
    %9981 = vmatpush1.bf16.msra.mxu0 %v9549
    %9982 = vmatprep.subr.bf16.mxu0 0
    %9983 = vmatpush1.bf16.msra.mxu0 %v9550
    %9984 = vmatprep.subr.bf16.mxu0 0
    %9985 = vmatpush1.bf16.msra.mxu0 %v9551
    %9986 = vmatprep.subr.bf16.mxu0 0
    %9987 = vmatpush1.bf16.msra.mxu0 %v9552
    %9988 = vmatprep.subr.bf16.mxu0 0
    %9989 = vmatpush1.bf16.msra.mxu0 %v9553
    %9990 = vmatprep.subr.bf16.mxu0 0
    %9991 = vmatpush1.bf16.msra.mxu0 %v9554
    %9992 = vmatprep.subr.bf16.mxu0 0
    %9993 = vmatpush1.bf16.msra.mxu0 %v9555
    %9994 = vmatprep.subr.bf16.mxu0 0
    %9995 = vmatpush1.bf16.msra.mxu0 %v9556
    %9996 = vmatprep.subr.bf16.mxu0 0
    %9997 = vmatpush1.bf16.msra.mxu0 %v9557
    %9998 = vmatprep.mubr.bf16.mxu0 %v8654
    %9999 = vmatmul.mubr.bf16.gmra.mrb[0].mxu0 %v8653
    %v10000 = vpop.f32.mrb[0].mxu0
    %v10001 = vadd.f32 %v9961, %v10000
    %v10002 = vpop.f32.mrb[0].mxu0
    %v10003 = vpop.f32.mrb[0].mxu0
    %v10004 = vpop.f32.mrb[0].mxu0
    %10005 = vdwg.mxu0
    %vm10006 = vcmask 162816
    %10007 = vst.msk [vmem:[%s7] sm:$0xff] %vm10006, %v10001
    // Predicated region
    $region50: #{emg_to_pose.1} parent=1 // pred_check
      _
    $region51: #{emg_to_pose.1} parent=1 // pred_check_branch
      %10009 = sbr.rel (0) target = $region53
    $region52: #{emg_to_pose.1} parent=1 // pred_region
      _
    $region53: #{emg_to_pose.1} parent=1 // pred_fallthru
      _
    // Predicated region
    $region54: #{emg_to_pose.1} parent=1 // pred_check
      _
    $region55: #{emg_to_pose.1} parent=1 // pred_check_branch
      %10011 = sbr.rel (0) target = $region57
    $region56: #{emg_to_pose.1} parent=1 // pred_region
      _
    $region57: #{emg_to_pose.1} parent=1 // pred_fallthru
      _
    %10012 = vsyncpa [#allocation3], 1
    %10013 = vsyncpa [#allocation5], 1
    %10014 = vsyncpa [#allocation8], 1

</llo_original>
